<compile_context>
chip_gen: v6e
topology: v6e:2x2x1
jax: 0.10.0
libtpu: 0.0.40
codegen_flags: <defaults>
</compile_context>

<pallas_src>
import functools

import jax
import jax.numpy as jnp
import numpy as np
from jax.experimental import pallas as pl
from jax.experimental.pallas import tpu as pltpu

LATENT_DIM = 64
IN_DIM = 28 * 28                  # 784
OUT_PAD = 896                     # 7 * 128 — lane-dense padded reconstruction width
ENC_DIMS = [IN_DIM, 1024, 512, 256]
DEC_DIMS = [LATENT_DIM, 256, 512, 1024, IN_DIM]

# Per-sample cost for pl.CostEstimate.
_W_ELEMS = (IN_DIM * 1024 + 1024 * 512 + 512 * 256 + 256 * (2 * LATENT_DIM)
            + LATENT_DIM * 256 + 256 * 512 + 512 * 1024 + 1024 * OUT_PAD)
_B_ELEMS = 1024 + 512 + 256 + 2 * LATENT_DIM + 256 + 512 + 1024 + OUT_PAD
_FLOPS_PER_SAMPLE = 2 * _W_ELEMS
# bf16 x in, f32 eps in, bf16 recon out, f32 [mu|logvar] out
_IO_BYTES_PER_SAMPLE = 2 * IN_DIM + 4 * LATENT_DIM + 2 * OUT_PAD + 4 * (2 * LATENT_DIM)
_TRANSC_PER_SAMPLE = LATENT_DIM + OUT_PAD      # exp + sigmoid


def _detect_vmem_bytes():
    try:
        return int(pltpu.get_tpu_info().vmem_capacity_bytes)
    except Exception:
        return 64 << 20          # conservative fallback (v7x per-TC VMEM)


_VMEM_BYTES = _detect_vmem_bytes()
_VMEM_LIMIT = int(min(96 << 20, (_VMEM_BYTES * 3) // 4))   # v5e/v6e: 96 MiB, v7x: 48 MiB
_MAX_TILE = 1024 if _VMEM_BYTES >= (100 << 20) else 512    # v5e/v6e: 1024, v7x: 512


def _vae_kernel(x_ref, eps_ref,
                w1, b1, w2, b2, w3, b3,          # encoder (bf16 W, f32 b)
                wh, bh,                          # fused [mu | logvar] head
                dw1, db1, dw2, db2, dw3, db3, dw4, db4,  # decoder
                recon_ref, muvar_ref):
    def dense(a, w_ref, b_ref, relu):
        y = jnp.dot(a.astype(jnp.bfloat16), w_ref[...],
                    preferred_element_type=jnp.float32) + b_ref[...]
        if relu:
            # Keep inter-layer activations bf16: halves VMEM scratch / vld pressure.
            return jnp.maximum(y, 0.0).astype(jnp.bfloat16)
        return y

    x = x_ref[...]                                # (TB, 784) bf16

    # ---- encoder: (Linear + ReLU) x3 ----
    h = dense(x, w1, b1, True)
    h = dense(h, w2, b2, True)
    h = dense(h, w3, b3, True)

    # ---- fused latent heads: one 256->128 matmul, lane-dense output ----
    muvar = dense(h, wh, bh, False)               # (TB, 128) f32 = [mu | logvar]
    mu = muvar[:, :LATENT_DIM]
    logvar = muvar[:, LATENT_DIM:]

    # ---- reparameterize: z = mu + eps * exp(0.5 * logvar)  (f32) ----
    z = mu + eps_ref[...] * jnp.exp(0.5 * logvar)

    # ---- decoder: (Linear + ReLU) x3, Linear + Sigmoid ----
    d = dense(z, dw1, db1, True)
    d = dense(d, dw2, db2, True)
    d = dense(d, dw3, db3, True)
    logits = dense(d, dw4, db4, False)            # (TB, 896) f32; cols >= 784 are pad
    # TODO(synk): trim sigmoid to the 784 valid columns if EUP ever shows up saturated.
    recon_ref[...] = jax.nn.sigmoid(logits).astype(recon_ref.dtype)   # bf16 writeback
    muvar_ref[...] = muvar


def init_params(key):
    """Deterministic PyTorch-Linear-shaped fp32 params, stored (in, out) for x @ W."""
    dims = []
    for a, b in zip(ENC_DIMS[:-1], ENC_DIMS[1:]):
        dims.append((a, b))
    dims.append((ENC_DIMS[-1], LATENT_DIM))       # fc_mu
    dims.append((ENC_DIMS[-1], LATENT_DIM))       # fc_logvar
    for a, b in zip(DEC_DIMS[:-1], DEC_DIMS[1:]):
        dims.append((a, b))

    params = []
    for i, (fan_in, fan_out) in enumerate(dims):
        kw = jax.random.fold_in(key, 2 * i)
        kb = jax.random.fold_in(key, 2 * i + 1)
        bound = 1.0 / np.sqrt(fan_in)
        w = jax.random.uniform(kw, (fan_in, fan_out), jnp.float32, -bound, bound)
        b = jax.random.uniform(kb, (1, fan_out), jnp.float32, -bound, bound)
        params += [w, b]
    return params


def prepare_params(params):
    """One-time kernel param prep: fuse heads, pad last layer to 896, cast W to bf16.

    Done once outside the jitted forward so the HBM-resident weight copy is bf16.
    """
    (w1, b1, w2, b2, w3, b3, wmu, bmu, wlv, blv,
     dw1, db1, dw2, db2, dw3, db3, dw4, db4) = params

    wh = jnp.concatenate([wmu, wlv], axis=1)                # (256, 128)
    bh = jnp.concatenate([bmu, blv], axis=1)                # (1, 128)
    pad = OUT_PAD - IN_DIM                                  # 112
    dw4p = jnp.pad(dw4, ((0, 0), (0, pad)))                 # (1024, 896)
    db4p = jnp.pad(db4, ((0, 0), (0, pad)))                 # (1, 896)

    weights = [w1, w2, w3, wh, dw1, dw2, dw3, dw4p]
    biases = [b1, b2, b3, bh, db1, db2, db3, db4p]
    # TODO(synk): quantize the two big layers (784x1024, 1024x896) to fp8 on v7x /
    # int8 on v5e-v6e with per-output-channel scales; needs tolerance re-validation.
    kp = []
    for w, b in zip(weights, biases):
        kp.append(w.astype(jnp.bfloat16))
        kp.append(b.astype(jnp.float32))
    return tuple(kp)


def _round_up(x, m):
    return (x + m - 1) // m * m


def _cdiv(a, b):
    return -(-a // b)


@functools.partial(jax.jit, static_argnames=("max_tile",))
def deep_vae_forward(x_nchw, eps, kparams, max_tile=_MAX_TILE):
    B = x_nchw.shape[0]
    # x.view(B, -1); cast to bf16 in the wrapper so the input DMA is half-width.
    x_flat = x_nchw.reshape(B, -1).astype(jnp.bfloat16)
    eps = eps.astype(jnp.float32)

    # Batch tile: aim for >= 4 grid tiles (so v7x's 2 TensorCores both get work and
    # pipelining has depth), multiple of 16 (bf16 sublane packing), capped at max_tile.
    TB = min(max_tile, _round_up(max(_cdiv(B, 4), 1), 16))
    B_pad = _round_up(B, TB)
    # TODO(synk): for ragged B, pass the true B via scalar prefetch and mask the last
    # tile in-kernel instead of this XLA-side pad of x/eps.
    if B_pad != B:
        x_flat = jnp.pad(x_flat, ((0, B_pad - B), (0, 0)))
        eps = jnp.pad(eps, ((0, B_pad - B), (0, 0)))

    grid = (B_pad // TB,)

    def batch_spec(cols):
        return pl.BlockSpec((TB, cols), lambda i: (i, 0))

    def weight_spec(shape):
        imap = lambda i: (0,) * len(shape)
        try:
            # Constant index_map => single buffer: no redundant re-DMA, half the VMEM.
            return pl.BlockSpec(shape, imap, pipeline_mode=pl.Buffered(1))
        except TypeError:
            return pl.BlockSpec(shape, imap)

    in_specs = ([batch_spec(IN_DIM), batch_spec(LATENT_DIM)]
                + [weight_spec(p.shape) for p in kparams])
    out_specs = (batch_spec(OUT_PAD), batch_spec(2 * LATENT_DIM))

    cost = pl.CostEstimate(
        flops=_FLOPS_PER_SAMPLE * B_pad,
        transcendentals=_TRANSC_PER_SAMPLE * B_pad,
        bytes_accessed=2 * _W_ELEMS + 4 * _B_ELEMS + _IO_BYTES_PER_SAMPLE * B_pad,
    )

    recon_pad, muvar = pl.pallas_call(
        _vae_kernel,
        out_shape=(
            jax.ShapeDtypeStruct((B_pad, OUT_PAD), jnp.bfloat16),
            jax.ShapeDtypeStruct((B_pad, 2 * LATENT_DIM), jnp.float32),
        ),
        grid_spec=pltpu.PrefetchScalarGridSpec(
            num_scalar_prefetch=0,
            grid=grid,
            in_specs=in_specs,
            out_specs=out_specs,
        ),
        compiler_params=pltpu.CompilerParams(
            dimension_semantics=("parallel",),          # v7x: 2 TCs split the batch
            vmem_limit_bytes=_VMEM_LIMIT,
        ),
        cost_estimate=cost,
    )(x_flat, eps, *kparams)

    recon_x = (recon_pad[:B, :IN_DIM].astype(jnp.float32)
               .reshape(-1, 1, 28, 28))                   # .view(-1, 1, 28, 28)
    mu = muvar[:B, :LATENT_DIM]
    logvar = muvar[:B, LATENT_DIM:]
    return recon_x, mu, logvar


def _reference_forward(x_nchw, eps, params):
    """Pure-JAX fp32 reference of the original forward pass (raw PyTorch-shaped params)."""
    B = x_nchw.shape[0]
    h = x_nchw.reshape(B, -1).astype(jnp.float32)
    (w1, b1, w2, b2, w3, b3, wmu, bmu, wlv, blv,
     dw1, db1, dw2, db2, dw3, db3, dw4, db4) = params
    h = jnp.maximum(h @ w1 + b1, 0.0)
    h = jnp.maximum(h @ w2 + b2, 0.0)
    h = jnp.maximum(h @ w3 + b3, 0.0)
    mu = h @ wmu + bmu
    logvar = h @ wlv + blv
    z = mu + eps * jnp.exp(0.5 * logvar)
    d = jnp.maximum(z @ dw1 + db1, 0.0)
    d = jnp.maximum(d @ dw2 + db2, 0.0)
    d = jnp.maximum(d @ dw3 + db3, 0.0)
    recon = jax.nn.sigmoid(d @ dw4 + db4).reshape(-1, 1, 28, 28)
    return recon, mu, logvar


if __name__ == "__main__":
    key = jax.random.PRNGKey(0)
    k_x, k_eps, k_p = jax.random.split(key, 3)

    B = 2
    x = jax.random.uniform(k_x, (B, 1, 28, 28), jnp.float32)       # NCHW, like MNIST
    # torch.randn_like(std) in reparameterize -> sampled outside the kernel
    eps = jax.random.normal(k_eps, (B, LATENT_DIM), jnp.float32)

    params = init_params(k_p)            # fp32, PyTorch-Linear-shaped
    kparams = prepare_params(params)     # bf16 weights, fused head, padded last layer

    recon_x, mu, logvar = deep_vae_forward(x, eps, kparams)
    jax.block_until_ready((recon_x, mu, logvar))

    ref_recon, ref_mu, ref_logvar = _reference_forward(x, eps, params)
    # bf16 weights + bf16 inter-layer activations + bf16 recon writeback vs the fp32
    # reference => loosened tolerance.
    np.testing.assert_allclose(np.asarray(recon_x), np.asarray(ref_recon), rtol=3e-2, atol=3e-2)
    np.testing.assert_allclose(np.asarray(mu), np.asarray(ref_mu), rtol=3e-2, atol=3e-2)
    np.testing.assert_allclose(np.asarray(logvar), np.asarray(ref_logvar), rtol=3e-2, atol=3e-2)

    assert recon_x.shape == (B, 1, 28, 28)
    assert mu.shape == (B, LATENT_DIM) and logvar.shape == (B, LATENT_DIM)

    print("KERNEL_OK")
</pallas_src>

<mosaic_0001>
module attributes {stable_mosaic.version = 11 : i64} {
  func.func @_vae_kernel(%arg0: i32, %arg1: memref<16x784xbf16, #tpu.memory_space<vmem>>, %arg2: memref<16x64xf32, #tpu.memory_space<vmem>>, %arg3: memref<784x1024xbf16, #tpu.memory_space<vmem>>, %arg4: memref<1x1024xf32, #tpu.memory_space<vmem>>, %arg5: memref<1024x512xbf16, #tpu.memory_space<vmem>>, %arg6: memref<1x512xf32, #tpu.memory_space<vmem>>, %arg7: memref<512x256xbf16, #tpu.memory_space<vmem>>, %arg8: memref<1x256xf32, #tpu.memory_space<vmem>>, %arg9: memref<256x128xbf16, #tpu.memory_space<vmem>>, %arg10: memref<1x128xf32, #tpu.memory_space<vmem>>, %arg11: memref<64x256xbf16, #tpu.memory_space<vmem>>, %arg12: memref<1x256xf32, #tpu.memory_space<vmem>>, %arg13: memref<256x512xbf16, #tpu.memory_space<vmem>>, %arg14: memref<1x512xf32, #tpu.memory_space<vmem>>, %arg15: memref<512x1024xbf16, #tpu.memory_space<vmem>>, %arg16: memref<1x1024xf32, #tpu.memory_space<vmem>>, %arg17: memref<1024x896xbf16, #tpu.memory_space<vmem>>, %arg18: memref<1x896xf32, #tpu.memory_space<vmem>>, %arg19: memref<16x896xbf16, #tpu.memory_space<vmem>>, %arg20: memref<16x128xf32, #tpu.memory_space<vmem>>) attributes {dimension_semantics = [#tpu.dimension_semantics<parallel>], iteration_bounds = array<i64: 1>, scalar_prefetch = 0 : i64, scratch_operands = 0 : i64, tpu.core_type = #tpu.core_type<tc>, window_params = [{transform_indices = @transform_0, window_bounds = array<i64: 16, 784>}, {transform_indices = @transform_1, window_bounds = array<i64: 16, 64>}, {pipeline_mode = #tpu.pipeline_mode<synchronous>, transform_indices = @transform_2, window_bounds = array<i64: 784, 1024>}, {pipeline_mode = #tpu.pipeline_mode<synchronous>, transform_indices = @transform_3, window_bounds = array<i64: 1, 1024>}, {pipeline_mode = #tpu.pipeline_mode<synchronous>, transform_indices = @transform_4, window_bounds = array<i64: 1024, 512>}, {pipeline_mode = #tpu.pipeline_mode<synchronous>, transform_indices = @transform_5, window_bounds = array<i64: 1, 512>}, {pipeline_mode = #tpu.pipeline_mode<synchronous>, transform_indices = @transform_6, window_bounds = array<i64: 512, 256>}, {pipeline_mode = #tpu.pipeline_mode<synchronous>, transform_indices = @transform_7, window_bounds = array<i64: 1, 256>}, {pipeline_mode = #tpu.pipeline_mode<synchronous>, transform_indices = @transform_8, window_bounds = array<i64: 256, 128>}, {pipeline_mode = #tpu.pipeline_mode<synchronous>, transform_indices = @transform_9, window_bounds = array<i64: 1, 128>}, {pipeline_mode = #tpu.pipeline_mode<synchronous>, transform_indices = @transform_10, window_bounds = array<i64: 64, 256>}, {pipeline_mode = #tpu.pipeline_mode<synchronous>, transform_indices = @transform_11, window_bounds = array<i64: 1, 256>}, {pipeline_mode = #tpu.pipeline_mode<synchronous>, transform_indices = @transform_12, window_bounds = array<i64: 256, 512>}, {pipeline_mode = #tpu.pipeline_mode<synchronous>, transform_indices = @transform_13, window_bounds = array<i64: 1, 512>}, {pipeline_mode = #tpu.pipeline_mode<synchronous>, transform_indices = @transform_14, window_bounds = array<i64: 512, 1024>}, {pipeline_mode = #tpu.pipeline_mode<synchronous>, transform_indices = @transform_15, window_bounds = array<i64: 1, 1024>}, {pipeline_mode = #tpu.pipeline_mode<synchronous>, transform_indices = @transform_16, window_bounds = array<i64: 1024, 896>}, {pipeline_mode = #tpu.pipeline_mode<synchronous>, transform_indices = @transform_17, window_bounds = array<i64: 1, 896>}, {transform_indices = @transform_18, window_bounds = array<i64: 16, 896>}, {transform_indices = @transform_19, window_bounds = array<i64: 16, 128>}]} {
    %c0 = arith.constant 0 : index
    %c0_0 = arith.constant 0 : index
    %0 = vector.load %arg1[%c0, %c0_0] : memref<16x784xbf16, #tpu.memory_space<vmem>>, vector<16x784xbf16>
    %c0_1 = arith.constant 0 : index
    %c0_2 = arith.constant 0 : index
    %1 = vector.load %arg3[%c0_1, %c0_2] : memref<784x1024xbf16, #tpu.memory_space<vmem>>, vector<784x1024xbf16>
    %cst = arith.constant dense<0.000000e+00> : vector<16x1024xf32>
    %2 = tpu.matmul %0, %1, %cst {dimension_numbers = #tpu.dot_dimension_numbers<[1], [0], [0], [1], [0, 0, 1, 1], [], []>} : vector<16x784xbf16>, vector<784x1024xbf16>, vector<16x1024xf32> -> vector<16x1024xf32>
    %c0_3 = arith.constant 0 : index
    %c0_4 = arith.constant 0 : index
    %3 = vector.load %arg4[%c0_3, %c0_4] : memref<1x1024xf32, #tpu.memory_space<vmem>>, vector<1x1024xf32>
    %4 = vector.broadcast %3 : vector<1x1024xf32> to vector<16x1024xf32>
    %5 = arith.addf %2, %4 : vector<16x1024xf32>
    %cst_5 = arith.constant 0.000000e+00 : f32
    %6 = vector.broadcast %cst_5 : f32 to vector<16x1024xf32>
    %7 = arith.maximumf %5, %6 : vector<16x1024xf32>
    %8 = arith.truncf %7 : vector<16x1024xf32> to vector<16x1024xbf16>
    %c0_6 = arith.constant 0 : index
    %c0_7 = arith.constant 0 : index
    %9 = vector.load %arg5[%c0_6, %c0_7] : memref<1024x512xbf16, #tpu.memory_space<vmem>>, vector<1024x512xbf16>
    %cst_8 = arith.constant dense<0.000000e+00> : vector<16x512xf32>
    %10 = tpu.matmul %8, %9, %cst_8 {dimension_numbers = #tpu.dot_dimension_numbers<[1], [0], [0], [1], [0, 0, 1, 1], [], []>} : vector<16x1024xbf16>, vector<1024x512xbf16>, vector<16x512xf32> -> vector<16x512xf32>
    %c0_9 = arith.constant 0 : index
    %c0_10 = arith.constant 0 : index
    %11 = vector.load %arg6[%c0_9, %c0_10] : memref<1x512xf32, #tpu.memory_space<vmem>>, vector<1x512xf32>
    %12 = vector.broadcast %11 : vector<1x512xf32> to vector<16x512xf32>
    %13 = arith.addf %10, %12 : vector<16x512xf32>
    %cst_11 = arith.constant 0.000000e+00 : f32
    %14 = vector.broadcast %cst_11 : f32 to vector<16x512xf32>
    %15 = arith.maximumf %13, %14 : vector<16x512xf32>
    %16 = arith.truncf %15 : vector<16x512xf32> to vector<16x512xbf16>
    %c0_12 = arith.constant 0 : index
    %c0_13 = arith.constant 0 : index
    %17 = vector.load %arg7[%c0_12, %c0_13] : memref<512x256xbf16, #tpu.memory_space<vmem>>, vector<512x256xbf16>
    %cst_14 = arith.constant dense<0.000000e+00> : vector<16x256xf32>
    %18 = tpu.matmul %16, %17, %cst_14 {dimension_numbers = #tpu.dot_dimension_numbers<[1], [0], [0], [1], [0, 0, 1, 1], [], []>} : vector<16x512xbf16>, vector<512x256xbf16>, vector<16x256xf32> -> vector<16x256xf32>
    %c0_15 = arith.constant 0 : index
    %c0_16 = arith.constant 0 : index
    %19 = vector.load %arg8[%c0_15, %c0_16] : memref<1x256xf32, #tpu.memory_space<vmem>>, vector<1x256xf32>
    %20 = vector.broadcast %19 : vector<1x256xf32> to vector<16x256xf32>
    %21 = arith.addf %18, %20 : vector<16x256xf32>
    %cst_17 = arith.constant 0.000000e+00 : f32
    %22 = vector.broadcast %cst_17 : f32 to vector<16x256xf32>
    %23 = arith.maximumf %21, %22 : vector<16x256xf32>
    %24 = arith.truncf %23 : vector<16x256xf32> to vector<16x256xbf16>
    %c0_18 = arith.constant 0 : index
    %c0_19 = arith.constant 0 : index
    %25 = vector.load %arg9[%c0_18, %c0_19] : memref<256x128xbf16, #tpu.memory_space<vmem>>, vector<256x128xbf16>
    %cst_20 = arith.constant dense<0.000000e+00> : vector<16x128xf32>
    %26 = tpu.matmul %24, %25, %cst_20 {dimension_numbers = #tpu.dot_dimension_numbers<[1], [0], [0], [1], [0, 0, 1, 1], [], []>} : vector<16x256xbf16>, vector<256x128xbf16>, vector<16x128xf32> -> vector<16x128xf32>
    %c0_21 = arith.constant 0 : index
    %c0_22 = arith.constant 0 : index
    %27 = vector.load %arg10[%c0_21, %c0_22] : memref<1x128xf32, #tpu.memory_space<vmem>>, vector<1x128xf32>
    %28 = vector.broadcast %27 : vector<1x128xf32> to vector<16x128xf32>
    %29 = arith.addf %26, %28 : vector<16x128xf32>
    %30 = vector.extract_strided_slice %29 {offsets = [0, 0], sizes = [16, 64], strides = [1, 1]} : vector<16x128xf32> to vector<16x64xf32>
    %31 = vector.extract_strided_slice %29 {offsets = [0, 64], sizes = [16, 64], strides = [1, 1]} : vector<16x128xf32> to vector<16x64xf32>
    %c0_23 = arith.constant 0 : index
    %c0_24 = arith.constant 0 : index
    %32 = vector.load %arg2[%c0_23, %c0_24] : memref<16x64xf32, #tpu.memory_space<vmem>>, vector<16x64xf32>
    %cst_25 = arith.constant 5.000000e-01 : f32
    %33 = vector.broadcast %cst_25 : f32 to vector<16x64xf32>
    %34 = arith.mulf %33, %31 : vector<16x64xf32>
    %35 = math.exp %34 : vector<16x64xf32>
    %36 = arith.mulf %32, %35 : vector<16x64xf32>
    %37 = arith.addf %30, %36 : vector<16x64xf32>
    %38 = arith.truncf %37 : vector<16x64xf32> to vector<16x64xbf16>
    %c0_26 = arith.constant 0 : index
    %c0_27 = arith.constant 0 : index
    %39 = vector.load %arg11[%c0_26, %c0_27] : memref<64x256xbf16, #tpu.memory_space<vmem>>, vector<64x256xbf16>
    %cst_28 = arith.constant dense<0.000000e+00> : vector<16x256xf32>
    %40 = tpu.matmul %38, %39, %cst_28 {dimension_numbers = #tpu.dot_dimension_numbers<[1], [0], [0], [1], [0, 0, 1, 1], [], []>} : vector<16x64xbf16>, vector<64x256xbf16>, vector<16x256xf32> -> vector<16x256xf32>
    %c0_29 = arith.constant 0 : index
    %c0_30 = arith.constant 0 : index
    %41 = vector.load %arg12[%c0_29, %c0_30] : memref<1x256xf32, #tpu.memory_space<vmem>>, vector<1x256xf32>
    %42 = vector.broadcast %41 : vector<1x256xf32> to vector<16x256xf32>
    %43 = arith.addf %40, %42 : vector<16x256xf32>
    %cst_31 = arith.constant 0.000000e+00 : f32
    %44 = vector.broadcast %cst_31 : f32 to vector<16x256xf32>
    %45 = arith.maximumf %43, %44 : vector<16x256xf32>
    %46 = arith.truncf %45 : vector<16x256xf32> to vector<16x256xbf16>
    %c0_32 = arith.constant 0 : index
    %c0_33 = arith.constant 0 : index
    %47 = vector.load %arg13[%c0_32, %c0_33] : memref<256x512xbf16, #tpu.memory_space<vmem>>, vector<256x512xbf16>
    %cst_34 = arith.constant dense<0.000000e+00> : vector<16x512xf32>
    %48 = tpu.matmul %46, %47, %cst_34 {dimension_numbers = #tpu.dot_dimension_numbers<[1], [0], [0], [1], [0, 0, 1, 1], [], []>} : vector<16x256xbf16>, vector<256x512xbf16>, vector<16x512xf32> -> vector<16x512xf32>
    %c0_35 = arith.constant 0 : index
    %c0_36 = arith.constant 0 : index
    %49 = vector.load %arg14[%c0_35, %c0_36] : memref<1x512xf32, #tpu.memory_space<vmem>>, vector<1x512xf32>
    %50 = vector.broadcast %49 : vector<1x512xf32> to vector<16x512xf32>
    %51 = arith.addf %48, %50 : vector<16x512xf32>
    %cst_37 = arith.constant 0.000000e+00 : f32
    %52 = vector.broadcast %cst_37 : f32 to vector<16x512xf32>
    %53 = arith.maximumf %51, %52 : vector<16x512xf32>
    %54 = arith.truncf %53 : vector<16x512xf32> to vector<16x512xbf16>
    %c0_38 = arith.constant 0 : index
    %c0_39 = arith.constant 0 : index
    %55 = vector.load %arg15[%c0_38, %c0_39] : memref<512x1024xbf16, #tpu.memory_space<vmem>>, vector<512x1024xbf16>
    %cst_40 = arith.constant dense<0.000000e+00> : vector<16x1024xf32>
    %56 = tpu.matmul %54, %55, %cst_40 {dimension_numbers = #tpu.dot_dimension_numbers<[1], [0], [0], [1], [0, 0, 1, 1], [], []>} : vector<16x512xbf16>, vector<512x1024xbf16>, vector<16x1024xf32> -> vector<16x1024xf32>
    %c0_41 = arith.constant 0 : index
    %c0_42 = arith.constant 0 : index
    %57 = vector.load %arg16[%c0_41, %c0_42] : memref<1x1024xf32, #tpu.memory_space<vmem>>, vector<1x1024xf32>
    %58 = vector.broadcast %57 : vector<1x1024xf32> to vector<16x1024xf32>
    %59 = arith.addf %56, %58 : vector<16x1024xf32>
    %cst_43 = arith.constant 0.000000e+00 : f32
    %60 = vector.broadcast %cst_43 : f32 to vector<16x1024xf32>
    %61 = arith.maximumf %59, %60 : vector<16x1024xf32>
    %62 = arith.truncf %61 : vector<16x1024xf32> to vector<16x1024xbf16>
    %c0_44 = arith.constant 0 : index
    %c0_45 = arith.constant 0 : index
    %63 = vector.load %arg17[%c0_44, %c0_45] : memref<1024x896xbf16, #tpu.memory_space<vmem>>, vector<1024x896xbf16>
    %cst_46 = arith.constant dense<0.000000e+00> : vector<16x896xf32>
    %64 = tpu.matmul %62, %63, %cst_46 {dimension_numbers = #tpu.dot_dimension_numbers<[1], [0], [0], [1], [0, 0, 1, 1], [], []>} : vector<16x1024xbf16>, vector<1024x896xbf16>, vector<16x896xf32> -> vector<16x896xf32>
    %c0_47 = arith.constant 0 : index
    %c0_48 = arith.constant 0 : index
    %65 = vector.load %arg18[%c0_47, %c0_48] : memref<1x896xf32, #tpu.memory_space<vmem>>, vector<1x896xf32>
    %66 = vector.broadcast %65 : vector<1x896xf32> to vector<16x896xf32>
    %67 = arith.addf %64, %66 : vector<16x896xf32>
    %68 = arith.negf %67 : vector<16x896xf32>
    %69 = math.exp %68 : vector<16x896xf32>
    %cst_49 = arith.constant 1.000000e+00 : f32
    %70 = vector.broadcast %cst_49 : f32 to vector<16x896xf32>
    %71 = arith.addf %70, %69 : vector<16x896xf32>
    %72 = arith.divf %70, %71 : vector<16x896xf32>
    %73 = arith.truncf %72 : vector<16x896xf32> to vector<16x896xbf16>
    %c0_50 = arith.constant 0 : index
    %c0_51 = arith.constant 0 : index
    %74 = vector.load %arg19[%c0_50, %c0_51] : memref<16x896xbf16, #tpu.memory_space<vmem>>, vector<16x896xbf16>
    tpu.vector_store %arg19[%c0_50, %c0_51], %73 {strides = array<i32>} : memref<16x896xbf16, #tpu.memory_space<vmem>>, vector<16x896xbf16>,
    %c0_52 = arith.constant 0 : index
    %c0_53 = arith.constant 0 : index
    %75 = vector.load %arg20[%c0_52, %c0_53] : memref<16x128xf32, #tpu.memory_space<vmem>>, vector<16x128xf32>
    tpu.vector_store %arg20[%c0_52, %c0_53], %29 {strides = array<i32>} : memref<16x128xf32, #tpu.memory_space<vmem>>, vector<16x128xf32>,
    return
  }
  func.func @transform_0(%arg0: i32) -> (i32, i32) {
    %c0_i32 = arith.constant 0 : i32
    %c0_i32_0 = arith.constant 0 : i32
    return %arg0, %c0_i32 : i32, i32
  }
  func.func @transform_1(%arg0: i32) -> (i32, i32) {
    %c0_i32 = arith.constant 0 : i32
    %c0_i32_0 = arith.constant 0 : i32
    return %arg0, %c0_i32 : i32, i32
  }
  func.func @transform_2(%arg0: i32) -> (i32, i32) {
    %c0_i32 = arith.constant 0 : i32
    %c0_i32_0 = arith.constant 0 : i32
    %c0_i32_1 = arith.constant 0 : i32
    return %c0_i32, %c0_i32_0 : i32, i32
  }
  func.func @transform_3(%arg0: i32) -> (i32, i32) {
    %c0_i32 = arith.constant 0 : i32
    %c0_i32_0 = arith.constant 0 : i32
    %c0_i32_1 = arith.constant 0 : i32
    return %c0_i32, %c0_i32_0 : i32, i32
  }
  func.func @transform_4(%arg0: i32) -> (i32, i32) {
    %c0_i32 = arith.constant 0 : i32
    %c0_i32_0 = arith.constant 0 : i32
    %c0_i32_1 = arith.constant 0 : i32
    return %c0_i32, %c0_i32_0 : i32, i32
  }
  func.func @transform_5(%arg0: i32) -> (i32, i32) {
    %c0_i32 = arith.constant 0 : i32
    %c0_i32_0 = arith.constant 0 : i32
    %c0_i32_1 = arith.constant 0 : i32
    return %c0_i32, %c0_i32_0 : i32, i32
  }
  func.func @transform_6(%arg0: i32) -> (i32, i32) {
    %c0_i32 = arith.constant 0 : i32
    %c0_i32_0 = arith.constant 0 : i32
    %c0_i32_1 = arith.constant 0 : i32
    return %c0_i32, %c0_i32_0 : i32, i32
  }
  func.func @transform_7(%arg0: i32) -> (i32, i32) {
    %c0_i32 = arith.constant 0 : i32
    %c0_i32_0 = arith.constant 0 : i32
    %c0_i32_1 = arith.constant 0 : i32
    return %c0_i32, %c0_i32_0 : i32, i32
  }
  func.func @transform_8(%arg0: i32) -> (i32, i32) {
    %c0_i32 = arith.constant 0 : i32
    %c0_i32_0 = arith.constant 0 : i32
    %c0_i32_1 = arith.constant 0 : i32
    return %c0_i32, %c0_i32_0 : i32, i32
  }
  func.func @transform_9(%arg0: i32) -> (i32, i32) {
    %c0_i32 = arith.constant 0 : i32
    %c0_i32_0 = arith.constant 0 : i32
    %c0_i32_1 = arith.constant 0 : i32
    return %c0_i32, %c0_i32_0 : i32, i32
  }
  func.func @transform_10(%arg0: i32) -> (i32, i32) {
    %c0_i32 = arith.constant 0 : i32
    %c0_i32_0 = arith.constant 0 : i32
    %c0_i32_1 = arith.constant 0 : i32
    return %c0_i32, %c0_i32_0 : i32, i32
  }
  func.func @transform_11(%arg0: i32) -> (i32, i32) {
    %c0_i32 = arith.constant 0 : i32
    %c0_i32_0 = arith.constant 0 : i32
    %c0_i32_1 = arith.constant 0 : i32
    return %c0_i32, %c0_i32_0 : i32, i32
  }
  func.func @transform_12(%arg0: i32) -> (i32, i32) {
    %c0_i32 = arith.constant 0 : i32
    %c0_i32_0 = arith.constant 0 : i32
    %c0_i32_1 = arith.constant 0 : i32
    return %c0_i32, %c0_i32_0 : i32, i32
  }
  func.func @transform_13(%arg0: i32) -> (i32, i32) {
    %c0_i32 = arith.constant 0 : i32
    %c0_i32_0 = arith.constant 0 : i32
    %c0_i32_1 = arith.constant 0 : i32
    return %c0_i32, %c0_i32_0 : i32, i32
  }
  func.func @transform_14(%arg0: i32) -> (i32, i32) {
    %c0_i32 = arith.constant 0 : i32
    %c0_i32_0 = arith.constant 0 : i32
    %c0_i32_1 = arith.constant 0 : i32
    return %c0_i32, %c0_i32_0 : i32, i32
  }
  func.func @transform_15(%arg0: i32) -> (i32, i32) {
    %c0_i32 = arith.constant 0 : i32
    %c0_i32_0 = arith.constant 0 : i32
    %c0_i32_1 = arith.constant 0 : i32
    return %c0_i32, %c0_i32_0 : i32, i32
  }
  func.func @transform_16(%arg0: i32) -> (i32, i32) {
    %c0_i32 = arith.constant 0 : i32
    %c0_i32_0 = arith.constant 0 : i32
    %c0_i32_1 = arith.constant 0 : i32
    return %c0_i32, %c0_i32_0 : i32, i32
  }
  func.func @transform_17(%arg0: i32) -> (i32, i32) {
    %c0_i32 = arith.constant 0 : i32
    %c0_i32_0 = arith.constant 0 : i32
    %c0_i32_1 = arith.constant 0 : i32
    return %c0_i32, %c0_i32_0 : i32, i32
  }
  func.func @transform_18(%arg0: i32) -> (i32, i32) {
    %c0_i32 = arith.constant 0 : i32
    %c0_i32_0 = arith.constant 0 : i32
    return %arg0, %c0_i32 : i32, i32
  }
  func.func @transform_19(%arg0: i32) -> (i32, i32) {
    %c0_i32 = arith.constant 0 : i32
    %c0_i32_0 = arith.constant 0 : i32
    return %arg0, %c0_i32 : i32, i32
  }
}

</mosaic_0001>

<llo_original>
// kernel: deep_vae_forward.1
$region0: #{deep_vae_forward.1}
  #allocation0 [shape = 'u32[]', space=smem, size = 0x4, offset = 0x4, fixed_abs, tag = 'smem constant byte address 0x4 - core index']
  #allocation1 [shape = 'u32[144,128]{1,0:T(1,128)}', space=vmem, size = 0x12000, scoped, tag = 'internal scratch']
  %s0 = inlined_call_operand.vmem [shape: bf16[16,784], index: 0, kind: input, shape index: {}]
  %s1 = inlined_call_operand.vmem [shape: f32[16,64], index: 1, kind: input, shape index: {}]
  %s2 = inlined_call_operand.hbm [shape: bf16[784,1024], index: 2, kind: input, shape index: {}]
  %s3 = inlined_call_operand.hbm [shape: f32[1,1024], index: 3, kind: input, shape index: {}]
  %s4 = inlined_call_operand.hbm [shape: bf16[1024,512], index: 4, kind: input, shape index: {}]
  %s5 = inlined_call_operand.hbm [shape: f32[1,512], index: 5, kind: input, shape index: {}]
  %s6 = inlined_call_operand.hbm [shape: bf16[512,256], index: 6, kind: input, shape index: {}]
  %s7 = inlined_call_operand.hbm [shape: f32[1,256], index: 7, kind: input, shape index: {}]
  %s8 = inlined_call_operand.hbm [shape: bf16[256,128], index: 8, kind: input, shape index: {}]
  %s9 = inlined_call_operand.hbm [shape: f32[1,128], index: 9, kind: input, shape index: {}]
  %s10 = inlined_call_operand.hbm [shape: bf16[64,256], index: 10, kind: input, shape index: {}]
  %s11 = inlined_call_operand.hbm [shape: f32[1,256], index: 11, kind: input, shape index: {}]
  %s12 = inlined_call_operand.hbm [shape: bf16[256,512], index: 12, kind: input, shape index: {}]
  %s13 = inlined_call_operand.hbm [shape: f32[1,512], index: 13, kind: input, shape index: {}]
  %s14 = inlined_call_operand.hbm [shape: bf16[512,1024], index: 14, kind: input, shape index: {}]
  %s15 = inlined_call_operand.hbm [shape: f32[1,1024], index: 15, kind: input, shape index: {}]
  %s16 = inlined_call_operand.hbm [shape: bf16[1024,896], index: 16, kind: input, shape index: {}]
  %s17 = inlined_call_operand.hbm [shape: f32[1,896], index: 17, kind: input, shape index: {}]
  %s18 = inlined_call_operand.vmem [shape: bf16[16,896], index: 18, kind: output, shape index: {0}]
  %s19 = inlined_call_operand.vmem [shape: f32[16,128], index: 19, kind: output, shape index: {1}]
  %20 = xla_tuple %s18, %s19
  %s21 = sld [smem:[#allocation0]]
  $region154: #{deep_vae_forward.1} parent=0
    _
  %s23 = ssub.s32 1, %s21
  %s24 = scalar_select 0, %s23, %s21
  $region1: #{deep_vae_forward.1} parent=0
    #allocation2 [shape = 'u8[1605632]{0}', space=vmem, size = 0x188000, scoped, tag = 'input window, operand 2, single buffered']
    #allocation3 [shape = 's32[1]{0}', space=sflag, size = 0x4, scoped, tag = 'scoped memory for deep_vae_forward.1']
    #allocation4 [shape = 'u8[4096]{0}', space=vmem, size = 0x1000, scoped, tag = 'input window, operand 3, single buffered']
    #allocation5 [shape = 's32[1]{0}', space=sflag, size = 0x4, scoped, tag = 'scoped memory for deep_vae_forward.1']
    #allocation6 [shape = 'u8[1048576]{0}', space=vmem, size = 0x100000, scoped, tag = 'input window, operand 4, single buffered']
    #allocation7 [shape = 'u8[2048]{0}', space=vmem, size = 0x800, scoped, tag = 'input window, operand 5, single buffered']
    #allocation8 [shape = 's32[1]{0}', space=sflag, size = 0x4, scoped, tag = 'scoped memory for deep_vae_forward.1']
    #allocation9 [shape = 'u8[262144]{0}', space=vmem, size = 0x40000, scoped, tag = 'input window, operand 6, single buffered']
    #allocation10 [shape = 'u8[1024]{0}', space=vmem, size = 0x400, scoped, tag = 'input window, operand 7, single buffered']
    #allocation11 [shape = 's32[1]{0}', space=sflag, size = 0x4, scoped, tag = 'scoped memory for deep_vae_forward.1']
    #allocation12 [shape = 'u8[65536]{0}', space=vmem, size = 0x10000, scoped, tag = 'input window, operand 8, single buffered']
    #allocation13 [shape = 'u8[512]{0}', space=vmem, size = 0x400, scoped, tag = 'input window, operand 9, single buffered']
    #allocation14 [shape = 's32[1]{0}', space=sflag, size = 0x4, scoped, tag = 'scoped memory for deep_vae_forward.1']
    #allocation15 [shape = 'u8[32768]{0}', space=vmem, size = 0x8000, scoped, tag = 'input window, operand 10, single buffered']
    #allocation16 [shape = 'u8[1024]{0}', space=vmem, size = 0x400, scoped, tag = 'input window, operand 11, single buffered']
    #allocation17 [shape = 's32[1]{0}', space=sflag, size = 0x4, scoped, tag = 'scoped memory for deep_vae_forward.1']
    #allocation18 [shape = 'u8[262144]{0}', space=vmem, size = 0x40000, scoped, tag = 'input window, operand 12, single buffered']
    #allocation19 [shape = 'u8[2048]{0}', space=vmem, size = 0x800, scoped, tag = 'input window, operand 13, single buffered']
    #allocation20 [shape = 's32[1]{0}', space=sflag, size = 0x4, scoped, tag = 'scoped memory for deep_vae_forward.1']
    #allocation21 [shape = 'u8[1048576]{0}', space=vmem, size = 0x100000, scoped, tag = 'input window, operand 14, single buffered']
    #allocation22 [shape = 'u8[4096]{0}', space=vmem, size = 0x1000, scoped, tag = 'input window, operand 15, single buffered']
    #allocation23 [shape = 's32[1]{0}', space=sflag, size = 0x4, scoped, tag = 'scoped memory for deep_vae_forward.1']
    #allocation24 [shape = 'u8[1835008]{0}', space=vmem, size = 0x1c0000, scoped, tag = 'input window, operand 16, single buffered']
    #allocation25 [shape = 'u8[3584]{0}', space=vmem, size = 0x1000, scoped, tag = 'input window, operand 17, single buffered']
    #allocation26 [shape = 's32[1]{0}', space=sflag, size = 0x4, scoped, tag = 'scoped memory for deep_vae_forward.1']
    %25 = vsyncpa [#allocation3], 0
    %26 = vsyncpa [#allocation5], 0
    %27 = vsyncpa [#allocation8], 0
    %28 = vsyncpa [#allocation11], 0
    %29 = vsyncpa [#allocation14], 0
    %30 = vsyncpa [#allocation17], 0
    %31 = vsyncpa [#allocation20], 0
    %32 = vsyncpa [#allocation23], 0
    %33 = vsyncpa [#allocation26], 0
    // Predicated region
    $region2: #{deep_vae_forward.1} parent=1 // pred_check
      _
    $region3: #{deep_vae_forward.1} parent=1 // pred_check_branch
      %35 = sbr.rel (0) target = $region5
    $region4: #{deep_vae_forward.1} parent=1 // pred_region
      _
    $region5: #{deep_vae_forward.1} parent=1 // pred_fallthru
      _
    // Predicated region
    $region6: #{deep_vae_forward.1} parent=1 // pred_check
      _
    $region7: #{deep_vae_forward.1} parent=1 // pred_check_branch
      %37 = sbr.rel (0) target = $region9
    $region8: #{deep_vae_forward.1} parent=1 // pred_region
      _
    $region9: #{deep_vae_forward.1} parent=1 // pred_fallthru
      _
    // Predicated region
    $region10: #{deep_vae_forward.1} parent=1 // pred_check
      _
    $region11: #{deep_vae_forward.1} parent=1 // pred_check_branch
      %39 = sbr.rel (0) target = $region13
    $region12: #{deep_vae_forward.1} parent=1 // pred_region
      %s41 = ssub.s32 50176, 50176
      %42 = vsyncadd [#allocation3], %s41
      %s43 = sshll.u32 [#allocation2], 4
      %s44 = int_to_ptr.vmem [resolvable:$true] %s43
      %49 = dma.hbm_to_vmem [thread:$0]  %s2, 50176, %s44, [#allocation3], 512, 512, 32
    $region13: #{deep_vae_forward.1} parent=1 // pred_fallthru
      _
    // Predicated region
    $region14: #{deep_vae_forward.1} parent=1 // pred_check
      _
    $region15: #{deep_vae_forward.1} parent=1 // pred_check_branch
      %51 = sbr.rel (0) target = $region17
    $region16: #{deep_vae_forward.1} parent=1 // pred_region
      %s53 = ssub.s32 128, 128
      %54 = vsyncadd [#allocation5], %s53
      %s56 = sshll.u32 [#allocation4], 4
      %s57 = int_to_ptr.vmem [resolvable:$true] %s56
      %59 = dma.hbm_to_vmem [thread:$0]  %s3, 128, %s57, [#allocation5]
    $region17: #{deep_vae_forward.1} parent=1 // pred_fallthru
      _
    // Predicated region
    $region18: #{deep_vae_forward.1} parent=1 // pred_check
      _
    $region19: #{deep_vae_forward.1} parent=1 // pred_check_branch
      %61 = sbr.rel (0) target = $region21
    $region20: #{deep_vae_forward.1} parent=1 // pred_region
      %s63 = ssub.s32 32768, 32768
      %64 = vsyncadd [#allocation5], %s63
      %s65 = sshll.u32 [#allocation6], 4
      %s66 = int_to_ptr.vmem [resolvable:$true] %s65
      %71 = dma.hbm_to_vmem [thread:$0]  %s4, 32768, %s66, [#allocation5], 256, 256, 16
    $region21: #{deep_vae_forward.1} parent=1 // pred_fallthru
      _
    // Predicated region
    $region22: #{deep_vae_forward.1} parent=1 // pred_check
      _
    $region23: #{deep_vae_forward.1} parent=1 // pred_check_branch
      %73 = sbr.rel (0) target = $region25
    $region24: #{deep_vae_forward.1} parent=1 // pred_region
      %s75 = ssub.s32 64, 64
      %76 = vsyncadd [#allocation8], %s75
      %s78 = sshll.u32 [#allocation7], 4
      %s79 = int_to_ptr.vmem [resolvable:$true] %s78
      %81 = dma.hbm_to_vmem [thread:$0]  %s5, 64, %s79, [#allocation8]
    $region25: #{deep_vae_forward.1} parent=1 // pred_fallthru
      _
    // Predicated region
    $region26: #{deep_vae_forward.1} parent=1 // pred_check
      _
    $region27: #{deep_vae_forward.1} parent=1 // pred_check_branch
      %83 = sbr.rel (0) target = $region29
    $region28: #{deep_vae_forward.1} parent=1 // pred_region
      %s85 = ssub.s32 8192, 8192
      %86 = vsyncadd [#allocation8], %s85
      %s87 = sshll.u32 [#allocation9], 4
      %s88 = int_to_ptr.vmem [resolvable:$true] %s87
      %93 = dma.hbm_to_vmem [thread:$0]  %s6, 8192, %s88, [#allocation8], 128, 128, 8
    $region29: #{deep_vae_forward.1} parent=1 // pred_fallthru
      _
    // Predicated region
    $region30: #{deep_vae_forward.1} parent=1 // pred_check
      _
    $region31: #{deep_vae_forward.1} parent=1 // pred_check_branch
      %95 = sbr.rel (0) target = $region33
    $region32: #{deep_vae_forward.1} parent=1 // pred_region
      %s97 = ssub.s32 32, 32
      %98 = vsyncadd [#allocation11], %s97
      %s100 = sshll.u32 [#allocation10], 4
      %s101 = int_to_ptr.vmem [resolvable:$true] %s100
      %103 = dma.hbm_to_vmem [thread:$0]  %s7, 32, %s101, [#allocation11]
    $region33: #{deep_vae_forward.1} parent=1 // pred_fallthru
      _
    // Predicated region
    $region34: #{deep_vae_forward.1} parent=1 // pred_check
      _
    $region35: #{deep_vae_forward.1} parent=1 // pred_check_branch
      %105 = sbr.rel (0) target = $region37
    $region36: #{deep_vae_forward.1} parent=1 // pred_region
      %s107 = ssub.s32 2048, 2048
      %108 = vsyncadd [#allocation11], %s107
      %s109 = sshll.u32 [#allocation12], 4
      %s110 = int_to_ptr.vmem [resolvable:$true] %s109
      %115 = dma.hbm_to_vmem [thread:$0]  %s8, 2048, %s110, [#allocation11], 64, 64, 4
    $region37: #{deep_vae_forward.1} parent=1 // pred_fallthru
      _
    // Predicated region
    $region38: #{deep_vae_forward.1} parent=1 // pred_check
      _
    $region39: #{deep_vae_forward.1} parent=1 // pred_check_branch
      %117 = sbr.rel (0) target = $region41
    $region40: #{deep_vae_forward.1} parent=1 // pred_region
      %s119 = ssub.s32 16, 16
      %120 = vsyncadd [#allocation14], %s119
      %s122 = sshll.u32 [#allocation13], 4
      %s123 = int_to_ptr.vmem [resolvable:$true] %s122
      %125 = dma.hbm_to_vmem [thread:$0]  %s9, 16, %s123, [#allocation14]
    $region41: #{deep_vae_forward.1} parent=1 // pred_fallthru
      _
    // Predicated region
    $region42: #{deep_vae_forward.1} parent=1 // pred_check
      _
    $region43: #{deep_vae_forward.1} parent=1 // pred_check_branch
      %127 = sbr.rel (0) target = $region45
    $region44: #{deep_vae_forward.1} parent=1 // pred_region
      %s129 = ssub.s32 1024, 1024
      %130 = vsyncadd [#allocation14], %s129
      %s131 = sshll.u32 [#allocation15], 4
      %s132 = int_to_ptr.vmem [resolvable:$true] %s131
      %137 = dma.hbm_to_vmem [thread:$0]  %s10, 1024, %s132, [#allocation14], 128, 128, 8
    $region45: #{deep_vae_forward.1} parent=1 // pred_fallthru
      _
    // Predicated region
    $region46: #{deep_vae_forward.1} parent=1 // pred_check
      _
    $region47: #{deep_vae_forward.1} parent=1 // pred_check_branch
      %139 = sbr.rel (0) target = $region49
    $region48: #{deep_vae_forward.1} parent=1 // pred_region
      %s141 = ssub.s32 32, 32
      %142 = vsyncadd [#allocation17], %s141
      %s144 = sshll.u32 [#allocation16], 4
      %s145 = int_to_ptr.vmem [resolvable:$true] %s144
      %147 = dma.hbm_to_vmem [thread:$0]  %s11, 32, %s145, [#allocation17]
    $region49: #{deep_vae_forward.1} parent=1 // pred_fallthru
      _
    // Predicated region
    $region50: #{deep_vae_forward.1} parent=1 // pred_check
      _
    $region51: #{deep_vae_forward.1} parent=1 // pred_check_branch
      %149 = sbr.rel (0) target = $region53
    $region52: #{deep_vae_forward.1} parent=1 // pred_region
      %s151 = ssub.s32 8192, 8192
      %152 = vsyncadd [#allocation17], %s151
      %s153 = sshll.u32 [#allocation18], 4
      %s154 = int_to_ptr.vmem [resolvable:$true] %s153
      %159 = dma.hbm_to_vmem [thread:$0]  %s12, 8192, %s154, [#allocation17], 256, 256, 16
    $region53: #{deep_vae_forward.1} parent=1 // pred_fallthru
      _
    // Predicated region
    $region54: #{deep_vae_forward.1} parent=1 // pred_check
      _
    $region55: #{deep_vae_forward.1} parent=1 // pred_check_branch
      %161 = sbr.rel (0) target = $region57
    $region56: #{deep_vae_forward.1} parent=1 // pred_region
      %s163 = ssub.s32 64, 64
      %164 = vsyncadd [#allocation20], %s163
      %s166 = sshll.u32 [#allocation19], 4
      %s167 = int_to_ptr.vmem [resolvable:$true] %s166
      %169 = dma.hbm_to_vmem [thread:$0]  %s13, 64, %s167, [#allocation20]
    $region57: #{deep_vae_forward.1} parent=1 // pred_fallthru
      _
    // Predicated region
    $region58: #{deep_vae_forward.1} parent=1 // pred_check
      _
    $region59: #{deep_vae_forward.1} parent=1 // pred_check_branch
      %171 = sbr.rel (0) target = $region61
    $region60: #{deep_vae_forward.1} parent=1 // pred_region
      %s173 = ssub.s32 32768, 32768
      %174 = vsyncadd [#allocation20], %s173
      %s175 = sshll.u32 [#allocation21], 4
      %s176 = int_to_ptr.vmem [resolvable:$true] %s175
      %181 = dma.hbm_to_vmem [thread:$0]  %s14, 32768, %s176, [#allocation20], 512, 512, 32
    $region61: #{deep_vae_forward.1} parent=1 // pred_fallthru
      _
    // Predicated region
    $region62: #{deep_vae_forward.1} parent=1 // pred_check
      _
    $region63: #{deep_vae_forward.1} parent=1 // pred_check_branch
      %183 = sbr.rel (0) target = $region65
    $region64: #{deep_vae_forward.1} parent=1 // pred_region
      %s185 = ssub.s32 128, 128
      %186 = vsyncadd [#allocation23], %s185
      %s188 = sshll.u32 [#allocation22], 4
      %s189 = int_to_ptr.vmem [resolvable:$true] %s188
      %191 = dma.hbm_to_vmem [thread:$0]  %s15, 128, %s189, [#allocation23]
    $region65: #{deep_vae_forward.1} parent=1 // pred_fallthru
      _
    // Predicated region
    $region66: #{deep_vae_forward.1} parent=1 // pred_check
      _
    $region67: #{deep_vae_forward.1} parent=1 // pred_check_branch
      %193 = sbr.rel (0) target = $region69
    $region68: #{deep_vae_forward.1} parent=1 // pred_region
      %s195 = ssub.s32 57344, 57344
      %196 = vsyncadd [#allocation23], %s195
      %s197 = sshll.u32 [#allocation24], 4
      %s198 = int_to_ptr.vmem [resolvable:$true] %s197
      %203 = dma.hbm_to_vmem [thread:$0]  %s16, 57344, %s198, [#allocation23], 448, 448, 28
    $region69: #{deep_vae_forward.1} parent=1 // pred_fallthru
      _
    // Predicated region
    $region70: #{deep_vae_forward.1} parent=1 // pred_check
      _
    $region71: #{deep_vae_forward.1} parent=1 // pred_check_branch
      %205 = sbr.rel (0) target = $region73
    $region72: #{deep_vae_forward.1} parent=1 // pred_region
      %s207 = ssub.s32 112, 112
      %208 = vsyncadd [#allocation26], %s207
      %s210 = sshll.u32 [#allocation25], 4
      %s211 = int_to_ptr.vmem [resolvable:$true] %s210
      %213 = dma.hbm_to_vmem [thread:$0]  %s17, 112, %s211, [#allocation26]
    $region73: #{deep_vae_forward.1} parent=1 // pred_fallthru
      _
    // Predicated region
    $region74: #{deep_vae_forward.1} parent=1 // pred_check
      _
    $region75: #{deep_vae_forward.1} parent=1 // pred_check_branch
      %215 = sbr.rel (0) target = $region77
    $region76: #{deep_vae_forward.1} parent=1 // pred_region
      %216 = dma.done [#allocation3], 50176
    $region77: #{deep_vae_forward.1} parent=1 // pred_fallthru
      _
    // Predicated region
    $region78: #{deep_vae_forward.1} parent=1 // pred_check
      _
    $region79: #{deep_vae_forward.1} parent=1 // pred_check_branch
      %218 = sbr.rel (0) target = $region81
    $region80: #{deep_vae_forward.1} parent=1 // pred_region
      %219 = dma.done [#allocation5], 128
    $region81: #{deep_vae_forward.1} parent=1 // pred_fallthru
      _
    // Predicated region
    $region82: #{deep_vae_forward.1} parent=1 // pred_check
      _
    $region83: #{deep_vae_forward.1} parent=1 // pred_check_branch
      %221 = sbr.rel (0) target = $region85
    $region84: #{deep_vae_forward.1} parent=1 // pred_region
      %222 = dma.done [#allocation5], 32768
    $region85: #{deep_vae_forward.1} parent=1 // pred_fallthru
      _
    // Predicated region
    $region86: #{deep_vae_forward.1} parent=1 // pred_check
      _
    $region87: #{deep_vae_forward.1} parent=1 // pred_check_branch
      %224 = sbr.rel (0) target = $region89
    $region88: #{deep_vae_forward.1} parent=1 // pred_region
      %225 = dma.done [#allocation8], 64
    $region89: #{deep_vae_forward.1} parent=1 // pred_fallthru
      _
    // Predicated region
    $region90: #{deep_vae_forward.1} parent=1 // pred_check
      _
    $region91: #{deep_vae_forward.1} parent=1 // pred_check_branch
      %227 = sbr.rel (0) target = $region93
    $region92: #{deep_vae_forward.1} parent=1 // pred_region
      %228 = dma.done [#allocation8], 8192
    $region93: #{deep_vae_forward.1} parent=1 // pred_fallthru
      _
    // Predicated region
    $region94: #{deep_vae_forward.1} parent=1 // pred_check
      _
    $region95: #{deep_vae_forward.1} parent=1 // pred_check_branch
      %230 = sbr.rel (0) target = $region97
    $region96: #{deep_vae_forward.1} parent=1 // pred_region
      %231 = dma.done [#allocation11], 32
    $region97: #{deep_vae_forward.1} parent=1 // pred_fallthru
      _
    // Predicated region
    $region98: #{deep_vae_forward.1} parent=1 // pred_check
      _
    $region99: #{deep_vae_forward.1} parent=1 // pred_check_branch
      %233 = sbr.rel (0) target = $region101
    $region100: #{deep_vae_forward.1} parent=1 // pred_region
      %234 = dma.done [#allocation11], 2048
    $region101: #{deep_vae_forward.1} parent=1 // pred_fallthru
      _
    // Predicated region
    $region102: #{deep_vae_forward.1} parent=1 // pred_check
      _
    $region103: #{deep_vae_forward.1} parent=1 // pred_check_branch
      %236 = sbr.rel (0) target = $region105
    $region104: #{deep_vae_forward.1} parent=1 // pred_region
      %237 = dma.done [#allocation14], 16
    $region105: #{deep_vae_forward.1} parent=1 // pred_fallthru
      _
    // Predicated region
    $region106: #{deep_vae_forward.1} parent=1 // pred_check
      _
    $region107: #{deep_vae_forward.1} parent=1 // pred_check_branch
      %239 = sbr.rel (0) target = $region109
    $region108: #{deep_vae_forward.1} parent=1 // pred_region
      %240 = dma.done [#allocation14], 1024
    $region109: #{deep_vae_forward.1} parent=1 // pred_fallthru
      _
    // Predicated region
    $region110: #{deep_vae_forward.1} parent=1 // pred_check
      _
    $region111: #{deep_vae_forward.1} parent=1 // pred_check_branch
      %242 = sbr.rel (0) target = $region113
    $region112: #{deep_vae_forward.1} parent=1 // pred_region
      %243 = dma.done [#allocation17], 32
    $region113: #{deep_vae_forward.1} parent=1 // pred_fallthru
      _
    // Predicated region
    $region114: #{deep_vae_forward.1} parent=1 // pred_check
      _
    $region115: #{deep_vae_forward.1} parent=1 // pred_check_branch
      %245 = sbr.rel (0) target = $region117
    $region116: #{deep_vae_forward.1} parent=1 // pred_region
      %246 = dma.done [#allocation17], 8192
    $region117: #{deep_vae_forward.1} parent=1 // pred_fallthru
      _
    // Predicated region
    $region118: #{deep_vae_forward.1} parent=1 // pred_check
      _
    $region119: #{deep_vae_forward.1} parent=1 // pred_check_branch
      %248 = sbr.rel (0) target = $region121
    $region120: #{deep_vae_forward.1} parent=1 // pred_region
      %249 = dma.done [#allocation20], 64
    $region121: #{deep_vae_forward.1} parent=1 // pred_fallthru
      _
    // Predicated region
    $region122: #{deep_vae_forward.1} parent=1 // pred_check
      _
    $region123: #{deep_vae_forward.1} parent=1 // pred_check_branch
      %251 = sbr.rel (0) target = $region125
    $region124: #{deep_vae_forward.1} parent=1 // pred_region
      %252 = dma.done [#allocation20], 32768
    $region125: #{deep_vae_forward.1} parent=1 // pred_fallthru
      _
    // Predicated region
    $region126: #{deep_vae_forward.1} parent=1 // pred_check
      _
    $region127: #{deep_vae_forward.1} parent=1 // pred_check_branch
      %254 = sbr.rel (0) target = $region129
    $region128: #{deep_vae_forward.1} parent=1 // pred_region
      %255 = dma.done [#allocation23], 128
    $region129: #{deep_vae_forward.1} parent=1 // pred_fallthru
      _
    // Predicated region
    $region130: #{deep_vae_forward.1} parent=1 // pred_check
      _
    $region131: #{deep_vae_forward.1} parent=1 // pred_check_branch
      %257 = sbr.rel (0) target = $region133
    $region132: #{deep_vae_forward.1} parent=1 // pred_region
      %258 = dma.done [#allocation23], 57344
    $region133: #{deep_vae_forward.1} parent=1 // pred_fallthru
      _
    // Predicated region
    $region134: #{deep_vae_forward.1} parent=1 // pred_check
      _
    $region135: #{deep_vae_forward.1} parent=1 // pred_check_branch
      %260 = sbr.rel (0) target = $region137
    $region136: #{deep_vae_forward.1} parent=1 // pred_region
      %261 = dma.done [#allocation26], 112
    $region137: #{deep_vae_forward.1} parent=1 // pred_fallthru
      _
    %v263 = vld [vmem:[%s0] sm:$0xff]
    %v264 = vld [vmem:[%s0 + $0x8] sm:$0xff]
    %v265 = vld [vmem:[%s0 + $0x10] sm:$0xff]
    %v266 = vld [vmem:[%s0 + $0x18] sm:$0xf]
    %v267 = vld [vmem:[%s0 + $0x1c] sm:$0xff]
    %v268 = vld [vmem:[%s0 + $0x24] sm:$0xff]
    %v269 = vld [vmem:[%s0 + $0x2c] sm:$0xff]
    %v270 = vld [vmem:[%s0 + $0x34] sm:$0xf]
    %v271 = vld [vmem:[#allocation2] sm:$0xff]
    %v272 = vld [vmem:[#allocation2 + $0x8] sm:$0xff]
    %v273 = vld [vmem:[#allocation2 + $0x10] sm:$0xff]
    %v274 = vld [vmem:[#allocation2 + $0x18] sm:$0xff]
    %v275 = vld [vmem:[#allocation2 + $0x20] sm:$0xff]
    %v276 = vld [vmem:[#allocation2 + $0x28] sm:$0xff]
    %v277 = vld [vmem:[#allocation2 + $0x30] sm:$0xff]
    %v278 = vld [vmem:[#allocation2 + $0x38] sm:$0xff]
    %v279 = vld [vmem:[#allocation2 + $0x40] sm:$0xff]
    %v280 = vld [vmem:[#allocation2 + $0x48] sm:$0xff]
    %v281 = vld [vmem:[#allocation2 + $0x50] sm:$0xff]
    %v282 = vld [vmem:[#allocation2 + $0x58] sm:$0xff]
    %v283 = vld [vmem:[#allocation2 + $0x60] sm:$0xff]
    %v284 = vld [vmem:[#allocation2 + $0x68] sm:$0xff]
    %v285 = vld [vmem:[#allocation2 + $0x70] sm:$0xff]
    %v286 = vld [vmem:[#allocation2 + $0x78] sm:$0xff]
    %v287 = vld [vmem:[#allocation2 + $0x80] sm:$0xff]
    %v288 = vld [vmem:[#allocation2 + $0x88] sm:$0xff]
    %v289 = vld [vmem:[#allocation2 + $0x90] sm:$0xff]
    %v290 = vld [vmem:[#allocation2 + $0x98] sm:$0xff]
    %v291 = vld [vmem:[#allocation2 + $0xa0] sm:$0xff]
    %v292 = vld [vmem:[#allocation2 + $0xa8] sm:$0xff]
    %v293 = vld [vmem:[#allocation2 + $0xb0] sm:$0xff]
    %v294 = vld [vmem:[#allocation2 + $0xb8] sm:$0xff]
    %v295 = vld [vmem:[#allocation2 + $0xc0] sm:$0xff]
    %v296 = vld [vmem:[#allocation2 + $0xc8] sm:$0xff]
    %v297 = vld [vmem:[#allocation2 + $0xd0] sm:$0xff]
    %v298 = vld [vmem:[#allocation2 + $0xd8] sm:$0xff]
    %v299 = vld [vmem:[#allocation2 + $0xe0] sm:$0xff]
    %v300 = vld [vmem:[#allocation2 + $0xe8] sm:$0xff]
    %v301 = vld [vmem:[#allocation2 + $0xf0] sm:$0xff]
    %v302 = vld [vmem:[#allocation2 + $0xf8] sm:$0xff]
    %v303 = vld [vmem:[#allocation2 + $0x100] sm:$0xff]
    %v304 = vld [vmem:[#allocation2 + $0x108] sm:$0xff]
    %v305 = vld [vmem:[#allocation2 + $0x110] sm:$0xff]
    %v306 = vld [vmem:[#allocation2 + $0x118] sm:$0xff]
    %v307 = vld [vmem:[#allocation2 + $0x120] sm:$0xff]
    %v308 = vld [vmem:[#allocation2 + $0x128] sm:$0xff]
    %v309 = vld [vmem:[#allocation2 + $0x130] sm:$0xff]
    %v310 = vld [vmem:[#allocation2 + $0x138] sm:$0xff]
    %v311 = vld [vmem:[#allocation2 + $0x140] sm:$0xff]
    %v312 = vld [vmem:[#allocation2 + $0x148] sm:$0xff]
    %v313 = vld [vmem:[#allocation2 + $0x150] sm:$0xff]
    %v314 = vld [vmem:[#allocation2 + $0x158] sm:$0xff]
    %v315 = vld [vmem:[#allocation2 + $0x160] sm:$0xff]
    %v316 = vld [vmem:[#allocation2 + $0x168] sm:$0xff]
    %v317 = vld [vmem:[#allocation2 + $0x170] sm:$0xff]
    %v318 = vld [vmem:[#allocation2 + $0x178] sm:$0xff]
    %v319 = vld [vmem:[#allocation2 + $0x180] sm:$0xff]
    %v320 = vld [vmem:[#allocation2 + $0x188] sm:$0xff]
    %v321 = vld [vmem:[#allocation2 + $0x190] sm:$0xff]
    %v322 = vld [vmem:[#allocation2 + $0x198] sm:$0xff]
    %v323 = vld [vmem:[#allocation2 + $0x1a0] sm:$0xff]
    %v324 = vld [vmem:[#allocation2 + $0x1a8] sm:$0xff]
    %v325 = vld [vmem:[#allocation2 + $0x1b0] sm:$0xff]
    %v326 = vld [vmem:[#allocation2 + $0x1b8] sm:$0xff]
    %v327 = vld [vmem:[#allocation2 + $0x1c0] sm:$0xff]
    %v328 = vld [vmem:[#allocation2 + $0x1c8] sm:$0xff]
    %v329 = vld [vmem:[#allocation2 + $0x1d0] sm:$0xff]
    %v330 = vld [vmem:[#allocation2 + $0x1d8] sm:$0xff]
    %v331 = vld [vmem:[#allocation2 + $0x1e0] sm:$0xff]
    %v332 = vld [vmem:[#allocation2 + $0x1e8] sm:$0xff]
    %v333 = vld [vmem:[#allocation2 + $0x1f0] sm:$0xff]
    %v334 = vld [vmem:[#allocation2 + $0x1f8] sm:$0xff]
    %v335 = vld [vmem:[#allocation2 + $0x200] sm:$0xff]
    %v336 = vld [vmem:[#allocation2 + $0x208] sm:$0xff]
    %v337 = vld [vmem:[#allocation2 + $0x210] sm:$0xff]
    %v338 = vld [vmem:[#allocation2 + $0x218] sm:$0xff]
    %v339 = vld [vmem:[#allocation2 + $0x220] sm:$0xff]
    %v340 = vld [vmem:[#allocation2 + $0x228] sm:$0xff]
    %v341 = vld [vmem:[#allocation2 + $0x230] sm:$0xff]
    %v342 = vld [vmem:[#allocation2 + $0x238] sm:$0xff]
    %v343 = vld [vmem:[#allocation2 + $0x240] sm:$0xff]
    %v344 = vld [vmem:[#allocation2 + $0x248] sm:$0xff]
    %v345 = vld [vmem:[#allocation2 + $0x250] sm:$0xff]
    %v346 = vld [vmem:[#allocation2 + $0x258] sm:$0xff]
    %v347 = vld [vmem:[#allocation2 + $0x260] sm:$0xff]
    %v348 = vld [vmem:[#allocation2 + $0x268] sm:$0xff]
    %v349 = vld [vmem:[#allocation2 + $0x270] sm:$0xff]
    %v350 = vld [vmem:[#allocation2 + $0x278] sm:$0xff]
    %v351 = vld [vmem:[#allocation2 + $0x280] sm:$0xff]
    %v352 = vld [vmem:[#allocation2 + $0x288] sm:$0xff]
    %v353 = vld [vmem:[#allocation2 + $0x290] sm:$0xff]
    %v354 = vld [vmem:[#allocation2 + $0x298] sm:$0xff]
    %v355 = vld [vmem:[#allocation2 + $0x2a0] sm:$0xff]
    %v356 = vld [vmem:[#allocation2 + $0x2a8] sm:$0xff]
    %v357 = vld [vmem:[#allocation2 + $0x2b0] sm:$0xff]
    %v358 = vld [vmem:[#allocation2 + $0x2b8] sm:$0xff]
    %v359 = vld [vmem:[#allocation2 + $0x2c0] sm:$0xff]
    %v360 = vld [vmem:[#allocation2 + $0x2c8] sm:$0xff]
    %v361 = vld [vmem:[#allocation2 + $0x2d0] sm:$0xff]
    %v362 = vld [vmem:[#allocation2 + $0x2d8] sm:$0xff]
    %v363 = vld [vmem:[#allocation2 + $0x2e0] sm:$0xff]
    %v364 = vld [vmem:[#allocation2 + $0x2e8] sm:$0xff]
    %v365 = vld [vmem:[#allocation2 + $0x2f0] sm:$0xff]
    %v366 = vld [vmem:[#allocation2 + $0x2f8] sm:$0xff]
    %v367 = vld [vmem:[#allocation2 + $0x300] sm:$0xff]
    %v368 = vld [vmem:[#allocation2 + $0x308] sm:$0xff]
    %v369 = vld [vmem:[#allocation2 + $0x310] sm:$0xff]
    %v370 = vld [vmem:[#allocation2 + $0x318] sm:$0xff]
    %v371 = vld [vmem:[#allocation2 + $0x320] sm:$0xff]
    %v372 = vld [vmem:[#allocation2 + $0x328] sm:$0xff]
    %v373 = vld [vmem:[#allocation2 + $0x330] sm:$0xff]
    %v374 = vld [vmem:[#allocation2 + $0x338] sm:$0xff]
    %v375 = vld [vmem:[#allocation2 + $0x340] sm:$0xff]
    %v376 = vld [vmem:[#allocation2 + $0x348] sm:$0xff]
    %v377 = vld [vmem:[#allocation2 + $0x350] sm:$0xff]
    %v378 = vld [vmem:[#allocation2 + $0x358] sm:$0xff]
    %v379 = vld [vmem:[#allocation2 + $0x360] sm:$0xff]
    %v380 = vld [vmem:[#allocation2 + $0x368] sm:$0xff]
    %v381 = vld [vmem:[#allocation2 + $0x370] sm:$0xff]
    %v382 = vld [vmem:[#allocation2 + $0x378] sm:$0xff]
    %v383 = vld [vmem:[#allocation2 + $0x380] sm:$0xff]
    %v384 = vld [vmem:[#allocation2 + $0x388] sm:$0xff]
    %v385 = vld [vmem:[#allocation2 + $0x390] sm:$0xff]
    %v386 = vld [vmem:[#allocation2 + $0x398] sm:$0xff]
    %v387 = vld [vmem:[#allocation2 + $0x3a0] sm:$0xff]
    %v388 = vld [vmem:[#allocation2 + $0x3a8] sm:$0xff]
    %v389 = vld [vmem:[#allocation2 + $0x3b0] sm:$0xff]
    %v390 = vld [vmem:[#allocation2 + $0x3b8] sm:$0xff]
    %v391 = vld [vmem:[#allocation2 + $0x3c0] sm:$0xff]
    %v392 = vld [vmem:[#allocation2 + $0x3c8] sm:$0xff]
    %v393 = vld [vmem:[#allocation2 + $0x3d0] sm:$0xff]
    %v394 = vld [vmem:[#allocation2 + $0x3d8] sm:$0xff]
    %v395 = vld [vmem:[#allocation2 + $0x3e0] sm:$0xff]
    %v396 = vld [vmem:[#allocation2 + $0x3e8] sm:$0xff]
    %v397 = vld [vmem:[#allocation2 + $0x3f0] sm:$0xff]
    %v398 = vld [vmem:[#allocation2 + $0x3f8] sm:$0xff]
    %v399 = vld [vmem:[#allocation2 + $0x400] sm:$0xff]
    %v400 = vld [vmem:[#allocation2 + $0x408] sm:$0xff]
    %v401 = vld [vmem:[#allocation2 + $0x410] sm:$0xff]
    %v402 = vld [vmem:[#allocation2 + $0x418] sm:$0xff]
    %v403 = vld [vmem:[#allocation2 + $0x420] sm:$0xff]
    %v404 = vld [vmem:[#allocation2 + $0x428] sm:$0xff]
    %v405 = vld [vmem:[#allocation2 + $0x430] sm:$0xff]
    %v406 = vld [vmem:[#allocation2 + $0x438] sm:$0xff]
    %v407 = vld [vmem:[#allocation2 + $0x440] sm:$0xff]
    %v408 = vld [vmem:[#allocation2 + $0x448] sm:$0xff]
    %v409 = vld [vmem:[#allocation2 + $0x450] sm:$0xff]
    %v410 = vld [vmem:[#allocation2 + $0x458] sm:$0xff]
    %v411 = vld [vmem:[#allocation2 + $0x460] sm:$0xff]
    %v412 = vld [vmem:[#allocation2 + $0x468] sm:$0xff]
    %v413 = vld [vmem:[#allocation2 + $0x470] sm:$0xff]
    %v414 = vld [vmem:[#allocation2 + $0x478] sm:$0xff]
    %v415 = vld [vmem:[#allocation2 + $0x480] sm:$0xff]
    %v416 = vld [vmem:[#allocation2 + $0x488] sm:$0xff]
    %v417 = vld [vmem:[#allocation2 + $0x490] sm:$0xff]
    %v418 = vld [vmem:[#allocation2 + $0x498] sm:$0xff]
    %v419 = vld [vmem:[#allocation2 + $0x4a0] sm:$0xff]
    %v420 = vld [vmem:[#allocation2 + $0x4a8] sm:$0xff]
    %v421 = vld [vmem:[#allocation2 + $0x4b0] sm:$0xff]
    %v422 = vld [vmem:[#allocation2 + $0x4b8] sm:$0xff]
    %v423 = vld [vmem:[#allocation2 + $0x4c0] sm:$0xff]
    %v424 = vld [vmem:[#allocation2 + $0x4c8] sm:$0xff]
    %v425 = vld [vmem:[#allocation2 + $0x4d0] sm:$0xff]
    %v426 = vld [vmem:[#allocation2 + $0x4d8] sm:$0xff]
    %v427 = vld [vmem:[#allocation2 + $0x4e0] sm:$0xff]
    %v428 = vld [vmem:[#allocation2 + $0x4e8] sm:$0xff]
    %v429 = vld [vmem:[#allocation2 + $0x4f0] sm:$0xff]
    %v430 = vld [vmem:[#allocation2 + $0x4f8] sm:$0xff]
    %v431 = vld [vmem:[#allocation2 + $0x500] sm:$0xff]
    %v432 = vld [vmem:[#allocation2 + $0x508] sm:$0xff]
    %v433 = vld [vmem:[#allocation2 + $0x510] sm:$0xff]
    %v434 = vld [vmem:[#allocation2 + $0x518] sm:$0xff]
    %v435 = vld [vmem:[#allocation2 + $0x520] sm:$0xff]
    %v436 = vld [vmem:[#allocation2 + $0x528] sm:$0xff]
    %v437 = vld [vmem:[#allocation2 + $0x530] sm:$0xff]
    %v438 = vld [vmem:[#allocation2 + $0x538] sm:$0xff]
    %v439 = vld [vmem:[#allocation2 + $0x540] sm:$0xff]
    %v440 = vld [vmem:[#allocation2 + $0x548] sm:$0xff]
    %v441 = vld [vmem:[#allocation2 + $0x550] sm:$0xff]
    %v442 = vld [vmem:[#allocation2 + $0x558] sm:$0xff]
    %v443 = vld [vmem:[#allocation2 + $0x560] sm:$0xff]
    %v444 = vld [vmem:[#allocation2 + $0x568] sm:$0xff]
    %v445 = vld [vmem:[#allocation2 + $0x570] sm:$0xff]
    %v446 = vld [vmem:[#allocation2 + $0x578] sm:$0xff]
    %v447 = vld [vmem:[#allocation2 + $0x580] sm:$0xff]
    %v448 = vld [vmem:[#allocation2 + $0x588] sm:$0xff]
    %v449 = vld [vmem:[#allocation2 + $0x590] sm:$0xff]
    %v450 = vld [vmem:[#allocation2 + $0x598] sm:$0xff]
    %v451 = vld [vmem:[#allocation2 + $0x5a0] sm:$0xff]
    %v452 = vld [vmem:[#allocation2 + $0x5a8] sm:$0xff]
    %v453 = vld [vmem:[#allocation2 + $0x5b0] sm:$0xff]
    %v454 = vld [vmem:[#allocation2 + $0x5b8] sm:$0xff]
    %v455 = vld [vmem:[#allocation2 + $0x5c0] sm:$0xff]
    %v456 = vld [vmem:[#allocation2 + $0x5c8] sm:$0xff]
    %v457 = vld [vmem:[#allocation2 + $0x5d0] sm:$0xff]
    %v458 = vld [vmem:[#allocation2 + $0x5d8] sm:$0xff]
    %v459 = vld [vmem:[#allocation2 + $0x5e0] sm:$0xff]
    %v460 = vld [vmem:[#allocation2 + $0x5e8] sm:$0xff]
    %v461 = vld [vmem:[#allocation2 + $0x5f0] sm:$0xff]
    %v462 = vld [vmem:[#allocation2 + $0x5f8] sm:$0xff]
    %v463 = vld [vmem:[#allocation2 + $0x600] sm:$0xff]
    %v464 = vld [vmem:[#allocation2 + $0x608] sm:$0xff]
    %v465 = vld [vmem:[#allocation2 + $0x610] sm:$0xff]
    %v466 = vld [vmem:[#allocation2 + $0x618] sm:$0xff]
    %v467 = vld [vmem:[#allocation2 + $0x620] sm:$0xff]
    %v468 = vld [vmem:[#allocation2 + $0x628] sm:$0xff]
    %v469 = vld [vmem:[#allocation2 + $0x630] sm:$0xff]
    %v470 = vld [vmem:[#allocation2 + $0x638] sm:$0xff]
    %v471 = vld [vmem:[#allocation2 + $0x640] sm:$0xff]
    %v472 = vld [vmem:[#allocation2 + $0x648] sm:$0xff]
    %v473 = vld [vmem:[#allocation2 + $0x650] sm:$0xff]
    %v474 = vld [vmem:[#allocation2 + $0x658] sm:$0xff]
    %v475 = vld [vmem:[#allocation2 + $0x660] sm:$0xff]
    %v476 = vld [vmem:[#allocation2 + $0x668] sm:$0xff]
    %v477 = vld [vmem:[#allocation2 + $0x670] sm:$0xff]
    %v478 = vld [vmem:[#allocation2 + $0x678] sm:$0xff]
    %v479 = vld [vmem:[#allocation2 + $0x680] sm:$0xff]
    %v480 = vld [vmem:[#allocation2 + $0x688] sm:$0xff]
    %v481 = vld [vmem:[#allocation2 + $0x690] sm:$0xff]
    %v482 = vld [vmem:[#allocation2 + $0x698] sm:$0xff]
    %v483 = vld [vmem:[#allocation2 + $0x6a0] sm:$0xff]
    %v484 = vld [vmem:[#allocation2 + $0x6a8] sm:$0xff]
    %v485 = vld [vmem:[#allocation2 + $0x6b0] sm:$0xff]
    %v486 = vld [vmem:[#allocation2 + $0x6b8] sm:$0xff]
    %v487 = vld [vmem:[#allocation2 + $0x6c0] sm:$0xff]
    %v488 = vld [vmem:[#allocation2 + $0x6c8] sm:$0xff]
    %v489 = vld [vmem:[#allocation2 + $0x6d0] sm:$0xff]
    %v490 = vld [vmem:[#allocation2 + $0x6d8] sm:$0xff]
    %v491 = vld [vmem:[#allocation2 + $0x6e0] sm:$0xff]
    %v492 = vld [vmem:[#allocation2 + $0x6e8] sm:$0xff]
    %v493 = vld [vmem:[#allocation2 + $0x6f0] sm:$0xff]
    %v494 = vld [vmem:[#allocation2 + $0x6f8] sm:$0xff]
    %v495 = vld [vmem:[#allocation2 + $0x700] sm:$0xff]
    %v496 = vld [vmem:[#allocation2 + $0x708] sm:$0xff]
    %v497 = vld [vmem:[#allocation2 + $0x710] sm:$0xff]
    %v498 = vld [vmem:[#allocation2 + $0x718] sm:$0xff]
    %v499 = vld [vmem:[#allocation2 + $0x720] sm:$0xff]
    %v500 = vld [vmem:[#allocation2 + $0x728] sm:$0xff]
    %v501 = vld [vmem:[#allocation2 + $0x730] sm:$0xff]
    %v502 = vld [vmem:[#allocation2 + $0x738] sm:$0xff]
    %v503 = vld [vmem:[#allocation2 + $0x740] sm:$0xff]
    %v504 = vld [vmem:[#allocation2 + $0x748] sm:$0xff]
    %v505 = vld [vmem:[#allocation2 + $0x750] sm:$0xff]
    %v506 = vld [vmem:[#allocation2 + $0x758] sm:$0xff]
    %v507 = vld [vmem:[#allocation2 + $0x760] sm:$0xff]
    %v508 = vld [vmem:[#allocation2 + $0x768] sm:$0xff]
    %v509 = vld [vmem:[#allocation2 + $0x770] sm:$0xff]
    %v510 = vld [vmem:[#allocation2 + $0x778] sm:$0xff]
    %v511 = vld [vmem:[#allocation2 + $0x780] sm:$0xff]
    %v512 = vld [vmem:[#allocation2 + $0x788] sm:$0xff]
    %v513 = vld [vmem:[#allocation2 + $0x790] sm:$0xff]
    %v514 = vld [vmem:[#allocation2 + $0x798] sm:$0xff]
    %v515 = vld [vmem:[#allocation2 + $0x7a0] sm:$0xff]
    %v516 = vld [vmem:[#allocation2 + $0x7a8] sm:$0xff]
    %v517 = vld [vmem:[#allocation2 + $0x7b0] sm:$0xff]
    %v518 = vld [vmem:[#allocation2 + $0x7b8] sm:$0xff]
    %v519 = vld [vmem:[#allocation2 + $0x7c0] sm:$0xff]
    %v520 = vld [vmem:[#allocation2 + $0x7c8] sm:$0xff]
    %v521 = vld [vmem:[#allocation2 + $0x7d0] sm:$0xff]
    %v522 = vld [vmem:[#allocation2 + $0x7d8] sm:$0xff]
    %v523 = vld [vmem:[#allocation2 + $0x7e0] sm:$0xff]
    %v524 = vld [vmem:[#allocation2 + $0x7e8] sm:$0xff]
    %v525 = vld [vmem:[#allocation2 + $0x7f0] sm:$0xff]
    %v526 = vld [vmem:[#allocation2 + $0x7f8] sm:$0xff]
    %v527 = vld [vmem:[#allocation2 + $0x800] sm:$0xff]
    %v528 = vld [vmem:[#allocation2 + $0x808] sm:$0xff]
    %v529 = vld [vmem:[#allocation2 + $0x810] sm:$0xff]
    %v530 = vld [vmem:[#allocation2 + $0x818] sm:$0xff]
    %v531 = vld [vmem:[#allocation2 + $0x820] sm:$0xff]
    %v532 = vld [vmem:[#allocation2 + $0x828] sm:$0xff]
    %v533 = vld [vmem:[#allocation2 + $0x830] sm:$0xff]
    %v534 = vld [vmem:[#allocation2 + $0x838] sm:$0xff]
    %v535 = vld [vmem:[#allocation2 + $0x840] sm:$0xff]
    %v536 = vld [vmem:[#allocation2 + $0x848] sm:$0xff]
    %v537 = vld [vmem:[#allocation2 + $0x850] sm:$0xff]
    %v538 = vld [vmem:[#allocation2 + $0x858] sm:$0xff]
    %v539 = vld [vmem:[#allocation2 + $0x860] sm:$0xff]
    %v540 = vld [vmem:[#allocation2 + $0x868] sm:$0xff]
    %v541 = vld [vmem:[#allocation2 + $0x870] sm:$0xff]
    %v542 = vld [vmem:[#allocation2 + $0x878] sm:$0xff]
    %v543 = vld [vmem:[#allocation2 + $0x880] sm:$0xff]
    %v544 = vld [vmem:[#allocation2 + $0x888] sm:$0xff]
    %v545 = vld [vmem:[#allocation2 + $0x890] sm:$0xff]
    %v546 = vld [vmem:[#allocation2 + $0x898] sm:$0xff]
    %v547 = vld [vmem:[#allocation2 + $0x8a0] sm:$0xff]
    %v548 = vld [vmem:[#allocation2 + $0x8a8] sm:$0xff]
    %v549 = vld [vmem:[#allocation2 + $0x8b0] sm:$0xff]
    %v550 = vld [vmem:[#allocation2 + $0x8b8] sm:$0xff]
    %v551 = vld [vmem:[#allocation2 + $0x8c0] sm:$0xff]
    %v552 = vld [vmem:[#allocation2 + $0x8c8] sm:$0xff]
    %v553 = vld [vmem:[#allocation2 + $0x8d0] sm:$0xff]
    %v554 = vld [vmem:[#allocation2 + $0x8d8] sm:$0xff]
    %v555 = vld [vmem:[#allocation2 + $0x8e0] sm:$0xff]
    %v556 = vld [vmem:[#allocation2 + $0x8e8] sm:$0xff]
    %v557 = vld [vmem:[#allocation2 + $0x8f0] sm:$0xff]
    %v558 = vld [vmem:[#allocation2 + $0x8f8] sm:$0xff]
    %v559 = vld [vmem:[#allocation2 + $0x900] sm:$0xff]
    %v560 = vld [vmem:[#allocation2 + $0x908] sm:$0xff]
    %v561 = vld [vmem:[#allocation2 + $0x910] sm:$0xff]
    %v562 = vld [vmem:[#allocation2 + $0x918] sm:$0xff]
    %v563 = vld [vmem:[#allocation2 + $0x920] sm:$0xff]
    %v564 = vld [vmem:[#allocation2 + $0x928] sm:$0xff]
    %v565 = vld [vmem:[#allocation2 + $0x930] sm:$0xff]
    %v566 = vld [vmem:[#allocation2 + $0x938] sm:$0xff]
    %v567 = vld [vmem:[#allocation2 + $0x940] sm:$0xff]
    %v568 = vld [vmem:[#allocation2 + $0x948] sm:$0xff]
    %v569 = vld [vmem:[#allocation2 + $0x950] sm:$0xff]
    %v570 = vld [vmem:[#allocation2 + $0x958] sm:$0xff]
    %v571 = vld [vmem:[#allocation2 + $0x960] sm:$0xff]
    %v572 = vld [vmem:[#allocation2 + $0x968] sm:$0xff]
    %v573 = vld [vmem:[#allocation2 + $0x970] sm:$0xff]
    %v574 = vld [vmem:[#allocation2 + $0x978] sm:$0xff]
    %v575 = vld [vmem:[#allocation2 + $0x980] sm:$0xff]
    %v576 = vld [vmem:[#allocation2 + $0x988] sm:$0xff]
    %v577 = vld [vmem:[#allocation2 + $0x990] sm:$0xff]
    %v578 = vld [vmem:[#allocation2 + $0x998] sm:$0xff]
    %v579 = vld [vmem:[#allocation2 + $0x9a0] sm:$0xff]
    %v580 = vld [vmem:[#allocation2 + $0x9a8] sm:$0xff]
    %v581 = vld [vmem:[#allocation2 + $0x9b0] sm:$0xff]
    %v582 = vld [vmem:[#allocation2 + $0x9b8] sm:$0xff]
    %v583 = vld [vmem:[#allocation2 + $0x9c0] sm:$0xff]
    %v584 = vld [vmem:[#allocation2 + $0x9c8] sm:$0xff]
    %v585 = vld [vmem:[#allocation2 + $0x9d0] sm:$0xff]
    %v586 = vld [vmem:[#allocation2 + $0x9d8] sm:$0xff]
    %v587 = vld [vmem:[#allocation2 + $0x9e0] sm:$0xff]
    %v588 = vld [vmem:[#allocation2 + $0x9e8] sm:$0xff]
    %v589 = vld [vmem:[#allocation2 + $0x9f0] sm:$0xff]
    %v590 = vld [vmem:[#allocation2 + $0x9f8] sm:$0xff]
    %v591 = vld [vmem:[#allocation2 + $0xa00] sm:$0xff]
    %v592 = vld [vmem:[#allocation2 + $0xa08] sm:$0xff]
    %v593 = vld [vmem:[#allocation2 + $0xa10] sm:$0xff]
    %v594 = vld [vmem:[#allocation2 + $0xa18] sm:$0xff]
    %v595 = vld [vmem:[#allocation2 + $0xa20] sm:$0xff]
    %v596 = vld [vmem:[#allocation2 + $0xa28] sm:$0xff]
    %v597 = vld [vmem:[#allocation2 + $0xa30] sm:$0xff]
    %v598 = vld [vmem:[#allocation2 + $0xa38] sm:$0xff]
    %v599 = vld [vmem:[#allocation2 + $0xa40] sm:$0xff]
    %v600 = vld [vmem:[#allocation2 + $0xa48] sm:$0xff]
    %v601 = vld [vmem:[#allocation2 + $0xa50] sm:$0xff]
    %v602 = vld [vmem:[#allocation2 + $0xa58] sm:$0xff]
    %v603 = vld [vmem:[#allocation2 + $0xa60] sm:$0xff]
    %v604 = vld [vmem:[#allocation2 + $0xa68] sm:$0xff]
    %v605 = vld [vmem:[#allocation2 + $0xa70] sm:$0xff]
    %v606 = vld [vmem:[#allocation2 + $0xa78] sm:$0xff]
    %v607 = vld [vmem:[#allocation2 + $0xa80] sm:$0xff]
    %v608 = vld [vmem:[#allocation2 + $0xa88] sm:$0xff]
    %v609 = vld [vmem:[#allocation2 + $0xa90] sm:$0xff]
    %v610 = vld [vmem:[#allocation2 + $0xa98] sm:$0xff]
    %v611 = vld [vmem:[#allocation2 + $0xaa0] sm:$0xff]
    %v612 = vld [vmem:[#allocation2 + $0xaa8] sm:$0xff]
    %v613 = vld [vmem:[#allocation2 + $0xab0] sm:$0xff]
    %v614 = vld [vmem:[#allocation2 + $0xab8] sm:$0xff]
    %v615 = vld [vmem:[#allocation2 + $0xac0] sm:$0xff]
    %v616 = vld [vmem:[#allocation2 + $0xac8] sm:$0xff]
    %v617 = vld [vmem:[#allocation2 + $0xad0] sm:$0xff]
    %v618 = vld [vmem:[#allocation2 + $0xad8] sm:$0xff]
    %v619 = vld [vmem:[#allocation2 + $0xae0] sm:$0xff]
    %v620 = vld [vmem:[#allocation2 + $0xae8] sm:$0xff]
    %v621 = vld [vmem:[#allocation2 + $0xaf0] sm:$0xff]
    %v622 = vld [vmem:[#allocation2 + $0xaf8] sm:$0xff]
    %v623 = vld [vmem:[#allocation2 + $0xb00] sm:$0xff]
    %v624 = vld [vmem:[#allocation2 + $0xb08] sm:$0xff]
    %v625 = vld [vmem:[#allocation2 + $0xb10] sm:$0xff]
    %v626 = vld [vmem:[#allocation2 + $0xb18] sm:$0xff]
    %v627 = vld [vmem:[#allocation2 + $0xb20] sm:$0xff]
    %v628 = vld [vmem:[#allocation2 + $0xb28] sm:$0xff]
    %v629 = vld [vmem:[#allocation2 + $0xb30] sm:$0xff]
    %v630 = vld [vmem:[#allocation2 + $0xb38] sm:$0xff]
    %v631 = vld [vmem:[#allocation2 + $0xb40] sm:$0xff]
    %v632 = vld [vmem:[#allocation2 + $0xb48] sm:$0xff]
    %v633 = vld [vmem:[#allocation2 + $0xb50] sm:$0xff]
    %v634 = vld [vmem:[#allocation2 + $0xb58] sm:$0xff]
    %v635 = vld [vmem:[#allocation2 + $0xb60] sm:$0xff]
    %v636 = vld [vmem:[#allocation2 + $0xb68] sm:$0xff]
    %v637 = vld [vmem:[#allocation2 + $0xb70] sm:$0xff]
    %v638 = vld [vmem:[#allocation2 + $0xb78] sm:$0xff]
    %v639 = vld [vmem:[#allocation2 + $0xb80] sm:$0xff]
    %v640 = vld [vmem:[#allocation2 + $0xb88] sm:$0xff]
    %v641 = vld [vmem:[#allocation2 + $0xb90] sm:$0xff]
    %v642 = vld [vmem:[#allocation2 + $0xb98] sm:$0xff]
    %v643 = vld [vmem:[#allocation2 + $0xba0] sm:$0xff]
    %v644 = vld [vmem:[#allocation2 + $0xba8] sm:$0xff]
    %v645 = vld [vmem:[#allocation2 + $0xbb0] sm:$0xff]
    %v646 = vld [vmem:[#allocation2 + $0xbb8] sm:$0xff]
    %v647 = vld [vmem:[#allocation2 + $0xbc0] sm:$0xff]
    %v648 = vld [vmem:[#allocation2 + $0xbc8] sm:$0xff]
    %v649 = vld [vmem:[#allocation2 + $0xbd0] sm:$0xff]
    %v650 = vld [vmem:[#allocation2 + $0xbd8] sm:$0xff]
    %v651 = vld [vmem:[#allocation2 + $0xbe0] sm:$0xff]
    %v652 = vld [vmem:[#allocation2 + $0xbe8] sm:$0xff]
    %v653 = vld [vmem:[#allocation2 + $0xbf0] sm:$0xff]
    %v654 = vld [vmem:[#allocation2 + $0xbf8] sm:$0xff]
    %v655 = vld [vmem:[#allocation2 + $0xc00] sm:$0xff]
    %v656 = vld [vmem:[#allocation2 + $0xc08] sm:$0xff]
    %v657 = vld [vmem:[#allocation2 + $0xc10] sm:$0xff]
    %v658 = vld [vmem:[#allocation2 + $0xc18] sm:$0xff]
    %v659 = vld [vmem:[#allocation2 + $0xc20] sm:$0xff]
    %v660 = vld [vmem:[#allocation2 + $0xc28] sm:$0xff]
    %v661 = vld [vmem:[#allocation2 + $0xc30] sm:$0xff]
    %v662 = vld [vmem:[#allocation2 + $0xc38] sm:$0xff]
    %v663 = vld [vmem:[#allocation4] sm:$0xff]
    %v665 = vlaneseq
    %v666 = vshrl.u32 %v665, 7
    %v667 = vsub.s32 0, %v666
    %v668 = vrot.slane %v663, %v667
    %v669 = vlaneseq
    %v670 = vshrl.u32 %v669, 7
    %v671 = vsub.s32 1, %v670
    %v672 = vrot.slane %v663, %v671
    %v673 = vlaneseq
    %v674 = vshrl.u32 %v673, 7
    %v675 = vsub.s32 2, %v674
    %v676 = vrot.slane %v663, %v675
    %v677 = vlaneseq
    %v678 = vshrl.u32 %v677, 7
    %v679 = vsub.s32 3, %v678
    %v680 = vrot.slane %v663, %v679
    %v681 = vlaneseq
    %v682 = vshrl.u32 %v681, 7
    %v683 = vsub.s32 4, %v682
    %v684 = vrot.slane %v663, %v683
    %v685 = vlaneseq
    %v686 = vshrl.u32 %v685, 7
    %v687 = vsub.s32 5, %v686
    %v688 = vrot.slane %v663, %v687
    %v689 = vlaneseq
    %v690 = vshrl.u32 %v689, 7
    %v691 = vsub.s32 6, %v690
    %v692 = vrot.slane %v663, %v691
    %v693 = vlaneseq
    %v694 = vshrl.u32 %v693, 7
    %v695 = vsub.s32 7, %v694
    %v696 = vrot.slane %v663, %v695
    %v713 = vunpack.c.l.b16 %v263
    %v714 = vunpack.c.h.b16 %v263
    %v715 = vunpack.c.l.b16 %v264
    %v716 = vunpack.c.h.b16 %v264
    %v717 = vunpack.c.l.b16 %v265
    %v718 = vunpack.c.h.b16 %v265
    %v719 = vunpack.c.l.b16 %v266
    %v720 = vunpack.c.l.b16 %v267
    %v721 = vunpack.c.h.b16 %v267
    %v722 = vunpack.c.l.b16 %v268
    %v723 = vunpack.c.h.b16 %v268
    %v724 = vunpack.c.l.b16 %v269
    %v725 = vunpack.c.h.b16 %v269
    %v726 = vunpack.c.l.b16 %v270
    %v727 = vpack.c.b16 %v720, %v713
    %v728 = vpack.c.b16 %v721, %v714
    %v729 = vpack.c.b16 %v722, %v715
    %v730 = vpack.c.b16 %v723, %v716
    %v731 = vpack.c.b16 %v724, %v717
    %v732 = vpack.c.b16 %v725, %v718
    %v733 = vpack.c.b16 %v726, %v719
    %v1132 = vunpack.c.l.b16 %v271
    %v1133 = vunpack.c.h.b16 %v271
    %v1134 = vunpack.c.l.b16 %v272
    %v1135 = vunpack.c.h.b16 %v272
    %v1136 = vunpack.c.l.b16 %v273
    %v1137 = vunpack.c.h.b16 %v273
    %v1138 = vunpack.c.l.b16 %v274
    %v1139 = vunpack.c.h.b16 %v274
    %v1140 = vunpack.c.l.b16 %v275
    %v1141 = vunpack.c.h.b16 %v275
    %v1142 = vunpack.c.l.b16 %v276
    %v1143 = vunpack.c.h.b16 %v276
    %v1144 = vunpack.c.l.b16 %v277
    %v1145 = vunpack.c.h.b16 %v277
    %v1146 = vunpack.c.l.b16 %v278
    %v1147 = vunpack.c.h.b16 %v278
    %v1148 = vunpack.c.l.b16 %v279
    %v1149 = vunpack.c.h.b16 %v279
    %v1150 = vunpack.c.l.b16 %v280
    %v1151 = vunpack.c.h.b16 %v280
    %v1152 = vunpack.c.l.b16 %v281
    %v1153 = vunpack.c.h.b16 %v281
    %v1154 = vunpack.c.l.b16 %v282
    %v1155 = vunpack.c.h.b16 %v282
    %v1156 = vunpack.c.l.b16 %v283
    %v1157 = vunpack.c.h.b16 %v283
    %v1158 = vunpack.c.l.b16 %v284
    %v1159 = vunpack.c.h.b16 %v284
    %v1160 = vunpack.c.l.b16 %v285
    %v1161 = vunpack.c.h.b16 %v285
    %v1162 = vunpack.c.l.b16 %v286
    %v1163 = vunpack.c.h.b16 %v286
    %v1164 = vunpack.c.l.b16 %v287
    %v1165 = vunpack.c.h.b16 %v287
    %v1166 = vunpack.c.l.b16 %v288
    %v1167 = vunpack.c.h.b16 %v288
    %v1168 = vunpack.c.l.b16 %v289
    %v1169 = vunpack.c.h.b16 %v289
    %v1170 = vunpack.c.l.b16 %v290
    %v1171 = vunpack.c.h.b16 %v290
    %v1172 = vunpack.c.l.b16 %v291
    %v1173 = vunpack.c.h.b16 %v291
    %v1174 = vunpack.c.l.b16 %v292
    %v1175 = vunpack.c.h.b16 %v292
    %v1176 = vunpack.c.l.b16 %v293
    %v1177 = vunpack.c.h.b16 %v293
    %v1178 = vunpack.c.l.b16 %v294
    %v1179 = vunpack.c.h.b16 %v294
    %v1180 = vunpack.c.l.b16 %v295
    %v1181 = vunpack.c.h.b16 %v295
    %v1182 = vunpack.c.l.b16 %v296
    %v1183 = vunpack.c.h.b16 %v296
    %v1184 = vunpack.c.l.b16 %v297
    %v1185 = vunpack.c.h.b16 %v297
    %v1186 = vunpack.c.l.b16 %v298
    %v1187 = vunpack.c.h.b16 %v298
    %v1188 = vunpack.c.l.b16 %v299
    %v1189 = vunpack.c.h.b16 %v299
    %v1190 = vunpack.c.l.b16 %v300
    %v1191 = vunpack.c.h.b16 %v300
    %v1192 = vunpack.c.l.b16 %v301
    %v1193 = vunpack.c.h.b16 %v301
    %v1194 = vunpack.c.l.b16 %v302
    %v1195 = vunpack.c.h.b16 %v302
    %v1196 = vunpack.c.l.b16 %v303
    %v1197 = vunpack.c.h.b16 %v303
    %v1198 = vunpack.c.l.b16 %v304
    %v1199 = vunpack.c.h.b16 %v304
    %v1200 = vunpack.c.l.b16 %v305
    %v1201 = vunpack.c.h.b16 %v305
    %v1202 = vunpack.c.l.b16 %v306
    %v1203 = vunpack.c.h.b16 %v306
    %v1204 = vunpack.c.l.b16 %v307
    %v1205 = vunpack.c.h.b16 %v307
    %v1206 = vunpack.c.l.b16 %v308
    %v1207 = vunpack.c.h.b16 %v308
    %v1208 = vunpack.c.l.b16 %v309
    %v1209 = vunpack.c.h.b16 %v309
    %v1210 = vunpack.c.l.b16 %v310
    %v1211 = vunpack.c.h.b16 %v310
    %v1212 = vunpack.c.l.b16 %v311
    %v1213 = vunpack.c.h.b16 %v311
    %v1214 = vunpack.c.l.b16 %v312
    %v1215 = vunpack.c.h.b16 %v312
    %v1216 = vunpack.c.l.b16 %v313
    %v1217 = vunpack.c.h.b16 %v313
    %v1218 = vunpack.c.l.b16 %v314
    %v1219 = vunpack.c.h.b16 %v314
    %v1220 = vunpack.c.l.b16 %v315
    %v1221 = vunpack.c.h.b16 %v315
    %v1222 = vunpack.c.l.b16 %v316
    %v1223 = vunpack.c.h.b16 %v316
    %v1224 = vunpack.c.l.b16 %v317
    %v1225 = vunpack.c.h.b16 %v317
    %v1226 = vunpack.c.l.b16 %v318
    %v1227 = vunpack.c.h.b16 %v318
    %v1228 = vunpack.c.l.b16 %v319
    %v1229 = vunpack.c.h.b16 %v319
    %v1230 = vunpack.c.l.b16 %v320
    %v1231 = vunpack.c.h.b16 %v320
    %v1232 = vunpack.c.l.b16 %v321
    %v1233 = vunpack.c.h.b16 %v321
    %v1234 = vunpack.c.l.b16 %v322
    %v1235 = vunpack.c.h.b16 %v322
    %v1236 = vunpack.c.l.b16 %v323
    %v1237 = vunpack.c.h.b16 %v323
    %v1238 = vunpack.c.l.b16 %v324
    %v1239 = vunpack.c.h.b16 %v324
    %v1240 = vunpack.c.l.b16 %v325
    %v1241 = vunpack.c.h.b16 %v325
    %v1242 = vunpack.c.l.b16 %v326
    %v1243 = vunpack.c.h.b16 %v326
    %v1244 = vunpack.c.l.b16 %v327
    %v1245 = vunpack.c.h.b16 %v327
    %v1246 = vunpack.c.l.b16 %v328
    %v1247 = vunpack.c.h.b16 %v328
    %v1248 = vunpack.c.l.b16 %v329
    %v1249 = vunpack.c.h.b16 %v329
    %v1250 = vunpack.c.l.b16 %v330
    %v1251 = vunpack.c.h.b16 %v330
    %v1252 = vunpack.c.l.b16 %v331
    %v1253 = vunpack.c.h.b16 %v331
    %v1254 = vunpack.c.l.b16 %v332
    %v1255 = vunpack.c.h.b16 %v332
    %v1256 = vunpack.c.l.b16 %v333
    %v1257 = vunpack.c.h.b16 %v333
    %v1258 = vunpack.c.l.b16 %v334
    %v1259 = vunpack.c.h.b16 %v334
    %v1260 = vunpack.c.l.b16 %v335
    %v1261 = vunpack.c.h.b16 %v335
    %v1262 = vunpack.c.l.b16 %v336
    %v1263 = vunpack.c.h.b16 %v336
    %v1264 = vunpack.c.l.b16 %v337
    %v1265 = vunpack.c.h.b16 %v337
    %v1266 = vunpack.c.l.b16 %v338
    %v1267 = vunpack.c.h.b16 %v338
    %v1268 = vunpack.c.l.b16 %v339
    %v1269 = vunpack.c.h.b16 %v339
    %v1270 = vunpack.c.l.b16 %v340
    %v1271 = vunpack.c.h.b16 %v340
    %v1272 = vunpack.c.l.b16 %v341
    %v1273 = vunpack.c.h.b16 %v341
    %v1274 = vunpack.c.l.b16 %v342
    %v1275 = vunpack.c.h.b16 %v342
    %v1276 = vunpack.c.l.b16 %v343
    %v1277 = vunpack.c.h.b16 %v343
    %v1278 = vunpack.c.l.b16 %v344
    %v1279 = vunpack.c.h.b16 %v344
    %v1280 = vunpack.c.l.b16 %v345
    %v1281 = vunpack.c.h.b16 %v345
    %v1282 = vunpack.c.l.b16 %v346
    %v1283 = vunpack.c.h.b16 %v346
    %v1284 = vunpack.c.l.b16 %v347
    %v1285 = vunpack.c.h.b16 %v347
    %v1286 = vunpack.c.l.b16 %v348
    %v1287 = vunpack.c.h.b16 %v348
    %v1288 = vunpack.c.l.b16 %v349
    %v1289 = vunpack.c.h.b16 %v349
    %v1290 = vunpack.c.l.b16 %v350
    %v1291 = vunpack.c.h.b16 %v350
    %v1292 = vunpack.c.l.b16 %v351
    %v1293 = vunpack.c.h.b16 %v351
    %v1294 = vunpack.c.l.b16 %v352
    %v1295 = vunpack.c.h.b16 %v352
    %v1296 = vunpack.c.l.b16 %v353
    %v1297 = vunpack.c.h.b16 %v353
    %v1298 = vunpack.c.l.b16 %v354
    %v1299 = vunpack.c.h.b16 %v354
    %v1300 = vunpack.c.l.b16 %v355
    %v1301 = vunpack.c.h.b16 %v355
    %v1302 = vunpack.c.l.b16 %v356
    %v1303 = vunpack.c.h.b16 %v356
    %v1304 = vunpack.c.l.b16 %v357
    %v1305 = vunpack.c.h.b16 %v357
    %v1306 = vunpack.c.l.b16 %v358
    %v1307 = vunpack.c.h.b16 %v358
    %v1308 = vunpack.c.l.b16 %v359
    %v1309 = vunpack.c.h.b16 %v359
    %v1310 = vunpack.c.l.b16 %v360
    %v1311 = vunpack.c.h.b16 %v360
    %v1312 = vunpack.c.l.b16 %v361
    %v1313 = vunpack.c.h.b16 %v361
    %v1314 = vunpack.c.l.b16 %v362
    %v1315 = vunpack.c.h.b16 %v362
    %v1316 = vunpack.c.l.b16 %v363
    %v1317 = vunpack.c.h.b16 %v363
    %v1318 = vunpack.c.l.b16 %v364
    %v1319 = vunpack.c.h.b16 %v364
    %v1320 = vunpack.c.l.b16 %v365
    %v1321 = vunpack.c.h.b16 %v365
    %v1322 = vunpack.c.l.b16 %v366
    %v1323 = vunpack.c.h.b16 %v366
    %v1324 = vunpack.c.l.b16 %v367
    %v1325 = vunpack.c.h.b16 %v367
    %v1326 = vunpack.c.l.b16 %v368
    %v1327 = vunpack.c.h.b16 %v368
    %v1328 = vunpack.c.l.b16 %v369
    %v1329 = vunpack.c.h.b16 %v369
    %v1330 = vunpack.c.l.b16 %v370
    %v1331 = vunpack.c.h.b16 %v370
    %v1332 = vunpack.c.l.b16 %v371
    %v1333 = vunpack.c.h.b16 %v371
    %v1334 = vunpack.c.l.b16 %v372
    %v1335 = vunpack.c.h.b16 %v372
    %v1336 = vunpack.c.l.b16 %v373
    %v1337 = vunpack.c.h.b16 %v373
    %v1338 = vunpack.c.l.b16 %v374
    %v1339 = vunpack.c.h.b16 %v374
    %v1340 = vunpack.c.l.b16 %v375
    %v1341 = vunpack.c.h.b16 %v375
    %v1342 = vunpack.c.l.b16 %v376
    %v1343 = vunpack.c.h.b16 %v376
    %v1344 = vunpack.c.l.b16 %v377
    %v1345 = vunpack.c.h.b16 %v377
    %v1346 = vunpack.c.l.b16 %v378
    %v1347 = vunpack.c.h.b16 %v378
    %v1348 = vunpack.c.l.b16 %v379
    %v1349 = vunpack.c.h.b16 %v379
    %v1350 = vunpack.c.l.b16 %v380
    %v1351 = vunpack.c.h.b16 %v380
    %v1352 = vunpack.c.l.b16 %v381
    %v1353 = vunpack.c.h.b16 %v381
    %v1354 = vunpack.c.l.b16 %v382
    %v1355 = vunpack.c.h.b16 %v382
    %v1356 = vunpack.c.l.b16 %v383
    %v1357 = vunpack.c.h.b16 %v383
    %v1358 = vunpack.c.l.b16 %v384
    %v1359 = vunpack.c.h.b16 %v384
    %v1360 = vunpack.c.l.b16 %v385
    %v1361 = vunpack.c.h.b16 %v385
    %v1362 = vunpack.c.l.b16 %v386
    %v1363 = vunpack.c.h.b16 %v386
    %v1364 = vunpack.c.l.b16 %v387
    %v1365 = vunpack.c.h.b16 %v387
    %v1366 = vunpack.c.l.b16 %v388
    %v1367 = vunpack.c.h.b16 %v388
    %v1368 = vunpack.c.l.b16 %v389
    %v1369 = vunpack.c.h.b16 %v389
    %v1370 = vunpack.c.l.b16 %v390
    %v1371 = vunpack.c.h.b16 %v390
    %v1372 = vunpack.c.l.b16 %v391
    %v1373 = vunpack.c.h.b16 %v391
    %v1374 = vunpack.c.l.b16 %v392
    %v1375 = vunpack.c.h.b16 %v392
    %v1376 = vunpack.c.l.b16 %v393
    %v1377 = vunpack.c.h.b16 %v393
    %v1378 = vunpack.c.l.b16 %v394
    %v1379 = vunpack.c.h.b16 %v394
    %v1380 = vunpack.c.l.b16 %v395
    %v1381 = vunpack.c.h.b16 %v395
    %v1382 = vunpack.c.l.b16 %v396
    %v1383 = vunpack.c.h.b16 %v396
    %v1384 = vunpack.c.l.b16 %v397
    %v1385 = vunpack.c.h.b16 %v397
    %v1386 = vunpack.c.l.b16 %v398
    %v1387 = vunpack.c.h.b16 %v398
    %v1388 = vunpack.c.l.b16 %v399
    %v1389 = vunpack.c.h.b16 %v399
    %v1390 = vunpack.c.l.b16 %v400
    %v1391 = vunpack.c.h.b16 %v400
    %v1392 = vunpack.c.l.b16 %v401
    %v1393 = vunpack.c.h.b16 %v401
    %v1394 = vunpack.c.l.b16 %v402
    %v1395 = vunpack.c.h.b16 %v402
    %v1396 = vunpack.c.l.b16 %v403
    %v1397 = vunpack.c.h.b16 %v403
    %v1398 = vunpack.c.l.b16 %v404
    %v1399 = vunpack.c.h.b16 %v404
    %v1400 = vunpack.c.l.b16 %v405
    %v1401 = vunpack.c.h.b16 %v405
    %v1402 = vunpack.c.l.b16 %v406
    %v1403 = vunpack.c.h.b16 %v406
    %v1404 = vunpack.c.l.b16 %v407
    %v1405 = vunpack.c.h.b16 %v407
    %v1406 = vunpack.c.l.b16 %v408
    %v1407 = vunpack.c.h.b16 %v408
    %v1408 = vunpack.c.l.b16 %v409
    %v1409 = vunpack.c.h.b16 %v409
    %v1410 = vunpack.c.l.b16 %v410
    %v1411 = vunpack.c.h.b16 %v410
    %v1412 = vunpack.c.l.b16 %v411
    %v1413 = vunpack.c.h.b16 %v411
    %v1414 = vunpack.c.l.b16 %v412
    %v1415 = vunpack.c.h.b16 %v412
    %v1416 = vunpack.c.l.b16 %v413
    %v1417 = vunpack.c.h.b16 %v413
    %v1418 = vunpack.c.l.b16 %v414
    %v1419 = vunpack.c.h.b16 %v414
    %v1420 = vunpack.c.l.b16 %v415
    %v1421 = vunpack.c.h.b16 %v415
    %v1422 = vunpack.c.l.b16 %v416
    %v1423 = vunpack.c.h.b16 %v416
    %v1424 = vunpack.c.l.b16 %v417
    %v1425 = vunpack.c.h.b16 %v417
    %v1426 = vunpack.c.l.b16 %v418
    %v1427 = vunpack.c.h.b16 %v418
    %v1428 = vunpack.c.l.b16 %v419
    %v1429 = vunpack.c.h.b16 %v419
    %v1430 = vunpack.c.l.b16 %v420
    %v1431 = vunpack.c.h.b16 %v420
    %v1432 = vunpack.c.l.b16 %v421
    %v1433 = vunpack.c.h.b16 %v421
    %v1434 = vunpack.c.l.b16 %v422
    %v1435 = vunpack.c.h.b16 %v422
    %v1436 = vunpack.c.l.b16 %v423
    %v1437 = vunpack.c.h.b16 %v423
    %v1438 = vunpack.c.l.b16 %v424
    %v1439 = vunpack.c.h.b16 %v424
    %v1440 = vunpack.c.l.b16 %v425
    %v1441 = vunpack.c.h.b16 %v425
    %v1442 = vunpack.c.l.b16 %v426
    %v1443 = vunpack.c.h.b16 %v426
    %v1444 = vunpack.c.l.b16 %v427
    %v1445 = vunpack.c.h.b16 %v427
    %v1446 = vunpack.c.l.b16 %v428
    %v1447 = vunpack.c.h.b16 %v428
    %v1448 = vunpack.c.l.b16 %v429
    %v1449 = vunpack.c.h.b16 %v429
    %v1450 = vunpack.c.l.b16 %v430
    %v1451 = vunpack.c.h.b16 %v430
    %v1452 = vunpack.c.l.b16 %v431
    %v1453 = vunpack.c.h.b16 %v431
    %v1454 = vunpack.c.l.b16 %v432
    %v1455 = vunpack.c.h.b16 %v432
    %v1456 = vunpack.c.l.b16 %v433
    %v1457 = vunpack.c.h.b16 %v433
    %v1458 = vunpack.c.l.b16 %v434
    %v1459 = vunpack.c.h.b16 %v434
    %v1460 = vunpack.c.l.b16 %v435
    %v1461 = vunpack.c.h.b16 %v435
    %v1462 = vunpack.c.l.b16 %v436
    %v1463 = vunpack.c.h.b16 %v436
    %v1464 = vunpack.c.l.b16 %v437
    %v1465 = vunpack.c.h.b16 %v437
    %v1466 = vunpack.c.l.b16 %v438
    %v1467 = vunpack.c.h.b16 %v438
    %v1468 = vunpack.c.l.b16 %v439
    %v1469 = vunpack.c.h.b16 %v439
    %v1470 = vunpack.c.l.b16 %v440
    %v1471 = vunpack.c.h.b16 %v440
    %v1472 = vunpack.c.l.b16 %v441
    %v1473 = vunpack.c.h.b16 %v441
    %v1474 = vunpack.c.l.b16 %v442
    %v1475 = vunpack.c.h.b16 %v442
    %v1476 = vunpack.c.l.b16 %v443
    %v1477 = vunpack.c.h.b16 %v443
    %v1478 = vunpack.c.l.b16 %v444
    %v1479 = vunpack.c.h.b16 %v444
    %v1480 = vunpack.c.l.b16 %v445
    %v1481 = vunpack.c.h.b16 %v445
    %v1482 = vunpack.c.l.b16 %v446
    %v1483 = vunpack.c.h.b16 %v446
    %v1484 = vunpack.c.l.b16 %v447
    %v1485 = vunpack.c.h.b16 %v447
    %v1486 = vunpack.c.l.b16 %v448
    %v1487 = vunpack.c.h.b16 %v448
    %v1488 = vunpack.c.l.b16 %v449
    %v1489 = vunpack.c.h.b16 %v449
    %v1490 = vunpack.c.l.b16 %v450
    %v1491 = vunpack.c.h.b16 %v450
    %v1492 = vunpack.c.l.b16 %v451
    %v1493 = vunpack.c.h.b16 %v451
    %v1494 = vunpack.c.l.b16 %v452
    %v1495 = vunpack.c.h.b16 %v452
    %v1496 = vunpack.c.l.b16 %v453
    %v1497 = vunpack.c.h.b16 %v453
    %v1498 = vunpack.c.l.b16 %v454
    %v1499 = vunpack.c.h.b16 %v454
    %v1500 = vunpack.c.l.b16 %v455
    %v1501 = vunpack.c.h.b16 %v455
    %v1502 = vunpack.c.l.b16 %v456
    %v1503 = vunpack.c.h.b16 %v456
    %v1504 = vunpack.c.l.b16 %v457
    %v1505 = vunpack.c.h.b16 %v457
    %v1506 = vunpack.c.l.b16 %v458
    %v1507 = vunpack.c.h.b16 %v458
    %v1508 = vunpack.c.l.b16 %v459
    %v1509 = vunpack.c.h.b16 %v459
    %v1510 = vunpack.c.l.b16 %v460
    %v1511 = vunpack.c.h.b16 %v460
    %v1512 = vunpack.c.l.b16 %v461
    %v1513 = vunpack.c.h.b16 %v461
    %v1514 = vunpack.c.l.b16 %v462
    %v1515 = vunpack.c.h.b16 %v462
    %v1516 = vunpack.c.l.b16 %v463
    %v1517 = vunpack.c.h.b16 %v463
    %v1518 = vunpack.c.l.b16 %v464
    %v1519 = vunpack.c.h.b16 %v464
    %v1520 = vunpack.c.l.b16 %v465
    %v1521 = vunpack.c.h.b16 %v465
    %v1522 = vunpack.c.l.b16 %v466
    %v1523 = vunpack.c.h.b16 %v466
    %v1524 = vunpack.c.l.b16 %v467
    %v1525 = vunpack.c.h.b16 %v467
    %v1526 = vunpack.c.l.b16 %v468
    %v1527 = vunpack.c.h.b16 %v468
    %v1528 = vunpack.c.l.b16 %v469
    %v1529 = vunpack.c.h.b16 %v469
    %v1530 = vunpack.c.l.b16 %v470
    %v1531 = vunpack.c.h.b16 %v470
    %v1532 = vunpack.c.l.b16 %v471
    %v1533 = vunpack.c.h.b16 %v471
    %v1534 = vunpack.c.l.b16 %v472
    %v1535 = vunpack.c.h.b16 %v472
    %v1536 = vunpack.c.l.b16 %v473
    %v1537 = vunpack.c.h.b16 %v473
    %v1538 = vunpack.c.l.b16 %v474
    %v1539 = vunpack.c.h.b16 %v474
    %v1540 = vunpack.c.l.b16 %v475
    %v1541 = vunpack.c.h.b16 %v475
    %v1542 = vunpack.c.l.b16 %v476
    %v1543 = vunpack.c.h.b16 %v476
    %v1544 = vunpack.c.l.b16 %v477
    %v1545 = vunpack.c.h.b16 %v477
    %v1546 = vunpack.c.l.b16 %v478
    %v1547 = vunpack.c.h.b16 %v478
    %v1548 = vunpack.c.l.b16 %v479
    %v1549 = vunpack.c.h.b16 %v479
    %v1550 = vunpack.c.l.b16 %v480
    %v1551 = vunpack.c.h.b16 %v480
    %v1552 = vunpack.c.l.b16 %v481
    %v1553 = vunpack.c.h.b16 %v481
    %v1554 = vunpack.c.l.b16 %v482
    %v1555 = vunpack.c.h.b16 %v482
    %v1556 = vunpack.c.l.b16 %v483
    %v1557 = vunpack.c.h.b16 %v483
    %v1558 = vunpack.c.l.b16 %v484
    %v1559 = vunpack.c.h.b16 %v484
    %v1560 = vunpack.c.l.b16 %v485
    %v1561 = vunpack.c.h.b16 %v485
    %v1562 = vunpack.c.l.b16 %v486
    %v1563 = vunpack.c.h.b16 %v486
    %v1564 = vunpack.c.l.b16 %v487
    %v1565 = vunpack.c.h.b16 %v487
    %v1566 = vunpack.c.l.b16 %v488
    %v1567 = vunpack.c.h.b16 %v488
    %v1568 = vunpack.c.l.b16 %v489
    %v1569 = vunpack.c.h.b16 %v489
    %v1570 = vunpack.c.l.b16 %v490
    %v1571 = vunpack.c.h.b16 %v490
    %v1572 = vunpack.c.l.b16 %v491
    %v1573 = vunpack.c.h.b16 %v491
    %v1574 = vunpack.c.l.b16 %v492
    %v1575 = vunpack.c.h.b16 %v492
    %v1576 = vunpack.c.l.b16 %v493
    %v1577 = vunpack.c.h.b16 %v493
    %v1578 = vunpack.c.l.b16 %v494
    %v1579 = vunpack.c.h.b16 %v494
    %v1580 = vunpack.c.l.b16 %v495
    %v1581 = vunpack.c.h.b16 %v495
    %v1582 = vunpack.c.l.b16 %v496
    %v1583 = vunpack.c.h.b16 %v496
    %v1584 = vunpack.c.l.b16 %v497
    %v1585 = vunpack.c.h.b16 %v497
    %v1586 = vunpack.c.l.b16 %v498
    %v1587 = vunpack.c.h.b16 %v498
    %v1588 = vunpack.c.l.b16 %v499
    %v1589 = vunpack.c.h.b16 %v499
    %v1590 = vunpack.c.l.b16 %v500
    %v1591 = vunpack.c.h.b16 %v500
    %v1592 = vunpack.c.l.b16 %v501
    %v1593 = vunpack.c.h.b16 %v501
    %v1594 = vunpack.c.l.b16 %v502
    %v1595 = vunpack.c.h.b16 %v502
    %v1596 = vunpack.c.l.b16 %v503
    %v1597 = vunpack.c.h.b16 %v503
    %v1598 = vunpack.c.l.b16 %v504
    %v1599 = vunpack.c.h.b16 %v504
    %v1600 = vunpack.c.l.b16 %v505
    %v1601 = vunpack.c.h.b16 %v505
    %v1602 = vunpack.c.l.b16 %v506
    %v1603 = vunpack.c.h.b16 %v506
    %v1604 = vunpack.c.l.b16 %v507
    %v1605 = vunpack.c.h.b16 %v507
    %v1606 = vunpack.c.l.b16 %v508
    %v1607 = vunpack.c.h.b16 %v508
    %v1608 = vunpack.c.l.b16 %v509
    %v1609 = vunpack.c.h.b16 %v509
    %v1610 = vunpack.c.l.b16 %v510
    %v1611 = vunpack.c.h.b16 %v510
    %v1612 = vunpack.c.l.b16 %v511
    %v1613 = vunpack.c.h.b16 %v511
    %v1614 = vunpack.c.l.b16 %v512
    %v1615 = vunpack.c.h.b16 %v512
    %v1616 = vunpack.c.l.b16 %v513
    %v1617 = vunpack.c.h.b16 %v513
    %v1618 = vunpack.c.l.b16 %v514
    %v1619 = vunpack.c.h.b16 %v514
    %v1620 = vunpack.c.l.b16 %v515
    %v1621 = vunpack.c.h.b16 %v515
    %v1622 = vunpack.c.l.b16 %v516
    %v1623 = vunpack.c.h.b16 %v516
    %v1624 = vunpack.c.l.b16 %v517
    %v1625 = vunpack.c.h.b16 %v517
    %v1626 = vunpack.c.l.b16 %v518
    %v1627 = vunpack.c.h.b16 %v518
    %v1628 = vunpack.c.l.b16 %v519
    %v1629 = vunpack.c.h.b16 %v519
    %v1630 = vunpack.c.l.b16 %v520
    %v1631 = vunpack.c.h.b16 %v520
    %v1632 = vunpack.c.l.b16 %v521
    %v1633 = vunpack.c.h.b16 %v521
    %v1634 = vunpack.c.l.b16 %v522
    %v1635 = vunpack.c.h.b16 %v522
    %v1636 = vunpack.c.l.b16 %v523
    %v1637 = vunpack.c.h.b16 %v523
    %v1638 = vunpack.c.l.b16 %v524
    %v1639 = vunpack.c.h.b16 %v524
    %v1640 = vunpack.c.l.b16 %v525
    %v1641 = vunpack.c.h.b16 %v525
    %v1642 = vunpack.c.l.b16 %v526
    %v1643 = vunpack.c.h.b16 %v526
    %v1644 = vunpack.c.l.b16 %v527
    %v1645 = vunpack.c.h.b16 %v527
    %v1646 = vunpack.c.l.b16 %v528
    %v1647 = vunpack.c.h.b16 %v528
    %v1648 = vunpack.c.l.b16 %v529
    %v1649 = vunpack.c.h.b16 %v529
    %v1650 = vunpack.c.l.b16 %v530
    %v1651 = vunpack.c.h.b16 %v530
    %v1652 = vunpack.c.l.b16 %v531
    %v1653 = vunpack.c.h.b16 %v531
    %v1654 = vunpack.c.l.b16 %v532
    %v1655 = vunpack.c.h.b16 %v532
    %v1656 = vunpack.c.l.b16 %v533
    %v1657 = vunpack.c.h.b16 %v533
    %v1658 = vunpack.c.l.b16 %v534
    %v1659 = vunpack.c.h.b16 %v534
    %v1660 = vunpack.c.l.b16 %v535
    %v1661 = vunpack.c.h.b16 %v535
    %v1662 = vunpack.c.l.b16 %v536
    %v1663 = vunpack.c.h.b16 %v536
    %v1664 = vunpack.c.l.b16 %v537
    %v1665 = vunpack.c.h.b16 %v537
    %v1666 = vunpack.c.l.b16 %v538
    %v1667 = vunpack.c.h.b16 %v538
    %v1668 = vunpack.c.l.b16 %v539
    %v1669 = vunpack.c.h.b16 %v539
    %v1670 = vunpack.c.l.b16 %v540
    %v1671 = vunpack.c.h.b16 %v540
    %v1672 = vunpack.c.l.b16 %v541
    %v1673 = vunpack.c.h.b16 %v541
    %v1674 = vunpack.c.l.b16 %v542
    %v1675 = vunpack.c.h.b16 %v542
    %v1676 = vunpack.c.l.b16 %v543
    %v1677 = vunpack.c.h.b16 %v543
    %v1678 = vunpack.c.l.b16 %v544
    %v1679 = vunpack.c.h.b16 %v544
    %v1680 = vunpack.c.l.b16 %v545
    %v1681 = vunpack.c.h.b16 %v545
    %v1682 = vunpack.c.l.b16 %v546
    %v1683 = vunpack.c.h.b16 %v546
    %v1684 = vunpack.c.l.b16 %v547
    %v1685 = vunpack.c.h.b16 %v547
    %v1686 = vunpack.c.l.b16 %v548
    %v1687 = vunpack.c.h.b16 %v548
    %v1688 = vunpack.c.l.b16 %v549
    %v1689 = vunpack.c.h.b16 %v549
    %v1690 = vunpack.c.l.b16 %v550
    %v1691 = vunpack.c.h.b16 %v550
    %v1692 = vunpack.c.l.b16 %v551
    %v1693 = vunpack.c.h.b16 %v551
    %v1694 = vunpack.c.l.b16 %v552
    %v1695 = vunpack.c.h.b16 %v552
    %v1696 = vunpack.c.l.b16 %v553
    %v1697 = vunpack.c.h.b16 %v553
    %v1698 = vunpack.c.l.b16 %v554
    %v1699 = vunpack.c.h.b16 %v554
    %v1700 = vunpack.c.l.b16 %v555
    %v1701 = vunpack.c.h.b16 %v555
    %v1702 = vunpack.c.l.b16 %v556
    %v1703 = vunpack.c.h.b16 %v556
    %v1704 = vunpack.c.l.b16 %v557
    %v1705 = vunpack.c.h.b16 %v557
    %v1706 = vunpack.c.l.b16 %v558
    %v1707 = vunpack.c.h.b16 %v558
    %v1708 = vunpack.c.l.b16 %v559
    %v1709 = vunpack.c.h.b16 %v559
    %v1710 = vunpack.c.l.b16 %v560
    %v1711 = vunpack.c.h.b16 %v560
    %v1712 = vunpack.c.l.b16 %v561
    %v1713 = vunpack.c.h.b16 %v561
    %v1714 = vunpack.c.l.b16 %v562
    %v1715 = vunpack.c.h.b16 %v562
    %v1716 = vunpack.c.l.b16 %v563
    %v1717 = vunpack.c.h.b16 %v563
    %v1718 = vunpack.c.l.b16 %v564
    %v1719 = vunpack.c.h.b16 %v564
    %v1720 = vunpack.c.l.b16 %v565
    %v1721 = vunpack.c.h.b16 %v565
    %v1722 = vunpack.c.l.b16 %v566
    %v1723 = vunpack.c.h.b16 %v566
    %v1724 = vunpack.c.l.b16 %v567
    %v1725 = vunpack.c.h.b16 %v567
    %v1726 = vunpack.c.l.b16 %v568
    %v1727 = vunpack.c.h.b16 %v568
    %v1728 = vunpack.c.l.b16 %v569
    %v1729 = vunpack.c.h.b16 %v569
    %v1730 = vunpack.c.l.b16 %v570
    %v1731 = vunpack.c.h.b16 %v570
    %v1732 = vunpack.c.l.b16 %v571
    %v1733 = vunpack.c.h.b16 %v571
    %v1734 = vunpack.c.l.b16 %v572
    %v1735 = vunpack.c.h.b16 %v572
    %v1736 = vunpack.c.l.b16 %v573
    %v1737 = vunpack.c.h.b16 %v573
    %v1738 = vunpack.c.l.b16 %v574
    %v1739 = vunpack.c.h.b16 %v574
    %v1740 = vunpack.c.l.b16 %v575
    %v1741 = vunpack.c.h.b16 %v575
    %v1742 = vunpack.c.l.b16 %v576
    %v1743 = vunpack.c.h.b16 %v576
    %v1744 = vunpack.c.l.b16 %v577
    %v1745 = vunpack.c.h.b16 %v577
    %v1746 = vunpack.c.l.b16 %v578
    %v1747 = vunpack.c.h.b16 %v578
    %v1748 = vunpack.c.l.b16 %v579
    %v1749 = vunpack.c.h.b16 %v579
    %v1750 = vunpack.c.l.b16 %v580
    %v1751 = vunpack.c.h.b16 %v580
    %v1752 = vunpack.c.l.b16 %v581
    %v1753 = vunpack.c.h.b16 %v581
    %v1754 = vunpack.c.l.b16 %v582
    %v1755 = vunpack.c.h.b16 %v582
    %v1756 = vunpack.c.l.b16 %v583
    %v1757 = vunpack.c.h.b16 %v583
    %v1758 = vunpack.c.l.b16 %v584
    %v1759 = vunpack.c.h.b16 %v584
    %v1760 = vunpack.c.l.b16 %v585
    %v1761 = vunpack.c.h.b16 %v585
    %v1762 = vunpack.c.l.b16 %v586
    %v1763 = vunpack.c.h.b16 %v586
    %v1764 = vunpack.c.l.b16 %v587
    %v1765 = vunpack.c.h.b16 %v587
    %v1766 = vunpack.c.l.b16 %v588
    %v1767 = vunpack.c.h.b16 %v588
    %v1768 = vunpack.c.l.b16 %v589
    %v1769 = vunpack.c.h.b16 %v589
    %v1770 = vunpack.c.l.b16 %v590
    %v1771 = vunpack.c.h.b16 %v590
    %v1772 = vunpack.c.l.b16 %v591
    %v1773 = vunpack.c.h.b16 %v591
    %v1774 = vunpack.c.l.b16 %v592
    %v1775 = vunpack.c.h.b16 %v592
    %v1776 = vunpack.c.l.b16 %v593
    %v1777 = vunpack.c.h.b16 %v593
    %v1778 = vunpack.c.l.b16 %v594
    %v1779 = vunpack.c.h.b16 %v594
    %v1780 = vunpack.c.l.b16 %v595
    %v1781 = vunpack.c.h.b16 %v595
    %v1782 = vunpack.c.l.b16 %v596
    %v1783 = vunpack.c.h.b16 %v596
    %v1784 = vunpack.c.l.b16 %v597
    %v1785 = vunpack.c.h.b16 %v597
    %v1786 = vunpack.c.l.b16 %v598
    %v1787 = vunpack.c.h.b16 %v598
    %v1788 = vunpack.c.l.b16 %v599
    %v1789 = vunpack.c.h.b16 %v599
    %v1790 = vunpack.c.l.b16 %v600
    %v1791 = vunpack.c.h.b16 %v600
    %v1792 = vunpack.c.l.b16 %v601
    %v1793 = vunpack.c.h.b16 %v601
    %v1794 = vunpack.c.l.b16 %v602
    %v1795 = vunpack.c.h.b16 %v602
    %v1796 = vunpack.c.l.b16 %v603
    %v1797 = vunpack.c.h.b16 %v603
    %v1798 = vunpack.c.l.b16 %v604
    %v1799 = vunpack.c.h.b16 %v604
    %v1800 = vunpack.c.l.b16 %v605
    %v1801 = vunpack.c.h.b16 %v605
    %v1802 = vunpack.c.l.b16 %v606
    %v1803 = vunpack.c.h.b16 %v606
    %v1804 = vunpack.c.l.b16 %v607
    %v1805 = vunpack.c.h.b16 %v607
    %v1806 = vunpack.c.l.b16 %v608
    %v1807 = vunpack.c.h.b16 %v608
    %v1808 = vunpack.c.l.b16 %v609
    %v1809 = vunpack.c.h.b16 %v609
    %v1810 = vunpack.c.l.b16 %v610
    %v1811 = vunpack.c.h.b16 %v610
    %v1812 = vunpack.c.l.b16 %v611
    %v1813 = vunpack.c.h.b16 %v611
    %v1814 = vunpack.c.l.b16 %v612
    %v1815 = vunpack.c.h.b16 %v612
    %v1816 = vunpack.c.l.b16 %v613
    %v1817 = vunpack.c.h.b16 %v613
    %v1818 = vunpack.c.l.b16 %v614
    %v1819 = vunpack.c.h.b16 %v614
    %v1820 = vunpack.c.l.b16 %v615
    %v1821 = vunpack.c.h.b16 %v615
    %v1822 = vunpack.c.l.b16 %v616
    %v1823 = vunpack.c.h.b16 %v616
    %v1824 = vunpack.c.l.b16 %v617
    %v1825 = vunpack.c.h.b16 %v617
    %v1826 = vunpack.c.l.b16 %v618
    %v1827 = vunpack.c.h.b16 %v618
    %v1828 = vunpack.c.l.b16 %v619
    %v1829 = vunpack.c.h.b16 %v619
    %v1830 = vunpack.c.l.b16 %v620
    %v1831 = vunpack.c.h.b16 %v620
    %v1832 = vunpack.c.l.b16 %v621
    %v1833 = vunpack.c.h.b16 %v621
    %v1834 = vunpack.c.l.b16 %v622
    %v1835 = vunpack.c.h.b16 %v622
    %v1836 = vunpack.c.l.b16 %v623
    %v1837 = vunpack.c.h.b16 %v623
    %v1838 = vunpack.c.l.b16 %v624
    %v1839 = vunpack.c.h.b16 %v624
    %v1840 = vunpack.c.l.b16 %v625
    %v1841 = vunpack.c.h.b16 %v625
    %v1842 = vunpack.c.l.b16 %v626
    %v1843 = vunpack.c.h.b16 %v626
    %v1844 = vunpack.c.l.b16 %v627
    %v1845 = vunpack.c.h.b16 %v627
    %v1846 = vunpack.c.l.b16 %v628
    %v1847 = vunpack.c.h.b16 %v628
    %v1848 = vunpack.c.l.b16 %v629
    %v1849 = vunpack.c.h.b16 %v629
    %v1850 = vunpack.c.l.b16 %v630
    %v1851 = vunpack.c.h.b16 %v630
    %v1852 = vunpack.c.l.b16 %v631
    %v1853 = vunpack.c.h.b16 %v631
    %v1854 = vunpack.c.l.b16 %v632
    %v1855 = vunpack.c.h.b16 %v632
    %v1856 = vunpack.c.l.b16 %v633
    %v1857 = vunpack.c.h.b16 %v633
    %v1858 = vunpack.c.l.b16 %v634
    %v1859 = vunpack.c.h.b16 %v634
    %v1860 = vunpack.c.l.b16 %v635
    %v1861 = vunpack.c.h.b16 %v635
    %v1862 = vunpack.c.l.b16 %v636
    %v1863 = vunpack.c.h.b16 %v636
    %v1864 = vunpack.c.l.b16 %v637
    %v1865 = vunpack.c.h.b16 %v637
    %v1866 = vunpack.c.l.b16 %v638
    %v1867 = vunpack.c.h.b16 %v638
    %v1868 = vunpack.c.l.b16 %v639
    %v1869 = vunpack.c.h.b16 %v639
    %v1870 = vunpack.c.l.b16 %v640
    %v1871 = vunpack.c.h.b16 %v640
    %v1872 = vunpack.c.l.b16 %v641
    %v1873 = vunpack.c.h.b16 %v641
    %v1874 = vunpack.c.l.b16 %v642
    %v1875 = vunpack.c.h.b16 %v642
    %v1876 = vunpack.c.l.b16 %v643
    %v1877 = vunpack.c.h.b16 %v643
    %v1878 = vunpack.c.l.b16 %v644
    %v1879 = vunpack.c.h.b16 %v644
    %v1880 = vunpack.c.l.b16 %v645
    %v1881 = vunpack.c.h.b16 %v645
    %v1882 = vunpack.c.l.b16 %v646
    %v1883 = vunpack.c.h.b16 %v646
    %v1884 = vunpack.c.l.b16 %v647
    %v1885 = vunpack.c.h.b16 %v647
    %v1886 = vunpack.c.l.b16 %v648
    %v1887 = vunpack.c.h.b16 %v648
    %v1888 = vunpack.c.l.b16 %v649
    %v1889 = vunpack.c.h.b16 %v649
    %v1890 = vunpack.c.l.b16 %v650
    %v1891 = vunpack.c.h.b16 %v650
    %v1892 = vunpack.c.l.b16 %v651
    %v1893 = vunpack.c.h.b16 %v651
    %v1894 = vunpack.c.l.b16 %v652
    %v1895 = vunpack.c.h.b16 %v652
    %v1896 = vunpack.c.l.b16 %v653
    %v1897 = vunpack.c.h.b16 %v653
    %v1898 = vunpack.c.l.b16 %v654
    %v1899 = vunpack.c.h.b16 %v654
    %v1900 = vunpack.c.l.b16 %v655
    %v1901 = vunpack.c.h.b16 %v655
    %v1902 = vunpack.c.l.b16 %v656
    %v1903 = vunpack.c.h.b16 %v656
    %v1904 = vunpack.c.l.b16 %v657
    %v1905 = vunpack.c.h.b16 %v657
    %v1906 = vunpack.c.l.b16 %v658
    %v1907 = vunpack.c.h.b16 %v658
    %v1908 = vunpack.c.l.b16 %v659
    %v1909 = vunpack.c.h.b16 %v659
    %v1910 = vunpack.c.l.b16 %v660
    %v1911 = vunpack.c.h.b16 %v660
    %v1912 = vunpack.c.l.b16 %v661
    %v1913 = vunpack.c.h.b16 %v661
    %v1914 = vunpack.c.l.b16 %v662
    %v1915 = vunpack.c.h.b16 %v662
    %v1916 = vpack.c.b16 %v1140, %v1132
    %v1917 = vpack.c.b16 %v1141, %v1133
    %v1918 = vpack.c.b16 %v1142, %v1134
    %v1919 = vpack.c.b16 %v1143, %v1135
    %v1920 = vpack.c.b16 %v1144, %v1136
    %v1921 = vpack.c.b16 %v1145, %v1137
    %v1922 = vpack.c.b16 %v1146, %v1138
    %v1923 = vpack.c.b16 %v1147, %v1139
    %v1924 = vpack.c.b16 %v1156, %v1148
    %v1925 = vpack.c.b16 %v1157, %v1149
    %v1926 = vpack.c.b16 %v1158, %v1150
    %v1927 = vpack.c.b16 %v1159, %v1151
    %v1928 = vpack.c.b16 %v1160, %v1152
    %v1929 = vpack.c.b16 %v1161, %v1153
    %v1930 = vpack.c.b16 %v1162, %v1154
    %v1931 = vpack.c.b16 %v1163, %v1155
    %v1932 = vpack.c.b16 %v1172, %v1164
    %v1933 = vpack.c.b16 %v1173, %v1165
    %v1934 = vpack.c.b16 %v1174, %v1166
    %v1935 = vpack.c.b16 %v1175, %v1167
    %v1936 = vpack.c.b16 %v1176, %v1168
    %v1937 = vpack.c.b16 %v1177, %v1169
    %v1938 = vpack.c.b16 %v1178, %v1170
    %v1939 = vpack.c.b16 %v1179, %v1171
    %v1940 = vpack.c.b16 %v1188, %v1180
    %v1941 = vpack.c.b16 %v1189, %v1181
    %v1942 = vpack.c.b16 %v1190, %v1182
    %v1943 = vpack.c.b16 %v1191, %v1183
    %v1944 = vpack.c.b16 %v1192, %v1184
    %v1945 = vpack.c.b16 %v1193, %v1185
    %v1946 = vpack.c.b16 %v1194, %v1186
    %v1947 = vpack.c.b16 %v1195, %v1187
    %v1948 = vpack.c.b16 %v1204, %v1196
    %v1949 = vpack.c.b16 %v1205, %v1197
    %v1950 = vpack.c.b16 %v1206, %v1198
    %v1951 = vpack.c.b16 %v1207, %v1199
    %v1952 = vpack.c.b16 %v1208, %v1200
    %v1953 = vpack.c.b16 %v1209, %v1201
    %v1954 = vpack.c.b16 %v1210, %v1202
    %v1955 = vpack.c.b16 %v1211, %v1203
    %v1956 = vpack.c.b16 %v1220, %v1212
    %v1957 = vpack.c.b16 %v1221, %v1213
    %v1958 = vpack.c.b16 %v1222, %v1214
    %v1959 = vpack.c.b16 %v1223, %v1215
    %v1960 = vpack.c.b16 %v1224, %v1216
    %v1961 = vpack.c.b16 %v1225, %v1217
    %v1962 = vpack.c.b16 %v1226, %v1218
    %v1963 = vpack.c.b16 %v1227, %v1219
    %v1964 = vpack.c.b16 %v1236, %v1228
    %v1965 = vpack.c.b16 %v1237, %v1229
    %v1966 = vpack.c.b16 %v1238, %v1230
    %v1967 = vpack.c.b16 %v1239, %v1231
    %v1968 = vpack.c.b16 %v1240, %v1232
    %v1969 = vpack.c.b16 %v1241, %v1233
    %v1970 = vpack.c.b16 %v1242, %v1234
    %v1971 = vpack.c.b16 %v1243, %v1235
    %v1972 = vpack.c.b16 %v1252, %v1244
    %v1973 = vpack.c.b16 %v1253, %v1245
    %v1974 = vpack.c.b16 %v1254, %v1246
    %v1975 = vpack.c.b16 %v1255, %v1247
    %v1976 = vpack.c.b16 %v1256, %v1248
    %v1977 = vpack.c.b16 %v1257, %v1249
    %v1978 = vpack.c.b16 %v1258, %v1250
    %v1979 = vpack.c.b16 %v1259, %v1251
    %v1980 = vpack.c.b16 %v1268, %v1260
    %v1981 = vpack.c.b16 %v1269, %v1261
    %v1982 = vpack.c.b16 %v1270, %v1262
    %v1983 = vpack.c.b16 %v1271, %v1263
    %v1984 = vpack.c.b16 %v1272, %v1264
    %v1985 = vpack.c.b16 %v1273, %v1265
    %v1986 = vpack.c.b16 %v1274, %v1266
    %v1987 = vpack.c.b16 %v1275, %v1267
    %v1988 = vpack.c.b16 %v1284, %v1276
    %v1989 = vpack.c.b16 %v1285, %v1277
    %v1990 = vpack.c.b16 %v1286, %v1278
    %v1991 = vpack.c.b16 %v1287, %v1279
    %v1992 = vpack.c.b16 %v1288, %v1280
    %v1993 = vpack.c.b16 %v1289, %v1281
    %v1994 = vpack.c.b16 %v1290, %v1282
    %v1995 = vpack.c.b16 %v1291, %v1283
    %v1996 = vpack.c.b16 %v1300, %v1292
    %v1997 = vpack.c.b16 %v1301, %v1293
    %v1998 = vpack.c.b16 %v1302, %v1294
    %v1999 = vpack.c.b16 %v1303, %v1295
    %v2000 = vpack.c.b16 %v1304, %v1296
    %v2001 = vpack.c.b16 %v1305, %v1297
    %v2002 = vpack.c.b16 %v1306, %v1298
    %v2003 = vpack.c.b16 %v1307, %v1299
    %v2004 = vpack.c.b16 %v1316, %v1308
    %v2005 = vpack.c.b16 %v1317, %v1309
    %v2006 = vpack.c.b16 %v1318, %v1310
    %v2007 = vpack.c.b16 %v1319, %v1311
    %v2008 = vpack.c.b16 %v1320, %v1312
    %v2009 = vpack.c.b16 %v1321, %v1313
    %v2010 = vpack.c.b16 %v1322, %v1314
    %v2011 = vpack.c.b16 %v1323, %v1315
    %v2012 = vpack.c.b16 %v1332, %v1324
    %v2013 = vpack.c.b16 %v1333, %v1325
    %v2014 = vpack.c.b16 %v1334, %v1326
    %v2015 = vpack.c.b16 %v1335, %v1327
    %v2016 = vpack.c.b16 %v1336, %v1328
    %v2017 = vpack.c.b16 %v1337, %v1329
    %v2018 = vpack.c.b16 %v1338, %v1330
    %v2019 = vpack.c.b16 %v1339, %v1331
    %v2020 = vpack.c.b16 %v1348, %v1340
    %v2021 = vpack.c.b16 %v1349, %v1341
    %v2022 = vpack.c.b16 %v1350, %v1342
    %v2023 = vpack.c.b16 %v1351, %v1343
    %v2024 = vpack.c.b16 %v1352, %v1344
    %v2025 = vpack.c.b16 %v1353, %v1345
    %v2026 = vpack.c.b16 %v1354, %v1346
    %v2027 = vpack.c.b16 %v1355, %v1347
    %v2028 = vpack.c.b16 %v1364, %v1356
    %v2029 = vpack.c.b16 %v1365, %v1357
    %v2030 = vpack.c.b16 %v1366, %v1358
    %v2031 = vpack.c.b16 %v1367, %v1359
    %v2032 = vpack.c.b16 %v1368, %v1360
    %v2033 = vpack.c.b16 %v1369, %v1361
    %v2034 = vpack.c.b16 %v1370, %v1362
    %v2035 = vpack.c.b16 %v1371, %v1363
    %v2036 = vpack.c.b16 %v1380, %v1372
    %v2037 = vpack.c.b16 %v1381, %v1373
    %v2038 = vpack.c.b16 %v1382, %v1374
    %v2039 = vpack.c.b16 %v1383, %v1375
    %v2040 = vpack.c.b16 %v1384, %v1376
    %v2041 = vpack.c.b16 %v1385, %v1377
    %v2042 = vpack.c.b16 %v1386, %v1378
    %v2043 = vpack.c.b16 %v1387, %v1379
    %v2044 = vpack.c.b16 %v1396, %v1388
    %v2045 = vpack.c.b16 %v1397, %v1389
    %v2046 = vpack.c.b16 %v1398, %v1390
    %v2047 = vpack.c.b16 %v1399, %v1391
    %v2048 = vpack.c.b16 %v1400, %v1392
    %v2049 = vpack.c.b16 %v1401, %v1393
    %v2050 = vpack.c.b16 %v1402, %v1394
    %v2051 = vpack.c.b16 %v1403, %v1395
    %v2052 = vpack.c.b16 %v1412, %v1404
    %v2053 = vpack.c.b16 %v1413, %v1405
    %v2054 = vpack.c.b16 %v1414, %v1406
    %v2055 = vpack.c.b16 %v1415, %v1407
    %v2056 = vpack.c.b16 %v1416, %v1408
    %v2057 = vpack.c.b16 %v1417, %v1409
    %v2058 = vpack.c.b16 %v1418, %v1410
    %v2059 = vpack.c.b16 %v1419, %v1411
    %v2060 = vpack.c.b16 %v1428, %v1420
    %v2061 = vpack.c.b16 %v1429, %v1421
    %v2062 = vpack.c.b16 %v1430, %v1422
    %v2063 = vpack.c.b16 %v1431, %v1423
    %v2064 = vpack.c.b16 %v1432, %v1424
    %v2065 = vpack.c.b16 %v1433, %v1425
    %v2066 = vpack.c.b16 %v1434, %v1426
    %v2067 = vpack.c.b16 %v1435, %v1427
    %v2068 = vpack.c.b16 %v1444, %v1436
    %v2069 = vpack.c.b16 %v1445, %v1437
    %v2070 = vpack.c.b16 %v1446, %v1438
    %v2071 = vpack.c.b16 %v1447, %v1439
    %v2072 = vpack.c.b16 %v1448, %v1440
    %v2073 = vpack.c.b16 %v1449, %v1441
    %v2074 = vpack.c.b16 %v1450, %v1442
    %v2075 = vpack.c.b16 %v1451, %v1443
    %v2076 = vpack.c.b16 %v1460, %v1452
    %v2077 = vpack.c.b16 %v1461, %v1453
    %v2078 = vpack.c.b16 %v1462, %v1454
    %v2079 = vpack.c.b16 %v1463, %v1455
    %v2080 = vpack.c.b16 %v1464, %v1456
    %v2081 = vpack.c.b16 %v1465, %v1457
    %v2082 = vpack.c.b16 %v1466, %v1458
    %v2083 = vpack.c.b16 %v1467, %v1459
    %v2084 = vpack.c.b16 %v1476, %v1468
    %v2085 = vpack.c.b16 %v1477, %v1469
    %v2086 = vpack.c.b16 %v1478, %v1470
    %v2087 = vpack.c.b16 %v1479, %v1471
    %v2088 = vpack.c.b16 %v1480, %v1472
    %v2089 = vpack.c.b16 %v1481, %v1473
    %v2090 = vpack.c.b16 %v1482, %v1474
    %v2091 = vpack.c.b16 %v1483, %v1475
    %v2092 = vpack.c.b16 %v1492, %v1484
    %v2093 = vpack.c.b16 %v1493, %v1485
    %v2094 = vpack.c.b16 %v1494, %v1486
    %v2095 = vpack.c.b16 %v1495, %v1487
    %v2096 = vpack.c.b16 %v1496, %v1488
    %v2097 = vpack.c.b16 %v1497, %v1489
    %v2098 = vpack.c.b16 %v1498, %v1490
    %v2099 = vpack.c.b16 %v1499, %v1491
    %v2100 = vpack.c.b16 %v1508, %v1500
    %v2101 = vpack.c.b16 %v1509, %v1501
    %v2102 = vpack.c.b16 %v1510, %v1502
    %v2103 = vpack.c.b16 %v1511, %v1503
    %v2104 = vpack.c.b16 %v1512, %v1504
    %v2105 = vpack.c.b16 %v1513, %v1505
    %v2106 = vpack.c.b16 %v1514, %v1506
    %v2107 = vpack.c.b16 %v1515, %v1507
    %v2108 = vpack.c.b16 %v1524, %v1516
    %v2109 = vpack.c.b16 %v1525, %v1517
    %v2110 = vpack.c.b16 %v1526, %v1518
    %v2111 = vpack.c.b16 %v1527, %v1519
    %v2112 = vpack.c.b16 %v1528, %v1520
    %v2113 = vpack.c.b16 %v1529, %v1521
    %v2114 = vpack.c.b16 %v1530, %v1522
    %v2115 = vpack.c.b16 %v1531, %v1523
    %v2116 = vpack.c.b16 %v1540, %v1532
    %v2117 = vpack.c.b16 %v1541, %v1533
    %v2118 = vpack.c.b16 %v1542, %v1534
    %v2119 = vpack.c.b16 %v1543, %v1535
    %v2120 = vpack.c.b16 %v1544, %v1536
    %v2121 = vpack.c.b16 %v1545, %v1537
    %v2122 = vpack.c.b16 %v1546, %v1538
    %v2123 = vpack.c.b16 %v1547, %v1539
    %v2124 = vpack.c.b16 %v1556, %v1548
    %v2125 = vpack.c.b16 %v1557, %v1549
    %v2126 = vpack.c.b16 %v1558, %v1550
    %v2127 = vpack.c.b16 %v1559, %v1551
    %v2128 = vpack.c.b16 %v1560, %v1552
    %v2129 = vpack.c.b16 %v1561, %v1553
    %v2130 = vpack.c.b16 %v1562, %v1554
    %v2131 = vpack.c.b16 %v1563, %v1555
    %v2132 = vpack.c.b16 %v1572, %v1564
    %v2133 = vpack.c.b16 %v1573, %v1565
    %v2134 = vpack.c.b16 %v1574, %v1566
    %v2135 = vpack.c.b16 %v1575, %v1567
    %v2136 = vpack.c.b16 %v1576, %v1568
    %v2137 = vpack.c.b16 %v1577, %v1569
    %v2138 = vpack.c.b16 %v1578, %v1570
    %v2139 = vpack.c.b16 %v1579, %v1571
    %v2140 = vpack.c.b16 %v1588, %v1580
    %v2141 = vpack.c.b16 %v1589, %v1581
    %v2142 = vpack.c.b16 %v1590, %v1582
    %v2143 = vpack.c.b16 %v1591, %v1583
    %v2144 = vpack.c.b16 %v1592, %v1584
    %v2145 = vpack.c.b16 %v1593, %v1585
    %v2146 = vpack.c.b16 %v1594, %v1586
    %v2147 = vpack.c.b16 %v1595, %v1587
    %v2148 = vpack.c.b16 %v1604, %v1596
    %v2149 = vpack.c.b16 %v1605, %v1597
    %v2150 = vpack.c.b16 %v1606, %v1598
    %v2151 = vpack.c.b16 %v1607, %v1599
    %v2152 = vpack.c.b16 %v1608, %v1600
    %v2153 = vpack.c.b16 %v1609, %v1601
    %v2154 = vpack.c.b16 %v1610, %v1602
    %v2155 = vpack.c.b16 %v1611, %v1603
    %v2156 = vpack.c.b16 %v1620, %v1612
    %v2157 = vpack.c.b16 %v1621, %v1613
    %v2158 = vpack.c.b16 %v1622, %v1614
    %v2159 = vpack.c.b16 %v1623, %v1615
    %v2160 = vpack.c.b16 %v1624, %v1616
    %v2161 = vpack.c.b16 %v1625, %v1617
    %v2162 = vpack.c.b16 %v1626, %v1618
    %v2163 = vpack.c.b16 %v1627, %v1619
    %v2164 = vpack.c.b16 %v1636, %v1628
    %v2165 = vpack.c.b16 %v1637, %v1629
    %v2166 = vpack.c.b16 %v1638, %v1630
    %v2167 = vpack.c.b16 %v1639, %v1631
    %v2168 = vpack.c.b16 %v1640, %v1632
    %v2169 = vpack.c.b16 %v1641, %v1633
    %v2170 = vpack.c.b16 %v1642, %v1634
    %v2171 = vpack.c.b16 %v1643, %v1635
    %v2172 = vpack.c.b16 %v1652, %v1644
    %v2173 = vpack.c.b16 %v1653, %v1645
    %v2174 = vpack.c.b16 %v1654, %v1646
    %v2175 = vpack.c.b16 %v1655, %v1647
    %v2176 = vpack.c.b16 %v1656, %v1648
    %v2177 = vpack.c.b16 %v1657, %v1649
    %v2178 = vpack.c.b16 %v1658, %v1650
    %v2179 = vpack.c.b16 %v1659, %v1651
    %v2180 = vpack.c.b16 %v1668, %v1660
    %v2181 = vpack.c.b16 %v1669, %v1661
    %v2182 = vpack.c.b16 %v1670, %v1662
    %v2183 = vpack.c.b16 %v1671, %v1663
    %v2184 = vpack.c.b16 %v1672, %v1664
    %v2185 = vpack.c.b16 %v1673, %v1665
    %v2186 = vpack.c.b16 %v1674, %v1666
    %v2187 = vpack.c.b16 %v1675, %v1667
    %v2188 = vpack.c.b16 %v1684, %v1676
    %v2189 = vpack.c.b16 %v1685, %v1677
    %v2190 = vpack.c.b16 %v1686, %v1678
    %v2191 = vpack.c.b16 %v1687, %v1679
    %v2192 = vpack.c.b16 %v1688, %v1680
    %v2193 = vpack.c.b16 %v1689, %v1681
    %v2194 = vpack.c.b16 %v1690, %v1682
    %v2195 = vpack.c.b16 %v1691, %v1683
    %v2196 = vpack.c.b16 %v1700, %v1692
    %v2197 = vpack.c.b16 %v1701, %v1693
    %v2198 = vpack.c.b16 %v1702, %v1694
    %v2199 = vpack.c.b16 %v1703, %v1695
    %v2200 = vpack.c.b16 %v1704, %v1696
    %v2201 = vpack.c.b16 %v1705, %v1697
    %v2202 = vpack.c.b16 %v1706, %v1698
    %v2203 = vpack.c.b16 %v1707, %v1699
    %v2204 = vpack.c.b16 %v1716, %v1708
    %v2205 = vpack.c.b16 %v1717, %v1709
    %v2206 = vpack.c.b16 %v1718, %v1710
    %v2207 = vpack.c.b16 %v1719, %v1711
    %v2208 = vpack.c.b16 %v1720, %v1712
    %v2209 = vpack.c.b16 %v1721, %v1713
    %v2210 = vpack.c.b16 %v1722, %v1714
    %v2211 = vpack.c.b16 %v1723, %v1715
    %v2212 = vpack.c.b16 %v1732, %v1724
    %v2213 = vpack.c.b16 %v1733, %v1725
    %v2214 = vpack.c.b16 %v1734, %v1726
    %v2215 = vpack.c.b16 %v1735, %v1727
    %v2216 = vpack.c.b16 %v1736, %v1728
    %v2217 = vpack.c.b16 %v1737, %v1729
    %v2218 = vpack.c.b16 %v1738, %v1730
    %v2219 = vpack.c.b16 %v1739, %v1731
    %v2220 = vpack.c.b16 %v1748, %v1740
    %v2221 = vpack.c.b16 %v1749, %v1741
    %v2222 = vpack.c.b16 %v1750, %v1742
    %v2223 = vpack.c.b16 %v1751, %v1743
    %v2224 = vpack.c.b16 %v1752, %v1744
    %v2225 = vpack.c.b16 %v1753, %v1745
    %v2226 = vpack.c.b16 %v1754, %v1746
    %v2227 = vpack.c.b16 %v1755, %v1747
    %v2228 = vpack.c.b16 %v1764, %v1756
    %v2229 = vpack.c.b16 %v1765, %v1757
    %v2230 = vpack.c.b16 %v1766, %v1758
    %v2231 = vpack.c.b16 %v1767, %v1759
    %v2232 = vpack.c.b16 %v1768, %v1760
    %v2233 = vpack.c.b16 %v1769, %v1761
    %v2234 = vpack.c.b16 %v1770, %v1762
    %v2235 = vpack.c.b16 %v1771, %v1763
    %v2236 = vpack.c.b16 %v1780, %v1772
    %v2237 = vpack.c.b16 %v1781, %v1773
    %v2238 = vpack.c.b16 %v1782, %v1774
    %v2239 = vpack.c.b16 %v1783, %v1775
    %v2240 = vpack.c.b16 %v1784, %v1776
    %v2241 = vpack.c.b16 %v1785, %v1777
    %v2242 = vpack.c.b16 %v1786, %v1778
    %v2243 = vpack.c.b16 %v1787, %v1779
    %v2244 = vpack.c.b16 %v1796, %v1788
    %v2245 = vpack.c.b16 %v1797, %v1789
    %v2246 = vpack.c.b16 %v1798, %v1790
    %v2247 = vpack.c.b16 %v1799, %v1791
    %v2248 = vpack.c.b16 %v1800, %v1792
    %v2249 = vpack.c.b16 %v1801, %v1793
    %v2250 = vpack.c.b16 %v1802, %v1794
    %v2251 = vpack.c.b16 %v1803, %v1795
    %v2252 = vpack.c.b16 %v1812, %v1804
    %v2253 = vpack.c.b16 %v1813, %v1805
    %v2254 = vpack.c.b16 %v1814, %v1806
    %v2255 = vpack.c.b16 %v1815, %v1807
    %v2256 = vpack.c.b16 %v1816, %v1808
    %v2257 = vpack.c.b16 %v1817, %v1809
    %v2258 = vpack.c.b16 %v1818, %v1810
    %v2259 = vpack.c.b16 %v1819, %v1811
    %v2260 = vpack.c.b16 %v1828, %v1820
    %v2261 = vpack.c.b16 %v1829, %v1821
    %v2262 = vpack.c.b16 %v1830, %v1822
    %v2263 = vpack.c.b16 %v1831, %v1823
    %v2264 = vpack.c.b16 %v1832, %v1824
    %v2265 = vpack.c.b16 %v1833, %v1825
    %v2266 = vpack.c.b16 %v1834, %v1826
    %v2267 = vpack.c.b16 %v1835, %v1827
    %v2268 = vpack.c.b16 %v1844, %v1836
    %v2269 = vpack.c.b16 %v1845, %v1837
    %v2270 = vpack.c.b16 %v1846, %v1838
    %v2271 = vpack.c.b16 %v1847, %v1839
    %v2272 = vpack.c.b16 %v1848, %v1840
    %v2273 = vpack.c.b16 %v1849, %v1841
    %v2274 = vpack.c.b16 %v1850, %v1842
    %v2275 = vpack.c.b16 %v1851, %v1843
    %v2276 = vpack.c.b16 %v1860, %v1852
    %v2277 = vpack.c.b16 %v1861, %v1853
    %v2278 = vpack.c.b16 %v1862, %v1854
    %v2279 = vpack.c.b16 %v1863, %v1855
    %v2280 = vpack.c.b16 %v1864, %v1856
    %v2281 = vpack.c.b16 %v1865, %v1857
    %v2282 = vpack.c.b16 %v1866, %v1858
    %v2283 = vpack.c.b16 %v1867, %v1859
    %v2284 = vpack.c.b16 %v1876, %v1868
    %v2285 = vpack.c.b16 %v1877, %v1869
    %v2286 = vpack.c.b16 %v1878, %v1870
    %v2287 = vpack.c.b16 %v1879, %v1871
    %v2288 = vpack.c.b16 %v1880, %v1872
    %v2289 = vpack.c.b16 %v1881, %v1873
    %v2290 = vpack.c.b16 %v1882, %v1874
    %v2291 = vpack.c.b16 %v1883, %v1875
    %v2292 = vpack.c.b16 %v1892, %v1884
    %v2293 = vpack.c.b16 %v1893, %v1885
    %v2294 = vpack.c.b16 %v1894, %v1886
    %v2295 = vpack.c.b16 %v1895, %v1887
    %v2296 = vpack.c.b16 %v1896, %v1888
    %v2297 = vpack.c.b16 %v1897, %v1889
    %v2298 = vpack.c.b16 %v1898, %v1890
    %v2299 = vpack.c.b16 %v1899, %v1891
    %v2300 = vpack.c.b16 %v1908, %v1900
    %v2301 = vpack.c.b16 %v1909, %v1901
    %v2302 = vpack.c.b16 %v1910, %v1902
    %v2303 = vpack.c.b16 %v1911, %v1903
    %v2304 = vpack.c.b16 %v1912, %v1904
    %v2305 = vpack.c.b16 %v1913, %v1905
    %v2306 = vpack.c.b16 %v1914, %v1906
    %v2307 = vpack.c.b16 %v1915, %v1907
    %vm2700 = vcmask 130048
    %v2702 = vsel %vm2700, %v733, 0
    %2704 = vmatprep.subr.bf16.mxu0 %v1973
    %2705 = vmatpush1.bf16.msra.mxu0 %v1972
    %2706 = vmatprep.subr.bf16.mxu0 %v1965
    %2707 = vmatpush1.bf16.msra.mxu0 %v1964
    %2708 = vmatprep.subr.bf16.mxu0 %v1957
    %2709 = vmatpush1.bf16.msra.mxu0 %v1956
    %2710 = vmatprep.subr.bf16.mxu0 %v1949
    %2711 = vmatpush1.bf16.msra.mxu0 %v1948
    %2712 = vmatprep.subr.bf16.mxu0 %v1941
    %2713 = vmatpush1.bf16.msra.mxu0 %v1940
    %2714 = vmatprep.subr.bf16.mxu0 %v1933
    %2715 = vmatpush1.bf16.msra.mxu0 %v1932
    %2716 = vmatprep.subr.bf16.mxu0 %v1925
    %2717 = vmatpush1.bf16.msra.mxu0 %v1924
    %2718 = vmatprep.subr.bf16.mxu0 %v1917
    %2719 = vmatpush1.bf16.msra.mxu0 %v1916
    %2720 = vmatprep.subr.bf16.mxu0 %v2037
    %2721 = vmatpush2.bf16.msra.mxu0 %v2036
    %2722 = vmatprep.subr.bf16.mxu0 %v2029
    %2723 = vmatpush2.bf16.msra.mxu0 %v2028
    %2724 = vmatprep.subr.bf16.mxu0 %v2021
    %2725 = vmatpush2.bf16.msra.mxu0 %v2020
    %2726 = vmatprep.subr.bf16.mxu0 %v2013
    %2727 = vmatpush2.bf16.msra.mxu0 %v2012
    %2728 = vmatprep.subr.bf16.mxu0 %v2005
    %2729 = vmatpush2.bf16.msra.mxu0 %v2004
    %2730 = vmatprep.subr.bf16.mxu0 %v1997
    %2731 = vmatpush2.bf16.msra.mxu0 %v1996
    %2732 = vmatprep.subr.bf16.mxu0 %v1989
    %2733 = vmatpush2.bf16.msra.mxu0 %v1988
    %2734 = vmatprep.subr.bf16.mxu0 %v1981
    %2735 = vmatpush2.bf16.msra.mxu0 %v1980
    %2736 = vmatprep.mubr.bf16.mxu0 %v728
    %2737 = vmatmul.mubr.bf16.gmra.mxu0 %v727
    %v2738 = vpop.f32.mrf.mxu0
    %v2739 = vadd.f32 %v668, %v2738
    %v2740 = vpop.f32.mrf.mxu0
    %v2741 = vadd.f32 %v672, %v2740
    %v2742 = vpop.f32.mrf.mxu0
    %v2743 = vadd.f32 %v668, %v2742
    %v2744 = vpop.f32.mrf.mxu0
    %v2745 = vadd.f32 %v672, %v2744
    %2746 = vdwg.mxu0
    %2747 = vmatprep.subr.bf16.mxu0 %v2101
    %2748 = vmatpush1.bf16.msra.mxu0 %v2100
    %2749 = vmatprep.subr.bf16.mxu0 %v2093
    %2750 = vmatpush1.bf16.msra.mxu0 %v2092
    %2751 = vmatprep.subr.bf16.mxu0 %v2085
    %2752 = vmatpush1.bf16.msra.mxu0 %v2084
    %2753 = vmatprep.subr.bf16.mxu0 %v2077
    %2754 = vmatpush1.bf16.msra.mxu0 %v2076
    %2755 = vmatprep.subr.bf16.mxu0 %v2069
    %2756 = vmatpush1.bf16.msra.mxu0 %v2068
    %2757 = vmatprep.subr.bf16.mxu0 %v2061
    %2758 = vmatpush1.bf16.msra.mxu0 %v2060
    %2759 = vmatprep.subr.bf16.mxu0 %v2053
    %2760 = vmatpush1.bf16.msra.mxu0 %v2052
    %2761 = vmatprep.subr.bf16.mxu0 %v2045
    %2762 = vmatpush1.bf16.msra.mxu0 %v2044
    %2763 = vmatprep.subr.bf16.mxu0 %v2165
    %2764 = vmatpush2.bf16.msra.mxu0 %v2164
    %2765 = vmatprep.subr.bf16.mxu0 %v2157
    %2766 = vmatpush2.bf16.msra.mxu0 %v2156
    %2767 = vmatprep.subr.bf16.mxu0 %v2149
    %2768 = vmatpush2.bf16.msra.mxu0 %v2148
    %2769 = vmatprep.subr.bf16.mxu0 %v2141
    %2770 = vmatpush2.bf16.msra.mxu0 %v2140
    %2771 = vmatprep.subr.bf16.mxu0 %v2133
    %2772 = vmatpush2.bf16.msra.mxu0 %v2132
    %2773 = vmatprep.subr.bf16.mxu0 %v2125
    %2774 = vmatpush2.bf16.msra.mxu0 %v2124
    %2775 = vmatprep.subr.bf16.mxu0 %v2117
    %2776 = vmatpush2.bf16.msra.mxu0 %v2116
    %2777 = vmatprep.subr.bf16.mxu0 %v2109
    %2778 = vmatpush2.bf16.msra.mxu0 %v2108
    %2779 = vmatprep.mubr.bf16.mxu0 %v730
    %2780 = vmatmul.mubr.bf16.gmra.mxu0 %v729
    %v2781 = vpop.f32.mrf.mxu0
    %v2782 = vadd.f32 %v2739, %v2781
    %v2783 = vpop.f32.mrf.mxu0
    %v2784 = vadd.f32 %v2741, %v2783
    %v2785 = vpop.f32.mrf.mxu0
    %v2786 = vadd.f32 %v2743, %v2785
    %v2787 = vpop.f32.mrf.mxu0
    %v2788 = vadd.f32 %v2745, %v2787
    %2789 = vdwg.mxu0
    %2790 = vmatprep.subr.bf16.mxu0 %v2229
    %2791 = vmatpush1.bf16.msra.mxu0 %v2228
    %2792 = vmatprep.subr.bf16.mxu0 %v2221
    %2793 = vmatpush1.bf16.msra.mxu0 %v2220
    %2794 = vmatprep.subr.bf16.mxu0 %v2213
    %2795 = vmatpush1.bf16.msra.mxu0 %v2212
    %2796 = vmatprep.subr.bf16.mxu0 %v2205
    %2797 = vmatpush1.bf16.msra.mxu0 %v2204
    %2798 = vmatprep.subr.bf16.mxu0 %v2197
    %2799 = vmatpush1.bf16.msra.mxu0 %v2196
    %2800 = vmatprep.subr.bf16.mxu0 %v2189
    %2801 = vmatpush1.bf16.msra.mxu0 %v2188
    %2802 = vmatprep.subr.bf16.mxu0 %v2181
    %2803 = vmatpush1.bf16.msra.mxu0 %v2180
    %2804 = vmatprep.subr.bf16.mxu0 %v2173
    %2805 = vmatpush1.bf16.msra.mxu0 %v2172
    %2806 = vmatprep.subr.bf16.mxu0 %v2293
    %2807 = vmatpush2.bf16.msra.mxu0 %v2292
    %2808 = vmatprep.subr.bf16.mxu0 %v2285
    %2809 = vmatpush2.bf16.msra.mxu0 %v2284
    %2810 = vmatprep.subr.bf16.mxu0 %v2277
    %2811 = vmatpush2.bf16.msra.mxu0 %v2276
    %2812 = vmatprep.subr.bf16.mxu0 %v2269
    %2813 = vmatpush2.bf16.msra.mxu0 %v2268
    %2814 = vmatprep.subr.bf16.mxu0 %v2261
    %2815 = vmatpush2.bf16.msra.mxu0 %v2260
    %2816 = vmatprep.subr.bf16.mxu0 %v2253
    %2817 = vmatpush2.bf16.msra.mxu0 %v2252
    %2818 = vmatprep.subr.bf16.mxu0 %v2245
    %2819 = vmatpush2.bf16.msra.mxu0 %v2244
    %2820 = vmatprep.subr.bf16.mxu0 %v2237
    %2821 = vmatpush2.bf16.msra.mxu0 %v2236
    %2822 = vmatprep.mubr.bf16.mxu0 %v732
    %2823 = vmatmul.mubr.bf16.gmra.mxu0 %v731
    %v2824 = vpop.f32.mrf.mxu0
    %v2825 = vadd.f32 %v2782, %v2824
    %v2826 = vpop.f32.mrf.mxu0
    %v2827 = vadd.f32 %v2784, %v2826
    %v2828 = vpop.f32.mrf.mxu0
    %v2829 = vadd.f32 %v2786, %v2828
    %v2830 = vpop.f32.mrf.mxu0
    %v2831 = vadd.f32 %v2788, %v2830
    %2832 = vdwg.mxu0
    %2833 = vmatprep.subr.bf16.mxu0 0
    %2834 = vmatpush1.bf16.msra.mxu0 0
    %2835 = vmatprep.subr.bf16.mxu0 0
    %2836 = vmatpush1.bf16.msra.mxu0 0
    %2837 = vmatprep.subr.bf16.mxu0 0
    %2838 = vmatpush1.bf16.msra.mxu0 0
    %2839 = vmatprep.subr.bf16.mxu0 0
    %2840 = vmatpush1.bf16.msra.mxu0 0
    %2841 = vmatprep.subr.bf16.mxu0 0
    %2842 = vmatpush1.bf16.msra.mxu0 0
    %2843 = vmatprep.subr.bf16.mxu0 0
    %2844 = vmatpush1.bf16.msra.mxu0 0
    %2845 = vmatprep.subr.bf16.mxu0 0
    %2846 = vmatpush1.bf16.msra.mxu0 0
    %2847 = vmatprep.subr.bf16.mxu0 %v2301
    %2848 = vmatpush1.bf16.msra.mxu0 %v2300
    %2849 = vmatprep.subr.bf16.mxu0 0
    %2850 = vmatpush2.bf16.msra.mxu0 0
    %2851 = vmatprep.subr.bf16.mxu0 0
    %2852 = vmatpush2.bf16.msra.mxu0 0
    %2853 = vmatprep.subr.bf16.mxu0 0
    %2854 = vmatpush2.bf16.msra.mxu0 0
    %2855 = vmatprep.subr.bf16.mxu0 0
    %2856 = vmatpush2.bf16.msra.mxu0 0
    %2857 = vmatprep.subr.bf16.mxu0 0
    %2858 = vmatpush2.bf16.msra.mxu0 0
    %2859 = vmatprep.subr.bf16.mxu0 0
    %2860 = vmatpush2.bf16.msra.mxu0 0
    %2861 = vmatprep.subr.bf16.mxu0 0
    %2862 = vmatpush2.bf16.msra.mxu0 0
    %2863 = vmatprep.subr.bf16.mxu0 0
    %2864 = vmatpush2.bf16.msra.mxu0 0
    %2865 = vmatprep.mubr.bf16.mxu0 0
    %2866 = vmatmul.mubr.bf16.gmra.mxu0 %v2702
    %v2867 = vpop.f32.mrf.mxu0
    %v2868 = vadd.f32 %v2825, %v2867
    %v2869 = vpop.f32.mrf.mxu0
    %v2870 = vadd.f32 %v2827, %v2869
    %v2871 = vpop.f32.mrf.mxu0
    %v2872 = vadd.f32 %v2829, %v2871
    %v2873 = vpop.f32.mrf.mxu0
    %v2874 = vadd.f32 %v2831, %v2873
    %2875 = vdwg.mxu0
    %2876 = vmatprep.subr.bf16.mxu0 %v1975
    %2877 = vmatpush1.bf16.msra.mxu0 %v1974
    %2878 = vmatprep.subr.bf16.mxu0 %v1967
    %2879 = vmatpush1.bf16.msra.mxu0 %v1966
    %2880 = vmatprep.subr.bf16.mxu0 %v1959
    %2881 = vmatpush1.bf16.msra.mxu0 %v1958
    %2882 = vmatprep.subr.bf16.mxu0 %v1951
    %2883 = vmatpush1.bf16.msra.mxu0 %v1950
    %2884 = vmatprep.subr.bf16.mxu0 %v1943
    %2885 = vmatpush1.bf16.msra.mxu0 %v1942
    %2886 = vmatprep.subr.bf16.mxu0 %v1935
    %2887 = vmatpush1.bf16.msra.mxu0 %v1934
    %2888 = vmatprep.subr.bf16.mxu0 %v1927
    %2889 = vmatpush1.bf16.msra.mxu0 %v1926
    %2890 = vmatprep.subr.bf16.mxu0 %v1919
    %2891 = vmatpush1.bf16.msra.mxu0 %v1918
    %2892 = vmatprep.subr.bf16.mxu0 %v2039
    %2893 = vmatpush2.bf16.msra.mxu0 %v2038
    %2894 = vmatprep.subr.bf16.mxu0 %v2031
    %2895 = vmatpush2.bf16.msra.mxu0 %v2030
    %2896 = vmatprep.subr.bf16.mxu0 %v2023
    %2897 = vmatpush2.bf16.msra.mxu0 %v2022
    %2898 = vmatprep.subr.bf16.mxu0 %v2015
    %2899 = vmatpush2.bf16.msra.mxu0 %v2014
    %2900 = vmatprep.subr.bf16.mxu0 %v2007
    %2901 = vmatpush2.bf16.msra.mxu0 %v2006
    %2902 = vmatprep.subr.bf16.mxu0 %v1999
    %2903 = vmatpush2.bf16.msra.mxu0 %v1998
    %2904 = vmatprep.subr.bf16.mxu0 %v1991
    %2905 = vmatpush2.bf16.msra.mxu0 %v1990
    %2906 = vmatprep.subr.bf16.mxu0 %v1983
    %2907 = vmatpush2.bf16.msra.mxu0 %v1982
    %2908 = vmatprep.mubr.bf16.mxu0 %v728
    %2909 = vmatmul.mubr.bf16.gmra.mxu0 %v727
    %v2910 = vpop.f32.mrf.mxu0
    %v2911 = vadd.f32 %v676, %v2910
    %v2912 = vpop.f32.mrf.mxu0
    %v2913 = vadd.f32 %v680, %v2912
    %v2914 = vpop.f32.mrf.mxu0
    %v2915 = vadd.f32 %v676, %v2914
    %v2916 = vpop.f32.mrf.mxu0
    %v2917 = vadd.f32 %v680, %v2916
    %2918 = vdwg.mxu0
    %2919 = vmatprep.subr.bf16.mxu0 %v2103
    %2920 = vmatpush1.bf16.msra.mxu0 %v2102
    %2921 = vmatprep.subr.bf16.mxu0 %v2095
    %2922 = vmatpush1.bf16.msra.mxu0 %v2094
    %2923 = vmatprep.subr.bf16.mxu0 %v2087
    %2924 = vmatpush1.bf16.msra.mxu0 %v2086
    %2925 = vmatprep.subr.bf16.mxu0 %v2079
    %2926 = vmatpush1.bf16.msra.mxu0 %v2078
    %2927 = vmatprep.subr.bf16.mxu0 %v2071
    %2928 = vmatpush1.bf16.msra.mxu0 %v2070
    %2929 = vmatprep.subr.bf16.mxu0 %v2063
    %2930 = vmatpush1.bf16.msra.mxu0 %v2062
    %2931 = vmatprep.subr.bf16.mxu0 %v2055
    %2932 = vmatpush1.bf16.msra.mxu0 %v2054
    %2933 = vmatprep.subr.bf16.mxu0 %v2047
    %2934 = vmatpush1.bf16.msra.mxu0 %v2046
    %2935 = vmatprep.subr.bf16.mxu0 %v2167
    %2936 = vmatpush2.bf16.msra.mxu0 %v2166
    %2937 = vmatprep.subr.bf16.mxu0 %v2159
    %2938 = vmatpush2.bf16.msra.mxu0 %v2158
    %2939 = vmatprep.subr.bf16.mxu0 %v2151
    %2940 = vmatpush2.bf16.msra.mxu0 %v2150
    %2941 = vmatprep.subr.bf16.mxu0 %v2143
    %2942 = vmatpush2.bf16.msra.mxu0 %v2142
    %2943 = vmatprep.subr.bf16.mxu0 %v2135
    %2944 = vmatpush2.bf16.msra.mxu0 %v2134
    %2945 = vmatprep.subr.bf16.mxu0 %v2127
    %2946 = vmatpush2.bf16.msra.mxu0 %v2126
    %2947 = vmatprep.subr.bf16.mxu0 %v2119
    %2948 = vmatpush2.bf16.msra.mxu0 %v2118
    %2949 = vmatprep.subr.bf16.mxu0 %v2111
    %2950 = vmatpush2.bf16.msra.mxu0 %v2110
    %2951 = vmatprep.mubr.bf16.mxu0 %v730
    %2952 = vmatmul.mubr.bf16.gmra.mxu0 %v729
    %v2953 = vpop.f32.mrf.mxu0
    %v2954 = vadd.f32 %v2911, %v2953
    %v2955 = vpop.f32.mrf.mxu0
    %v2956 = vadd.f32 %v2913, %v2955
    %v2957 = vpop.f32.mrf.mxu0
    %v2958 = vadd.f32 %v2915, %v2957
    %v2959 = vpop.f32.mrf.mxu0
    %v2960 = vadd.f32 %v2917, %v2959
    %2961 = vdwg.mxu0
    %2962 = vmatprep.subr.bf16.mxu0 %v2231
    %2963 = vmatpush1.bf16.msra.mxu0 %v2230
    %2964 = vmatprep.subr.bf16.mxu0 %v2223
    %2965 = vmatpush1.bf16.msra.mxu0 %v2222
    %2966 = vmatprep.subr.bf16.mxu0 %v2215
    %2967 = vmatpush1.bf16.msra.mxu0 %v2214
    %2968 = vmatprep.subr.bf16.mxu0 %v2207
    %2969 = vmatpush1.bf16.msra.mxu0 %v2206
    %2970 = vmatprep.subr.bf16.mxu0 %v2199
    %2971 = vmatpush1.bf16.msra.mxu0 %v2198
    %2972 = vmatprep.subr.bf16.mxu0 %v2191
    %2973 = vmatpush1.bf16.msra.mxu0 %v2190
    %2974 = vmatprep.subr.bf16.mxu0 %v2183
    %2975 = vmatpush1.bf16.msra.mxu0 %v2182
    %2976 = vmatprep.subr.bf16.mxu0 %v2175
    %2977 = vmatpush1.bf16.msra.mxu0 %v2174
    %2978 = vmatprep.subr.bf16.mxu0 %v2295
    %2979 = vmatpush2.bf16.msra.mxu0 %v2294
    %2980 = vmatprep.subr.bf16.mxu0 %v2287
    %2981 = vmatpush2.bf16.msra.mxu0 %v2286
    %2982 = vmatprep.subr.bf16.mxu0 %v2279
    %2983 = vmatpush2.bf16.msra.mxu0 %v2278
    %2984 = vmatprep.subr.bf16.mxu0 %v2271
    %2985 = vmatpush2.bf16.msra.mxu0 %v2270
    %2986 = vmatprep.subr.bf16.mxu0 %v2263
    %2987 = vmatpush2.bf16.msra.mxu0 %v2262
    %2988 = vmatprep.subr.bf16.mxu0 %v2255
    %2989 = vmatpush2.bf16.msra.mxu0 %v2254
    %2990 = vmatprep.subr.bf16.mxu0 %v2247
    %2991 = vmatpush2.bf16.msra.mxu0 %v2246
    %2992 = vmatprep.subr.bf16.mxu0 %v2239
    %2993 = vmatpush2.bf16.msra.mxu0 %v2238
    %2994 = vmatprep.mubr.bf16.mxu0 %v732
    %2995 = vmatmul.mubr.bf16.gmra.mxu0 %v731
    %v2996 = vpop.f32.mrf.mxu0
    %v2997 = vadd.f32 %v2954, %v2996
    %v2998 = vpop.f32.mrf.mxu0
    %v2999 = vadd.f32 %v2956, %v2998
    %v3000 = vpop.f32.mrf.mxu0
    %v3001 = vadd.f32 %v2958, %v3000
    %v3002 = vpop.f32.mrf.mxu0
    %v3003 = vadd.f32 %v2960, %v3002
    %3004 = vdwg.mxu0
    %3005 = vmatprep.subr.bf16.mxu0 0
    %3006 = vmatpush1.bf16.msra.mxu0 0
    %3007 = vmatprep.subr.bf16.mxu0 0
    %3008 = vmatpush1.bf16.msra.mxu0 0
    %3009 = vmatprep.subr.bf16.mxu0 0
    %3010 = vmatpush1.bf16.msra.mxu0 0
    %3011 = vmatprep.subr.bf16.mxu0 0
    %3012 = vmatpush1.bf16.msra.mxu0 0
    %3013 = vmatprep.subr.bf16.mxu0 0
    %3014 = vmatpush1.bf16.msra.mxu0 0
    %3015 = vmatprep.subr.bf16.mxu0 0
    %3016 = vmatpush1.bf16.msra.mxu0 0
    %3017 = vmatprep.subr.bf16.mxu0 0
    %3018 = vmatpush1.bf16.msra.mxu0 0
    %3019 = vmatprep.subr.bf16.mxu0 %v2303
    %3020 = vmatpush1.bf16.msra.mxu0 %v2302
    %3021 = vmatprep.subr.bf16.mxu0 0
    %3022 = vmatpush2.bf16.msra.mxu0 0
    %3023 = vmatprep.subr.bf16.mxu0 0
    %3024 = vmatpush2.bf16.msra.mxu0 0
    %3025 = vmatprep.subr.bf16.mxu0 0
    %3026 = vmatpush2.bf16.msra.mxu0 0
    %3027 = vmatprep.subr.bf16.mxu0 0
    %3028 = vmatpush2.bf16.msra.mxu0 0
    %3029 = vmatprep.subr.bf16.mxu0 0
    %3030 = vmatpush2.bf16.msra.mxu0 0
    %3031 = vmatprep.subr.bf16.mxu0 0
    %3032 = vmatpush2.bf16.msra.mxu0 0
    %3033 = vmatprep.subr.bf16.mxu0 0
    %3034 = vmatpush2.bf16.msra.mxu0 0
    %3035 = vmatprep.subr.bf16.mxu0 0
    %3036 = vmatpush2.bf16.msra.mxu0 0
    %3037 = vmatprep.mubr.bf16.mxu0 0
    %3038 = vmatmul.mubr.bf16.gmra.mxu0 %v2702
    %v3039 = vpop.f32.mrf.mxu0
    %v3040 = vadd.f32 %v2997, %v3039
    %v3041 = vpop.f32.mrf.mxu0
    %v3042 = vadd.f32 %v2999, %v3041
    %v3043 = vpop.f32.mrf.mxu0
    %v3044 = vadd.f32 %v3001, %v3043
    %v3045 = vpop.f32.mrf.mxu0
    %v3046 = vadd.f32 %v3003, %v3045
    %3047 = vdwg.mxu0
    %3048 = vmatprep.subr.bf16.mxu0 %v1977
    %3049 = vmatpush1.bf16.msra.mxu0 %v1976
    %3050 = vmatprep.subr.bf16.mxu0 %v1969
    %3051 = vmatpush1.bf16.msra.mxu0 %v1968
    %3052 = vmatprep.subr.bf16.mxu0 %v1961
    %3053 = vmatpush1.bf16.msra.mxu0 %v1960
    %3054 = vmatprep.subr.bf16.mxu0 %v1953
    %3055 = vmatpush1.bf16.msra.mxu0 %v1952
    %3056 = vmatprep.subr.bf16.mxu0 %v1945
    %3057 = vmatpush1.bf16.msra.mxu0 %v1944
    %3058 = vmatprep.subr.bf16.mxu0 %v1937
    %3059 = vmatpush1.bf16.msra.mxu0 %v1936
    %3060 = vmatprep.subr.bf16.mxu0 %v1929
    %3061 = vmatpush1.bf16.msra.mxu0 %v1928
    %3062 = vmatprep.subr.bf16.mxu0 %v1921
    %3063 = vmatpush1.bf16.msra.mxu0 %v1920
    %3064 = vmatprep.subr.bf16.mxu0 %v2041
    %3065 = vmatpush2.bf16.msra.mxu0 %v2040
    %3066 = vmatprep.subr.bf16.mxu0 %v2033
    %3067 = vmatpush2.bf16.msra.mxu0 %v2032
    %3068 = vmatprep.subr.bf16.mxu0 %v2025
    %3069 = vmatpush2.bf16.msra.mxu0 %v2024
    %3070 = vmatprep.subr.bf16.mxu0 %v2017
    %3071 = vmatpush2.bf16.msra.mxu0 %v2016
    %3072 = vmatprep.subr.bf16.mxu0 %v2009
    %3073 = vmatpush2.bf16.msra.mxu0 %v2008
    %3074 = vmatprep.subr.bf16.mxu0 %v2001
    %3075 = vmatpush2.bf16.msra.mxu0 %v2000
    %3076 = vmatprep.subr.bf16.mxu0 %v1993
    %3077 = vmatpush2.bf16.msra.mxu0 %v1992
    %3078 = vmatprep.subr.bf16.mxu0 %v1985
    %3079 = vmatpush2.bf16.msra.mxu0 %v1984
    %3080 = vmatprep.mubr.bf16.mxu0 %v728
    %3081 = vmatmul.mubr.bf16.gmra.mxu0 %v727
    %v3082 = vpop.f32.mrf.mxu0
    %v3083 = vadd.f32 %v684, %v3082
    %v3084 = vpop.f32.mrf.mxu0
    %v3085 = vadd.f32 %v688, %v3084
    %v3086 = vpop.f32.mrf.mxu0
    %v3087 = vadd.f32 %v684, %v3086
    %v3088 = vpop.f32.mrf.mxu0
    %v3089 = vadd.f32 %v688, %v3088
    %3090 = vdwg.mxu0
    %3091 = vmatprep.subr.bf16.mxu0 %v2105
    %3092 = vmatpush1.bf16.msra.mxu0 %v2104
    %3093 = vmatprep.subr.bf16.mxu0 %v2097
    %3094 = vmatpush1.bf16.msra.mxu0 %v2096
    %3095 = vmatprep.subr.bf16.mxu0 %v2089
    %3096 = vmatpush1.bf16.msra.mxu0 %v2088
    %3097 = vmatprep.subr.bf16.mxu0 %v2081
    %3098 = vmatpush1.bf16.msra.mxu0 %v2080
    %3099 = vmatprep.subr.bf16.mxu0 %v2073
    %3100 = vmatpush1.bf16.msra.mxu0 %v2072
    %3101 = vmatprep.subr.bf16.mxu0 %v2065
    %3102 = vmatpush1.bf16.msra.mxu0 %v2064
    %3103 = vmatprep.subr.bf16.mxu0 %v2057
    %3104 = vmatpush1.bf16.msra.mxu0 %v2056
    %3105 = vmatprep.subr.bf16.mxu0 %v2049
    %3106 = vmatpush1.bf16.msra.mxu0 %v2048
    %3107 = vmatprep.subr.bf16.mxu0 %v2169
    %3108 = vmatpush2.bf16.msra.mxu0 %v2168
    %3109 = vmatprep.subr.bf16.mxu0 %v2161
    %3110 = vmatpush2.bf16.msra.mxu0 %v2160
    %3111 = vmatprep.subr.bf16.mxu0 %v2153
    %3112 = vmatpush2.bf16.msra.mxu0 %v2152
    %3113 = vmatprep.subr.bf16.mxu0 %v2145
    %3114 = vmatpush2.bf16.msra.mxu0 %v2144
    %3115 = vmatprep.subr.bf16.mxu0 %v2137
    %3116 = vmatpush2.bf16.msra.mxu0 %v2136
    %3117 = vmatprep.subr.bf16.mxu0 %v2129
    %3118 = vmatpush2.bf16.msra.mxu0 %v2128
    %3119 = vmatprep.subr.bf16.mxu0 %v2121
    %3120 = vmatpush2.bf16.msra.mxu0 %v2120
    %3121 = vmatprep.subr.bf16.mxu0 %v2113
    %3122 = vmatpush2.bf16.msra.mxu0 %v2112
    %3123 = vmatprep.mubr.bf16.mxu0 %v730
    %3124 = vmatmul.mubr.bf16.gmra.mxu0 %v729
    %v3125 = vpop.f32.mrf.mxu0
    %v3126 = vadd.f32 %v3083, %v3125
    %v3127 = vpop.f32.mrf.mxu0
    %v3128 = vadd.f32 %v3085, %v3127
    %v3129 = vpop.f32.mrf.mxu0
    %v3130 = vadd.f32 %v3087, %v3129
    %v3131 = vpop.f32.mrf.mxu0
    %v3132 = vadd.f32 %v3089, %v3131
    %3133 = vdwg.mxu0
    %3134 = vmatprep.subr.bf16.mxu0 %v2233
    %3135 = vmatpush1.bf16.msra.mxu0 %v2232
    %3136 = vmatprep.subr.bf16.mxu0 %v2225
    %3137 = vmatpush1.bf16.msra.mxu0 %v2224
    %3138 = vmatprep.subr.bf16.mxu0 %v2217
    %3139 = vmatpush1.bf16.msra.mxu0 %v2216
    %3140 = vmatprep.subr.bf16.mxu0 %v2209
    %3141 = vmatpush1.bf16.msra.mxu0 %v2208
    %3142 = vmatprep.subr.bf16.mxu0 %v2201
    %3143 = vmatpush1.bf16.msra.mxu0 %v2200
    %3144 = vmatprep.subr.bf16.mxu0 %v2193
    %3145 = vmatpush1.bf16.msra.mxu0 %v2192
    %3146 = vmatprep.subr.bf16.mxu0 %v2185
    %3147 = vmatpush1.bf16.msra.mxu0 %v2184
    %3148 = vmatprep.subr.bf16.mxu0 %v2177
    %3149 = vmatpush1.bf16.msra.mxu0 %v2176
    %3150 = vmatprep.subr.bf16.mxu0 %v2297
    %3151 = vmatpush2.bf16.msra.mxu0 %v2296
    %3152 = vmatprep.subr.bf16.mxu0 %v2289
    %3153 = vmatpush2.bf16.msra.mxu0 %v2288
    %3154 = vmatprep.subr.bf16.mxu0 %v2281
    %3155 = vmatpush2.bf16.msra.mxu0 %v2280
    %3156 = vmatprep.subr.bf16.mxu0 %v2273
    %3157 = vmatpush2.bf16.msra.mxu0 %v2272
    %3158 = vmatprep.subr.bf16.mxu0 %v2265
    %3159 = vmatpush2.bf16.msra.mxu0 %v2264
    %3160 = vmatprep.subr.bf16.mxu0 %v2257
    %3161 = vmatpush2.bf16.msra.mxu0 %v2256
    %3162 = vmatprep.subr.bf16.mxu0 %v2249
    %3163 = vmatpush2.bf16.msra.mxu0 %v2248
    %3164 = vmatprep.subr.bf16.mxu0 %v2241
    %3165 = vmatpush2.bf16.msra.mxu0 %v2240
    %3166 = vmatprep.mubr.bf16.mxu0 %v732
    %3167 = vmatmul.mubr.bf16.gmra.mxu0 %v731
    %v3168 = vpop.f32.mrf.mxu0
    %v3169 = vadd.f32 %v3126, %v3168
    %v3170 = vpop.f32.mrf.mxu0
    %v3171 = vadd.f32 %v3128, %v3170
    %v3172 = vpop.f32.mrf.mxu0
    %v3173 = vadd.f32 %v3130, %v3172
    %v3174 = vpop.f32.mrf.mxu0
    %v3175 = vadd.f32 %v3132, %v3174
    %3176 = vdwg.mxu0
    %3177 = vmatprep.subr.bf16.mxu0 0
    %3178 = vmatpush1.bf16.msra.mxu0 0
    %3179 = vmatprep.subr.bf16.mxu0 0
    %3180 = vmatpush1.bf16.msra.mxu0 0
    %3181 = vmatprep.subr.bf16.mxu0 0
    %3182 = vmatpush1.bf16.msra.mxu0 0
    %3183 = vmatprep.subr.bf16.mxu0 0
    %3184 = vmatpush1.bf16.msra.mxu0 0
    %3185 = vmatprep.subr.bf16.mxu0 0
    %3186 = vmatpush1.bf16.msra.mxu0 0
    %3187 = vmatprep.subr.bf16.mxu0 0
    %3188 = vmatpush1.bf16.msra.mxu0 0
    %3189 = vmatprep.subr.bf16.mxu0 0
    %3190 = vmatpush1.bf16.msra.mxu0 0
    %3191 = vmatprep.subr.bf16.mxu0 %v2305
    %3192 = vmatpush1.bf16.msra.mxu0 %v2304
    %3193 = vmatprep.subr.bf16.mxu0 0
    %3194 = vmatpush2.bf16.msra.mxu0 0
    %3195 = vmatprep.subr.bf16.mxu0 0
    %3196 = vmatpush2.bf16.msra.mxu0 0
    %3197 = vmatprep.subr.bf16.mxu0 0
    %3198 = vmatpush2.bf16.msra.mxu0 0
    %3199 = vmatprep.subr.bf16.mxu0 0
    %3200 = vmatpush2.bf16.msra.mxu0 0
    %3201 = vmatprep.subr.bf16.mxu0 0
    %3202 = vmatpush2.bf16.msra.mxu0 0
    %3203 = vmatprep.subr.bf16.mxu0 0
    %3204 = vmatpush2.bf16.msra.mxu0 0
    %3205 = vmatprep.subr.bf16.mxu0 0
    %3206 = vmatpush2.bf16.msra.mxu0 0
    %3207 = vmatprep.subr.bf16.mxu0 0
    %3208 = vmatpush2.bf16.msra.mxu0 0
    %3209 = vmatprep.mubr.bf16.mxu0 0
    %3210 = vmatmul.mubr.bf16.gmra.mxu0 %v2702
    %v3211 = vpop.f32.mrf.mxu0
    %v3212 = vadd.f32 %v3169, %v3211
    %v3213 = vpop.f32.mrf.mxu0
    %v3214 = vadd.f32 %v3171, %v3213
    %v3215 = vpop.f32.mrf.mxu0
    %v3216 = vadd.f32 %v3173, %v3215
    %v3217 = vpop.f32.mrf.mxu0
    %v3218 = vadd.f32 %v3175, %v3217
    %3219 = vdwg.mxu0
    %3220 = vmatprep.subr.bf16.mxu0 %v1979
    %3221 = vmatpush1.bf16.msra.mxu0 %v1978
    %3222 = vmatprep.subr.bf16.mxu0 %v1971
    %3223 = vmatpush1.bf16.msra.mxu0 %v1970
    %3224 = vmatprep.subr.bf16.mxu0 %v1963
    %3225 = vmatpush1.bf16.msra.mxu0 %v1962
    %3226 = vmatprep.subr.bf16.mxu0 %v1955
    %3227 = vmatpush1.bf16.msra.mxu0 %v1954
    %3228 = vmatprep.subr.bf16.mxu0 %v1947
    %3229 = vmatpush1.bf16.msra.mxu0 %v1946
    %3230 = vmatprep.subr.bf16.mxu0 %v1939
    %3231 = vmatpush1.bf16.msra.mxu0 %v1938
    %3232 = vmatprep.subr.bf16.mxu0 %v1931
    %3233 = vmatpush1.bf16.msra.mxu0 %v1930
    %3234 = vmatprep.subr.bf16.mxu0 %v1923
    %3235 = vmatpush1.bf16.msra.mxu0 %v1922
    %3236 = vmatprep.subr.bf16.mxu0 %v2043
    %3237 = vmatpush2.bf16.msra.mxu0 %v2042
    %3238 = vmatprep.subr.bf16.mxu0 %v2035
    %3239 = vmatpush2.bf16.msra.mxu0 %v2034
    %3240 = vmatprep.subr.bf16.mxu0 %v2027
    %3241 = vmatpush2.bf16.msra.mxu0 %v2026
    %3242 = vmatprep.subr.bf16.mxu0 %v2019
    %3243 = vmatpush2.bf16.msra.mxu0 %v2018
    %3244 = vmatprep.subr.bf16.mxu0 %v2011
    %3245 = vmatpush2.bf16.msra.mxu0 %v2010
    %3246 = vmatprep.subr.bf16.mxu0 %v2003
    %3247 = vmatpush2.bf16.msra.mxu0 %v2002
    %3248 = vmatprep.subr.bf16.mxu0 %v1995
    %3249 = vmatpush2.bf16.msra.mxu0 %v1994
    %3250 = vmatprep.subr.bf16.mxu0 %v1987
    %3251 = vmatpush2.bf16.msra.mxu0 %v1986
    %3252 = vmatprep.mubr.bf16.mxu0 %v728
    %3253 = vmatmul.mubr.bf16.gmra.mxu0 %v727
    %v3254 = vpop.f32.mrf.mxu0
    %v3255 = vadd.f32 %v692, %v3254
    %v3256 = vpop.f32.mrf.mxu0
    %v3257 = vadd.f32 %v696, %v3256
    %v3258 = vpop.f32.mrf.mxu0
    %v3259 = vadd.f32 %v692, %v3258
    %v3260 = vpop.f32.mrf.mxu0
    %v3261 = vadd.f32 %v696, %v3260
    %3262 = vdwg.mxu0
    %3263 = vmatprep.subr.bf16.mxu0 %v2107
    %3264 = vmatpush1.bf16.msra.mxu0 %v2106
    %3265 = vmatprep.subr.bf16.mxu0 %v2099
    %3266 = vmatpush1.bf16.msra.mxu0 %v2098
    %3267 = vmatprep.subr.bf16.mxu0 %v2091
    %3268 = vmatpush1.bf16.msra.mxu0 %v2090
    %3269 = vmatprep.subr.bf16.mxu0 %v2083
    %3270 = vmatpush1.bf16.msra.mxu0 %v2082
    %3271 = vmatprep.subr.bf16.mxu0 %v2075
    %3272 = vmatpush1.bf16.msra.mxu0 %v2074
    %3273 = vmatprep.subr.bf16.mxu0 %v2067
    %3274 = vmatpush1.bf16.msra.mxu0 %v2066
    %3275 = vmatprep.subr.bf16.mxu0 %v2059
    %3276 = vmatpush1.bf16.msra.mxu0 %v2058
    %3277 = vmatprep.subr.bf16.mxu0 %v2051
    %3278 = vmatpush1.bf16.msra.mxu0 %v2050
    %3279 = vmatprep.subr.bf16.mxu0 %v2171
    %3280 = vmatpush2.bf16.msra.mxu0 %v2170
    %3281 = vmatprep.subr.bf16.mxu0 %v2163
    %3282 = vmatpush2.bf16.msra.mxu0 %v2162
    %3283 = vmatprep.subr.bf16.mxu0 %v2155
    %3284 = vmatpush2.bf16.msra.mxu0 %v2154
    %3285 = vmatprep.subr.bf16.mxu0 %v2147
    %3286 = vmatpush2.bf16.msra.mxu0 %v2146
    %3287 = vmatprep.subr.bf16.mxu0 %v2139
    %3288 = vmatpush2.bf16.msra.mxu0 %v2138
    %3289 = vmatprep.subr.bf16.mxu0 %v2131
    %3290 = vmatpush2.bf16.msra.mxu0 %v2130
    %3291 = vmatprep.subr.bf16.mxu0 %v2123
    %3292 = vmatpush2.bf16.msra.mxu0 %v2122
    %3293 = vmatprep.subr.bf16.mxu0 %v2115
    %3294 = vmatpush2.bf16.msra.mxu0 %v2114
    %3295 = vmatprep.mubr.bf16.mxu0 %v730
    %3296 = vmatmul.mubr.bf16.gmra.mxu0 %v729
    %v3297 = vpop.f32.mrf.mxu0
    %v3298 = vadd.f32 %v3255, %v3297
    %v3299 = vpop.f32.mrf.mxu0
    %v3300 = vadd.f32 %v3257, %v3299
    %v3301 = vpop.f32.mrf.mxu0
    %v3302 = vadd.f32 %v3259, %v3301
    %v3303 = vpop.f32.mrf.mxu0
    %v3304 = vadd.f32 %v3261, %v3303
    %3305 = vdwg.mxu0
    %3306 = vmatprep.subr.bf16.mxu0 %v2235
    %3307 = vmatpush1.bf16.msra.mxu0 %v2234
    %3308 = vmatprep.subr.bf16.mxu0 %v2227
    %3309 = vmatpush1.bf16.msra.mxu0 %v2226
    %3310 = vmatprep.subr.bf16.mxu0 %v2219
    %3311 = vmatpush1.bf16.msra.mxu0 %v2218
    %3312 = vmatprep.subr.bf16.mxu0 %v2211
    %3313 = vmatpush1.bf16.msra.mxu0 %v2210
    %3314 = vmatprep.subr.bf16.mxu0 %v2203
    %3315 = vmatpush1.bf16.msra.mxu0 %v2202
    %3316 = vmatprep.subr.bf16.mxu0 %v2195
    %3317 = vmatpush1.bf16.msra.mxu0 %v2194
    %3318 = vmatprep.subr.bf16.mxu0 %v2187
    %3319 = vmatpush1.bf16.msra.mxu0 %v2186
    %3320 = vmatprep.subr.bf16.mxu0 %v2179
    %3321 = vmatpush1.bf16.msra.mxu0 %v2178
    %3322 = vmatprep.subr.bf16.mxu0 %v2299
    %3323 = vmatpush2.bf16.msra.mxu0 %v2298
    %3324 = vmatprep.subr.bf16.mxu0 %v2291
    %3325 = vmatpush2.bf16.msra.mxu0 %v2290
    %3326 = vmatprep.subr.bf16.mxu0 %v2283
    %3327 = vmatpush2.bf16.msra.mxu0 %v2282
    %3328 = vmatprep.subr.bf16.mxu0 %v2275
    %3329 = vmatpush2.bf16.msra.mxu0 %v2274
    %3330 = vmatprep.subr.bf16.mxu0 %v2267
    %3331 = vmatpush2.bf16.msra.mxu0 %v2266
    %3332 = vmatprep.subr.bf16.mxu0 %v2259
    %3333 = vmatpush2.bf16.msra.mxu0 %v2258
    %3334 = vmatprep.subr.bf16.mxu0 %v2251
    %3335 = vmatpush2.bf16.msra.mxu0 %v2250
    %3336 = vmatprep.subr.bf16.mxu0 %v2243
    %3337 = vmatpush2.bf16.msra.mxu0 %v2242
    %3338 = vmatprep.mubr.bf16.mxu0 %v732
    %3339 = vmatmul.mubr.bf16.gmra.mxu0 %v731
    %v3340 = vpop.f32.mrf.mxu0
    %v3341 = vadd.f32 %v3298, %v3340
    %v3342 = vpop.f32.mrf.mxu0
    %v3343 = vadd.f32 %v3300, %v3342
    %v3344 = vpop.f32.mrf.mxu0
    %v3345 = vadd.f32 %v3302, %v3344
    %v3346 = vpop.f32.mrf.mxu0
    %v3347 = vadd.f32 %v3304, %v3346
    %3348 = vdwg.mxu0
    %3349 = vmatprep.subr.bf16.mxu0 0
    %3350 = vmatpush1.bf16.msra.mxu0 0
    %3351 = vmatprep.subr.bf16.mxu0 0
    %3352 = vmatpush1.bf16.msra.mxu0 0
    %3353 = vmatprep.subr.bf16.mxu0 0
    %3354 = vmatpush1.bf16.msra.mxu0 0
    %3355 = vmatprep.subr.bf16.mxu0 0
    %3356 = vmatpush1.bf16.msra.mxu0 0
    %3357 = vmatprep.subr.bf16.mxu0 0
    %3358 = vmatpush1.bf16.msra.mxu0 0
    %3359 = vmatprep.subr.bf16.mxu0 0
    %3360 = vmatpush1.bf16.msra.mxu0 0
    %3361 = vmatprep.subr.bf16.mxu0 0
    %3362 = vmatpush1.bf16.msra.mxu0 0
    %3363 = vmatprep.subr.bf16.mxu0 %v2307
    %3364 = vmatpush1.bf16.msra.mxu0 %v2306
    %3365 = vmatprep.subr.bf16.mxu0 0
    %3366 = vmatpush2.bf16.msra.mxu0 0
    %3367 = vmatprep.subr.bf16.mxu0 0
    %3368 = vmatpush2.bf16.msra.mxu0 0
    %3369 = vmatprep.subr.bf16.mxu0 0
    %3370 = vmatpush2.bf16.msra.mxu0 0
    %3371 = vmatprep.subr.bf16.mxu0 0
    %3372 = vmatpush2.bf16.msra.mxu0 0
    %3373 = vmatprep.subr.bf16.mxu0 0
    %3374 = vmatpush2.bf16.msra.mxu0 0
    %3375 = vmatprep.subr.bf16.mxu0 0
    %3376 = vmatpush2.bf16.msra.mxu0 0
    %3377 = vmatprep.subr.bf16.mxu0 0
    %3378 = vmatpush2.bf16.msra.mxu0 0
    %3379 = vmatprep.subr.bf16.mxu0 0
    %3380 = vmatpush2.bf16.msra.mxu0 0
    %3381 = vmatprep.mubr.bf16.mxu0 0
    %3382 = vmatmul.mubr.bf16.gmra.mxu0 %v2702
    %v3383 = vpop.f32.mrf.mxu0
    %v3384 = vadd.f32 %v3341, %v3383
    %v3385 = vpop.f32.mrf.mxu0
    %v3386 = vadd.f32 %v3343, %v3385
    %v3387 = vpop.f32.mrf.mxu0
    %v3388 = vadd.f32 %v3345, %v3387
    %v3389 = vpop.f32.mrf.mxu0
    %v3390 = vadd.f32 %v3347, %v3389
    %3391 = vdwg.mxu0
    %v3392 = vmax.f32 %v2868, 0.0
    %v3393 = vmax.f32 %v2870, 0.0
    %v3394 = vmax.f32 %v3040, 0.0
    %v3395 = vmax.f32 %v3042, 0.0
    %v3396 = vmax.f32 %v3212, 0.0
    %v3397 = vmax.f32 %v3214, 0.0
    %v3398 = vmax.f32 %v3384, 0.0
    %v3399 = vmax.f32 %v3386, 0.0
    %v3400 = vmax.f32 %v2872, 0.0
    %v3401 = vmax.f32 %v2874, 0.0
    %v3402 = vmax.f32 %v3044, 0.0
    %v3403 = vmax.f32 %v3046, 0.0
    %v3404 = vmax.f32 %v3216, 0.0
    %v3405 = vmax.f32 %v3218, 0.0
    %v3406 = vmax.f32 %v3388, 0.0
    %v3407 = vmax.f32 %v3390, 0.0
    %v3408 = vpack.c.bf16 %v3400, %v3392
    %v3409 = vpack.c.bf16 %v3401, %v3393
    %v3410 = vpack.c.bf16 %v3402, %v3394
    %v3411 = vpack.c.bf16 %v3403, %v3395
    %v3412 = vpack.c.bf16 %v3404, %v3396
    %v3413 = vpack.c.bf16 %v3405, %v3397
    %v3414 = vpack.c.bf16 %v3406, %v3398
    %v3415 = vpack.c.bf16 %v3407, %v3399
    %v3416 = vld [vmem:[#allocation6] sm:$0xff]
    %v3417 = vld [vmem:[#allocation6 + $0x8] sm:$0xff]
    %v3418 = vld [vmem:[#allocation6 + $0x10] sm:$0xff]
    %v3419 = vld [vmem:[#allocation6 + $0x18] sm:$0xff]
    %v3420 = vld [vmem:[#allocation6 + $0x20] sm:$0xff]
    %v3421 = vld [vmem:[#allocation6 + $0x28] sm:$0xff]
    %v3422 = vld [vmem:[#allocation6 + $0x30] sm:$0xff]
    %v3423 = vld [vmem:[#allocation6 + $0x38] sm:$0xff]
    %v3424 = vld [vmem:[#allocation6 + $0x40] sm:$0xff]
    %v3425 = vld [vmem:[#allocation6 + $0x48] sm:$0xff]
    %v3426 = vld [vmem:[#allocation6 + $0x50] sm:$0xff]
    %v3427 = vld [vmem:[#allocation6 + $0x58] sm:$0xff]
    %v3428 = vld [vmem:[#allocation6 + $0x60] sm:$0xff]
    %v3429 = vld [vmem:[#allocation6 + $0x68] sm:$0xff]
    %v3430 = vld [vmem:[#allocation6 + $0x70] sm:$0xff]
    %v3431 = vld [vmem:[#allocation6 + $0x78] sm:$0xff]
    %v3432 = vld [vmem:[#allocation6 + $0x80] sm:$0xff]
    %v3433 = vld [vmem:[#allocation6 + $0x88] sm:$0xff]
    %v3434 = vld [vmem:[#allocation6 + $0x90] sm:$0xff]
    %v3435 = vld [vmem:[#allocation6 + $0x98] sm:$0xff]
    %v3436 = vld [vmem:[#allocation6 + $0xa0] sm:$0xff]
    %v3437 = vld [vmem:[#allocation6 + $0xa8] sm:$0xff]
    %v3438 = vld [vmem:[#allocation6 + $0xb0] sm:$0xff]
    %v3439 = vld [vmem:[#allocation6 + $0xb8] sm:$0xff]
    %v3440 = vld [vmem:[#allocation6 + $0xc0] sm:$0xff]
    %v3441 = vld [vmem:[#allocation6 + $0xc8] sm:$0xff]
    %v3442 = vld [vmem:[#allocation6 + $0xd0] sm:$0xff]
    %v3443 = vld [vmem:[#allocation6 + $0xd8] sm:$0xff]
    %v3444 = vld [vmem:[#allocation6 + $0xe0] sm:$0xff]
    %v3445 = vld [vmem:[#allocation6 + $0xe8] sm:$0xff]
    %v3446 = vld [vmem:[#allocation6 + $0xf0] sm:$0xff]
    %v3447 = vld [vmem:[#allocation6 + $0xf8] sm:$0xff]
    %v3448 = vld [vmem:[#allocation6 + $0x100] sm:$0xff]
    %v3449 = vld [vmem:[#allocation6 + $0x108] sm:$0xff]
    %v3450 = vld [vmem:[#allocation6 + $0x110] sm:$0xff]
    %v3451 = vld [vmem:[#allocation6 + $0x118] sm:$0xff]
    %v3452 = vld [vmem:[#allocation6 + $0x120] sm:$0xff]
    %v3453 = vld [vmem:[#allocation6 + $0x128] sm:$0xff]
    %v3454 = vld [vmem:[#allocation6 + $0x130] sm:$0xff]
    %v3455 = vld [vmem:[#allocation6 + $0x138] sm:$0xff]
    %v3456 = vld [vmem:[#allocation6 + $0x140] sm:$0xff]
    %v3457 = vld [vmem:[#allocation6 + $0x148] sm:$0xff]
    %v3458 = vld [vmem:[#allocation6 + $0x150] sm:$0xff]
    %v3459 = vld [vmem:[#allocation6 + $0x158] sm:$0xff]
    %v3460 = vld [vmem:[#allocation6 + $0x160] sm:$0xff]
    %v3461 = vld [vmem:[#allocation6 + $0x168] sm:$0xff]
    %v3462 = vld [vmem:[#allocation6 + $0x170] sm:$0xff]
    %v3463 = vld [vmem:[#allocation6 + $0x178] sm:$0xff]
    %v3464 = vld [vmem:[#allocation6 + $0x180] sm:$0xff]
    %v3465 = vld [vmem:[#allocation6 + $0x188] sm:$0xff]
    %v3466 = vld [vmem:[#allocation6 + $0x190] sm:$0xff]
    %v3467 = vld [vmem:[#allocation6 + $0x198] sm:$0xff]
    %v3468 = vld [vmem:[#allocation6 + $0x1a0] sm:$0xff]
    %v3469 = vld [vmem:[#allocation6 + $0x1a8] sm:$0xff]
    %v3470 = vld [vmem:[#allocation6 + $0x1b0] sm:$0xff]
    %v3471 = vld [vmem:[#allocation6 + $0x1b8] sm:$0xff]
    %v3472 = vld [vmem:[#allocation6 + $0x1c0] sm:$0xff]
    %v3473 = vld [vmem:[#allocation6 + $0x1c8] sm:$0xff]
    %v3474 = vld [vmem:[#allocation6 + $0x1d0] sm:$0xff]
    %v3475 = vld [vmem:[#allocation6 + $0x1d8] sm:$0xff]
    %v3476 = vld [vmem:[#allocation6 + $0x1e0] sm:$0xff]
    %v3477 = vld [vmem:[#allocation6 + $0x1e8] sm:$0xff]
    %v3478 = vld [vmem:[#allocation6 + $0x1f0] sm:$0xff]
    %v3479 = vld [vmem:[#allocation6 + $0x1f8] sm:$0xff]
    %v3480 = vld [vmem:[#allocation6 + $0x200] sm:$0xff]
    %v3481 = vld [vmem:[#allocation6 + $0x208] sm:$0xff]
    %v3482 = vld [vmem:[#allocation6 + $0x210] sm:$0xff]
    %v3483 = vld [vmem:[#allocation6 + $0x218] sm:$0xff]
    %v3484 = vld [vmem:[#allocation6 + $0x220] sm:$0xff]
    %v3485 = vld [vmem:[#allocation6 + $0x228] sm:$0xff]
    %v3486 = vld [vmem:[#allocation6 + $0x230] sm:$0xff]
    %v3487 = vld [vmem:[#allocation6 + $0x238] sm:$0xff]
    %v3488 = vld [vmem:[#allocation6 + $0x240] sm:$0xff]
    %v3489 = vld [vmem:[#allocation6 + $0x248] sm:$0xff]
    %v3490 = vld [vmem:[#allocation6 + $0x250] sm:$0xff]
    %v3491 = vld [vmem:[#allocation6 + $0x258] sm:$0xff]
    %v3492 = vld [vmem:[#allocation6 + $0x260] sm:$0xff]
    %v3493 = vld [vmem:[#allocation6 + $0x268] sm:$0xff]
    %v3494 = vld [vmem:[#allocation6 + $0x270] sm:$0xff]
    %v3495 = vld [vmem:[#allocation6 + $0x278] sm:$0xff]
    %v3496 = vld [vmem:[#allocation6 + $0x280] sm:$0xff]
    %v3497 = vld [vmem:[#allocation6 + $0x288] sm:$0xff]
    %v3498 = vld [vmem:[#allocation6 + $0x290] sm:$0xff]
    %v3499 = vld [vmem:[#allocation6 + $0x298] sm:$0xff]
    %v3500 = vld [vmem:[#allocation6 + $0x2a0] sm:$0xff]
    %v3501 = vld [vmem:[#allocation6 + $0x2a8] sm:$0xff]
    %v3502 = vld [vmem:[#allocation6 + $0x2b0] sm:$0xff]
    %v3503 = vld [vmem:[#allocation6 + $0x2b8] sm:$0xff]
    %v3504 = vld [vmem:[#allocation6 + $0x2c0] sm:$0xff]
    %v3505 = vld [vmem:[#allocation6 + $0x2c8] sm:$0xff]
    %v3506 = vld [vmem:[#allocation6 + $0x2d0] sm:$0xff]
    %v3507 = vld [vmem:[#allocation6 + $0x2d8] sm:$0xff]
    %v3508 = vld [vmem:[#allocation6 + $0x2e0] sm:$0xff]
    %v3509 = vld [vmem:[#allocation6 + $0x2e8] sm:$0xff]
    %v3510 = vld [vmem:[#allocation6 + $0x2f0] sm:$0xff]
    %v3511 = vld [vmem:[#allocation6 + $0x2f8] sm:$0xff]
    %v3512 = vld [vmem:[#allocation6 + $0x300] sm:$0xff]
    %v3513 = vld [vmem:[#allocation6 + $0x308] sm:$0xff]
    %v3514 = vld [vmem:[#allocation6 + $0x310] sm:$0xff]
    %v3515 = vld [vmem:[#allocation6 + $0x318] sm:$0xff]
    %v3516 = vld [vmem:[#allocation6 + $0x320] sm:$0xff]
    %v3517 = vld [vmem:[#allocation6 + $0x328] sm:$0xff]
    %v3518 = vld [vmem:[#allocation6 + $0x330] sm:$0xff]
    %v3519 = vld [vmem:[#allocation6 + $0x338] sm:$0xff]
    %v3520 = vld [vmem:[#allocation6 + $0x340] sm:$0xff]
    %v3521 = vld [vmem:[#allocation6 + $0x348] sm:$0xff]
    %v3522 = vld [vmem:[#allocation6 + $0x350] sm:$0xff]
    %v3523 = vld [vmem:[#allocation6 + $0x358] sm:$0xff]
    %v3524 = vld [vmem:[#allocation6 + $0x360] sm:$0xff]
    %v3525 = vld [vmem:[#allocation6 + $0x368] sm:$0xff]
    %v3526 = vld [vmem:[#allocation6 + $0x370] sm:$0xff]
    %v3527 = vld [vmem:[#allocation6 + $0x378] sm:$0xff]
    %v3528 = vld [vmem:[#allocation6 + $0x380] sm:$0xff]
    %v3529 = vld [vmem:[#allocation6 + $0x388] sm:$0xff]
    %v3530 = vld [vmem:[#allocation6 + $0x390] sm:$0xff]
    %v3531 = vld [vmem:[#allocation6 + $0x398] sm:$0xff]
    %v3532 = vld [vmem:[#allocation6 + $0x3a0] sm:$0xff]
    %v3533 = vld [vmem:[#allocation6 + $0x3a8] sm:$0xff]
    %v3534 = vld [vmem:[#allocation6 + $0x3b0] sm:$0xff]
    %v3535 = vld [vmem:[#allocation6 + $0x3b8] sm:$0xff]
    %v3536 = vld [vmem:[#allocation6 + $0x3c0] sm:$0xff]
    %v3537 = vld [vmem:[#allocation6 + $0x3c8] sm:$0xff]
    %v3538 = vld [vmem:[#allocation6 + $0x3d0] sm:$0xff]
    %v3539 = vld [vmem:[#allocation6 + $0x3d8] sm:$0xff]
    %v3540 = vld [vmem:[#allocation6 + $0x3e0] sm:$0xff]
    %v3541 = vld [vmem:[#allocation6 + $0x3e8] sm:$0xff]
    %v3542 = vld [vmem:[#allocation6 + $0x3f0] sm:$0xff]
    %v3543 = vld [vmem:[#allocation6 + $0x3f8] sm:$0xff]
    %v3544 = vld [vmem:[#allocation6 + $0x400] sm:$0xff]
    %v3545 = vld [vmem:[#allocation6 + $0x408] sm:$0xff]
    %v3546 = vld [vmem:[#allocation6 + $0x410] sm:$0xff]
    %v3547 = vld [vmem:[#allocation6 + $0x418] sm:$0xff]
    %v3548 = vld [vmem:[#allocation6 + $0x420] sm:$0xff]
    %v3549 = vld [vmem:[#allocation6 + $0x428] sm:$0xff]
    %v3550 = vld [vmem:[#allocation6 + $0x430] sm:$0xff]
    %v3551 = vld [vmem:[#allocation6 + $0x438] sm:$0xff]
    %v3552 = vld [vmem:[#allocation6 + $0x440] sm:$0xff]
    %v3553 = vld [vmem:[#allocation6 + $0x448] sm:$0xff]
    %v3554 = vld [vmem:[#allocation6 + $0x450] sm:$0xff]
    %v3555 = vld [vmem:[#allocation6 + $0x458] sm:$0xff]
    %v3556 = vld [vmem:[#allocation6 + $0x460] sm:$0xff]
    %v3557 = vld [vmem:[#allocation6 + $0x468] sm:$0xff]
    %v3558 = vld [vmem:[#allocation6 + $0x470] sm:$0xff]
    %v3559 = vld [vmem:[#allocation6 + $0x478] sm:$0xff]
    %v3560 = vld [vmem:[#allocation6 + $0x480] sm:$0xff]
    %v3561 = vld [vmem:[#allocation6 + $0x488] sm:$0xff]
    %v3562 = vld [vmem:[#allocation6 + $0x490] sm:$0xff]
    %v3563 = vld [vmem:[#allocation6 + $0x498] sm:$0xff]
    %v3564 = vld [vmem:[#allocation6 + $0x4a0] sm:$0xff]
    %v3565 = vld [vmem:[#allocation6 + $0x4a8] sm:$0xff]
    %v3566 = vld [vmem:[#allocation6 + $0x4b0] sm:$0xff]
    %v3567 = vld [vmem:[#allocation6 + $0x4b8] sm:$0xff]
    %v3568 = vld [vmem:[#allocation6 + $0x4c0] sm:$0xff]
    %v3569 = vld [vmem:[#allocation6 + $0x4c8] sm:$0xff]
    %v3570 = vld [vmem:[#allocation6 + $0x4d0] sm:$0xff]
    %v3571 = vld [vmem:[#allocation6 + $0x4d8] sm:$0xff]
    %v3572 = vld [vmem:[#allocation6 + $0x4e0] sm:$0xff]
    %v3573 = vld [vmem:[#allocation6 + $0x4e8] sm:$0xff]
    %v3574 = vld [vmem:[#allocation6 + $0x4f0] sm:$0xff]
    %v3575 = vld [vmem:[#allocation6 + $0x4f8] sm:$0xff]
    %v3576 = vld [vmem:[#allocation6 + $0x500] sm:$0xff]
    %v3577 = vld [vmem:[#allocation6 + $0x508] sm:$0xff]
    %v3578 = vld [vmem:[#allocation6 + $0x510] sm:$0xff]
    %v3579 = vld [vmem:[#allocation6 + $0x518] sm:$0xff]
    %v3580 = vld [vmem:[#allocation6 + $0x520] sm:$0xff]
    %v3581 = vld [vmem:[#allocation6 + $0x528] sm:$0xff]
    %v3582 = vld [vmem:[#allocation6 + $0x530] sm:$0xff]
    %v3583 = vld [vmem:[#allocation6 + $0x538] sm:$0xff]
    %v3584 = vld [vmem:[#allocation6 + $0x540] sm:$0xff]
    %v3585 = vld [vmem:[#allocation6 + $0x548] sm:$0xff]
    %v3586 = vld [vmem:[#allocation6 + $0x550] sm:$0xff]
    %v3587 = vld [vmem:[#allocation6 + $0x558] sm:$0xff]
    %v3588 = vld [vmem:[#allocation6 + $0x560] sm:$0xff]
    %v3589 = vld [vmem:[#allocation6 + $0x568] sm:$0xff]
    %v3590 = vld [vmem:[#allocation6 + $0x570] sm:$0xff]
    %v3591 = vld [vmem:[#allocation6 + $0x578] sm:$0xff]
    %v3592 = vld [vmem:[#allocation6 + $0x580] sm:$0xff]
    %v3593 = vld [vmem:[#allocation6 + $0x588] sm:$0xff]
    %v3594 = vld [vmem:[#allocation6 + $0x590] sm:$0xff]
    %v3595 = vld [vmem:[#allocation6 + $0x598] sm:$0xff]
    %v3596 = vld [vmem:[#allocation6 + $0x5a0] sm:$0xff]
    %v3597 = vld [vmem:[#allocation6 + $0x5a8] sm:$0xff]
    %v3598 = vld [vmem:[#allocation6 + $0x5b0] sm:$0xff]
    %v3599 = vld [vmem:[#allocation6 + $0x5b8] sm:$0xff]
    %v3600 = vld [vmem:[#allocation6 + $0x5c0] sm:$0xff]
    %v3601 = vld [vmem:[#allocation6 + $0x5c8] sm:$0xff]
    %v3602 = vld [vmem:[#allocation6 + $0x5d0] sm:$0xff]
    %v3603 = vld [vmem:[#allocation6 + $0x5d8] sm:$0xff]
    %v3604 = vld [vmem:[#allocation6 + $0x5e0] sm:$0xff]
    %v3605 = vld [vmem:[#allocation6 + $0x5e8] sm:$0xff]
    %v3606 = vld [vmem:[#allocation6 + $0x5f0] sm:$0xff]
    %v3607 = vld [vmem:[#allocation6 + $0x5f8] sm:$0xff]
    %v3608 = vld [vmem:[#allocation6 + $0x600] sm:$0xff]
    %v3609 = vld [vmem:[#allocation6 + $0x608] sm:$0xff]
    %v3610 = vld [vmem:[#allocation6 + $0x610] sm:$0xff]
    %v3611 = vld [vmem:[#allocation6 + $0x618] sm:$0xff]
    %v3612 = vld [vmem:[#allocation6 + $0x620] sm:$0xff]
    %v3613 = vld [vmem:[#allocation6 + $0x628] sm:$0xff]
    %v3614 = vld [vmem:[#allocation6 + $0x630] sm:$0xff]
    %v3615 = vld [vmem:[#allocation6 + $0x638] sm:$0xff]
    %v3616 = vld [vmem:[#allocation6 + $0x640] sm:$0xff]
    %v3617 = vld [vmem:[#allocation6 + $0x648] sm:$0xff]
    %v3618 = vld [vmem:[#allocation6 + $0x650] sm:$0xff]
    %v3619 = vld [vmem:[#allocation6 + $0x658] sm:$0xff]
    %v3620 = vld [vmem:[#allocation6 + $0x660] sm:$0xff]
    %v3621 = vld [vmem:[#allocation6 + $0x668] sm:$0xff]
    %v3622 = vld [vmem:[#allocation6 + $0x670] sm:$0xff]
    %v3623 = vld [vmem:[#allocation6 + $0x678] sm:$0xff]
    %v3624 = vld [vmem:[#allocation6 + $0x680] sm:$0xff]
    %v3625 = vld [vmem:[#allocation6 + $0x688] sm:$0xff]
    %v3626 = vld [vmem:[#allocation6 + $0x690] sm:$0xff]
    %v3627 = vld [vmem:[#allocation6 + $0x698] sm:$0xff]
    %v3628 = vld [vmem:[#allocation6 + $0x6a0] sm:$0xff]
    %v3629 = vld [vmem:[#allocation6 + $0x6a8] sm:$0xff]
    %v3630 = vld [vmem:[#allocation6 + $0x6b0] sm:$0xff]
    %v3631 = vld [vmem:[#allocation6 + $0x6b8] sm:$0xff]
    %v3632 = vld [vmem:[#allocation6 + $0x6c0] sm:$0xff]
    %v3633 = vld [vmem:[#allocation6 + $0x6c8] sm:$0xff]
    %v3634 = vld [vmem:[#allocation6 + $0x6d0] sm:$0xff]
    %v3635 = vld [vmem:[#allocation6 + $0x6d8] sm:$0xff]
    %v3636 = vld [vmem:[#allocation6 + $0x6e0] sm:$0xff]
    %v3637 = vld [vmem:[#allocation6 + $0x6e8] sm:$0xff]
    %v3638 = vld [vmem:[#allocation6 + $0x6f0] sm:$0xff]
    %v3639 = vld [vmem:[#allocation6 + $0x6f8] sm:$0xff]
    %v3640 = vld [vmem:[#allocation6 + $0x700] sm:$0xff]
    %v3641 = vld [vmem:[#allocation6 + $0x708] sm:$0xff]
    %v3642 = vld [vmem:[#allocation6 + $0x710] sm:$0xff]
    %v3643 = vld [vmem:[#allocation6 + $0x718] sm:$0xff]
    %v3644 = vld [vmem:[#allocation6 + $0x720] sm:$0xff]
    %v3645 = vld [vmem:[#allocation6 + $0x728] sm:$0xff]
    %v3646 = vld [vmem:[#allocation6 + $0x730] sm:$0xff]
    %v3647 = vld [vmem:[#allocation6 + $0x738] sm:$0xff]
    %v3648 = vld [vmem:[#allocation6 + $0x740] sm:$0xff]
    %v3649 = vld [vmem:[#allocation6 + $0x748] sm:$0xff]
    %v3650 = vld [vmem:[#allocation6 + $0x750] sm:$0xff]
    %v3651 = vld [vmem:[#allocation6 + $0x758] sm:$0xff]
    %v3652 = vld [vmem:[#allocation6 + $0x760] sm:$0xff]
    %v3653 = vld [vmem:[#allocation6 + $0x768] sm:$0xff]
    %v3654 = vld [vmem:[#allocation6 + $0x770] sm:$0xff]
    %v3655 = vld [vmem:[#allocation6 + $0x778] sm:$0xff]
    %v3656 = vld [vmem:[#allocation6 + $0x780] sm:$0xff]
    %v3657 = vld [vmem:[#allocation6 + $0x788] sm:$0xff]
    %v3658 = vld [vmem:[#allocation6 + $0x790] sm:$0xff]
    %v3659 = vld [vmem:[#allocation6 + $0x798] sm:$0xff]
    %v3660 = vld [vmem:[#allocation6 + $0x7a0] sm:$0xff]
    %v3661 = vld [vmem:[#allocation6 + $0x7a8] sm:$0xff]
    %v3662 = vld [vmem:[#allocation6 + $0x7b0] sm:$0xff]
    %v3663 = vld [vmem:[#allocation6 + $0x7b8] sm:$0xff]
    %v3664 = vld [vmem:[#allocation6 + $0x7c0] sm:$0xff]
    %v3665 = vld [vmem:[#allocation6 + $0x7c8] sm:$0xff]
    %v3666 = vld [vmem:[#allocation6 + $0x7d0] sm:$0xff]
    %v3667 = vld [vmem:[#allocation6 + $0x7d8] sm:$0xff]
    %v3668 = vld [vmem:[#allocation6 + $0x7e0] sm:$0xff]
    %v3669 = vld [vmem:[#allocation6 + $0x7e8] sm:$0xff]
    %v3670 = vld [vmem:[#allocation6 + $0x7f0] sm:$0xff]
    %v3671 = vld [vmem:[#allocation6 + $0x7f8] sm:$0xff]
    %v3672 = vld [vmem:[#allocation7] sm:$0xf]
    %v3674 = vlaneseq
    %v3675 = vshrl.u32 %v3674, 7
    %v3676 = vsub.s32 0, %v3675
    %v3677 = vrot.slane %v3672, %v3676
    %v3678 = vlaneseq
    %v3679 = vshrl.u32 %v3678, 7
    %v3680 = vsub.s32 1, %v3679
    %v3681 = vrot.slane %v3672, %v3680
    %v3682 = vlaneseq
    %v3683 = vshrl.u32 %v3682, 7
    %v3684 = vsub.s32 2, %v3683
    %v3685 = vrot.slane %v3672, %v3684
    %v3686 = vlaneseq
    %v3687 = vshrl.u32 %v3686, 7
    %v3688 = vsub.s32 3, %v3687
    %v3689 = vrot.slane %v3672, %v3688
    %v3950 = vunpack.c.l.b16 %v3416
    %v3951 = vunpack.c.h.b16 %v3416
    %v3952 = vunpack.c.l.b16 %v3417
    %v3953 = vunpack.c.h.b16 %v3417
    %v3954 = vunpack.c.l.b16 %v3418
    %v3955 = vunpack.c.h.b16 %v3418
    %v3956 = vunpack.c.l.b16 %v3419
    %v3957 = vunpack.c.h.b16 %v3419
    %v3958 = vunpack.c.l.b16 %v3420
    %v3959 = vunpack.c.h.b16 %v3420
    %v3960 = vunpack.c.l.b16 %v3421
    %v3961 = vunpack.c.h.b16 %v3421
    %v3962 = vunpack.c.l.b16 %v3422
    %v3963 = vunpack.c.h.b16 %v3422
    %v3964 = vunpack.c.l.b16 %v3423
    %v3965 = vunpack.c.h.b16 %v3423
    %v3966 = vunpack.c.l.b16 %v3424
    %v3967 = vunpack.c.h.b16 %v3424
    %v3968 = vunpack.c.l.b16 %v3425
    %v3969 = vunpack.c.h.b16 %v3425
    %v3970 = vunpack.c.l.b16 %v3426
    %v3971 = vunpack.c.h.b16 %v3426
    %v3972 = vunpack.c.l.b16 %v3427
    %v3973 = vunpack.c.h.b16 %v3427
    %v3974 = vunpack.c.l.b16 %v3428
    %v3975 = vunpack.c.h.b16 %v3428
    %v3976 = vunpack.c.l.b16 %v3429
    %v3977 = vunpack.c.h.b16 %v3429
    %v3978 = vunpack.c.l.b16 %v3430
    %v3979 = vunpack.c.h.b16 %v3430
    %v3980 = vunpack.c.l.b16 %v3431
    %v3981 = vunpack.c.h.b16 %v3431
    %v3982 = vunpack.c.l.b16 %v3432
    %v3983 = vunpack.c.h.b16 %v3432
    %v3984 = vunpack.c.l.b16 %v3433
    %v3985 = vunpack.c.h.b16 %v3433
    %v3986 = vunpack.c.l.b16 %v3434
    %v3987 = vunpack.c.h.b16 %v3434
    %v3988 = vunpack.c.l.b16 %v3435
    %v3989 = vunpack.c.h.b16 %v3435
    %v3990 = vunpack.c.l.b16 %v3436
    %v3991 = vunpack.c.h.b16 %v3436
    %v3992 = vunpack.c.l.b16 %v3437
    %v3993 = vunpack.c.h.b16 %v3437
    %v3994 = vunpack.c.l.b16 %v3438
    %v3995 = vunpack.c.h.b16 %v3438
    %v3996 = vunpack.c.l.b16 %v3439
    %v3997 = vunpack.c.h.b16 %v3439
    %v3998 = vunpack.c.l.b16 %v3440
    %v3999 = vunpack.c.h.b16 %v3440
    %v4000 = vunpack.c.l.b16 %v3441
    %v4001 = vunpack.c.h.b16 %v3441
    %v4002 = vunpack.c.l.b16 %v3442
    %v4003 = vunpack.c.h.b16 %v3442
    %v4004 = vunpack.c.l.b16 %v3443
    %v4005 = vunpack.c.h.b16 %v3443
    %v4006 = vunpack.c.l.b16 %v3444
    %v4007 = vunpack.c.h.b16 %v3444
    %v4008 = vunpack.c.l.b16 %v3445
    %v4009 = vunpack.c.h.b16 %v3445
    %v4010 = vunpack.c.l.b16 %v3446
    %v4011 = vunpack.c.h.b16 %v3446
    %v4012 = vunpack.c.l.b16 %v3447
    %v4013 = vunpack.c.h.b16 %v3447
    %v4014 = vunpack.c.l.b16 %v3448
    %v4015 = vunpack.c.h.b16 %v3448
    %v4016 = vunpack.c.l.b16 %v3449
    %v4017 = vunpack.c.h.b16 %v3449
    %v4018 = vunpack.c.l.b16 %v3450
    %v4019 = vunpack.c.h.b16 %v3450
    %v4020 = vunpack.c.l.b16 %v3451
    %v4021 = vunpack.c.h.b16 %v3451
    %v4022 = vunpack.c.l.b16 %v3452
    %v4023 = vunpack.c.h.b16 %v3452
    %v4024 = vunpack.c.l.b16 %v3453
    %v4025 = vunpack.c.h.b16 %v3453
    %v4026 = vunpack.c.l.b16 %v3454
    %v4027 = vunpack.c.h.b16 %v3454
    %v4028 = vunpack.c.l.b16 %v3455
    %v4029 = vunpack.c.h.b16 %v3455
    %v4030 = vunpack.c.l.b16 %v3456
    %v4031 = vunpack.c.h.b16 %v3456
    %v4032 = vunpack.c.l.b16 %v3457
    %v4033 = vunpack.c.h.b16 %v3457
    %v4034 = vunpack.c.l.b16 %v3458
    %v4035 = vunpack.c.h.b16 %v3458
    %v4036 = vunpack.c.l.b16 %v3459
    %v4037 = vunpack.c.h.b16 %v3459
    %v4038 = vunpack.c.l.b16 %v3460
    %v4039 = vunpack.c.h.b16 %v3460
    %v4040 = vunpack.c.l.b16 %v3461
    %v4041 = vunpack.c.h.b16 %v3461
    %v4042 = vunpack.c.l.b16 %v3462
    %v4043 = vunpack.c.h.b16 %v3462
    %v4044 = vunpack.c.l.b16 %v3463
    %v4045 = vunpack.c.h.b16 %v3463
    %v4046 = vunpack.c.l.b16 %v3464
    %v4047 = vunpack.c.h.b16 %v3464
    %v4048 = vunpack.c.l.b16 %v3465
    %v4049 = vunpack.c.h.b16 %v3465
    %v4050 = vunpack.c.l.b16 %v3466
    %v4051 = vunpack.c.h.b16 %v3466
    %v4052 = vunpack.c.l.b16 %v3467
    %v4053 = vunpack.c.h.b16 %v3467
    %v4054 = vunpack.c.l.b16 %v3468
    %v4055 = vunpack.c.h.b16 %v3468
    %v4056 = vunpack.c.l.b16 %v3469
    %v4057 = vunpack.c.h.b16 %v3469
    %v4058 = vunpack.c.l.b16 %v3470
    %v4059 = vunpack.c.h.b16 %v3470
    %v4060 = vunpack.c.l.b16 %v3471
    %v4061 = vunpack.c.h.b16 %v3471
    %v4062 = vunpack.c.l.b16 %v3472
    %v4063 = vunpack.c.h.b16 %v3472
    %v4064 = vunpack.c.l.b16 %v3473
    %v4065 = vunpack.c.h.b16 %v3473
    %v4066 = vunpack.c.l.b16 %v3474
    %v4067 = vunpack.c.h.b16 %v3474
    %v4068 = vunpack.c.l.b16 %v3475
    %v4069 = vunpack.c.h.b16 %v3475
    %v4070 = vunpack.c.l.b16 %v3476
    %v4071 = vunpack.c.h.b16 %v3476
    %v4072 = vunpack.c.l.b16 %v3477
    %v4073 = vunpack.c.h.b16 %v3477
    %v4074 = vunpack.c.l.b16 %v3478
    %v4075 = vunpack.c.h.b16 %v3478
    %v4076 = vunpack.c.l.b16 %v3479
    %v4077 = vunpack.c.h.b16 %v3479
    %v4078 = vunpack.c.l.b16 %v3480
    %v4079 = vunpack.c.h.b16 %v3480
    %v4080 = vunpack.c.l.b16 %v3481
    %v4081 = vunpack.c.h.b16 %v3481
    %v4082 = vunpack.c.l.b16 %v3482
    %v4083 = vunpack.c.h.b16 %v3482
    %v4084 = vunpack.c.l.b16 %v3483
    %v4085 = vunpack.c.h.b16 %v3483
    %v4086 = vunpack.c.l.b16 %v3484
    %v4087 = vunpack.c.h.b16 %v3484
    %v4088 = vunpack.c.l.b16 %v3485
    %v4089 = vunpack.c.h.b16 %v3485
    %v4090 = vunpack.c.l.b16 %v3486
    %v4091 = vunpack.c.h.b16 %v3486
    %v4092 = vunpack.c.l.b16 %v3487
    %v4093 = vunpack.c.h.b16 %v3487
    %v4094 = vunpack.c.l.b16 %v3488
    %v4095 = vunpack.c.h.b16 %v3488
    %v4096 = vunpack.c.l.b16 %v3489
    %v4097 = vunpack.c.h.b16 %v3489
    %v4098 = vunpack.c.l.b16 %v3490
    %v4099 = vunpack.c.h.b16 %v3490
    %v4100 = vunpack.c.l.b16 %v3491
    %v4101 = vunpack.c.h.b16 %v3491
    %v4102 = vunpack.c.l.b16 %v3492
    %v4103 = vunpack.c.h.b16 %v3492
    %v4104 = vunpack.c.l.b16 %v3493
    %v4105 = vunpack.c.h.b16 %v3493
    %v4106 = vunpack.c.l.b16 %v3494
    %v4107 = vunpack.c.h.b16 %v3494
    %v4108 = vunpack.c.l.b16 %v3495
    %v4109 = vunpack.c.h.b16 %v3495
    %v4110 = vunpack.c.l.b16 %v3496
    %v4111 = vunpack.c.h.b16 %v3496
    %v4112 = vunpack.c.l.b16 %v3497
    %v4113 = vunpack.c.h.b16 %v3497
    %v4114 = vunpack.c.l.b16 %v3498
    %v4115 = vunpack.c.h.b16 %v3498
    %v4116 = vunpack.c.l.b16 %v3499
    %v4117 = vunpack.c.h.b16 %v3499
    %v4118 = vunpack.c.l.b16 %v3500
    %v4119 = vunpack.c.h.b16 %v3500
    %v4120 = vunpack.c.l.b16 %v3501
    %v4121 = vunpack.c.h.b16 %v3501
    %v4122 = vunpack.c.l.b16 %v3502
    %v4123 = vunpack.c.h.b16 %v3502
    %v4124 = vunpack.c.l.b16 %v3503
    %v4125 = vunpack.c.h.b16 %v3503
    %v4126 = vunpack.c.l.b16 %v3504
    %v4127 = vunpack.c.h.b16 %v3504
    %v4128 = vunpack.c.l.b16 %v3505
    %v4129 = vunpack.c.h.b16 %v3505
    %v4130 = vunpack.c.l.b16 %v3506
    %v4131 = vunpack.c.h.b16 %v3506
    %v4132 = vunpack.c.l.b16 %v3507
    %v4133 = vunpack.c.h.b16 %v3507
    %v4134 = vunpack.c.l.b16 %v3508
    %v4135 = vunpack.c.h.b16 %v3508
    %v4136 = vunpack.c.l.b16 %v3509
    %v4137 = vunpack.c.h.b16 %v3509
    %v4138 = vunpack.c.l.b16 %v3510
    %v4139 = vunpack.c.h.b16 %v3510
    %v4140 = vunpack.c.l.b16 %v3511
    %v4141 = vunpack.c.h.b16 %v3511
    %v4142 = vunpack.c.l.b16 %v3512
    %v4143 = vunpack.c.h.b16 %v3512
    %v4144 = vunpack.c.l.b16 %v3513
    %v4145 = vunpack.c.h.b16 %v3513
    %v4146 = vunpack.c.l.b16 %v3514
    %v4147 = vunpack.c.h.b16 %v3514
    %v4148 = vunpack.c.l.b16 %v3515
    %v4149 = vunpack.c.h.b16 %v3515
    %v4150 = vunpack.c.l.b16 %v3516
    %v4151 = vunpack.c.h.b16 %v3516
    %v4152 = vunpack.c.l.b16 %v3517
    %v4153 = vunpack.c.h.b16 %v3517
    %v4154 = vunpack.c.l.b16 %v3518
    %v4155 = vunpack.c.h.b16 %v3518
    %v4156 = vunpack.c.l.b16 %v3519
    %v4157 = vunpack.c.h.b16 %v3519
    %v4158 = vunpack.c.l.b16 %v3520
    %v4159 = vunpack.c.h.b16 %v3520
    %v4160 = vunpack.c.l.b16 %v3521
    %v4161 = vunpack.c.h.b16 %v3521
    %v4162 = vunpack.c.l.b16 %v3522
    %v4163 = vunpack.c.h.b16 %v3522
    %v4164 = vunpack.c.l.b16 %v3523
    %v4165 = vunpack.c.h.b16 %v3523
    %v4166 = vunpack.c.l.b16 %v3524
    %v4167 = vunpack.c.h.b16 %v3524
    %v4168 = vunpack.c.l.b16 %v3525
    %v4169 = vunpack.c.h.b16 %v3525
    %v4170 = vunpack.c.l.b16 %v3526
    %v4171 = vunpack.c.h.b16 %v3526
    %v4172 = vunpack.c.l.b16 %v3527
    %v4173 = vunpack.c.h.b16 %v3527
    %v4174 = vunpack.c.l.b16 %v3528
    %v4175 = vunpack.c.h.b16 %v3528
    %v4176 = vunpack.c.l.b16 %v3529
    %v4177 = vunpack.c.h.b16 %v3529
    %v4178 = vunpack.c.l.b16 %v3530
    %v4179 = vunpack.c.h.b16 %v3530
    %v4180 = vunpack.c.l.b16 %v3531
    %v4181 = vunpack.c.h.b16 %v3531
    %v4182 = vunpack.c.l.b16 %v3532
    %v4183 = vunpack.c.h.b16 %v3532
    %v4184 = vunpack.c.l.b16 %v3533
    %v4185 = vunpack.c.h.b16 %v3533
    %v4186 = vunpack.c.l.b16 %v3534
    %v4187 = vunpack.c.h.b16 %v3534
    %v4188 = vunpack.c.l.b16 %v3535
    %v4189 = vunpack.c.h.b16 %v3535
    %v4190 = vunpack.c.l.b16 %v3536
    %v4191 = vunpack.c.h.b16 %v3536
    %v4192 = vunpack.c.l.b16 %v3537
    %v4193 = vunpack.c.h.b16 %v3537
    %v4194 = vunpack.c.l.b16 %v3538
    %v4195 = vunpack.c.h.b16 %v3538
    %v4196 = vunpack.c.l.b16 %v3539
    %v4197 = vunpack.c.h.b16 %v3539
    %v4198 = vunpack.c.l.b16 %v3540
    %v4199 = vunpack.c.h.b16 %v3540
    %v4200 = vunpack.c.l.b16 %v3541
    %v4201 = vunpack.c.h.b16 %v3541
    %v4202 = vunpack.c.l.b16 %v3542
    %v4203 = vunpack.c.h.b16 %v3542
    %v4204 = vunpack.c.l.b16 %v3543
    %v4205 = vunpack.c.h.b16 %v3543
    %v4206 = vunpack.c.l.b16 %v3544
    %v4207 = vunpack.c.h.b16 %v3544
    %v4208 = vunpack.c.l.b16 %v3545
    %v4209 = vunpack.c.h.b16 %v3545
    %v4210 = vunpack.c.l.b16 %v3546
    %v4211 = vunpack.c.h.b16 %v3546
    %v4212 = vunpack.c.l.b16 %v3547
    %v4213 = vunpack.c.h.b16 %v3547
    %v4214 = vunpack.c.l.b16 %v3548
    %v4215 = vunpack.c.h.b16 %v3548
    %v4216 = vunpack.c.l.b16 %v3549
    %v4217 = vunpack.c.h.b16 %v3549
    %v4218 = vunpack.c.l.b16 %v3550
    %v4219 = vunpack.c.h.b16 %v3550
    %v4220 = vunpack.c.l.b16 %v3551
    %v4221 = vunpack.c.h.b16 %v3551
    %v4222 = vunpack.c.l.b16 %v3552
    %v4223 = vunpack.c.h.b16 %v3552
    %v4224 = vunpack.c.l.b16 %v3553
    %v4225 = vunpack.c.h.b16 %v3553
    %v4226 = vunpack.c.l.b16 %v3554
    %v4227 = vunpack.c.h.b16 %v3554
    %v4228 = vunpack.c.l.b16 %v3555
    %v4229 = vunpack.c.h.b16 %v3555
    %v4230 = vunpack.c.l.b16 %v3556
    %v4231 = vunpack.c.h.b16 %v3556
    %v4232 = vunpack.c.l.b16 %v3557
    %v4233 = vunpack.c.h.b16 %v3557
    %v4234 = vunpack.c.l.b16 %v3558
    %v4235 = vunpack.c.h.b16 %v3558
    %v4236 = vunpack.c.l.b16 %v3559
    %v4237 = vunpack.c.h.b16 %v3559
    %v4238 = vunpack.c.l.b16 %v3560
    %v4239 = vunpack.c.h.b16 %v3560
    %v4240 = vunpack.c.l.b16 %v3561
    %v4241 = vunpack.c.h.b16 %v3561
    %v4242 = vunpack.c.l.b16 %v3562
    %v4243 = vunpack.c.h.b16 %v3562
    %v4244 = vunpack.c.l.b16 %v3563
    %v4245 = vunpack.c.h.b16 %v3563
    %v4246 = vunpack.c.l.b16 %v3564
    %v4247 = vunpack.c.h.b16 %v3564
    %v4248 = vunpack.c.l.b16 %v3565
    %v4249 = vunpack.c.h.b16 %v3565
    %v4250 = vunpack.c.l.b16 %v3566
    %v4251 = vunpack.c.h.b16 %v3566
    %v4252 = vunpack.c.l.b16 %v3567
    %v4253 = vunpack.c.h.b16 %v3567
    %v4254 = vunpack.c.l.b16 %v3568
    %v4255 = vunpack.c.h.b16 %v3568
    %v4256 = vunpack.c.l.b16 %v3569
    %v4257 = vunpack.c.h.b16 %v3569
    %v4258 = vunpack.c.l.b16 %v3570
    %v4259 = vunpack.c.h.b16 %v3570
    %v4260 = vunpack.c.l.b16 %v3571
    %v4261 = vunpack.c.h.b16 %v3571
    %v4262 = vunpack.c.l.b16 %v3572
    %v4263 = vunpack.c.h.b16 %v3572
    %v4264 = vunpack.c.l.b16 %v3573
    %v4265 = vunpack.c.h.b16 %v3573
    %v4266 = vunpack.c.l.b16 %v3574
    %v4267 = vunpack.c.h.b16 %v3574
    %v4268 = vunpack.c.l.b16 %v3575
    %v4269 = vunpack.c.h.b16 %v3575
    %v4270 = vunpack.c.l.b16 %v3576
    %v4271 = vunpack.c.h.b16 %v3576
    %v4272 = vunpack.c.l.b16 %v3577
    %v4273 = vunpack.c.h.b16 %v3577
    %v4274 = vunpack.c.l.b16 %v3578
    %v4275 = vunpack.c.h.b16 %v3578
    %v4276 = vunpack.c.l.b16 %v3579
    %v4277 = vunpack.c.h.b16 %v3579
    %v4278 = vunpack.c.l.b16 %v3580
    %v4279 = vunpack.c.h.b16 %v3580
    %v4280 = vunpack.c.l.b16 %v3581
    %v4281 = vunpack.c.h.b16 %v3581
    %v4282 = vunpack.c.l.b16 %v3582
    %v4283 = vunpack.c.h.b16 %v3582
    %v4284 = vunpack.c.l.b16 %v3583
    %v4285 = vunpack.c.h.b16 %v3583
    %v4286 = vunpack.c.l.b16 %v3584
    %v4287 = vunpack.c.h.b16 %v3584
    %v4288 = vunpack.c.l.b16 %v3585
    %v4289 = vunpack.c.h.b16 %v3585
    %v4290 = vunpack.c.l.b16 %v3586
    %v4291 = vunpack.c.h.b16 %v3586
    %v4292 = vunpack.c.l.b16 %v3587
    %v4293 = vunpack.c.h.b16 %v3587
    %v4294 = vunpack.c.l.b16 %v3588
    %v4295 = vunpack.c.h.b16 %v3588
    %v4296 = vunpack.c.l.b16 %v3589
    %v4297 = vunpack.c.h.b16 %v3589
    %v4298 = vunpack.c.l.b16 %v3590
    %v4299 = vunpack.c.h.b16 %v3590
    %v4300 = vunpack.c.l.b16 %v3591
    %v4301 = vunpack.c.h.b16 %v3591
    %v4302 = vunpack.c.l.b16 %v3592
    %v4303 = vunpack.c.h.b16 %v3592
    %v4304 = vunpack.c.l.b16 %v3593
    %v4305 = vunpack.c.h.b16 %v3593
    %v4306 = vunpack.c.l.b16 %v3594
    %v4307 = vunpack.c.h.b16 %v3594
    %v4308 = vunpack.c.l.b16 %v3595
    %v4309 = vunpack.c.h.b16 %v3595
    %v4310 = vunpack.c.l.b16 %v3596
    %v4311 = vunpack.c.h.b16 %v3596
    %v4312 = vunpack.c.l.b16 %v3597
    %v4313 = vunpack.c.h.b16 %v3597
    %v4314 = vunpack.c.l.b16 %v3598
    %v4315 = vunpack.c.h.b16 %v3598
    %v4316 = vunpack.c.l.b16 %v3599
    %v4317 = vunpack.c.h.b16 %v3599
    %v4318 = vunpack.c.l.b16 %v3600
    %v4319 = vunpack.c.h.b16 %v3600
    %v4320 = vunpack.c.l.b16 %v3601
    %v4321 = vunpack.c.h.b16 %v3601
    %v4322 = vunpack.c.l.b16 %v3602
    %v4323 = vunpack.c.h.b16 %v3602
    %v4324 = vunpack.c.l.b16 %v3603
    %v4325 = vunpack.c.h.b16 %v3603
    %v4326 = vunpack.c.l.b16 %v3604
    %v4327 = vunpack.c.h.b16 %v3604
    %v4328 = vunpack.c.l.b16 %v3605
    %v4329 = vunpack.c.h.b16 %v3605
    %v4330 = vunpack.c.l.b16 %v3606
    %v4331 = vunpack.c.h.b16 %v3606
    %v4332 = vunpack.c.l.b16 %v3607
    %v4333 = vunpack.c.h.b16 %v3607
    %v4334 = vunpack.c.l.b16 %v3608
    %v4335 = vunpack.c.h.b16 %v3608
    %v4336 = vunpack.c.l.b16 %v3609
    %v4337 = vunpack.c.h.b16 %v3609
    %v4338 = vunpack.c.l.b16 %v3610
    %v4339 = vunpack.c.h.b16 %v3610
    %v4340 = vunpack.c.l.b16 %v3611
    %v4341 = vunpack.c.h.b16 %v3611
    %v4342 = vunpack.c.l.b16 %v3612
    %v4343 = vunpack.c.h.b16 %v3612
    %v4344 = vunpack.c.l.b16 %v3613
    %v4345 = vunpack.c.h.b16 %v3613
    %v4346 = vunpack.c.l.b16 %v3614
    %v4347 = vunpack.c.h.b16 %v3614
    %v4348 = vunpack.c.l.b16 %v3615
    %v4349 = vunpack.c.h.b16 %v3615
    %v4350 = vunpack.c.l.b16 %v3616
    %v4351 = vunpack.c.h.b16 %v3616
    %v4352 = vunpack.c.l.b16 %v3617
    %v4353 = vunpack.c.h.b16 %v3617
    %v4354 = vunpack.c.l.b16 %v3618
    %v4355 = vunpack.c.h.b16 %v3618
    %v4356 = vunpack.c.l.b16 %v3619
    %v4357 = vunpack.c.h.b16 %v3619
    %v4358 = vunpack.c.l.b16 %v3620
    %v4359 = vunpack.c.h.b16 %v3620
    %v4360 = vunpack.c.l.b16 %v3621
    %v4361 = vunpack.c.h.b16 %v3621
    %v4362 = vunpack.c.l.b16 %v3622
    %v4363 = vunpack.c.h.b16 %v3622
    %v4364 = vunpack.c.l.b16 %v3623
    %v4365 = vunpack.c.h.b16 %v3623
    %v4366 = vunpack.c.l.b16 %v3624
    %v4367 = vunpack.c.h.b16 %v3624
    %v4368 = vunpack.c.l.b16 %v3625
    %v4369 = vunpack.c.h.b16 %v3625
    %v4370 = vunpack.c.l.b16 %v3626
    %v4371 = vunpack.c.h.b16 %v3626
    %v4372 = vunpack.c.l.b16 %v3627
    %v4373 = vunpack.c.h.b16 %v3627
    %v4374 = vunpack.c.l.b16 %v3628
    %v4375 = vunpack.c.h.b16 %v3628
    %v4376 = vunpack.c.l.b16 %v3629
    %v4377 = vunpack.c.h.b16 %v3629
    %v4378 = vunpack.c.l.b16 %v3630
    %v4379 = vunpack.c.h.b16 %v3630
    %v4380 = vunpack.c.l.b16 %v3631
    %v4381 = vunpack.c.h.b16 %v3631
    %v4382 = vunpack.c.l.b16 %v3632
    %v4383 = vunpack.c.h.b16 %v3632
    %v4384 = vunpack.c.l.b16 %v3633
    %v4385 = vunpack.c.h.b16 %v3633
    %v4386 = vunpack.c.l.b16 %v3634
    %v4387 = vunpack.c.h.b16 %v3634
    %v4388 = vunpack.c.l.b16 %v3635
    %v4389 = vunpack.c.h.b16 %v3635
    %v4390 = vunpack.c.l.b16 %v3636
    %v4391 = vunpack.c.h.b16 %v3636
    %v4392 = vunpack.c.l.b16 %v3637
    %v4393 = vunpack.c.h.b16 %v3637
    %v4394 = vunpack.c.l.b16 %v3638
    %v4395 = vunpack.c.h.b16 %v3638
    %v4396 = vunpack.c.l.b16 %v3639
    %v4397 = vunpack.c.h.b16 %v3639
    %v4398 = vunpack.c.l.b16 %v3640
    %v4399 = vunpack.c.h.b16 %v3640
    %v4400 = vunpack.c.l.b16 %v3641
    %v4401 = vunpack.c.h.b16 %v3641
    %v4402 = vunpack.c.l.b16 %v3642
    %v4403 = vunpack.c.h.b16 %v3642
    %v4404 = vunpack.c.l.b16 %v3643
    %v4405 = vunpack.c.h.b16 %v3643
    %v4406 = vunpack.c.l.b16 %v3644
    %v4407 = vunpack.c.h.b16 %v3644
    %v4408 = vunpack.c.l.b16 %v3645
    %v4409 = vunpack.c.h.b16 %v3645
    %v4410 = vunpack.c.l.b16 %v3646
    %v4411 = vunpack.c.h.b16 %v3646
    %v4412 = vunpack.c.l.b16 %v3647
    %v4413 = vunpack.c.h.b16 %v3647
    %v4414 = vunpack.c.l.b16 %v3648
    %v4415 = vunpack.c.h.b16 %v3648
    %v4416 = vunpack.c.l.b16 %v3649
    %v4417 = vunpack.c.h.b16 %v3649
    %v4418 = vunpack.c.l.b16 %v3650
    %v4419 = vunpack.c.h.b16 %v3650
    %v4420 = vunpack.c.l.b16 %v3651
    %v4421 = vunpack.c.h.b16 %v3651
    %v4422 = vunpack.c.l.b16 %v3652
    %v4423 = vunpack.c.h.b16 %v3652
    %v4424 = vunpack.c.l.b16 %v3653
    %v4425 = vunpack.c.h.b16 %v3653
    %v4426 = vunpack.c.l.b16 %v3654
    %v4427 = vunpack.c.h.b16 %v3654
    %v4428 = vunpack.c.l.b16 %v3655
    %v4429 = vunpack.c.h.b16 %v3655
    %v4430 = vunpack.c.l.b16 %v3656
    %v4431 = vunpack.c.h.b16 %v3656
    %v4432 = vunpack.c.l.b16 %v3657
    %v4433 = vunpack.c.h.b16 %v3657
    %v4434 = vunpack.c.l.b16 %v3658
    %v4435 = vunpack.c.h.b16 %v3658
    %v4436 = vunpack.c.l.b16 %v3659
    %v4437 = vunpack.c.h.b16 %v3659
    %v4438 = vunpack.c.l.b16 %v3660
    %v4439 = vunpack.c.h.b16 %v3660
    %v4440 = vunpack.c.l.b16 %v3661
    %v4441 = vunpack.c.h.b16 %v3661
    %v4442 = vunpack.c.l.b16 %v3662
    %v4443 = vunpack.c.h.b16 %v3662
    %v4444 = vunpack.c.l.b16 %v3663
    %v4445 = vunpack.c.h.b16 %v3663
    %v4446 = vunpack.c.l.b16 %v3664
    %v4447 = vunpack.c.h.b16 %v3664
    %v4448 = vunpack.c.l.b16 %v3665
    %v4449 = vunpack.c.h.b16 %v3665
    %v4450 = vunpack.c.l.b16 %v3666
    %v4451 = vunpack.c.h.b16 %v3666
    %v4452 = vunpack.c.l.b16 %v3667
    %v4453 = vunpack.c.h.b16 %v3667
    %v4454 = vunpack.c.l.b16 %v3668
    %v4455 = vunpack.c.h.b16 %v3668
    %v4456 = vunpack.c.l.b16 %v3669
    %v4457 = vunpack.c.h.b16 %v3669
    %v4458 = vunpack.c.l.b16 %v3670
    %v4459 = vunpack.c.h.b16 %v3670
    %v4460 = vunpack.c.l.b16 %v3671
    %v4461 = vunpack.c.h.b16 %v3671
    %v4462 = vpack.c.b16 %v3954, %v3950
    %v4463 = vpack.c.b16 %v3955, %v3951
    %v4464 = vpack.c.b16 %v3956, %v3952
    %v4465 = vpack.c.b16 %v3957, %v3953
    %v4466 = vpack.c.b16 %v3962, %v3958
    %v4467 = vpack.c.b16 %v3963, %v3959
    %v4468 = vpack.c.b16 %v3964, %v3960
    %v4469 = vpack.c.b16 %v3965, %v3961
    %v4470 = vpack.c.b16 %v3970, %v3966
    %v4471 = vpack.c.b16 %v3971, %v3967
    %v4472 = vpack.c.b16 %v3972, %v3968
    %v4473 = vpack.c.b16 %v3973, %v3969
    %v4474 = vpack.c.b16 %v3978, %v3974
    %v4475 = vpack.c.b16 %v3979, %v3975
    %v4476 = vpack.c.b16 %v3980, %v3976
    %v4477 = vpack.c.b16 %v3981, %v3977
    %v4478 = vpack.c.b16 %v3986, %v3982
    %v4479 = vpack.c.b16 %v3987, %v3983
    %v4480 = vpack.c.b16 %v3988, %v3984
    %v4481 = vpack.c.b16 %v3989, %v3985
    %v4482 = vpack.c.b16 %v3994, %v3990
    %v4483 = vpack.c.b16 %v3995, %v3991
    %v4484 = vpack.c.b16 %v3996, %v3992
    %v4485 = vpack.c.b16 %v3997, %v3993
    %v4486 = vpack.c.b16 %v4002, %v3998
    %v4487 = vpack.c.b16 %v4003, %v3999
    %v4488 = vpack.c.b16 %v4004, %v4000
    %v4489 = vpack.c.b16 %v4005, %v4001
    %v4490 = vpack.c.b16 %v4010, %v4006
    %v4491 = vpack.c.b16 %v4011, %v4007
    %v4492 = vpack.c.b16 %v4012, %v4008
    %v4493 = vpack.c.b16 %v4013, %v4009
    %v4494 = vpack.c.b16 %v4018, %v4014
    %v4495 = vpack.c.b16 %v4019, %v4015
    %v4496 = vpack.c.b16 %v4020, %v4016
    %v4497 = vpack.c.b16 %v4021, %v4017
    %v4498 = vpack.c.b16 %v4026, %v4022
    %v4499 = vpack.c.b16 %v4027, %v4023
    %v4500 = vpack.c.b16 %v4028, %v4024
    %v4501 = vpack.c.b16 %v4029, %v4025
    %v4502 = vpack.c.b16 %v4034, %v4030
    %v4503 = vpack.c.b16 %v4035, %v4031
    %v4504 = vpack.c.b16 %v4036, %v4032
    %v4505 = vpack.c.b16 %v4037, %v4033
    %v4506 = vpack.c.b16 %v4042, %v4038
    %v4507 = vpack.c.b16 %v4043, %v4039
    %v4508 = vpack.c.b16 %v4044, %v4040
    %v4509 = vpack.c.b16 %v4045, %v4041
    %v4510 = vpack.c.b16 %v4050, %v4046
    %v4511 = vpack.c.b16 %v4051, %v4047
    %v4512 = vpack.c.b16 %v4052, %v4048
    %v4513 = vpack.c.b16 %v4053, %v4049
    %v4514 = vpack.c.b16 %v4058, %v4054
    %v4515 = vpack.c.b16 %v4059, %v4055
    %v4516 = vpack.c.b16 %v4060, %v4056
    %v4517 = vpack.c.b16 %v4061, %v4057
    %v4518 = vpack.c.b16 %v4066, %v4062
    %v4519 = vpack.c.b16 %v4067, %v4063
    %v4520 = vpack.c.b16 %v4068, %v4064
    %v4521 = vpack.c.b16 %v4069, %v4065
    %v4522 = vpack.c.b16 %v4074, %v4070
    %v4523 = vpack.c.b16 %v4075, %v4071
    %v4524 = vpack.c.b16 %v4076, %v4072
    %v4525 = vpack.c.b16 %v4077, %v4073
    %v4526 = vpack.c.b16 %v4082, %v4078
    %v4527 = vpack.c.b16 %v4083, %v4079
    %v4528 = vpack.c.b16 %v4084, %v4080
    %v4529 = vpack.c.b16 %v4085, %v4081
    %v4530 = vpack.c.b16 %v4090, %v4086
    %v4531 = vpack.c.b16 %v4091, %v4087
    %v4532 = vpack.c.b16 %v4092, %v4088
    %v4533 = vpack.c.b16 %v4093, %v4089
    %v4534 = vpack.c.b16 %v4098, %v4094
    %v4535 = vpack.c.b16 %v4099, %v4095
    %v4536 = vpack.c.b16 %v4100, %v4096
    %v4537 = vpack.c.b16 %v4101, %v4097
    %v4538 = vpack.c.b16 %v4106, %v4102
    %v4539 = vpack.c.b16 %v4107, %v4103
    %v4540 = vpack.c.b16 %v4108, %v4104
    %v4541 = vpack.c.b16 %v4109, %v4105
    %v4542 = vpack.c.b16 %v4114, %v4110
    %v4543 = vpack.c.b16 %v4115, %v4111
    %v4544 = vpack.c.b16 %v4116, %v4112
    %v4545 = vpack.c.b16 %v4117, %v4113
    %v4546 = vpack.c.b16 %v4122, %v4118
    %v4547 = vpack.c.b16 %v4123, %v4119
    %v4548 = vpack.c.b16 %v4124, %v4120
    %v4549 = vpack.c.b16 %v4125, %v4121
    %v4550 = vpack.c.b16 %v4130, %v4126
    %v4551 = vpack.c.b16 %v4131, %v4127
    %v4552 = vpack.c.b16 %v4132, %v4128
    %v4553 = vpack.c.b16 %v4133, %v4129
    %v4554 = vpack.c.b16 %v4138, %v4134
    %v4555 = vpack.c.b16 %v4139, %v4135
    %v4556 = vpack.c.b16 %v4140, %v4136
    %v4557 = vpack.c.b16 %v4141, %v4137
    %v4558 = vpack.c.b16 %v4146, %v4142
    %v4559 = vpack.c.b16 %v4147, %v4143
    %v4560 = vpack.c.b16 %v4148, %v4144
    %v4561 = vpack.c.b16 %v4149, %v4145
    %v4562 = vpack.c.b16 %v4154, %v4150
    %v4563 = vpack.c.b16 %v4155, %v4151
    %v4564 = vpack.c.b16 %v4156, %v4152
    %v4565 = vpack.c.b16 %v4157, %v4153
    %v4566 = vpack.c.b16 %v4162, %v4158
    %v4567 = vpack.c.b16 %v4163, %v4159
    %v4568 = vpack.c.b16 %v4164, %v4160
    %v4569 = vpack.c.b16 %v4165, %v4161
    %v4570 = vpack.c.b16 %v4170, %v4166
    %v4571 = vpack.c.b16 %v4171, %v4167
    %v4572 = vpack.c.b16 %v4172, %v4168
    %v4573 = vpack.c.b16 %v4173, %v4169
    %v4574 = vpack.c.b16 %v4178, %v4174
    %v4575 = vpack.c.b16 %v4179, %v4175
    %v4576 = vpack.c.b16 %v4180, %v4176
    %v4577 = vpack.c.b16 %v4181, %v4177
    %v4578 = vpack.c.b16 %v4186, %v4182
    %v4579 = vpack.c.b16 %v4187, %v4183
    %v4580 = vpack.c.b16 %v4188, %v4184
    %v4581 = vpack.c.b16 %v4189, %v4185
    %v4582 = vpack.c.b16 %v4194, %v4190
    %v4583 = vpack.c.b16 %v4195, %v4191
    %v4584 = vpack.c.b16 %v4196, %v4192
    %v4585 = vpack.c.b16 %v4197, %v4193
    %v4586 = vpack.c.b16 %v4202, %v4198
    %v4587 = vpack.c.b16 %v4203, %v4199
    %v4588 = vpack.c.b16 %v4204, %v4200
    %v4589 = vpack.c.b16 %v4205, %v4201
    %v4590 = vpack.c.b16 %v4210, %v4206
    %v4591 = vpack.c.b16 %v4211, %v4207
    %v4592 = vpack.c.b16 %v4212, %v4208
    %v4593 = vpack.c.b16 %v4213, %v4209
    %v4594 = vpack.c.b16 %v4218, %v4214
    %v4595 = vpack.c.b16 %v4219, %v4215
    %v4596 = vpack.c.b16 %v4220, %v4216
    %v4597 = vpack.c.b16 %v4221, %v4217
    %v4598 = vpack.c.b16 %v4226, %v4222
    %v4599 = vpack.c.b16 %v4227, %v4223
    %v4600 = vpack.c.b16 %v4228, %v4224
    %v4601 = vpack.c.b16 %v4229, %v4225
    %v4602 = vpack.c.b16 %v4234, %v4230
    %v4603 = vpack.c.b16 %v4235, %v4231
    %v4604 = vpack.c.b16 %v4236, %v4232
    %v4605 = vpack.c.b16 %v4237, %v4233
    %v4606 = vpack.c.b16 %v4242, %v4238
    %v4607 = vpack.c.b16 %v4243, %v4239
    %v4608 = vpack.c.b16 %v4244, %v4240
    %v4609 = vpack.c.b16 %v4245, %v4241
    %v4610 = vpack.c.b16 %v4250, %v4246
    %v4611 = vpack.c.b16 %v4251, %v4247
    %v4612 = vpack.c.b16 %v4252, %v4248
    %v4613 = vpack.c.b16 %v4253, %v4249
    %v4614 = vpack.c.b16 %v4258, %v4254
    %v4615 = vpack.c.b16 %v4259, %v4255
    %v4616 = vpack.c.b16 %v4260, %v4256
    %v4617 = vpack.c.b16 %v4261, %v4257
    %v4618 = vpack.c.b16 %v4266, %v4262
    %v4619 = vpack.c.b16 %v4267, %v4263
    %v4620 = vpack.c.b16 %v4268, %v4264
    %v4621 = vpack.c.b16 %v4269, %v4265
    %v4622 = vpack.c.b16 %v4274, %v4270
    %v4623 = vpack.c.b16 %v4275, %v4271
    %v4624 = vpack.c.b16 %v4276, %v4272
    %v4625 = vpack.c.b16 %v4277, %v4273
    %v4626 = vpack.c.b16 %v4282, %v4278
    %v4627 = vpack.c.b16 %v4283, %v4279
    %v4628 = vpack.c.b16 %v4284, %v4280
    %v4629 = vpack.c.b16 %v4285, %v4281
    %v4630 = vpack.c.b16 %v4290, %v4286
    %v4631 = vpack.c.b16 %v4291, %v4287
    %v4632 = vpack.c.b16 %v4292, %v4288
    %v4633 = vpack.c.b16 %v4293, %v4289
    %v4634 = vpack.c.b16 %v4298, %v4294
    %v4635 = vpack.c.b16 %v4299, %v4295
    %v4636 = vpack.c.b16 %v4300, %v4296
    %v4637 = vpack.c.b16 %v4301, %v4297
    %v4638 = vpack.c.b16 %v4306, %v4302
    %v4639 = vpack.c.b16 %v4307, %v4303
    %v4640 = vpack.c.b16 %v4308, %v4304
    %v4641 = vpack.c.b16 %v4309, %v4305
    %v4642 = vpack.c.b16 %v4314, %v4310
    %v4643 = vpack.c.b16 %v4315, %v4311
    %v4644 = vpack.c.b16 %v4316, %v4312
    %v4645 = vpack.c.b16 %v4317, %v4313
    %v4646 = vpack.c.b16 %v4322, %v4318
    %v4647 = vpack.c.b16 %v4323, %v4319
    %v4648 = vpack.c.b16 %v4324, %v4320
    %v4649 = vpack.c.b16 %v4325, %v4321
    %v4650 = vpack.c.b16 %v4330, %v4326
    %v4651 = vpack.c.b16 %v4331, %v4327
    %v4652 = vpack.c.b16 %v4332, %v4328
    %v4653 = vpack.c.b16 %v4333, %v4329
    %v4654 = vpack.c.b16 %v4338, %v4334
    %v4655 = vpack.c.b16 %v4339, %v4335
    %v4656 = vpack.c.b16 %v4340, %v4336
    %v4657 = vpack.c.b16 %v4341, %v4337
    %v4658 = vpack.c.b16 %v4346, %v4342
    %v4659 = vpack.c.b16 %v4347, %v4343
    %v4660 = vpack.c.b16 %v4348, %v4344
    %v4661 = vpack.c.b16 %v4349, %v4345
    %v4662 = vpack.c.b16 %v4354, %v4350
    %v4663 = vpack.c.b16 %v4355, %v4351
    %v4664 = vpack.c.b16 %v4356, %v4352
    %v4665 = vpack.c.b16 %v4357, %v4353
    %v4666 = vpack.c.b16 %v4362, %v4358
    %v4667 = vpack.c.b16 %v4363, %v4359
    %v4668 = vpack.c.b16 %v4364, %v4360
    %v4669 = vpack.c.b16 %v4365, %v4361
    %v4670 = vpack.c.b16 %v4370, %v4366
    %v4671 = vpack.c.b16 %v4371, %v4367
    %v4672 = vpack.c.b16 %v4372, %v4368
    %v4673 = vpack.c.b16 %v4373, %v4369
    %v4674 = vpack.c.b16 %v4378, %v4374
    %v4675 = vpack.c.b16 %v4379, %v4375
    %v4676 = vpack.c.b16 %v4380, %v4376
    %v4677 = vpack.c.b16 %v4381, %v4377
    %v4678 = vpack.c.b16 %v4386, %v4382
    %v4679 = vpack.c.b16 %v4387, %v4383
    %v4680 = vpack.c.b16 %v4388, %v4384
    %v4681 = vpack.c.b16 %v4389, %v4385
    %v4682 = vpack.c.b16 %v4394, %v4390
    %v4683 = vpack.c.b16 %v4395, %v4391
    %v4684 = vpack.c.b16 %v4396, %v4392
    %v4685 = vpack.c.b16 %v4397, %v4393
    %v4686 = vpack.c.b16 %v4402, %v4398
    %v4687 = vpack.c.b16 %v4403, %v4399
    %v4688 = vpack.c.b16 %v4404, %v4400
    %v4689 = vpack.c.b16 %v4405, %v4401
    %v4690 = vpack.c.b16 %v4410, %v4406
    %v4691 = vpack.c.b16 %v4411, %v4407
    %v4692 = vpack.c.b16 %v4412, %v4408
    %v4693 = vpack.c.b16 %v4413, %v4409
    %v4694 = vpack.c.b16 %v4418, %v4414
    %v4695 = vpack.c.b16 %v4419, %v4415
    %v4696 = vpack.c.b16 %v4420, %v4416
    %v4697 = vpack.c.b16 %v4421, %v4417
    %v4698 = vpack.c.b16 %v4426, %v4422
    %v4699 = vpack.c.b16 %v4427, %v4423
    %v4700 = vpack.c.b16 %v4428, %v4424
    %v4701 = vpack.c.b16 %v4429, %v4425
    %v4702 = vpack.c.b16 %v4434, %v4430
    %v4703 = vpack.c.b16 %v4435, %v4431
    %v4704 = vpack.c.b16 %v4436, %v4432
    %v4705 = vpack.c.b16 %v4437, %v4433
    %v4706 = vpack.c.b16 %v4442, %v4438
    %v4707 = vpack.c.b16 %v4443, %v4439
    %v4708 = vpack.c.b16 %v4444, %v4440
    %v4709 = vpack.c.b16 %v4445, %v4441
    %v4710 = vpack.c.b16 %v4450, %v4446
    %v4711 = vpack.c.b16 %v4451, %v4447
    %v4712 = vpack.c.b16 %v4452, %v4448
    %v4713 = vpack.c.b16 %v4453, %v4449
    %v4714 = vpack.c.b16 %v4458, %v4454
    %v4715 = vpack.c.b16 %v4459, %v4455
    %v4716 = vpack.c.b16 %v4460, %v4456
    %v4717 = vpack.c.b16 %v4461, %v4457
    %4974 = vmatprep.subr.bf16.mxu0 %v4491
    %4975 = vmatpush1.bf16.msra.mxu0 %v4490
    %4976 = vmatprep.subr.bf16.mxu0 %v4487
    %4977 = vmatpush1.bf16.msra.mxu0 %v4486
    %4978 = vmatprep.subr.bf16.mxu0 %v4483
    %4979 = vmatpush1.bf16.msra.mxu0 %v4482
    %4980 = vmatprep.subr.bf16.mxu0 %v4479
    %4981 = vmatpush1.bf16.msra.mxu0 %v4478
    %4982 = vmatprep.subr.bf16.mxu0 %v4475
    %4983 = vmatpush1.bf16.msra.mxu0 %v4474
    %4984 = vmatprep.subr.bf16.mxu0 %v4471
    %4985 = vmatpush1.bf16.msra.mxu0 %v4470
    %4986 = vmatprep.subr.bf16.mxu0 %v4467
    %4987 = vmatpush1.bf16.msra.mxu0 %v4466
    %4988 = vmatprep.subr.bf16.mxu0 %v4463
    %4989 = vmatpush1.bf16.msra.mxu0 %v4462
    %4990 = vmatprep.subr.bf16.mxu0 %v4523
    %4991 = vmatpush2.bf16.msra.mxu0 %v4522
    %4992 = vmatprep.subr.bf16.mxu0 %v4519
    %4993 = vmatpush2.bf16.msra.mxu0 %v4518
    %4994 = vmatprep.subr.bf16.mxu0 %v4515
    %4995 = vmatpush2.bf16.msra.mxu0 %v4514
    %4996 = vmatprep.subr.bf16.mxu0 %v4511
    %4997 = vmatpush2.bf16.msra.mxu0 %v4510
    %4998 = vmatprep.subr.bf16.mxu0 %v4507
    %4999 = vmatpush2.bf16.msra.mxu0 %v4506
    %5000 = vmatprep.subr.bf16.mxu0 %v4503
    %5001 = vmatpush2.bf16.msra.mxu0 %v4502
    %5002 = vmatprep.subr.bf16.mxu0 %v4499
    %5003 = vmatpush2.bf16.msra.mxu0 %v4498
    %5004 = vmatprep.subr.bf16.mxu0 %v4495
    %5005 = vmatpush2.bf16.msra.mxu0 %v4494
    %5006 = vmatprep.mubr.bf16.mxu0 %v3409
    %5007 = vmatmul.mubr.bf16.gmra.mxu0 %v3408
    %v5008 = vpop.f32.mrf.mxu0
    %v5009 = vadd.f32 %v3677, %v5008
    %v5010 = vpop.f32.mrf.mxu0
    %v5011 = vadd.f32 %v3681, %v5010
    %v5012 = vpop.f32.mrf.mxu0
    %v5013 = vadd.f32 %v3677, %v5012
    %v5014 = vpop.f32.mrf.mxu0
    %v5015 = vadd.f32 %v3681, %v5014
    %5016 = vdwg.mxu0
    %5017 = vmatprep.subr.bf16.mxu0 %v4555
    %5018 = vmatpush1.bf16.msra.mxu0 %v4554
    %5019 = vmatprep.subr.bf16.mxu0 %v4551
    %5020 = vmatpush1.bf16.msra.mxu0 %v4550
    %5021 = vmatprep.subr.bf16.mxu0 %v4547
    %5022 = vmatpush1.bf16.msra.mxu0 %v4546
    %5023 = vmatprep.subr.bf16.mxu0 %v4543
    %5024 = vmatpush1.bf16.msra.mxu0 %v4542
    %5025 = vmatprep.subr.bf16.mxu0 %v4539
    %5026 = vmatpush1.bf16.msra.mxu0 %v4538
    %5027 = vmatprep.subr.bf16.mxu0 %v4535
    %5028 = vmatpush1.bf16.msra.mxu0 %v4534
    %5029 = vmatprep.subr.bf16.mxu0 %v4531
    %5030 = vmatpush1.bf16.msra.mxu0 %v4530
    %5031 = vmatprep.subr.bf16.mxu0 %v4527
    %5032 = vmatpush1.bf16.msra.mxu0 %v4526
    %5033 = vmatprep.subr.bf16.mxu0 %v4587
    %5034 = vmatpush2.bf16.msra.mxu0 %v4586
    %5035 = vmatprep.subr.bf16.mxu0 %v4583
    %5036 = vmatpush2.bf16.msra.mxu0 %v4582
    %5037 = vmatprep.subr.bf16.mxu0 %v4579
    %5038 = vmatpush2.bf16.msra.mxu0 %v4578
    %5039 = vmatprep.subr.bf16.mxu0 %v4575
    %5040 = vmatpush2.bf16.msra.mxu0 %v4574
    %5041 = vmatprep.subr.bf16.mxu0 %v4571
    %5042 = vmatpush2.bf16.msra.mxu0 %v4570
    %5043 = vmatprep.subr.bf16.mxu0 %v4567
    %5044 = vmatpush2.bf16.msra.mxu0 %v4566
    %5045 = vmatprep.subr.bf16.mxu0 %v4563
    %5046 = vmatpush2.bf16.msra.mxu0 %v4562
    %5047 = vmatprep.subr.bf16.mxu0 %v4559
    %5048 = vmatpush2.bf16.msra.mxu0 %v4558
    %5049 = vmatprep.mubr.bf16.mxu0 %v3411
    %5050 = vmatmul.mubr.bf16.gmra.mxu0 %v3410
    %v5051 = vpop.f32.mrf.mxu0
    %v5052 = vadd.f32 %v5009, %v5051
    %v5053 = vpop.f32.mrf.mxu0
    %v5054 = vadd.f32 %v5011, %v5053
    %v5055 = vpop.f32.mrf.mxu0
    %v5056 = vadd.f32 %v5013, %v5055
    %v5057 = vpop.f32.mrf.mxu0
    %v5058 = vadd.f32 %v5015, %v5057
    %5059 = vdwg.mxu0
    %5060 = vmatprep.subr.bf16.mxu0 %v4619
    %5061 = vmatpush1.bf16.msra.mxu0 %v4618
    %5062 = vmatprep.subr.bf16.mxu0 %v4615
    %5063 = vmatpush1.bf16.msra.mxu0 %v4614
    %5064 = vmatprep.subr.bf16.mxu0 %v4611
    %5065 = vmatpush1.bf16.msra.mxu0 %v4610
    %5066 = vmatprep.subr.bf16.mxu0 %v4607
    %5067 = vmatpush1.bf16.msra.mxu0 %v4606
    %5068 = vmatprep.subr.bf16.mxu0 %v4603
    %5069 = vmatpush1.bf16.msra.mxu0 %v4602
    %5070 = vmatprep.subr.bf16.mxu0 %v4599
    %5071 = vmatpush1.bf16.msra.mxu0 %v4598
    %5072 = vmatprep.subr.bf16.mxu0 %v4595
    %5073 = vmatpush1.bf16.msra.mxu0 %v4594
    %5074 = vmatprep.subr.bf16.mxu0 %v4591
    %5075 = vmatpush1.bf16.msra.mxu0 %v4590
    %5076 = vmatprep.subr.bf16.mxu0 %v4651
    %5077 = vmatpush2.bf16.msra.mxu0 %v4650
    %5078 = vmatprep.subr.bf16.mxu0 %v4647
    %5079 = vmatpush2.bf16.msra.mxu0 %v4646
    %5080 = vmatprep.subr.bf16.mxu0 %v4643
    %5081 = vmatpush2.bf16.msra.mxu0 %v4642
    %5082 = vmatprep.subr.bf16.mxu0 %v4639
    %5083 = vmatpush2.bf16.msra.mxu0 %v4638
    %5084 = vmatprep.subr.bf16.mxu0 %v4635
    %5085 = vmatpush2.bf16.msra.mxu0 %v4634
    %5086 = vmatprep.subr.bf16.mxu0 %v4631
    %5087 = vmatpush2.bf16.msra.mxu0 %v4630
    %5088 = vmatprep.subr.bf16.mxu0 %v4627
    %5089 = vmatpush2.bf16.msra.mxu0 %v4626
    %5090 = vmatprep.subr.bf16.mxu0 %v4623
    %5091 = vmatpush2.bf16.msra.mxu0 %v4622
    %5092 = vmatprep.mubr.bf16.mxu0 %v3413
    %5093 = vmatmul.mubr.bf16.gmra.mxu0 %v3412
    %v5094 = vpop.f32.mrf.mxu0
    %v5095 = vadd.f32 %v5052, %v5094
    %v5096 = vpop.f32.mrf.mxu0
    %v5097 = vadd.f32 %v5054, %v5096
    %v5098 = vpop.f32.mrf.mxu0
    %v5099 = vadd.f32 %v5056, %v5098
    %v5100 = vpop.f32.mrf.mxu0
    %v5101 = vadd.f32 %v5058, %v5100
    %5102 = vdwg.mxu0
    %5103 = vmatprep.subr.bf16.mxu0 %v4683
    %5104 = vmatpush1.bf16.msra.mxu0 %v4682
    %5105 = vmatprep.subr.bf16.mxu0 %v4679
    %5106 = vmatpush1.bf16.msra.mxu0 %v4678
    %5107 = vmatprep.subr.bf16.mxu0 %v4675
    %5108 = vmatpush1.bf16.msra.mxu0 %v4674
    %5109 = vmatprep.subr.bf16.mxu0 %v4671
    %5110 = vmatpush1.bf16.msra.mxu0 %v4670
    %5111 = vmatprep.subr.bf16.mxu0 %v4667
    %5112 = vmatpush1.bf16.msra.mxu0 %v4666
    %5113 = vmatprep.subr.bf16.mxu0 %v4663
    %5114 = vmatpush1.bf16.msra.mxu0 %v4662
    %5115 = vmatprep.subr.bf16.mxu0 %v4659
    %5116 = vmatpush1.bf16.msra.mxu0 %v4658
    %5117 = vmatprep.subr.bf16.mxu0 %v4655
    %5118 = vmatpush1.bf16.msra.mxu0 %v4654
    %5119 = vmatprep.subr.bf16.mxu0 %v4715
    %5120 = vmatpush2.bf16.msra.mxu0 %v4714
    %5121 = vmatprep.subr.bf16.mxu0 %v4711
    %5122 = vmatpush2.bf16.msra.mxu0 %v4710
    %5123 = vmatprep.subr.bf16.mxu0 %v4707
    %5124 = vmatpush2.bf16.msra.mxu0 %v4706
    %5125 = vmatprep.subr.bf16.mxu0 %v4703
    %5126 = vmatpush2.bf16.msra.mxu0 %v4702
    %5127 = vmatprep.subr.bf16.mxu0 %v4699
    %5128 = vmatpush2.bf16.msra.mxu0 %v4698
    %5129 = vmatprep.subr.bf16.mxu0 %v4695
    %5130 = vmatpush2.bf16.msra.mxu0 %v4694
    %5131 = vmatprep.subr.bf16.mxu0 %v4691
    %5132 = vmatpush2.bf16.msra.mxu0 %v4690
    %5133 = vmatprep.subr.bf16.mxu0 %v4687
    %5134 = vmatpush2.bf16.msra.mxu0 %v4686
    %5135 = vmatprep.mubr.bf16.mxu0 %v3415
    %5136 = vmatmul.mubr.bf16.gmra.mxu0 %v3414
    %v5137 = vpop.f32.mrf.mxu0
    %v5138 = vadd.f32 %v5095, %v5137
    %v5139 = vpop.f32.mrf.mxu0
    %v5140 = vadd.f32 %v5097, %v5139
    %v5141 = vpop.f32.mrf.mxu0
    %v5142 = vadd.f32 %v5099, %v5141
    %v5143 = vpop.f32.mrf.mxu0
    %v5144 = vadd.f32 %v5101, %v5143
    %5145 = vdwg.mxu0
    %5146 = vmatprep.subr.bf16.mxu0 %v4493
    %5147 = vmatpush1.bf16.msra.mxu0 %v4492
    %5148 = vmatprep.subr.bf16.mxu0 %v4489
    %5149 = vmatpush1.bf16.msra.mxu0 %v4488
    %5150 = vmatprep.subr.bf16.mxu0 %v4485
    %5151 = vmatpush1.bf16.msra.mxu0 %v4484
    %5152 = vmatprep.subr.bf16.mxu0 %v4481
    %5153 = vmatpush1.bf16.msra.mxu0 %v4480
    %5154 = vmatprep.subr.bf16.mxu0 %v4477
    %5155 = vmatpush1.bf16.msra.mxu0 %v4476
    %5156 = vmatprep.subr.bf16.mxu0 %v4473
    %5157 = vmatpush1.bf16.msra.mxu0 %v4472
    %5158 = vmatprep.subr.bf16.mxu0 %v4469
    %5159 = vmatpush1.bf16.msra.mxu0 %v4468
    %5160 = vmatprep.subr.bf16.mxu0 %v4465
    %5161 = vmatpush1.bf16.msra.mxu0 %v4464
    %5162 = vmatprep.subr.bf16.mxu0 %v4525
    %5163 = vmatpush2.bf16.msra.mxu0 %v4524
    %5164 = vmatprep.subr.bf16.mxu0 %v4521
    %5165 = vmatpush2.bf16.msra.mxu0 %v4520
    %5166 = vmatprep.subr.bf16.mxu0 %v4517
    %5167 = vmatpush2.bf16.msra.mxu0 %v4516
    %5168 = vmatprep.subr.bf16.mxu0 %v4513
    %5169 = vmatpush2.bf16.msra.mxu0 %v4512
    %5170 = vmatprep.subr.bf16.mxu0 %v4509
    %5171 = vmatpush2.bf16.msra.mxu0 %v4508
    %5172 = vmatprep.subr.bf16.mxu0 %v4505
    %5173 = vmatpush2.bf16.msra.mxu0 %v4504
    %5174 = vmatprep.subr.bf16.mxu0 %v4501
    %5175 = vmatpush2.bf16.msra.mxu0 %v4500
    %5176 = vmatprep.subr.bf16.mxu0 %v4497
    %5177 = vmatpush2.bf16.msra.mxu0 %v4496
    %5178 = vmatprep.mubr.bf16.mxu0 %v3409
    %5179 = vmatmul.mubr.bf16.gmra.mxu0 %v3408
    %v5180 = vpop.f32.mrf.mxu0
    %v5181 = vadd.f32 %v3685, %v5180
    %v5182 = vpop.f32.mrf.mxu0
    %v5183 = vadd.f32 %v3689, %v5182
    %v5184 = vpop.f32.mrf.mxu0
    %v5185 = vadd.f32 %v3685, %v5184
    %v5186 = vpop.f32.mrf.mxu0
    %v5187 = vadd.f32 %v3689, %v5186
    %5188 = vdwg.mxu0
    %5189 = vmatprep.subr.bf16.mxu0 %v4557
    %5190 = vmatpush1.bf16.msra.mxu0 %v4556
    %5191 = vmatprep.subr.bf16.mxu0 %v4553
    %5192 = vmatpush1.bf16.msra.mxu0 %v4552
    %5193 = vmatprep.subr.bf16.mxu0 %v4549
    %5194 = vmatpush1.bf16.msra.mxu0 %v4548
    %5195 = vmatprep.subr.bf16.mxu0 %v4545
    %5196 = vmatpush1.bf16.msra.mxu0 %v4544
    %5197 = vmatprep.subr.bf16.mxu0 %v4541
    %5198 = vmatpush1.bf16.msra.mxu0 %v4540
    %5199 = vmatprep.subr.bf16.mxu0 %v4537
    %5200 = vmatpush1.bf16.msra.mxu0 %v4536
    %5201 = vmatprep.subr.bf16.mxu0 %v4533
    %5202 = vmatpush1.bf16.msra.mxu0 %v4532
    %5203 = vmatprep.subr.bf16.mxu0 %v4529
    %5204 = vmatpush1.bf16.msra.mxu0 %v4528
    %5205 = vmatprep.subr.bf16.mxu0 %v4589
    %5206 = vmatpush2.bf16.msra.mxu0 %v4588
    %5207 = vmatprep.subr.bf16.mxu0 %v4585
    %5208 = vmatpush2.bf16.msra.mxu0 %v4584
    %5209 = vmatprep.subr.bf16.mxu0 %v4581
    %5210 = vmatpush2.bf16.msra.mxu0 %v4580
    %5211 = vmatprep.subr.bf16.mxu0 %v4577
    %5212 = vmatpush2.bf16.msra.mxu0 %v4576
    %5213 = vmatprep.subr.bf16.mxu0 %v4573
    %5214 = vmatpush2.bf16.msra.mxu0 %v4572
    %5215 = vmatprep.subr.bf16.mxu0 %v4569
    %5216 = vmatpush2.bf16.msra.mxu0 %v4568
    %5217 = vmatprep.subr.bf16.mxu0 %v4565
    %5218 = vmatpush2.bf16.msra.mxu0 %v4564
    %5219 = vmatprep.subr.bf16.mxu0 %v4561
    %5220 = vmatpush2.bf16.msra.mxu0 %v4560
    %5221 = vmatprep.mubr.bf16.mxu0 %v3411
    %5222 = vmatmul.mubr.bf16.gmra.mxu0 %v3410
    %v5223 = vpop.f32.mrf.mxu0
    %v5224 = vadd.f32 %v5181, %v5223
    %v5225 = vpop.f32.mrf.mxu0
    %v5226 = vadd.f32 %v5183, %v5225
    %v5227 = vpop.f32.mrf.mxu0
    %v5228 = vadd.f32 %v5185, %v5227
    %v5229 = vpop.f32.mrf.mxu0
    %v5230 = vadd.f32 %v5187, %v5229
    %5231 = vdwg.mxu0
    %5232 = vmatprep.subr.bf16.mxu0 %v4621
    %5233 = vmatpush1.bf16.msra.mxu0 %v4620
    %5234 = vmatprep.subr.bf16.mxu0 %v4617
    %5235 = vmatpush1.bf16.msra.mxu0 %v4616
    %5236 = vmatprep.subr.bf16.mxu0 %v4613
    %5237 = vmatpush1.bf16.msra.mxu0 %v4612
    %5238 = vmatprep.subr.bf16.mxu0 %v4609
    %5239 = vmatpush1.bf16.msra.mxu0 %v4608
    %5240 = vmatprep.subr.bf16.mxu0 %v4605
    %5241 = vmatpush1.bf16.msra.mxu0 %v4604
    %5242 = vmatprep.subr.bf16.mxu0 %v4601
    %5243 = vmatpush1.bf16.msra.mxu0 %v4600
    %5244 = vmatprep.subr.bf16.mxu0 %v4597
    %5245 = vmatpush1.bf16.msra.mxu0 %v4596
    %5246 = vmatprep.subr.bf16.mxu0 %v4593
    %5247 = vmatpush1.bf16.msra.mxu0 %v4592
    %5248 = vmatprep.subr.bf16.mxu0 %v4653
    %5249 = vmatpush2.bf16.msra.mxu0 %v4652
    %5250 = vmatprep.subr.bf16.mxu0 %v4649
    %5251 = vmatpush2.bf16.msra.mxu0 %v4648
    %5252 = vmatprep.subr.bf16.mxu0 %v4645
    %5253 = vmatpush2.bf16.msra.mxu0 %v4644
    %5254 = vmatprep.subr.bf16.mxu0 %v4641
    %5255 = vmatpush2.bf16.msra.mxu0 %v4640
    %5256 = vmatprep.subr.bf16.mxu0 %v4637
    %5257 = vmatpush2.bf16.msra.mxu0 %v4636
    %5258 = vmatprep.subr.bf16.mxu0 %v4633
    %5259 = vmatpush2.bf16.msra.mxu0 %v4632
    %5260 = vmatprep.subr.bf16.mxu0 %v4629
    %5261 = vmatpush2.bf16.msra.mxu0 %v4628
    %5262 = vmatprep.subr.bf16.mxu0 %v4625
    %5263 = vmatpush2.bf16.msra.mxu0 %v4624
    %5264 = vmatprep.mubr.bf16.mxu0 %v3413
    %5265 = vmatmul.mubr.bf16.gmra.mxu0 %v3412
    %v5266 = vpop.f32.mrf.mxu0
    %v5267 = vadd.f32 %v5224, %v5266
    %v5268 = vpop.f32.mrf.mxu0
    %v5269 = vadd.f32 %v5226, %v5268
    %v5270 = vpop.f32.mrf.mxu0
    %v5271 = vadd.f32 %v5228, %v5270
    %v5272 = vpop.f32.mrf.mxu0
    %v5273 = vadd.f32 %v5230, %v5272
    %5274 = vdwg.mxu0
    %5275 = vmatprep.subr.bf16.mxu0 %v4685
    %5276 = vmatpush1.bf16.msra.mxu0 %v4684
    %5277 = vmatprep.subr.bf16.mxu0 %v4681
    %5278 = vmatpush1.bf16.msra.mxu0 %v4680
    %5279 = vmatprep.subr.bf16.mxu0 %v4677
    %5280 = vmatpush1.bf16.msra.mxu0 %v4676
    %5281 = vmatprep.subr.bf16.mxu0 %v4673
    %5282 = vmatpush1.bf16.msra.mxu0 %v4672
    %5283 = vmatprep.subr.bf16.mxu0 %v4669
    %5284 = vmatpush1.bf16.msra.mxu0 %v4668
    %5285 = vmatprep.subr.bf16.mxu0 %v4665
    %5286 = vmatpush1.bf16.msra.mxu0 %v4664
    %5287 = vmatprep.subr.bf16.mxu0 %v4661
    %5288 = vmatpush1.bf16.msra.mxu0 %v4660
    %5289 = vmatprep.subr.bf16.mxu0 %v4657
    %5290 = vmatpush1.bf16.msra.mxu0 %v4656
    %5291 = vmatprep.subr.bf16.mxu0 %v4717
    %5292 = vmatpush2.bf16.msra.mxu0 %v4716
    %5293 = vmatprep.subr.bf16.mxu0 %v4713
    %5294 = vmatpush2.bf16.msra.mxu0 %v4712
    %5295 = vmatprep.subr.bf16.mxu0 %v4709
    %5296 = vmatpush2.bf16.msra.mxu0 %v4708
    %5297 = vmatprep.subr.bf16.mxu0 %v4705
    %5298 = vmatpush2.bf16.msra.mxu0 %v4704
    %5299 = vmatprep.subr.bf16.mxu0 %v4701
    %5300 = vmatpush2.bf16.msra.mxu0 %v4700
    %5301 = vmatprep.subr.bf16.mxu0 %v4697
    %5302 = vmatpush2.bf16.msra.mxu0 %v4696
    %5303 = vmatprep.subr.bf16.mxu0 %v4693
    %5304 = vmatpush2.bf16.msra.mxu0 %v4692
    %5305 = vmatprep.subr.bf16.mxu0 %v4689
    %5306 = vmatpush2.bf16.msra.mxu0 %v4688
    %5307 = vmatprep.mubr.bf16.mxu0 %v3415
    %5308 = vmatmul.mubr.bf16.gmra.mxu0 %v3414
    %v5309 = vpop.f32.mrf.mxu0
    %v5310 = vadd.f32 %v5267, %v5309
    %v5311 = vpop.f32.mrf.mxu0
    %v5312 = vadd.f32 %v5269, %v5311
    %v5313 = vpop.f32.mrf.mxu0
    %v5314 = vadd.f32 %v5271, %v5313
    %v5315 = vpop.f32.mrf.mxu0
    %v5316 = vadd.f32 %v5273, %v5315
    %5317 = vdwg.mxu0
    %v5318 = vmax.f32 %v5138, 0.0
    %v5319 = vmax.f32 %v5140, 0.0
    %v5320 = vmax.f32 %v5310, 0.0
    %v5321 = vmax.f32 %v5312, 0.0
    %v5322 = vmax.f32 %v5142, 0.0
    %v5323 = vmax.f32 %v5144, 0.0
    %v5324 = vmax.f32 %v5314, 0.0
    %v5325 = vmax.f32 %v5316, 0.0
    %v5326 = vpack.c.bf16 %v5322, %v5318
    %v5327 = vpack.c.bf16 %v5323, %v5319
    %v5328 = vpack.c.bf16 %v5324, %v5320
    %v5329 = vpack.c.bf16 %v5325, %v5321
    %v5330 = vld [vmem:[#allocation9] sm:$0xff]
    %v5331 = vld [vmem:[#allocation9 + $0x8] sm:$0xff]
    %v5332 = vld [vmem:[#allocation9 + $0x10] sm:$0xff]
    %v5333 = vld [vmem:[#allocation9 + $0x18] sm:$0xff]
    %v5334 = vld [vmem:[#allocation9 + $0x20] sm:$0xff]
    %v5335 = vld [vmem:[#allocation9 + $0x28] sm:$0xff]
    %v5336 = vld [vmem:[#allocation9 + $0x30] sm:$0xff]
    %v5337 = vld [vmem:[#allocation9 + $0x38] sm:$0xff]
    %v5338 = vld [vmem:[#allocation9 + $0x40] sm:$0xff]
    %v5339 = vld [vmem:[#allocation9 + $0x48] sm:$0xff]
    %v5340 = vld [vmem:[#allocation9 + $0x50] sm:$0xff]
    %v5341 = vld [vmem:[#allocation9 + $0x58] sm:$0xff]
    %v5342 = vld [vmem:[#allocation9 + $0x60] sm:$0xff]
    %v5343 = vld [vmem:[#allocation9 + $0x68] sm:$0xff]
    %v5344 = vld [vmem:[#allocation9 + $0x70] sm:$0xff]
    %v5345 = vld [vmem:[#allocation9 + $0x78] sm:$0xff]
    %v5346 = vld [vmem:[#allocation9 + $0x80] sm:$0xff]
    %v5347 = vld [vmem:[#allocation9 + $0x88] sm:$0xff]
    %v5348 = vld [vmem:[#allocation9 + $0x90] sm:$0xff]
    %v5349 = vld [vmem:[#allocation9 + $0x98] sm:$0xff]
    %v5350 = vld [vmem:[#allocation9 + $0xa0] sm:$0xff]
    %v5351 = vld [vmem:[#allocation9 + $0xa8] sm:$0xff]
    %v5352 = vld [vmem:[#allocation9 + $0xb0] sm:$0xff]
    %v5353 = vld [vmem:[#allocation9 + $0xb8] sm:$0xff]
    %v5354 = vld [vmem:[#allocation9 + $0xc0] sm:$0xff]
    %v5355 = vld [vmem:[#allocation9 + $0xc8] sm:$0xff]
    %v5356 = vld [vmem:[#allocation9 + $0xd0] sm:$0xff]
    %v5357 = vld [vmem:[#allocation9 + $0xd8] sm:$0xff]
    %v5358 = vld [vmem:[#allocation9 + $0xe0] sm:$0xff]
    %v5359 = vld [vmem:[#allocation9 + $0xe8] sm:$0xff]
    %v5360 = vld [vmem:[#allocation9 + $0xf0] sm:$0xff]
    %v5361 = vld [vmem:[#allocation9 + $0xf8] sm:$0xff]
    %v5362 = vld [vmem:[#allocation9 + $0x100] sm:$0xff]
    %v5363 = vld [vmem:[#allocation9 + $0x108] sm:$0xff]
    %v5364 = vld [vmem:[#allocation9 + $0x110] sm:$0xff]
    %v5365 = vld [vmem:[#allocation9 + $0x118] sm:$0xff]
    %v5366 = vld [vmem:[#allocation9 + $0x120] sm:$0xff]
    %v5367 = vld [vmem:[#allocation9 + $0x128] sm:$0xff]
    %v5368 = vld [vmem:[#allocation9 + $0x130] sm:$0xff]
    %v5369 = vld [vmem:[#allocation9 + $0x138] sm:$0xff]
    %v5370 = vld [vmem:[#allocation9 + $0x140] sm:$0xff]
    %v5371 = vld [vmem:[#allocation9 + $0x148] sm:$0xff]
    %v5372 = vld [vmem:[#allocation9 + $0x150] sm:$0xff]
    %v5373 = vld [vmem:[#allocation9 + $0x158] sm:$0xff]
    %v5374 = vld [vmem:[#allocation9 + $0x160] sm:$0xff]
    %v5375 = vld [vmem:[#allocation9 + $0x168] sm:$0xff]
    %v5376 = vld [vmem:[#allocation9 + $0x170] sm:$0xff]
    %v5377 = vld [vmem:[#allocation9 + $0x178] sm:$0xff]
    %v5378 = vld [vmem:[#allocation9 + $0x180] sm:$0xff]
    %v5379 = vld [vmem:[#allocation9 + $0x188] sm:$0xff]
    %v5380 = vld [vmem:[#allocation9 + $0x190] sm:$0xff]
    %v5381 = vld [vmem:[#allocation9 + $0x198] sm:$0xff]
    %v5382 = vld [vmem:[#allocation9 + $0x1a0] sm:$0xff]
    %v5383 = vld [vmem:[#allocation9 + $0x1a8] sm:$0xff]
    %v5384 = vld [vmem:[#allocation9 + $0x1b0] sm:$0xff]
    %v5385 = vld [vmem:[#allocation9 + $0x1b8] sm:$0xff]
    %v5386 = vld [vmem:[#allocation9 + $0x1c0] sm:$0xff]
    %v5387 = vld [vmem:[#allocation9 + $0x1c8] sm:$0xff]
    %v5388 = vld [vmem:[#allocation9 + $0x1d0] sm:$0xff]
    %v5389 = vld [vmem:[#allocation9 + $0x1d8] sm:$0xff]
    %v5390 = vld [vmem:[#allocation9 + $0x1e0] sm:$0xff]
    %v5391 = vld [vmem:[#allocation9 + $0x1e8] sm:$0xff]
    %v5392 = vld [vmem:[#allocation9 + $0x1f0] sm:$0xff]
    %v5393 = vld [vmem:[#allocation9 + $0x1f8] sm:$0xff]
    %v5394 = vld [vmem:[#allocation10] sm:$0x3]
    %v5396 = vlaneseq
    %v5397 = vshrl.u32 %v5396, 7
    %v5398 = vsub.s32 0, %v5397
    %v5399 = vrot.slane %v5394, %v5398
    %v5400 = vlaneseq
    %v5401 = vshrl.u32 %v5400, 7
    %v5402 = vsub.s32 1, %v5401
    %v5403 = vrot.slane %v5394, %v5402
    %v5470 = vunpack.c.l.b16 %v5330
    %v5471 = vunpack.c.h.b16 %v5330
    %v5472 = vunpack.c.l.b16 %v5331
    %v5473 = vunpack.c.h.b16 %v5331
    %v5474 = vunpack.c.l.b16 %v5332
    %v5475 = vunpack.c.h.b16 %v5332
    %v5476 = vunpack.c.l.b16 %v5333
    %v5477 = vunpack.c.h.b16 %v5333
    %v5478 = vunpack.c.l.b16 %v5334
    %v5479 = vunpack.c.h.b16 %v5334
    %v5480 = vunpack.c.l.b16 %v5335
    %v5481 = vunpack.c.h.b16 %v5335
    %v5482 = vunpack.c.l.b16 %v5336
    %v5483 = vunpack.c.h.b16 %v5336
    %v5484 = vunpack.c.l.b16 %v5337
    %v5485 = vunpack.c.h.b16 %v5337
    %v5486 = vunpack.c.l.b16 %v5338
    %v5487 = vunpack.c.h.b16 %v5338
    %v5488 = vunpack.c.l.b16 %v5339
    %v5489 = vunpack.c.h.b16 %v5339
    %v5490 = vunpack.c.l.b16 %v5340
    %v5491 = vunpack.c.h.b16 %v5340
    %v5492 = vunpack.c.l.b16 %v5341
    %v5493 = vunpack.c.h.b16 %v5341
    %v5494 = vunpack.c.l.b16 %v5342
    %v5495 = vunpack.c.h.b16 %v5342
    %v5496 = vunpack.c.l.b16 %v5343
    %v5497 = vunpack.c.h.b16 %v5343
    %v5498 = vunpack.c.l.b16 %v5344
    %v5499 = vunpack.c.h.b16 %v5344
    %v5500 = vunpack.c.l.b16 %v5345
    %v5501 = vunpack.c.h.b16 %v5345
    %v5502 = vunpack.c.l.b16 %v5346
    %v5503 = vunpack.c.h.b16 %v5346
    %v5504 = vunpack.c.l.b16 %v5347
    %v5505 = vunpack.c.h.b16 %v5347
    %v5506 = vunpack.c.l.b16 %v5348
    %v5507 = vunpack.c.h.b16 %v5348
    %v5508 = vunpack.c.l.b16 %v5349
    %v5509 = vunpack.c.h.b16 %v5349
    %v5510 = vunpack.c.l.b16 %v5350
    %v5511 = vunpack.c.h.b16 %v5350
    %v5512 = vunpack.c.l.b16 %v5351
    %v5513 = vunpack.c.h.b16 %v5351
    %v5514 = vunpack.c.l.b16 %v5352
    %v5515 = vunpack.c.h.b16 %v5352
    %v5516 = vunpack.c.l.b16 %v5353
    %v5517 = vunpack.c.h.b16 %v5353
    %v5518 = vunpack.c.l.b16 %v5354
    %v5519 = vunpack.c.h.b16 %v5354
    %v5520 = vunpack.c.l.b16 %v5355
    %v5521 = vunpack.c.h.b16 %v5355
    %v5522 = vunpack.c.l.b16 %v5356
    %v5523 = vunpack.c.h.b16 %v5356
    %v5524 = vunpack.c.l.b16 %v5357
    %v5525 = vunpack.c.h.b16 %v5357
    %v5526 = vunpack.c.l.b16 %v5358
    %v5527 = vunpack.c.h.b16 %v5358
    %v5528 = vunpack.c.l.b16 %v5359
    %v5529 = vunpack.c.h.b16 %v5359
    %v5530 = vunpack.c.l.b16 %v5360
    %v5531 = vunpack.c.h.b16 %v5360
    %v5532 = vunpack.c.l.b16 %v5361
    %v5533 = vunpack.c.h.b16 %v5361
    %v5534 = vunpack.c.l.b16 %v5362
    %v5535 = vunpack.c.h.b16 %v5362
    %v5536 = vunpack.c.l.b16 %v5363
    %v5537 = vunpack.c.h.b16 %v5363
    %v5538 = vunpack.c.l.b16 %v5364
    %v5539 = vunpack.c.h.b16 %v5364
    %v5540 = vunpack.c.l.b16 %v5365
    %v5541 = vunpack.c.h.b16 %v5365
    %v5542 = vunpack.c.l.b16 %v5366
    %v5543 = vunpack.c.h.b16 %v5366
    %v5544 = vunpack.c.l.b16 %v5367
    %v5545 = vunpack.c.h.b16 %v5367
    %v5546 = vunpack.c.l.b16 %v5368
    %v5547 = vunpack.c.h.b16 %v5368
    %v5548 = vunpack.c.l.b16 %v5369
    %v5549 = vunpack.c.h.b16 %v5369
    %v5550 = vunpack.c.l.b16 %v5370
    %v5551 = vunpack.c.h.b16 %v5370
    %v5552 = vunpack.c.l.b16 %v5371
    %v5553 = vunpack.c.h.b16 %v5371
    %v5554 = vunpack.c.l.b16 %v5372
    %v5555 = vunpack.c.h.b16 %v5372
    %v5556 = vunpack.c.l.b16 %v5373
    %v5557 = vunpack.c.h.b16 %v5373
    %v5558 = vunpack.c.l.b16 %v5374
    %v5559 = vunpack.c.h.b16 %v5374
    %v5560 = vunpack.c.l.b16 %v5375
    %v5561 = vunpack.c.h.b16 %v5375
    %v5562 = vunpack.c.l.b16 %v5376
    %v5563 = vunpack.c.h.b16 %v5376
    %v5564 = vunpack.c.l.b16 %v5377
    %v5565 = vunpack.c.h.b16 %v5377
    %v5566 = vunpack.c.l.b16 %v5378
    %v5567 = vunpack.c.h.b16 %v5378
    %v5568 = vunpack.c.l.b16 %v5379
    %v5569 = vunpack.c.h.b16 %v5379
    %v5570 = vunpack.c.l.b16 %v5380
    %v5571 = vunpack.c.h.b16 %v5380
    %v5572 = vunpack.c.l.b16 %v5381
    %v5573 = vunpack.c.h.b16 %v5381
    %v5574 = vunpack.c.l.b16 %v5382
    %v5575 = vunpack.c.h.b16 %v5382
    %v5576 = vunpack.c.l.b16 %v5383
    %v5577 = vunpack.c.h.b16 %v5383
    %v5578 = vunpack.c.l.b16 %v5384
    %v5579 = vunpack.c.h.b16 %v5384
    %v5580 = vunpack.c.l.b16 %v5385
    %v5581 = vunpack.c.h.b16 %v5385
    %v5582 = vunpack.c.l.b16 %v5386
    %v5583 = vunpack.c.h.b16 %v5386
    %v5584 = vunpack.c.l.b16 %v5387
    %v5585 = vunpack.c.h.b16 %v5387
    %v5586 = vunpack.c.l.b16 %v5388
    %v5587 = vunpack.c.h.b16 %v5388
    %v5588 = vunpack.c.l.b16 %v5389
    %v5589 = vunpack.c.h.b16 %v5389
    %v5590 = vunpack.c.l.b16 %v5390
    %v5591 = vunpack.c.h.b16 %v5390
    %v5592 = vunpack.c.l.b16 %v5391
    %v5593 = vunpack.c.h.b16 %v5391
    %v5594 = vunpack.c.l.b16 %v5392
    %v5595 = vunpack.c.h.b16 %v5392
    %v5596 = vunpack.c.l.b16 %v5393
    %v5597 = vunpack.c.h.b16 %v5393
    %v5598 = vpack.c.b16 %v5472, %v5470
    %v5599 = vpack.c.b16 %v5473, %v5471
    %v5600 = vpack.c.b16 %v5476, %v5474
    %v5601 = vpack.c.b16 %v5477, %v5475
    %v5602 = vpack.c.b16 %v5480, %v5478
    %v5603 = vpack.c.b16 %v5481, %v5479
    %v5604 = vpack.c.b16 %v5484, %v5482
    %v5605 = vpack.c.b16 %v5485, %v5483
    %v5606 = vpack.c.b16 %v5488, %v5486
    %v5607 = vpack.c.b16 %v5489, %v5487
    %v5608 = vpack.c.b16 %v5492, %v5490
    %v5609 = vpack.c.b16 %v5493, %v5491
    %v5610 = vpack.c.b16 %v5496, %v5494
    %v5611 = vpack.c.b16 %v5497, %v5495
    %v5612 = vpack.c.b16 %v5500, %v5498
    %v5613 = vpack.c.b16 %v5501, %v5499
    %v5614 = vpack.c.b16 %v5504, %v5502
    %v5615 = vpack.c.b16 %v5505, %v5503
    %v5616 = vpack.c.b16 %v5508, %v5506
    %v5617 = vpack.c.b16 %v5509, %v5507
    %v5618 = vpack.c.b16 %v5512, %v5510
    %v5619 = vpack.c.b16 %v5513, %v5511
    %v5620 = vpack.c.b16 %v5516, %v5514
    %v5621 = vpack.c.b16 %v5517, %v5515
    %v5622 = vpack.c.b16 %v5520, %v5518
    %v5623 = vpack.c.b16 %v5521, %v5519
    %v5624 = vpack.c.b16 %v5524, %v5522
    %v5625 = vpack.c.b16 %v5525, %v5523
    %v5626 = vpack.c.b16 %v5528, %v5526
    %v5627 = vpack.c.b16 %v5529, %v5527
    %v5628 = vpack.c.b16 %v5532, %v5530
    %v5629 = vpack.c.b16 %v5533, %v5531
    %v5630 = vpack.c.b16 %v5536, %v5534
    %v5631 = vpack.c.b16 %v5537, %v5535
    %v5632 = vpack.c.b16 %v5540, %v5538
    %v5633 = vpack.c.b16 %v5541, %v5539
    %v5634 = vpack.c.b16 %v5544, %v5542
    %v5635 = vpack.c.b16 %v5545, %v5543
    %v5636 = vpack.c.b16 %v5548, %v5546
    %v5637 = vpack.c.b16 %v5549, %v5547
    %v5638 = vpack.c.b16 %v5552, %v5550
    %v5639 = vpack.c.b16 %v5553, %v5551
    %v5640 = vpack.c.b16 %v5556, %v5554
    %v5641 = vpack.c.b16 %v5557, %v5555
    %v5642 = vpack.c.b16 %v5560, %v5558
    %v5643 = vpack.c.b16 %v5561, %v5559
    %v5644 = vpack.c.b16 %v5564, %v5562
    %v5645 = vpack.c.b16 %v5565, %v5563
    %v5646 = vpack.c.b16 %v5568, %v5566
    %v5647 = vpack.c.b16 %v5569, %v5567
    %v5648 = vpack.c.b16 %v5572, %v5570
    %v5649 = vpack.c.b16 %v5573, %v5571
    %v5650 = vpack.c.b16 %v5576, %v5574
    %v5651 = vpack.c.b16 %v5577, %v5575
    %v5652 = vpack.c.b16 %v5580, %v5578
    %v5653 = vpack.c.b16 %v5581, %v5579
    %v5654 = vpack.c.b16 %v5584, %v5582
    %v5655 = vpack.c.b16 %v5585, %v5583
    %v5656 = vpack.c.b16 %v5588, %v5586
    %v5657 = vpack.c.b16 %v5589, %v5587
    %v5658 = vpack.c.b16 %v5592, %v5590
    %v5659 = vpack.c.b16 %v5593, %v5591
    %v5660 = vpack.c.b16 %v5596, %v5594
    %v5661 = vpack.c.b16 %v5597, %v5595
    %5726 = vmatprep.subr.bf16.mxu0 %v5613
    %5727 = vmatpush1.bf16.msra.mxu0 %v5612
    %5728 = vmatprep.subr.bf16.mxu0 %v5611
    %5729 = vmatpush1.bf16.msra.mxu0 %v5610
    %5730 = vmatprep.subr.bf16.mxu0 %v5609
    %5731 = vmatpush1.bf16.msra.mxu0 %v5608
    %5732 = vmatprep.subr.bf16.mxu0 %v5607
    %5733 = vmatpush1.bf16.msra.mxu0 %v5606
    %5734 = vmatprep.subr.bf16.mxu0 %v5605
    %5735 = vmatpush1.bf16.msra.mxu0 %v5604
    %5736 = vmatprep.subr.bf16.mxu0 %v5603
    %5737 = vmatpush1.bf16.msra.mxu0 %v5602
    %5738 = vmatprep.subr.bf16.mxu0 %v5601
    %5739 = vmatpush1.bf16.msra.mxu0 %v5600
    %5740 = vmatprep.subr.bf16.mxu0 %v5599
    %5741 = vmatpush1.bf16.msra.mxu0 %v5598
    %5742 = vmatprep.subr.bf16.mxu0 %v5629
    %5743 = vmatpush2.bf16.msra.mxu0 %v5628
    %5744 = vmatprep.subr.bf16.mxu0 %v5627
    %5745 = vmatpush2.bf16.msra.mxu0 %v5626
    %5746 = vmatprep.subr.bf16.mxu0 %v5625
    %5747 = vmatpush2.bf16.msra.mxu0 %v5624
    %5748 = vmatprep.subr.bf16.mxu0 %v5623
    %5749 = vmatpush2.bf16.msra.mxu0 %v5622
    %5750 = vmatprep.subr.bf16.mxu0 %v5621
    %5751 = vmatpush2.bf16.msra.mxu0 %v5620
    %5752 = vmatprep.subr.bf16.mxu0 %v5619
    %5753 = vmatpush2.bf16.msra.mxu0 %v5618
    %5754 = vmatprep.subr.bf16.mxu0 %v5617
    %5755 = vmatpush2.bf16.msra.mxu0 %v5616
    %5756 = vmatprep.subr.bf16.mxu0 %v5615
    %5757 = vmatpush2.bf16.msra.mxu0 %v5614
    %5758 = vmatprep.mubr.bf16.mxu0 %v5327
    %5759 = vmatmul.mubr.bf16.gmra.mxu0 %v5326
    %v5760 = vpop.f32.mrf.mxu0
    %v5761 = vadd.f32 %v5399, %v5760
    %v5762 = vpop.f32.mrf.mxu0
    %v5763 = vadd.f32 %v5403, %v5762
    %v5764 = vpop.f32.mrf.mxu0
    %v5765 = vadd.f32 %v5399, %v5764
    %v5766 = vpop.f32.mrf.mxu0
    %v5767 = vadd.f32 %v5403, %v5766
    %5768 = vdwg.mxu0
    %5769 = vmatprep.subr.bf16.mxu0 %v5645
    %5770 = vmatpush1.bf16.msra.mxu0 %v5644
    %5771 = vmatprep.subr.bf16.mxu0 %v5643
    %5772 = vmatpush1.bf16.msra.mxu0 %v5642
    %5773 = vmatprep.subr.bf16.mxu0 %v5641
    %5774 = vmatpush1.bf16.msra.mxu0 %v5640
    %5775 = vmatprep.subr.bf16.mxu0 %v5639
    %5776 = vmatpush1.bf16.msra.mxu0 %v5638
    %5777 = vmatprep.subr.bf16.mxu0 %v5637
    %5778 = vmatpush1.bf16.msra.mxu0 %v5636
    %5779 = vmatprep.subr.bf16.mxu0 %v5635
    %5780 = vmatpush1.bf16.msra.mxu0 %v5634
    %5781 = vmatprep.subr.bf16.mxu0 %v5633
    %5782 = vmatpush1.bf16.msra.mxu0 %v5632
    %5783 = vmatprep.subr.bf16.mxu0 %v5631
    %5784 = vmatpush1.bf16.msra.mxu0 %v5630
    %5785 = vmatprep.subr.bf16.mxu0 %v5661
    %5786 = vmatpush2.bf16.msra.mxu0 %v5660
    %5787 = vmatprep.subr.bf16.mxu0 %v5659
    %5788 = vmatpush2.bf16.msra.mxu0 %v5658
    %5789 = vmatprep.subr.bf16.mxu0 %v5657
    %5790 = vmatpush2.bf16.msra.mxu0 %v5656
    %5791 = vmatprep.subr.bf16.mxu0 %v5655
    %5792 = vmatpush2.bf16.msra.mxu0 %v5654
    %5793 = vmatprep.subr.bf16.mxu0 %v5653
    %5794 = vmatpush2.bf16.msra.mxu0 %v5652
    %5795 = vmatprep.subr.bf16.mxu0 %v5651
    %5796 = vmatpush2.bf16.msra.mxu0 %v5650
    %5797 = vmatprep.subr.bf16.mxu0 %v5649
    %5798 = vmatpush2.bf16.msra.mxu0 %v5648
    %5799 = vmatprep.subr.bf16.mxu0 %v5647
    %5800 = vmatpush2.bf16.msra.mxu0 %v5646
    %5801 = vmatprep.mubr.bf16.mxu0 %v5329
    %5802 = vmatmul.mubr.bf16.gmra.mxu0 %v5328
    %v5803 = vpop.f32.mrf.mxu0
    %v5804 = vadd.f32 %v5761, %v5803
    %v5805 = vpop.f32.mrf.mxu0
    %v5806 = vadd.f32 %v5763, %v5805
    %v5807 = vpop.f32.mrf.mxu0
    %v5808 = vadd.f32 %v5765, %v5807
    %v5809 = vpop.f32.mrf.mxu0
    %v5810 = vadd.f32 %v5767, %v5809
    %5811 = vdwg.mxu0
    %v5812 = vmax.f32 %v5804, 0.0
    %v5813 = vmax.f32 %v5806, 0.0
    %v5814 = vmax.f32 %v5808, 0.0
    %v5815 = vmax.f32 %v5810, 0.0
    %v5816 = vpack.c.bf16 %v5814, %v5812
    %v5817 = vpack.c.bf16 %v5815, %v5813
    %v5818 = vld [vmem:[#allocation12] sm:$0xf]
    %v5819 = vld [vmem:[#allocation12 + $0x4] sm:$0xf]
    %v5820 = vld [vmem:[#allocation12 + $0x8] sm:$0xf]
    %v5821 = vld [vmem:[#allocation12 + $0xc] sm:$0xf]
    %v5822 = vld [vmem:[#allocation12 + $0x10] sm:$0xf]
    %v5823 = vld [vmem:[#allocation12 + $0x14] sm:$0xf]
    %v5824 = vld [vmem:[#allocation12 + $0x18] sm:$0xf]
    %v5825 = vld [vmem:[#allocation12 + $0x1c] sm:$0xf]
    %v5826 = vld [vmem:[#allocation12 + $0x20] sm:$0xf]
    %v5827 = vld [vmem:[#allocation12 + $0x24] sm:$0xf]
    %v5828 = vld [vmem:[#allocation12 + $0x28] sm:$0xf]
    %v5829 = vld [vmem:[#allocation12 + $0x2c] sm:$0xf]
    %v5830 = vld [vmem:[#allocation12 + $0x30] sm:$0xf]
    %v5831 = vld [vmem:[#allocation12 + $0x34] sm:$0xf]
    %v5832 = vld [vmem:[#allocation12 + $0x38] sm:$0xf]
    %v5833 = vld [vmem:[#allocation12 + $0x3c] sm:$0xf]
    %v5834 = vld [vmem:[#allocation12 + $0x40] sm:$0xf]
    %v5835 = vld [vmem:[#allocation12 + $0x44] sm:$0xf]
    %v5836 = vld [vmem:[#allocation12 + $0x48] sm:$0xf]
    %v5837 = vld [vmem:[#allocation12 + $0x4c] sm:$0xf]
    %v5838 = vld [vmem:[#allocation12 + $0x50] sm:$0xf]
    %v5839 = vld [vmem:[#allocation12 + $0x54] sm:$0xf]
    %v5840 = vld [vmem:[#allocation12 + $0x58] sm:$0xf]
    %v5841 = vld [vmem:[#allocation12 + $0x5c] sm:$0xf]
    %v5842 = vld [vmem:[#allocation12 + $0x60] sm:$0xf]
    %v5843 = vld [vmem:[#allocation12 + $0x64] sm:$0xf]
    %v5844 = vld [vmem:[#allocation12 + $0x68] sm:$0xf]
    %v5845 = vld [vmem:[#allocation12 + $0x6c] sm:$0xf]
    %v5846 = vld [vmem:[#allocation12 + $0x70] sm:$0xf]
    %v5847 = vld [vmem:[#allocation12 + $0x74] sm:$0xf]
    %v5848 = vld [vmem:[#allocation12 + $0x78] sm:$0xf]
    %v5849 = vld [vmem:[#allocation12 + $0x7c] sm:$0xf]
    %v5850 = vld [vmem:[#allocation13] sm:$0x1]
    %v5852 = vlaneseq
    %v5853 = vshrl.u32 %v5852, 7
    %v5854 = vsub.s32 0, %v5853
    %v5855 = vrot.slane %v5850, %v5854
    %v5889 = vunpack.c.l.b16 %v5818
    %v5890 = vunpack.c.l.b16 %v5819
    %v5891 = vunpack.c.l.b16 %v5820
    %v5892 = vunpack.c.l.b16 %v5821
    %v5893 = vunpack.c.l.b16 %v5822
    %v5894 = vunpack.c.l.b16 %v5823
    %v5895 = vunpack.c.l.b16 %v5824
    %v5896 = vunpack.c.l.b16 %v5825
    %v5897 = vunpack.c.l.b16 %v5826
    %v5898 = vunpack.c.l.b16 %v5827
    %v5899 = vunpack.c.l.b16 %v5828
    %v5900 = vunpack.c.l.b16 %v5829
    %v5901 = vunpack.c.l.b16 %v5830
    %v5902 = vunpack.c.l.b16 %v5831
    %v5903 = vunpack.c.l.b16 %v5832
    %v5904 = vunpack.c.l.b16 %v5833
    %v5905 = vunpack.c.l.b16 %v5834
    %v5906 = vunpack.c.l.b16 %v5835
    %v5907 = vunpack.c.l.b16 %v5836
    %v5908 = vunpack.c.l.b16 %v5837
    %v5909 = vunpack.c.l.b16 %v5838
    %v5910 = vunpack.c.l.b16 %v5839
    %v5911 = vunpack.c.l.b16 %v5840
    %v5912 = vunpack.c.l.b16 %v5841
    %v5913 = vunpack.c.l.b16 %v5842
    %v5914 = vunpack.c.l.b16 %v5843
    %v5915 = vunpack.c.l.b16 %v5844
    %v5916 = vunpack.c.l.b16 %v5845
    %v5917 = vunpack.c.l.b16 %v5846
    %v5918 = vunpack.c.l.b16 %v5847
    %v5919 = vunpack.c.l.b16 %v5848
    %v5920 = vunpack.c.l.b16 %v5849
    %v5921 = vpack.c.b16 %v5890, %v5889
    %v5922 = vpack.c.b16 %v5892, %v5891
    %v5923 = vpack.c.b16 %v5894, %v5893
    %v5924 = vpack.c.b16 %v5896, %v5895
    %v5925 = vpack.c.b16 %v5898, %v5897
    %v5926 = vpack.c.b16 %v5900, %v5899
    %v5927 = vpack.c.b16 %v5902, %v5901
    %v5928 = vpack.c.b16 %v5904, %v5903
    %v5929 = vpack.c.b16 %v5906, %v5905
    %v5930 = vpack.c.b16 %v5908, %v5907
    %v5931 = vpack.c.b16 %v5910, %v5909
    %v5932 = vpack.c.b16 %v5912, %v5911
    %v5933 = vpack.c.b16 %v5914, %v5913
    %v5934 = vpack.c.b16 %v5916, %v5915
    %v5935 = vpack.c.b16 %v5918, %v5917
    %v5936 = vpack.c.b16 %v5920, %v5919
    %5953 = vmatprep.subr.bf16.mxu0 0
    %5954 = vmatpush1.bf16.msra.mxu0 %v5928
    %5955 = vmatprep.subr.bf16.mxu0 0
    %5956 = vmatpush1.bf16.msra.mxu0 %v5927
    %5957 = vmatprep.subr.bf16.mxu0 0
    %5958 = vmatpush1.bf16.msra.mxu0 %v5926
    %5959 = vmatprep.subr.bf16.mxu0 0
    %5960 = vmatpush1.bf16.msra.mxu0 %v5925
    %5961 = vmatprep.subr.bf16.mxu0 0
    %5962 = vmatpush1.bf16.msra.mxu0 %v5924
    %5963 = vmatprep.subr.bf16.mxu0 0
    %5964 = vmatpush1.bf16.msra.mxu0 %v5923
    %5965 = vmatprep.subr.bf16.mxu0 0
    %5966 = vmatpush1.bf16.msra.mxu0 %v5922
    %5967 = vmatprep.subr.bf16.mxu0 0
    %5968 = vmatpush1.bf16.msra.mxu0 %v5921
    %5969 = vmatprep.subr.bf16.mxu0 0
    %5970 = vmatpush2.bf16.msra.mxu0 %v5936
    %5971 = vmatprep.subr.bf16.mxu0 0
    %5972 = vmatpush2.bf16.msra.mxu0 %v5935
    %5973 = vmatprep.subr.bf16.mxu0 0
    %5974 = vmatpush2.bf16.msra.mxu0 %v5934
    %5975 = vmatprep.subr.bf16.mxu0 0
    %5976 = vmatpush2.bf16.msra.mxu0 %v5933
    %5977 = vmatprep.subr.bf16.mxu0 0
    %5978 = vmatpush2.bf16.msra.mxu0 %v5932
    %5979 = vmatprep.subr.bf16.mxu0 0
    %5980 = vmatpush2.bf16.msra.mxu0 %v5931
    %5981 = vmatprep.subr.bf16.mxu0 0
    %5982 = vmatpush2.bf16.msra.mxu0 %v5930
    %5983 = vmatprep.subr.bf16.mxu0 0
    %5984 = vmatpush2.bf16.msra.mxu0 %v5929
    %5985 = vmatprep.mubr.bf16.mxu0 %v5817
    %5986 = vmatmul.mubr.bf16.gmra.mxu0 %v5816
    %v5987 = vpop.f32.mrf.mxu0
    %v5988 = vadd.f32 %v5855, %v5987
    %v5989 = vpop.f32.mrf.mxu0
    %v5990 = vpop.f32.mrf.mxu0
    %v5991 = vadd.f32 %v5855, %v5990
    %v5992 = vpop.f32.mrf.mxu0
    %5993 = vdwg.mxu0
    %v5994 = vld [vmem:[%s1] sm:$0xff]
    %v5995 = vld [vmem:[%s1 + $0x8] sm:$0xff]
    %v5996 = vmul.f32 %v5988, 0.5
    %v5997 = vmul.f32 %v5991, 0.5
    %v5998 = vmul.f32 %v5996, 1.442695
    %v5999 = vpow.pop %v5998
    %v6000 = vmul.f32 %v5997, 1.442695
    %v6001 = vpow.pop %v6000
    %6004 = vrot.lane.b32.xlu0 %v5999, 64
    %v6005 = vpop.permute.xlu0 %6004
    %6006 = vrot.lane.b32.xlu0 %v6001, 64
    %v6007 = vpop.permute.xlu0 %6006
    %v6010 = vmul.f32 %v5994, %v6005
    %v6011 = vmul.f32 %v5995, %v6007
    %v6012 = vadd.f32 %v5988, %v6010
    %v6013 = vadd.f32 %v5991, %v6011
    %v6014 = vpack.c.bf16 %v6013, %v6012
    %v6015 = vld [vmem:[#allocation15] sm:$0xff]
    %v6016 = vld [vmem:[#allocation15 + $0x8] sm:$0xff]
    %v6017 = vld [vmem:[#allocation15 + $0x10] sm:$0xff]
    %v6018 = vld [vmem:[#allocation15 + $0x18] sm:$0xff]
    %v6019 = vld [vmem:[#allocation15 + $0x20] sm:$0xff]
    %v6020 = vld [vmem:[#allocation15 + $0x28] sm:$0xff]
    %v6021 = vld [vmem:[#allocation15 + $0x30] sm:$0xff]
    %v6022 = vld [vmem:[#allocation15 + $0x38] sm:$0xff]
    %v6023 = vld [vmem:[#allocation16] sm:$0x3]
    %v6025 = vlaneseq
    %v6026 = vshrl.u32 %v6025, 7
    %v6027 = vsub.s32 0, %v6026
    %v6028 = vrot.slane %v6023, %v6027
    %v6029 = vlaneseq
    %v6030 = vshrl.u32 %v6029, 7
    %v6031 = vsub.s32 1, %v6030
    %v6032 = vrot.slane %v6023, %v6031
    %v6043 = vunpack.c.l.b16 %v6015
    %v6044 = vunpack.c.h.b16 %v6015
    %v6045 = vunpack.c.l.b16 %v6016
    %v6046 = vunpack.c.h.b16 %v6016
    %v6047 = vunpack.c.l.b16 %v6017
    %v6048 = vunpack.c.h.b16 %v6017
    %v6049 = vunpack.c.l.b16 %v6018
    %v6050 = vunpack.c.h.b16 %v6018
    %v6051 = vunpack.c.l.b16 %v6019
    %v6052 = vunpack.c.h.b16 %v6019
    %v6053 = vunpack.c.l.b16 %v6020
    %v6054 = vunpack.c.h.b16 %v6020
    %v6055 = vunpack.c.l.b16 %v6021
    %v6056 = vunpack.c.h.b16 %v6021
    %v6057 = vunpack.c.l.b16 %v6022
    %v6058 = vunpack.c.h.b16 %v6022
    %v6059 = vpack.c.b16 %v6045, %v6043
    %v6060 = vpack.c.b16 %v6046, %v6044
    %v6061 = vpack.c.b16 %v6049, %v6047
    %v6062 = vpack.c.b16 %v6050, %v6048
    %v6063 = vpack.c.b16 %v6053, %v6051
    %v6064 = vpack.c.b16 %v6054, %v6052
    %v6065 = vpack.c.b16 %v6057, %v6055
    %v6066 = vpack.c.b16 %v6058, %v6056
    %vm6075 = vcmask 523264
    %v6077 = vsel %vm6075, %v6014, 0
    %6079 = vmatprep.subr.bf16.mxu0 0
    %6080 = vmatpush1.bf16.msra.mxu0 0
    %6081 = vmatprep.subr.bf16.mxu0 0
    %6082 = vmatpush1.bf16.msra.mxu0 0
    %6083 = vmatprep.subr.bf16.mxu0 0
    %6084 = vmatpush1.bf16.msra.mxu0 0
    %6085 = vmatprep.subr.bf16.mxu0 0
    %6086 = vmatpush1.bf16.msra.mxu0 0
    %6087 = vmatprep.subr.bf16.mxu0 %v6066
    %6088 = vmatpush1.bf16.msra.mxu0 %v6065
    %6089 = vmatprep.subr.bf16.mxu0 %v6064
    %6090 = vmatpush1.bf16.msra.mxu0 %v6063
    %6091 = vmatprep.subr.bf16.mxu0 %v6062
    %6092 = vmatpush1.bf16.msra.mxu0 %v6061
    %6093 = vmatprep.subr.bf16.mxu0 %v6060
    %6094 = vmatpush1.bf16.msra.mxu0 %v6059
    %6095 = vmatprep.subr.bf16.mxu0 0
    %6096 = vmatpush2.bf16.msra.mxu0 0
    %6097 = vmatprep.subr.bf16.mxu0 0
    %6098 = vmatpush2.bf16.msra.mxu0 0
    %6099 = vmatprep.subr.bf16.mxu0 0
    %6100 = vmatpush2.bf16.msra.mxu0 0
    %6101 = vmatprep.subr.bf16.mxu0 0
    %6102 = vmatpush2.bf16.msra.mxu0 0
    %6103 = vmatprep.subr.bf16.mxu0 0
    %6104 = vmatpush2.bf16.msra.mxu0 0
    %6105 = vmatprep.subr.bf16.mxu0 0
    %6106 = vmatpush2.bf16.msra.mxu0 0
    %6107 = vmatprep.subr.bf16.mxu0 0
    %6108 = vmatpush2.bf16.msra.mxu0 0
    %6109 = vmatprep.subr.bf16.mxu0 0
    %6110 = vmatpush2.bf16.msra.mxu0 0
    %6111 = vmatprep.mubr.bf16.mxu0 0
    %6112 = vmatmul.mubr.bf16.gmra.mxu0 %v6077
    %v6113 = vpop.f32.mrf.mxu0
    %v6114 = vadd.f32 %v6028, %v6113
    %v6115 = vpop.f32.mrf.mxu0
    %v6116 = vadd.f32 %v6032, %v6115
    %v6117 = vpop.f32.mrf.mxu0
    %v6118 = vadd.f32 %v6028, %v6117
    %v6119 = vpop.f32.mrf.mxu0
    %v6120 = vadd.f32 %v6032, %v6119
    %6121 = vdwg.mxu0
    %v6122 = vmax.f32 %v6114, 0.0
    %v6123 = vmax.f32 %v6116, 0.0
    %v6124 = vmax.f32 %v6118, 0.0
    %v6125 = vmax.f32 %v6120, 0.0
    %v6126 = vpack.c.bf16 %v6124, %v6122
    %v6127 = vpack.c.bf16 %v6125, %v6123
    %v6128 = vld [vmem:[#allocation18] sm:$0xff]
    %v6129 = vld [vmem:[#allocation18 + $0x8] sm:$0xff]
    %v6130 = vld [vmem:[#allocation18 + $0x10] sm:$0xff]
    %v6131 = vld [vmem:[#allocation18 + $0x18] sm:$0xff]
    %v6132 = vld [vmem:[#allocation18 + $0x20] sm:$0xff]
    %v6133 = vld [vmem:[#allocation18 + $0x28] sm:$0xff]
    %v6134 = vld [vmem:[#allocation18 + $0x30] sm:$0xff]
    %v6135 = vld [vmem:[#allocation18 + $0x38] sm:$0xff]
    %v6136 = vld [vmem:[#allocation18 + $0x40] sm:$0xff]
    %v6137 = vld [vmem:[#allocation18 + $0x48] sm:$0xff]
    %v6138 = vld [vmem:[#allocation18 + $0x50] sm:$0xff]
    %v6139 = vld [vmem:[#allocation18 + $0x58] sm:$0xff]
    %v6140 = vld [vmem:[#allocation18 + $0x60] sm:$0xff]
    %v6141 = vld [vmem:[#allocation18 + $0x68] sm:$0xff]
    %v6142 = vld [vmem:[#allocation18 + $0x70] sm:$0xff]
    %v6143 = vld [vmem:[#allocation18 + $0x78] sm:$0xff]
    %v6144 = vld [vmem:[#allocation18 + $0x80] sm:$0xff]
    %v6145 = vld [vmem:[#allocation18 + $0x88] sm:$0xff]
    %v6146 = vld [vmem:[#allocation18 + $0x90] sm:$0xff]
    %v6147 = vld [vmem:[#allocation18 + $0x98] sm:$0xff]
    %v6148 = vld [vmem:[#allocation18 + $0xa0] sm:$0xff]
    %v6149 = vld [vmem:[#allocation18 + $0xa8] sm:$0xff]
    %v6150 = vld [vmem:[#allocation18 + $0xb0] sm:$0xff]
    %v6151 = vld [vmem:[#allocation18 + $0xb8] sm:$0xff]
    %v6152 = vld [vmem:[#allocation18 + $0xc0] sm:$0xff]
    %v6153 = vld [vmem:[#allocation18 + $0xc8] sm:$0xff]
    %v6154 = vld [vmem:[#allocation18 + $0xd0] sm:$0xff]
    %v6155 = vld [vmem:[#allocation18 + $0xd8] sm:$0xff]
    %v6156 = vld [vmem:[#allocation18 + $0xe0] sm:$0xff]
    %v6157 = vld [vmem:[#allocation18 + $0xe8] sm:$0xff]
    %v6158 = vld [vmem:[#allocation18 + $0xf0] sm:$0xff]
    %v6159 = vld [vmem:[#allocation18 + $0xf8] sm:$0xff]
    %v6160 = vld [vmem:[#allocation18 + $0x100] sm:$0xff]
    %v6161 = vld [vmem:[#allocation18 + $0x108] sm:$0xff]
    %v6162 = vld [vmem:[#allocation18 + $0x110] sm:$0xff]
    %v6163 = vld [vmem:[#allocation18 + $0x118] sm:$0xff]
    %v6164 = vld [vmem:[#allocation18 + $0x120] sm:$0xff]
    %v6165 = vld [vmem:[#allocation18 + $0x128] sm:$0xff]
    %v6166 = vld [vmem:[#allocation18 + $0x130] sm:$0xff]
    %v6167 = vld [vmem:[#allocation18 + $0x138] sm:$0xff]
    %v6168 = vld [vmem:[#allocation18 + $0x140] sm:$0xff]
    %v6169 = vld [vmem:[#allocation18 + $0x148] sm:$0xff]
    %v6170 = vld [vmem:[#allocation18 + $0x150] sm:$0xff]
    %v6171 = vld [vmem:[#allocation18 + $0x158] sm:$0xff]
    %v6172 = vld [vmem:[#allocation18 + $0x160] sm:$0xff]
    %v6173 = vld [vmem:[#allocation18 + $0x168] sm:$0xff]
    %v6174 = vld [vmem:[#allocation18 + $0x170] sm:$0xff]
    %v6175 = vld [vmem:[#allocation18 + $0x178] sm:$0xff]
    %v6176 = vld [vmem:[#allocation18 + $0x180] sm:$0xff]
    %v6177 = vld [vmem:[#allocation18 + $0x188] sm:$0xff]
    %v6178 = vld [vmem:[#allocation18 + $0x190] sm:$0xff]
    %v6179 = vld [vmem:[#allocation18 + $0x198] sm:$0xff]
    %v6180 = vld [vmem:[#allocation18 + $0x1a0] sm:$0xff]
    %v6181 = vld [vmem:[#allocation18 + $0x1a8] sm:$0xff]
    %v6182 = vld [vmem:[#allocation18 + $0x1b0] sm:$0xff]
    %v6183 = vld [vmem:[#allocation18 + $0x1b8] sm:$0xff]
    %v6184 = vld [vmem:[#allocation18 + $0x1c0] sm:$0xff]
    %v6185 = vld [vmem:[#allocation18 + $0x1c8] sm:$0xff]
    %v6186 = vld [vmem:[#allocation18 + $0x1d0] sm:$0xff]
    %v6187 = vld [vmem:[#allocation18 + $0x1d8] sm:$0xff]
    %v6188 = vld [vmem:[#allocation18 + $0x1e0] sm:$0xff]
    %v6189 = vld [vmem:[#allocation18 + $0x1e8] sm:$0xff]
    %v6190 = vld [vmem:[#allocation18 + $0x1f0] sm:$0xff]
    %v6191 = vld [vmem:[#allocation18 + $0x1f8] sm:$0xff]
    %v6192 = vld [vmem:[#allocation19] sm:$0xf]
    %v6194 = vlaneseq
    %v6195 = vshrl.u32 %v6194, 7
    %v6196 = vsub.s32 0, %v6195
    %v6197 = vrot.slane %v6192, %v6196
    %v6198 = vlaneseq
    %v6199 = vshrl.u32 %v6198, 7
    %v6200 = vsub.s32 1, %v6199
    %v6201 = vrot.slane %v6192, %v6200
    %v6202 = vlaneseq
    %v6203 = vshrl.u32 %v6202, 7
    %v6204 = vsub.s32 2, %v6203
    %v6205 = vrot.slane %v6192, %v6204
    %v6206 = vlaneseq
    %v6207 = vshrl.u32 %v6206, 7
    %v6208 = vsub.s32 3, %v6207
    %v6209 = vrot.slane %v6192, %v6208
    %v6278 = vunpack.c.l.b16 %v6128
    %v6279 = vunpack.c.h.b16 %v6128
    %v6280 = vunpack.c.l.b16 %v6129
    %v6281 = vunpack.c.h.b16 %v6129
    %v6282 = vunpack.c.l.b16 %v6130
    %v6283 = vunpack.c.h.b16 %v6130
    %v6284 = vunpack.c.l.b16 %v6131
    %v6285 = vunpack.c.h.b16 %v6131
    %v6286 = vunpack.c.l.b16 %v6132
    %v6287 = vunpack.c.h.b16 %v6132
    %v6288 = vunpack.c.l.b16 %v6133
    %v6289 = vunpack.c.h.b16 %v6133
    %v6290 = vunpack.c.l.b16 %v6134
    %v6291 = vunpack.c.h.b16 %v6134
    %v6292 = vunpack.c.l.b16 %v6135
    %v6293 = vunpack.c.h.b16 %v6135
    %v6294 = vunpack.c.l.b16 %v6136
    %v6295 = vunpack.c.h.b16 %v6136
    %v6296 = vunpack.c.l.b16 %v6137
    %v6297 = vunpack.c.h.b16 %v6137
    %v6298 = vunpack.c.l.b16 %v6138
    %v6299 = vunpack.c.h.b16 %v6138
    %v6300 = vunpack.c.l.b16 %v6139
    %v6301 = vunpack.c.h.b16 %v6139
    %v6302 = vunpack.c.l.b16 %v6140
    %v6303 = vunpack.c.h.b16 %v6140
    %v6304 = vunpack.c.l.b16 %v6141
    %v6305 = vunpack.c.h.b16 %v6141
    %v6306 = vunpack.c.l.b16 %v6142
    %v6307 = vunpack.c.h.b16 %v6142
    %v6308 = vunpack.c.l.b16 %v6143
    %v6309 = vunpack.c.h.b16 %v6143
    %v6310 = vunpack.c.l.b16 %v6144
    %v6311 = vunpack.c.h.b16 %v6144
    %v6312 = vunpack.c.l.b16 %v6145
    %v6313 = vunpack.c.h.b16 %v6145
    %v6314 = vunpack.c.l.b16 %v6146
    %v6315 = vunpack.c.h.b16 %v6146
    %v6316 = vunpack.c.l.b16 %v6147
    %v6317 = vunpack.c.h.b16 %v6147
    %v6318 = vunpack.c.l.b16 %v6148
    %v6319 = vunpack.c.h.b16 %v6148
    %v6320 = vunpack.c.l.b16 %v6149
    %v6321 = vunpack.c.h.b16 %v6149
    %v6322 = vunpack.c.l.b16 %v6150
    %v6323 = vunpack.c.h.b16 %v6150
    %v6324 = vunpack.c.l.b16 %v6151
    %v6325 = vunpack.c.h.b16 %v6151
    %v6326 = vunpack.c.l.b16 %v6152
    %v6327 = vunpack.c.h.b16 %v6152
    %v6328 = vunpack.c.l.b16 %v6153
    %v6329 = vunpack.c.h.b16 %v6153
    %v6330 = vunpack.c.l.b16 %v6154
    %v6331 = vunpack.c.h.b16 %v6154
    %v6332 = vunpack.c.l.b16 %v6155
    %v6333 = vunpack.c.h.b16 %v6155
    %v6334 = vunpack.c.l.b16 %v6156
    %v6335 = vunpack.c.h.b16 %v6156
    %v6336 = vunpack.c.l.b16 %v6157
    %v6337 = vunpack.c.h.b16 %v6157
    %v6338 = vunpack.c.l.b16 %v6158
    %v6339 = vunpack.c.h.b16 %v6158
    %v6340 = vunpack.c.l.b16 %v6159
    %v6341 = vunpack.c.h.b16 %v6159
    %v6342 = vunpack.c.l.b16 %v6160
    %v6343 = vunpack.c.h.b16 %v6160
    %v6344 = vunpack.c.l.b16 %v6161
    %v6345 = vunpack.c.h.b16 %v6161
    %v6346 = vunpack.c.l.b16 %v6162
    %v6347 = vunpack.c.h.b16 %v6162
    %v6348 = vunpack.c.l.b16 %v6163
    %v6349 = vunpack.c.h.b16 %v6163
    %v6350 = vunpack.c.l.b16 %v6164
    %v6351 = vunpack.c.h.b16 %v6164
    %v6352 = vunpack.c.l.b16 %v6165
    %v6353 = vunpack.c.h.b16 %v6165
    %v6354 = vunpack.c.l.b16 %v6166
    %v6355 = vunpack.c.h.b16 %v6166
    %v6356 = vunpack.c.l.b16 %v6167
    %v6357 = vunpack.c.h.b16 %v6167
    %v6358 = vunpack.c.l.b16 %v6168
    %v6359 = vunpack.c.h.b16 %v6168
    %v6360 = vunpack.c.l.b16 %v6169
    %v6361 = vunpack.c.h.b16 %v6169
    %v6362 = vunpack.c.l.b16 %v6170
    %v6363 = vunpack.c.h.b16 %v6170
    %v6364 = vunpack.c.l.b16 %v6171
    %v6365 = vunpack.c.h.b16 %v6171
    %v6366 = vunpack.c.l.b16 %v6172
    %v6367 = vunpack.c.h.b16 %v6172
    %v6368 = vunpack.c.l.b16 %v6173
    %v6369 = vunpack.c.h.b16 %v6173
    %v6370 = vunpack.c.l.b16 %v6174
    %v6371 = vunpack.c.h.b16 %v6174
    %v6372 = vunpack.c.l.b16 %v6175
    %v6373 = vunpack.c.h.b16 %v6175
    %v6374 = vunpack.c.l.b16 %v6176
    %v6375 = vunpack.c.h.b16 %v6176
    %v6376 = vunpack.c.l.b16 %v6177
    %v6377 = vunpack.c.h.b16 %v6177
    %v6378 = vunpack.c.l.b16 %v6178
    %v6379 = vunpack.c.h.b16 %v6178
    %v6380 = vunpack.c.l.b16 %v6179
    %v6381 = vunpack.c.h.b16 %v6179
    %v6382 = vunpack.c.l.b16 %v6180
    %v6383 = vunpack.c.h.b16 %v6180
    %v6384 = vunpack.c.l.b16 %v6181
    %v6385 = vunpack.c.h.b16 %v6181
    %v6386 = vunpack.c.l.b16 %v6182
    %v6387 = vunpack.c.h.b16 %v6182
    %v6388 = vunpack.c.l.b16 %v6183
    %v6389 = vunpack.c.h.b16 %v6183
    %v6390 = vunpack.c.l.b16 %v6184
    %v6391 = vunpack.c.h.b16 %v6184
    %v6392 = vunpack.c.l.b16 %v6185
    %v6393 = vunpack.c.h.b16 %v6185
    %v6394 = vunpack.c.l.b16 %v6186
    %v6395 = vunpack.c.h.b16 %v6186
    %v6396 = vunpack.c.l.b16 %v6187
    %v6397 = vunpack.c.h.b16 %v6187
    %v6398 = vunpack.c.l.b16 %v6188
    %v6399 = vunpack.c.h.b16 %v6188
    %v6400 = vunpack.c.l.b16 %v6189
    %v6401 = vunpack.c.h.b16 %v6189
    %v6402 = vunpack.c.l.b16 %v6190
    %v6403 = vunpack.c.h.b16 %v6190
    %v6404 = vunpack.c.l.b16 %v6191
    %v6405 = vunpack.c.h.b16 %v6191
    %v6406 = vpack.c.b16 %v6282, %v6278
    %v6407 = vpack.c.b16 %v6283, %v6279
    %v6408 = vpack.c.b16 %v6284, %v6280
    %v6409 = vpack.c.b16 %v6285, %v6281
    %v6410 = vpack.c.b16 %v6290, %v6286
    %v6411 = vpack.c.b16 %v6291, %v6287
    %v6412 = vpack.c.b16 %v6292, %v6288
    %v6413 = vpack.c.b16 %v6293, %v6289
    %v6414 = vpack.c.b16 %v6298, %v6294
    %v6415 = vpack.c.b16 %v6299, %v6295
    %v6416 = vpack.c.b16 %v6300, %v6296
    %v6417 = vpack.c.b16 %v6301, %v6297
    %v6418 = vpack.c.b16 %v6306, %v6302
    %v6419 = vpack.c.b16 %v6307, %v6303
    %v6420 = vpack.c.b16 %v6308, %v6304
    %v6421 = vpack.c.b16 %v6309, %v6305
    %v6422 = vpack.c.b16 %v6314, %v6310
    %v6423 = vpack.c.b16 %v6315, %v6311
    %v6424 = vpack.c.b16 %v6316, %v6312
    %v6425 = vpack.c.b16 %v6317, %v6313
    %v6426 = vpack.c.b16 %v6322, %v6318
    %v6427 = vpack.c.b16 %v6323, %v6319
    %v6428 = vpack.c.b16 %v6324, %v6320
    %v6429 = vpack.c.b16 %v6325, %v6321
    %v6430 = vpack.c.b16 %v6330, %v6326
    %v6431 = vpack.c.b16 %v6331, %v6327
    %v6432 = vpack.c.b16 %v6332, %v6328
    %v6433 = vpack.c.b16 %v6333, %v6329
    %v6434 = vpack.c.b16 %v6338, %v6334
    %v6435 = vpack.c.b16 %v6339, %v6335
    %v6436 = vpack.c.b16 %v6340, %v6336
    %v6437 = vpack.c.b16 %v6341, %v6337
    %v6438 = vpack.c.b16 %v6346, %v6342
    %v6439 = vpack.c.b16 %v6347, %v6343
    %v6440 = vpack.c.b16 %v6348, %v6344
    %v6441 = vpack.c.b16 %v6349, %v6345
    %v6442 = vpack.c.b16 %v6354, %v6350
    %v6443 = vpack.c.b16 %v6355, %v6351
    %v6444 = vpack.c.b16 %v6356, %v6352
    %v6445 = vpack.c.b16 %v6357, %v6353
    %v6446 = vpack.c.b16 %v6362, %v6358
    %v6447 = vpack.c.b16 %v6363, %v6359
    %v6448 = vpack.c.b16 %v6364, %v6360
    %v6449 = vpack.c.b16 %v6365, %v6361
    %v6450 = vpack.c.b16 %v6370, %v6366
    %v6451 = vpack.c.b16 %v6371, %v6367
    %v6452 = vpack.c.b16 %v6372, %v6368
    %v6453 = vpack.c.b16 %v6373, %v6369
    %v6454 = vpack.c.b16 %v6378, %v6374
    %v6455 = vpack.c.b16 %v6379, %v6375
    %v6456 = vpack.c.b16 %v6380, %v6376
    %v6457 = vpack.c.b16 %v6381, %v6377
    %v6458 = vpack.c.b16 %v6386, %v6382
    %v6459 = vpack.c.b16 %v6387, %v6383
    %v6460 = vpack.c.b16 %v6388, %v6384
    %v6461 = vpack.c.b16 %v6389, %v6385
    %v6462 = vpack.c.b16 %v6394, %v6390
    %v6463 = vpack.c.b16 %v6395, %v6391
    %v6464 = vpack.c.b16 %v6396, %v6392
    %v6465 = vpack.c.b16 %v6397, %v6393
    %v6466 = vpack.c.b16 %v6402, %v6398
    %v6467 = vpack.c.b16 %v6403, %v6399
    %v6468 = vpack.c.b16 %v6404, %v6400
    %v6469 = vpack.c.b16 %v6405, %v6401
    %6534 = vmatprep.subr.bf16.mxu0 %v6435
    %6535 = vmatpush1.bf16.msra.mxu0 %v6434
    %6536 = vmatprep.subr.bf16.mxu0 %v6431
    %6537 = vmatpush1.bf16.msra.mxu0 %v6430
    %6538 = vmatprep.subr.bf16.mxu0 %v6427
    %6539 = vmatpush1.bf16.msra.mxu0 %v6426
    %6540 = vmatprep.subr.bf16.mxu0 %v6423
    %6541 = vmatpush1.bf16.msra.mxu0 %v6422
    %6542 = vmatprep.subr.bf16.mxu0 %v6419
    %6543 = vmatpush1.bf16.msra.mxu0 %v6418
    %6544 = vmatprep.subr.bf16.mxu0 %v6415
    %6545 = vmatpush1.bf16.msra.mxu0 %v6414
    %6546 = vmatprep.subr.bf16.mxu0 %v6411
    %6547 = vmatpush1.bf16.msra.mxu0 %v6410
    %6548 = vmatprep.subr.bf16.mxu0 %v6407
    %6549 = vmatpush1.bf16.msra.mxu0 %v6406
    %6550 = vmatprep.subr.bf16.mxu0 %v6467
    %6551 = vmatpush2.bf16.msra.mxu0 %v6466
    %6552 = vmatprep.subr.bf16.mxu0 %v6463
    %6553 = vmatpush2.bf16.msra.mxu0 %v6462
    %6554 = vmatprep.subr.bf16.mxu0 %v6459
    %6555 = vmatpush2.bf16.msra.mxu0 %v6458
    %6556 = vmatprep.subr.bf16.mxu0 %v6455
    %6557 = vmatpush2.bf16.msra.mxu0 %v6454
    %6558 = vmatprep.subr.bf16.mxu0 %v6451
    %6559 = vmatpush2.bf16.msra.mxu0 %v6450
    %6560 = vmatprep.subr.bf16.mxu0 %v6447
    %6561 = vmatpush2.bf16.msra.mxu0 %v6446
    %6562 = vmatprep.subr.bf16.mxu0 %v6443
    %6563 = vmatpush2.bf16.msra.mxu0 %v6442
    %6564 = vmatprep.subr.bf16.mxu0 %v6439
    %6565 = vmatpush2.bf16.msra.mxu0 %v6438
    %6566 = vmatprep.mubr.bf16.mxu0 %v6127
    %6567 = vmatmul.mubr.bf16.gmra.mxu0 %v6126
    %v6568 = vpop.f32.mrf.mxu0
    %v6569 = vadd.f32 %v6197, %v6568
    %v6570 = vpop.f32.mrf.mxu0
    %v6571 = vadd.f32 %v6201, %v6570
    %v6572 = vpop.f32.mrf.mxu0
    %v6573 = vadd.f32 %v6197, %v6572
    %v6574 = vpop.f32.mrf.mxu0
    %v6575 = vadd.f32 %v6201, %v6574
    %6576 = vdwg.mxu0
    %6577 = vmatprep.subr.bf16.mxu0 %v6437
    %6578 = vmatpush1.bf16.msra.mxu0 %v6436
    %6579 = vmatprep.subr.bf16.mxu0 %v6433
    %6580 = vmatpush1.bf16.msra.mxu0 %v6432
    %6581 = vmatprep.subr.bf16.mxu0 %v6429
    %6582 = vmatpush1.bf16.msra.mxu0 %v6428
    %6583 = vmatprep.subr.bf16.mxu0 %v6425
    %6584 = vmatpush1.bf16.msra.mxu0 %v6424
    %6585 = vmatprep.subr.bf16.mxu0 %v6421
    %6586 = vmatpush1.bf16.msra.mxu0 %v6420
    %6587 = vmatprep.subr.bf16.mxu0 %v6417
    %6588 = vmatpush1.bf16.msra.mxu0 %v6416
    %6589 = vmatprep.subr.bf16.mxu0 %v6413
    %6590 = vmatpush1.bf16.msra.mxu0 %v6412
    %6591 = vmatprep.subr.bf16.mxu0 %v6409
    %6592 = vmatpush1.bf16.msra.mxu0 %v6408
    %6593 = vmatprep.subr.bf16.mxu0 %v6469
    %6594 = vmatpush2.bf16.msra.mxu0 %v6468
    %6595 = vmatprep.subr.bf16.mxu0 %v6465
    %6596 = vmatpush2.bf16.msra.mxu0 %v6464
    %6597 = vmatprep.subr.bf16.mxu0 %v6461
    %6598 = vmatpush2.bf16.msra.mxu0 %v6460
    %6599 = vmatprep.subr.bf16.mxu0 %v6457
    %6600 = vmatpush2.bf16.msra.mxu0 %v6456
    %6601 = vmatprep.subr.bf16.mxu0 %v6453
    %6602 = vmatpush2.bf16.msra.mxu0 %v6452
    %6603 = vmatprep.subr.bf16.mxu0 %v6449
    %6604 = vmatpush2.bf16.msra.mxu0 %v6448
    %6605 = vmatprep.subr.bf16.mxu0 %v6445
    %6606 = vmatpush2.bf16.msra.mxu0 %v6444
    %6607 = vmatprep.subr.bf16.mxu0 %v6441
    %6608 = vmatpush2.bf16.msra.mxu0 %v6440
    %6609 = vmatprep.mubr.bf16.mxu0 %v6127
    %6610 = vmatmul.mubr.bf16.gmra.mxu0 %v6126
    %v6611 = vpop.f32.mrf.mxu0
    %v6612 = vadd.f32 %v6205, %v6611
    %v6613 = vpop.f32.mrf.mxu0
    %v6614 = vadd.f32 %v6209, %v6613
    %v6615 = vpop.f32.mrf.mxu0
    %v6616 = vadd.f32 %v6205, %v6615
    %v6617 = vpop.f32.mrf.mxu0
    %v6618 = vadd.f32 %v6209, %v6617
    %6619 = vdwg.mxu0
    %v6620 = vmax.f32 %v6569, 0.0
    %v6621 = vmax.f32 %v6571, 0.0
    %v6622 = vmax.f32 %v6612, 0.0
    %v6623 = vmax.f32 %v6614, 0.0
    %v6624 = vmax.f32 %v6573, 0.0
    %v6625 = vmax.f32 %v6575, 0.0
    %v6626 = vmax.f32 %v6616, 0.0
    %v6627 = vmax.f32 %v6618, 0.0
    %v6628 = vpack.c.bf16 %v6624, %v6620
    %v6629 = vpack.c.bf16 %v6625, %v6621
    %v6630 = vpack.c.bf16 %v6626, %v6622
    %v6631 = vpack.c.bf16 %v6627, %v6623
    %v6632 = vld [vmem:[#allocation21] sm:$0xff]
    %v6633 = vld [vmem:[#allocation21 + $0x8] sm:$0xff]
    %v6634 = vld [vmem:[#allocation21 + $0x10] sm:$0xff]
    %v6635 = vld [vmem:[#allocation21 + $0x18] sm:$0xff]
    %v6636 = vld [vmem:[#allocation21 + $0x20] sm:$0xff]
    %v6637 = vld [vmem:[#allocation21 + $0x28] sm:$0xff]
    %v6638 = vld [vmem:[#allocation21 + $0x30] sm:$0xff]
    %v6639 = vld [vmem:[#allocation21 + $0x38] sm:$0xff]
    %v6640 = vld [vmem:[#allocation21 + $0x40] sm:$0xff]
    %v6641 = vld [vmem:[#allocation21 + $0x48] sm:$0xff]
    %v6642 = vld [vmem:[#allocation21 + $0x50] sm:$0xff]
    %v6643 = vld [vmem:[#allocation21 + $0x58] sm:$0xff]
    %v6644 = vld [vmem:[#allocation21 + $0x60] sm:$0xff]
    %v6645 = vld [vmem:[#allocation21 + $0x68] sm:$0xff]
    %v6646 = vld [vmem:[#allocation21 + $0x70] sm:$0xff]
    %v6647 = vld [vmem:[#allocation21 + $0x78] sm:$0xff]
    %v6648 = vld [vmem:[#allocation21 + $0x80] sm:$0xff]
    %v6649 = vld [vmem:[#allocation21 + $0x88] sm:$0xff]
    %v6650 = vld [vmem:[#allocation21 + $0x90] sm:$0xff]
    %v6651 = vld [vmem:[#allocation21 + $0x98] sm:$0xff]
    %v6652 = vld [vmem:[#allocation21 + $0xa0] sm:$0xff]
    %v6653 = vld [vmem:[#allocation21 + $0xa8] sm:$0xff]
    %v6654 = vld [vmem:[#allocation21 + $0xb0] sm:$0xff]
    %v6655 = vld [vmem:[#allocation21 + $0xb8] sm:$0xff]
    %v6656 = vld [vmem:[#allocation21 + $0xc0] sm:$0xff]
    %v6657 = vld [vmem:[#allocation21 + $0xc8] sm:$0xff]
    %v6658 = vld [vmem:[#allocation21 + $0xd0] sm:$0xff]
    %v6659 = vld [vmem:[#allocation21 + $0xd8] sm:$0xff]
    %v6660 = vld [vmem:[#allocation21 + $0xe0] sm:$0xff]
    %v6661 = vld [vmem:[#allocation21 + $0xe8] sm:$0xff]
    %v6662 = vld [vmem:[#allocation21 + $0xf0] sm:$0xff]
    %v6663 = vld [vmem:[#allocation21 + $0xf8] sm:$0xff]
    %v6664 = vld [vmem:[#allocation21 + $0x100] sm:$0xff]
    %v6665 = vld [vmem:[#allocation21 + $0x108] sm:$0xff]
    %v6666 = vld [vmem:[#allocation21 + $0x110] sm:$0xff]
    %v6667 = vld [vmem:[#allocation21 + $0x118] sm:$0xff]
    %v6668 = vld [vmem:[#allocation21 + $0x120] sm:$0xff]
    %v6669 = vld [vmem:[#allocation21 + $0x128] sm:$0xff]
    %v6670 = vld [vmem:[#allocation21 + $0x130] sm:$0xff]
    %v6671 = vld [vmem:[#allocation21 + $0x138] sm:$0xff]
    %v6672 = vld [vmem:[#allocation21 + $0x140] sm:$0xff]
    %v6673 = vld [vmem:[#allocation21 + $0x148] sm:$0xff]
    %v6674 = vld [vmem:[#allocation21 + $0x150] sm:$0xff]
    %v6675 = vld [vmem:[#allocation21 + $0x158] sm:$0xff]
    %v6676 = vld [vmem:[#allocation21 + $0x160] sm:$0xff]
    %v6677 = vld [vmem:[#allocation21 + $0x168] sm:$0xff]
    %v6678 = vld [vmem:[#allocation21 + $0x170] sm:$0xff]
    %v6679 = vld [vmem:[#allocation21 + $0x178] sm:$0xff]
    %v6680 = vld [vmem:[#allocation21 + $0x180] sm:$0xff]
    %v6681 = vld [vmem:[#allocation21 + $0x188] sm:$0xff]
    %v6682 = vld [vmem:[#allocation21 + $0x190] sm:$0xff]
    %v6683 = vld [vmem:[#allocation21 + $0x198] sm:$0xff]
    %v6684 = vld [vmem:[#allocation21 + $0x1a0] sm:$0xff]
    %v6685 = vld [vmem:[#allocation21 + $0x1a8] sm:$0xff]
    %v6686 = vld [vmem:[#allocation21 + $0x1b0] sm:$0xff]
    %v6687 = vld [vmem:[#allocation21 + $0x1b8] sm:$0xff]
    %v6688 = vld [vmem:[#allocation21 + $0x1c0] sm:$0xff]
    %v6689 = vld [vmem:[#allocation21 + $0x1c8] sm:$0xff]
    %v6690 = vld [vmem:[#allocation21 + $0x1d0] sm:$0xff]
    %v6691 = vld [vmem:[#allocation21 + $0x1d8] sm:$0xff]
    %v6692 = vld [vmem:[#allocation21 + $0x1e0] sm:$0xff]
    %v6693 = vld [vmem:[#allocation21 + $0x1e8] sm:$0xff]
    %v6694 = vld [vmem:[#allocation21 + $0x1f0] sm:$0xff]
    %v6695 = vld [vmem:[#allocation21 + $0x1f8] sm:$0xff]
    %v6696 = vld [vmem:[#allocation21 + $0x200] sm:$0xff]
    %v6697 = vld [vmem:[#allocation21 + $0x208] sm:$0xff]
    %v6698 = vld [vmem:[#allocation21 + $0x210] sm:$0xff]
    %v6699 = vld [vmem:[#allocation21 + $0x218] sm:$0xff]
    %v6700 = vld [vmem:[#allocation21 + $0x220] sm:$0xff]
    %v6701 = vld [vmem:[#allocation21 + $0x228] sm:$0xff]
    %v6702 = vld [vmem:[#allocation21 + $0x230] sm:$0xff]
    %v6703 = vld [vmem:[#allocation21 + $0x238] sm:$0xff]
    %v6704 = vld [vmem:[#allocation21 + $0x240] sm:$0xff]
    %v6705 = vld [vmem:[#allocation21 + $0x248] sm:$0xff]
    %v6706 = vld [vmem:[#allocation21 + $0x250] sm:$0xff]
    %v6707 = vld [vmem:[#allocation21 + $0x258] sm:$0xff]
    %v6708 = vld [vmem:[#allocation21 + $0x260] sm:$0xff]
    %v6709 = vld [vmem:[#allocation21 + $0x268] sm:$0xff]
    %v6710 = vld [vmem:[#allocation21 + $0x270] sm:$0xff]
    %v6711 = vld [vmem:[#allocation21 + $0x278] sm:$0xff]
    %v6712 = vld [vmem:[#allocation21 + $0x280] sm:$0xff]
    %v6713 = vld [vmem:[#allocation21 + $0x288] sm:$0xff]
    %v6714 = vld [vmem:[#allocation21 + $0x290] sm:$0xff]
    %v6715 = vld [vmem:[#allocation21 + $0x298] sm:$0xff]
    %v6716 = vld [vmem:[#allocation21 + $0x2a0] sm:$0xff]
    %v6717 = vld [vmem:[#allocation21 + $0x2a8] sm:$0xff]
    %v6718 = vld [vmem:[#allocation21 + $0x2b0] sm:$0xff]
    %v6719 = vld [vmem:[#allocation21 + $0x2b8] sm:$0xff]
    %v6720 = vld [vmem:[#allocation21 + $0x2c0] sm:$0xff]
    %v6721 = vld [vmem:[#allocation21 + $0x2c8] sm:$0xff]
    %v6722 = vld [vmem:[#allocation21 + $0x2d0] sm:$0xff]
    %v6723 = vld [vmem:[#allocation21 + $0x2d8] sm:$0xff]
    %v6724 = vld [vmem:[#allocation21 + $0x2e0] sm:$0xff]
    %v6725 = vld [vmem:[#allocation21 + $0x2e8] sm:$0xff]
    %v6726 = vld [vmem:[#allocation21 + $0x2f0] sm:$0xff]
    %v6727 = vld [vmem:[#allocation21 + $0x2f8] sm:$0xff]
    %v6728 = vld [vmem:[#allocation21 + $0x300] sm:$0xff]
    %v6729 = vld [vmem:[#allocation21 + $0x308] sm:$0xff]
    %v6730 = vld [vmem:[#allocation21 + $0x310] sm:$0xff]
    %v6731 = vld [vmem:[#allocation21 + $0x318] sm:$0xff]
    %v6732 = vld [vmem:[#allocation21 + $0x320] sm:$0xff]
    %v6733 = vld [vmem:[#allocation21 + $0x328] sm:$0xff]
    %v6734 = vld [vmem:[#allocation21 + $0x330] sm:$0xff]
    %v6735 = vld [vmem:[#allocation21 + $0x338] sm:$0xff]
    %v6736 = vld [vmem:[#allocation21 + $0x340] sm:$0xff]
    %v6737 = vld [vmem:[#allocation21 + $0x348] sm:$0xff]
    %v6738 = vld [vmem:[#allocation21 + $0x350] sm:$0xff]
    %v6739 = vld [vmem:[#allocation21 + $0x358] sm:$0xff]
    %v6740 = vld [vmem:[#allocation21 + $0x360] sm:$0xff]
    %v6741 = vld [vmem:[#allocation21 + $0x368] sm:$0xff]
    %v6742 = vld [vmem:[#allocation21 + $0x370] sm:$0xff]
    %v6743 = vld [vmem:[#allocation21 + $0x378] sm:$0xff]
    %v6744 = vld [vmem:[#allocation21 + $0x380] sm:$0xff]
    %v6745 = vld [vmem:[#allocation21 + $0x388] sm:$0xff]
    %v6746 = vld [vmem:[#allocation21 + $0x390] sm:$0xff]
    %v6747 = vld [vmem:[#allocation21 + $0x398] sm:$0xff]
    %v6748 = vld [vmem:[#allocation21 + $0x3a0] sm:$0xff]
    %v6749 = vld [vmem:[#allocation21 + $0x3a8] sm:$0xff]
    %v6750 = vld [vmem:[#allocation21 + $0x3b0] sm:$0xff]
    %v6751 = vld [vmem:[#allocation21 + $0x3b8] sm:$0xff]
    %v6752 = vld [vmem:[#allocation21 + $0x3c0] sm:$0xff]
    %v6753 = vld [vmem:[#allocation21 + $0x3c8] sm:$0xff]
    %v6754 = vld [vmem:[#allocation21 + $0x3d0] sm:$0xff]
    %v6755 = vld [vmem:[#allocation21 + $0x3d8] sm:$0xff]
    %v6756 = vld [vmem:[#allocation21 + $0x3e0] sm:$0xff]
    %v6757 = vld [vmem:[#allocation21 + $0x3e8] sm:$0xff]
    %v6758 = vld [vmem:[#allocation21 + $0x3f0] sm:$0xff]
    %v6759 = vld [vmem:[#allocation21 + $0x3f8] sm:$0xff]
    %v6760 = vld [vmem:[#allocation21 + $0x400] sm:$0xff]
    %v6761 = vld [vmem:[#allocation21 + $0x408] sm:$0xff]
    %v6762 = vld [vmem:[#allocation21 + $0x410] sm:$0xff]
    %v6763 = vld [vmem:[#allocation21 + $0x418] sm:$0xff]
    %v6764 = vld [vmem:[#allocation21 + $0x420] sm:$0xff]
    %v6765 = vld [vmem:[#allocation21 + $0x428] sm:$0xff]
    %v6766 = vld [vmem:[#allocation21 + $0x430] sm:$0xff]
    %v6767 = vld [vmem:[#allocation21 + $0x438] sm:$0xff]
    %v6768 = vld [vmem:[#allocation21 + $0x440] sm:$0xff]
    %v6769 = vld [vmem:[#allocation21 + $0x448] sm:$0xff]
    %v6770 = vld [vmem:[#allocation21 + $0x450] sm:$0xff]
    %v6771 = vld [vmem:[#allocation21 + $0x458] sm:$0xff]
    %v6772 = vld [vmem:[#allocation21 + $0x460] sm:$0xff]
    %v6773 = vld [vmem:[#allocation21 + $0x468] sm:$0xff]
    %v6774 = vld [vmem:[#allocation21 + $0x470] sm:$0xff]
    %v6775 = vld [vmem:[#allocation21 + $0x478] sm:$0xff]
    %v6776 = vld [vmem:[#allocation21 + $0x480] sm:$0xff]
    %v6777 = vld [vmem:[#allocation21 + $0x488] sm:$0xff]
    %v6778 = vld [vmem:[#allocation21 + $0x490] sm:$0xff]
    %v6779 = vld [vmem:[#allocation21 + $0x498] sm:$0xff]
    %v6780 = vld [vmem:[#allocation21 + $0x4a0] sm:$0xff]
    %v6781 = vld [vmem:[#allocation21 + $0x4a8] sm:$0xff]
    %v6782 = vld [vmem:[#allocation21 + $0x4b0] sm:$0xff]
    %v6783 = vld [vmem:[#allocation21 + $0x4b8] sm:$0xff]
    %v6784 = vld [vmem:[#allocation21 + $0x4c0] sm:$0xff]
    %v6785 = vld [vmem:[#allocation21 + $0x4c8] sm:$0xff]
    %v6786 = vld [vmem:[#allocation21 + $0x4d0] sm:$0xff]
    %v6787 = vld [vmem:[#allocation21 + $0x4d8] sm:$0xff]
    %v6788 = vld [vmem:[#allocation21 + $0x4e0] sm:$0xff]
    %v6789 = vld [vmem:[#allocation21 + $0x4e8] sm:$0xff]
    %v6790 = vld [vmem:[#allocation21 + $0x4f0] sm:$0xff]
    %v6791 = vld [vmem:[#allocation21 + $0x4f8] sm:$0xff]
    %v6792 = vld [vmem:[#allocation21 + $0x500] sm:$0xff]
    %v6793 = vld [vmem:[#allocation21 + $0x508] sm:$0xff]
    %v6794 = vld [vmem:[#allocation21 + $0x510] sm:$0xff]
    %v6795 = vld [vmem:[#allocation21 + $0x518] sm:$0xff]
    %v6796 = vld [vmem:[#allocation21 + $0x520] sm:$0xff]
    %v6797 = vld [vmem:[#allocation21 + $0x528] sm:$0xff]
    %v6798 = vld [vmem:[#allocation21 + $0x530] sm:$0xff]
    %v6799 = vld [vmem:[#allocation21 + $0x538] sm:$0xff]
    %v6800 = vld [vmem:[#allocation21 + $0x540] sm:$0xff]
    %v6801 = vld [vmem:[#allocation21 + $0x548] sm:$0xff]
    %v6802 = vld [vmem:[#allocation21 + $0x550] sm:$0xff]
    %v6803 = vld [vmem:[#allocation21 + $0x558] sm:$0xff]
    %v6804 = vld [vmem:[#allocation21 + $0x560] sm:$0xff]
    %v6805 = vld [vmem:[#allocation21 + $0x568] sm:$0xff]
    %v6806 = vld [vmem:[#allocation21 + $0x570] sm:$0xff]
    %v6807 = vld [vmem:[#allocation21 + $0x578] sm:$0xff]
    %v6808 = vld [vmem:[#allocation21 + $0x580] sm:$0xff]
    %v6809 = vld [vmem:[#allocation21 + $0x588] sm:$0xff]
    %v6810 = vld [vmem:[#allocation21 + $0x590] sm:$0xff]
    %v6811 = vld [vmem:[#allocation21 + $0x598] sm:$0xff]
    %v6812 = vld [vmem:[#allocation21 + $0x5a0] sm:$0xff]
    %v6813 = vld [vmem:[#allocation21 + $0x5a8] sm:$0xff]
    %v6814 = vld [vmem:[#allocation21 + $0x5b0] sm:$0xff]
    %v6815 = vld [vmem:[#allocation21 + $0x5b8] sm:$0xff]
    %v6816 = vld [vmem:[#allocation21 + $0x5c0] sm:$0xff]
    %v6817 = vld [vmem:[#allocation21 + $0x5c8] sm:$0xff]
    %v6818 = vld [vmem:[#allocation21 + $0x5d0] sm:$0xff]
    %v6819 = vld [vmem:[#allocation21 + $0x5d8] sm:$0xff]
    %v6820 = vld [vmem:[#allocation21 + $0x5e0] sm:$0xff]
    %v6821 = vld [vmem:[#allocation21 + $0x5e8] sm:$0xff]
    %v6822 = vld [vmem:[#allocation21 + $0x5f0] sm:$0xff]
    %v6823 = vld [vmem:[#allocation21 + $0x5f8] sm:$0xff]
    %v6824 = vld [vmem:[#allocation21 + $0x600] sm:$0xff]
    %v6825 = vld [vmem:[#allocation21 + $0x608] sm:$0xff]
    %v6826 = vld [vmem:[#allocation21 + $0x610] sm:$0xff]
    %v6827 = vld [vmem:[#allocation21 + $0x618] sm:$0xff]
    %v6828 = vld [vmem:[#allocation21 + $0x620] sm:$0xff]
    %v6829 = vld [vmem:[#allocation21 + $0x628] sm:$0xff]
    %v6830 = vld [vmem:[#allocation21 + $0x630] sm:$0xff]
    %v6831 = vld [vmem:[#allocation21 + $0x638] sm:$0xff]
    %v6832 = vld [vmem:[#allocation21 + $0x640] sm:$0xff]
    %v6833 = vld [vmem:[#allocation21 + $0x648] sm:$0xff]
    %v6834 = vld [vmem:[#allocation21 + $0x650] sm:$0xff]
    %v6835 = vld [vmem:[#allocation21 + $0x658] sm:$0xff]
    %v6836 = vld [vmem:[#allocation21 + $0x660] sm:$0xff]
    %v6837 = vld [vmem:[#allocation21 + $0x668] sm:$0xff]
    %v6838 = vld [vmem:[#allocation21 + $0x670] sm:$0xff]
    %v6839 = vld [vmem:[#allocation21 + $0x678] sm:$0xff]
    %v6840 = vld [vmem:[#allocation21 + $0x680] sm:$0xff]
    %v6841 = vld [vmem:[#allocation21 + $0x688] sm:$0xff]
    %v6842 = vld [vmem:[#allocation21 + $0x690] sm:$0xff]
    %v6843 = vld [vmem:[#allocation21 + $0x698] sm:$0xff]
    %v6844 = vld [vmem:[#allocation21 + $0x6a0] sm:$0xff]
    %v6845 = vld [vmem:[#allocation21 + $0x6a8] sm:$0xff]
    %v6846 = vld [vmem:[#allocation21 + $0x6b0] sm:$0xff]
    %v6847 = vld [vmem:[#allocation21 + $0x6b8] sm:$0xff]
    %v6848 = vld [vmem:[#allocation21 + $0x6c0] sm:$0xff]
    %v6849 = vld [vmem:[#allocation21 + $0x6c8] sm:$0xff]
    %v6850 = vld [vmem:[#allocation21 + $0x6d0] sm:$0xff]
    %v6851 = vld [vmem:[#allocation21 + $0x6d8] sm:$0xff]
    %v6852 = vld [vmem:[#allocation21 + $0x6e0] sm:$0xff]
    %v6853 = vld [vmem:[#allocation21 + $0x6e8] sm:$0xff]
    %v6854 = vld [vmem:[#allocation21 + $0x6f0] sm:$0xff]
    %v6855 = vld [vmem:[#allocation21 + $0x6f8] sm:$0xff]
    %v6856 = vld [vmem:[#allocation21 + $0x700] sm:$0xff]
    %v6857 = vld [vmem:[#allocation21 + $0x708] sm:$0xff]
    %v6858 = vld [vmem:[#allocation21 + $0x710] sm:$0xff]
    %v6859 = vld [vmem:[#allocation21 + $0x718] sm:$0xff]
    %v6860 = vld [vmem:[#allocation21 + $0x720] sm:$0xff]
    %v6861 = vld [vmem:[#allocation21 + $0x728] sm:$0xff]
    %v6862 = vld [vmem:[#allocation21 + $0x730] sm:$0xff]
    %v6863 = vld [vmem:[#allocation21 + $0x738] sm:$0xff]
    %v6864 = vld [vmem:[#allocation21 + $0x740] sm:$0xff]
    %v6865 = vld [vmem:[#allocation21 + $0x748] sm:$0xff]
    %v6866 = vld [vmem:[#allocation21 + $0x750] sm:$0xff]
    %v6867 = vld [vmem:[#allocation21 + $0x758] sm:$0xff]
    %v6868 = vld [vmem:[#allocation21 + $0x760] sm:$0xff]
    %v6869 = vld [vmem:[#allocation21 + $0x768] sm:$0xff]
    %v6870 = vld [vmem:[#allocation21 + $0x770] sm:$0xff]
    %v6871 = vld [vmem:[#allocation21 + $0x778] sm:$0xff]
    %v6872 = vld [vmem:[#allocation21 + $0x780] sm:$0xff]
    %v6873 = vld [vmem:[#allocation21 + $0x788] sm:$0xff]
    %v6874 = vld [vmem:[#allocation21 + $0x790] sm:$0xff]
    %v6875 = vld [vmem:[#allocation21 + $0x798] sm:$0xff]
    %v6876 = vld [vmem:[#allocation21 + $0x7a0] sm:$0xff]
    %v6877 = vld [vmem:[#allocation21 + $0x7a8] sm:$0xff]
    %v6878 = vld [vmem:[#allocation21 + $0x7b0] sm:$0xff]
    %v6879 = vld [vmem:[#allocation21 + $0x7b8] sm:$0xff]
    %v6880 = vld [vmem:[#allocation21 + $0x7c0] sm:$0xff]
    %v6881 = vld [vmem:[#allocation21 + $0x7c8] sm:$0xff]
    %v6882 = vld [vmem:[#allocation21 + $0x7d0] sm:$0xff]
    %v6883 = vld [vmem:[#allocation21 + $0x7d8] sm:$0xff]
    %v6884 = vld [vmem:[#allocation21 + $0x7e0] sm:$0xff]
    %v6885 = vld [vmem:[#allocation21 + $0x7e8] sm:$0xff]
    %v6886 = vld [vmem:[#allocation21 + $0x7f0] sm:$0xff]
    %v6887 = vld [vmem:[#allocation21 + $0x7f8] sm:$0xff]
    %v6888 = vld [vmem:[#allocation22] sm:$0xff]
    %v6890 = vlaneseq
    %v6891 = vshrl.u32 %v6890, 7
    %v6892 = vsub.s32 0, %v6891
    %v6893 = vrot.slane %v6888, %v6892
    %v6894 = vlaneseq
    %v6895 = vshrl.u32 %v6894, 7
    %v6896 = vsub.s32 1, %v6895
    %v6897 = vrot.slane %v6888, %v6896
    %v6898 = vlaneseq
    %v6899 = vshrl.u32 %v6898, 7
    %v6900 = vsub.s32 2, %v6899
    %v6901 = vrot.slane %v6888, %v6900
    %v6902 = vlaneseq
    %v6903 = vshrl.u32 %v6902, 7
    %v6904 = vsub.s32 3, %v6903
    %v6905 = vrot.slane %v6888, %v6904
    %v6906 = vlaneseq
    %v6907 = vshrl.u32 %v6906, 7
    %v6908 = vsub.s32 4, %v6907
    %v6909 = vrot.slane %v6888, %v6908
    %v6910 = vlaneseq
    %v6911 = vshrl.u32 %v6910, 7
    %v6912 = vsub.s32 5, %v6911
    %v6913 = vrot.slane %v6888, %v6912
    %v6914 = vlaneseq
    %v6915 = vshrl.u32 %v6914, 7
    %v6916 = vsub.s32 6, %v6915
    %v6917 = vrot.slane %v6888, %v6916
    %v6918 = vlaneseq
    %v6919 = vshrl.u32 %v6918, 7
    %v6920 = vsub.s32 7, %v6919
    %v6921 = vrot.slane %v6888, %v6920
    %v7186 = vunpack.c.l.b16 %v6632
    %v7187 = vunpack.c.h.b16 %v6632
    %v7188 = vunpack.c.l.b16 %v6633
    %v7189 = vunpack.c.h.b16 %v6633
    %v7190 = vunpack.c.l.b16 %v6634
    %v7191 = vunpack.c.h.b16 %v6634
    %v7192 = vunpack.c.l.b16 %v6635
    %v7193 = vunpack.c.h.b16 %v6635
    %v7194 = vunpack.c.l.b16 %v6636
    %v7195 = vunpack.c.h.b16 %v6636
    %v7196 = vunpack.c.l.b16 %v6637
    %v7197 = vunpack.c.h.b16 %v6637
    %v7198 = vunpack.c.l.b16 %v6638
    %v7199 = vunpack.c.h.b16 %v6638
    %v7200 = vunpack.c.l.b16 %v6639
    %v7201 = vunpack.c.h.b16 %v6639
    %v7202 = vunpack.c.l.b16 %v6640
    %v7203 = vunpack.c.h.b16 %v6640
    %v7204 = vunpack.c.l.b16 %v6641
    %v7205 = vunpack.c.h.b16 %v6641
    %v7206 = vunpack.c.l.b16 %v6642
    %v7207 = vunpack.c.h.b16 %v6642
    %v7208 = vunpack.c.l.b16 %v6643
    %v7209 = vunpack.c.h.b16 %v6643
    %v7210 = vunpack.c.l.b16 %v6644
    %v7211 = vunpack.c.h.b16 %v6644
    %v7212 = vunpack.c.l.b16 %v6645
    %v7213 = vunpack.c.h.b16 %v6645
    %v7214 = vunpack.c.l.b16 %v6646
    %v7215 = vunpack.c.h.b16 %v6646
    %v7216 = vunpack.c.l.b16 %v6647
    %v7217 = vunpack.c.h.b16 %v6647
    %v7218 = vunpack.c.l.b16 %v6648
    %v7219 = vunpack.c.h.b16 %v6648
    %v7220 = vunpack.c.l.b16 %v6649
    %v7221 = vunpack.c.h.b16 %v6649
    %v7222 = vunpack.c.l.b16 %v6650
    %v7223 = vunpack.c.h.b16 %v6650
    %v7224 = vunpack.c.l.b16 %v6651
    %v7225 = vunpack.c.h.b16 %v6651
    %v7226 = vunpack.c.l.b16 %v6652
    %v7227 = vunpack.c.h.b16 %v6652
    %v7228 = vunpack.c.l.b16 %v6653
    %v7229 = vunpack.c.h.b16 %v6653
    %v7230 = vunpack.c.l.b16 %v6654
    %v7231 = vunpack.c.h.b16 %v6654
    %v7232 = vunpack.c.l.b16 %v6655
    %v7233 = vunpack.c.h.b16 %v6655
    %v7234 = vunpack.c.l.b16 %v6656
    %v7235 = vunpack.c.h.b16 %v6656
    %v7236 = vunpack.c.l.b16 %v6657
    %v7237 = vunpack.c.h.b16 %v6657
    %v7238 = vunpack.c.l.b16 %v6658
    %v7239 = vunpack.c.h.b16 %v6658
    %v7240 = vunpack.c.l.b16 %v6659
    %v7241 = vunpack.c.h.b16 %v6659
    %v7242 = vunpack.c.l.b16 %v6660
    %v7243 = vunpack.c.h.b16 %v6660
    %v7244 = vunpack.c.l.b16 %v6661
    %v7245 = vunpack.c.h.b16 %v6661
    %v7246 = vunpack.c.l.b16 %v6662
    %v7247 = vunpack.c.h.b16 %v6662
    %v7248 = vunpack.c.l.b16 %v6663
    %v7249 = vunpack.c.h.b16 %v6663
    %v7250 = vunpack.c.l.b16 %v6664
    %v7251 = vunpack.c.h.b16 %v6664
    %v7252 = vunpack.c.l.b16 %v6665
    %v7253 = vunpack.c.h.b16 %v6665
    %v7254 = vunpack.c.l.b16 %v6666
    %v7255 = vunpack.c.h.b16 %v6666
    %v7256 = vunpack.c.l.b16 %v6667
    %v7257 = vunpack.c.h.b16 %v6667
    %v7258 = vunpack.c.l.b16 %v6668
    %v7259 = vunpack.c.h.b16 %v6668
    %v7260 = vunpack.c.l.b16 %v6669
    %v7261 = vunpack.c.h.b16 %v6669
    %v7262 = vunpack.c.l.b16 %v6670
    %v7263 = vunpack.c.h.b16 %v6670
    %v7264 = vunpack.c.l.b16 %v6671
    %v7265 = vunpack.c.h.b16 %v6671
    %v7266 = vunpack.c.l.b16 %v6672
    %v7267 = vunpack.c.h.b16 %v6672
    %v7268 = vunpack.c.l.b16 %v6673
    %v7269 = vunpack.c.h.b16 %v6673
    %v7270 = vunpack.c.l.b16 %v6674
    %v7271 = vunpack.c.h.b16 %v6674
    %v7272 = vunpack.c.l.b16 %v6675
    %v7273 = vunpack.c.h.b16 %v6675
    %v7274 = vunpack.c.l.b16 %v6676
    %v7275 = vunpack.c.h.b16 %v6676
    %v7276 = vunpack.c.l.b16 %v6677
    %v7277 = vunpack.c.h.b16 %v6677
    %v7278 = vunpack.c.l.b16 %v6678
    %v7279 = vunpack.c.h.b16 %v6678
    %v7280 = vunpack.c.l.b16 %v6679
    %v7281 = vunpack.c.h.b16 %v6679
    %v7282 = vunpack.c.l.b16 %v6680
    %v7283 = vunpack.c.h.b16 %v6680
    %v7284 = vunpack.c.l.b16 %v6681
    %v7285 = vunpack.c.h.b16 %v6681
    %v7286 = vunpack.c.l.b16 %v6682
    %v7287 = vunpack.c.h.b16 %v6682
    %v7288 = vunpack.c.l.b16 %v6683
    %v7289 = vunpack.c.h.b16 %v6683
    %v7290 = vunpack.c.l.b16 %v6684
    %v7291 = vunpack.c.h.b16 %v6684
    %v7292 = vunpack.c.l.b16 %v6685
    %v7293 = vunpack.c.h.b16 %v6685
    %v7294 = vunpack.c.l.b16 %v6686
    %v7295 = vunpack.c.h.b16 %v6686
    %v7296 = vunpack.c.l.b16 %v6687
    %v7297 = vunpack.c.h.b16 %v6687
    %v7298 = vunpack.c.l.b16 %v6688
    %v7299 = vunpack.c.h.b16 %v6688
    %v7300 = vunpack.c.l.b16 %v6689
    %v7301 = vunpack.c.h.b16 %v6689
    %v7302 = vunpack.c.l.b16 %v6690
    %v7303 = vunpack.c.h.b16 %v6690
    %v7304 = vunpack.c.l.b16 %v6691
    %v7305 = vunpack.c.h.b16 %v6691
    %v7306 = vunpack.c.l.b16 %v6692
    %v7307 = vunpack.c.h.b16 %v6692
    %v7308 = vunpack.c.l.b16 %v6693
    %v7309 = vunpack.c.h.b16 %v6693
    %v7310 = vunpack.c.l.b16 %v6694
    %v7311 = vunpack.c.h.b16 %v6694
    %v7312 = vunpack.c.l.b16 %v6695
    %v7313 = vunpack.c.h.b16 %v6695
    %v7314 = vunpack.c.l.b16 %v6696
    %v7315 = vunpack.c.h.b16 %v6696
    %v7316 = vunpack.c.l.b16 %v6697
    %v7317 = vunpack.c.h.b16 %v6697
    %v7318 = vunpack.c.l.b16 %v6698
    %v7319 = vunpack.c.h.b16 %v6698
    %v7320 = vunpack.c.l.b16 %v6699
    %v7321 = vunpack.c.h.b16 %v6699
    %v7322 = vunpack.c.l.b16 %v6700
    %v7323 = vunpack.c.h.b16 %v6700
    %v7324 = vunpack.c.l.b16 %v6701
    %v7325 = vunpack.c.h.b16 %v6701
    %v7326 = vunpack.c.l.b16 %v6702
    %v7327 = vunpack.c.h.b16 %v6702
    %v7328 = vunpack.c.l.b16 %v6703
    %v7329 = vunpack.c.h.b16 %v6703
    %v7330 = vunpack.c.l.b16 %v6704
    %v7331 = vunpack.c.h.b16 %v6704
    %v7332 = vunpack.c.l.b16 %v6705
    %v7333 = vunpack.c.h.b16 %v6705
    %v7334 = vunpack.c.l.b16 %v6706
    %v7335 = vunpack.c.h.b16 %v6706
    %v7336 = vunpack.c.l.b16 %v6707
    %v7337 = vunpack.c.h.b16 %v6707
    %v7338 = vunpack.c.l.b16 %v6708
    %v7339 = vunpack.c.h.b16 %v6708
    %v7340 = vunpack.c.l.b16 %v6709
    %v7341 = vunpack.c.h.b16 %v6709
    %v7342 = vunpack.c.l.b16 %v6710
    %v7343 = vunpack.c.h.b16 %v6710
    %v7344 = vunpack.c.l.b16 %v6711
    %v7345 = vunpack.c.h.b16 %v6711
    %v7346 = vunpack.c.l.b16 %v6712
    %v7347 = vunpack.c.h.b16 %v6712
    %v7348 = vunpack.c.l.b16 %v6713
    %v7349 = vunpack.c.h.b16 %v6713
    %v7350 = vunpack.c.l.b16 %v6714
    %v7351 = vunpack.c.h.b16 %v6714
    %v7352 = vunpack.c.l.b16 %v6715
    %v7353 = vunpack.c.h.b16 %v6715
    %v7354 = vunpack.c.l.b16 %v6716
    %v7355 = vunpack.c.h.b16 %v6716
    %v7356 = vunpack.c.l.b16 %v6717
    %v7357 = vunpack.c.h.b16 %v6717
    %v7358 = vunpack.c.l.b16 %v6718
    %v7359 = vunpack.c.h.b16 %v6718
    %v7360 = vunpack.c.l.b16 %v6719
    %v7361 = vunpack.c.h.b16 %v6719
    %v7362 = vunpack.c.l.b16 %v6720
    %v7363 = vunpack.c.h.b16 %v6720
    %v7364 = vunpack.c.l.b16 %v6721
    %v7365 = vunpack.c.h.b16 %v6721
    %v7366 = vunpack.c.l.b16 %v6722
    %v7367 = vunpack.c.h.b16 %v6722
    %v7368 = vunpack.c.l.b16 %v6723
    %v7369 = vunpack.c.h.b16 %v6723
    %v7370 = vunpack.c.l.b16 %v6724
    %v7371 = vunpack.c.h.b16 %v6724
    %v7372 = vunpack.c.l.b16 %v6725
    %v7373 = vunpack.c.h.b16 %v6725
    %v7374 = vunpack.c.l.b16 %v6726
    %v7375 = vunpack.c.h.b16 %v6726
    %v7376 = vunpack.c.l.b16 %v6727
    %v7377 = vunpack.c.h.b16 %v6727
    %v7378 = vunpack.c.l.b16 %v6728
    %v7379 = vunpack.c.h.b16 %v6728
    %v7380 = vunpack.c.l.b16 %v6729
    %v7381 = vunpack.c.h.b16 %v6729
    %v7382 = vunpack.c.l.b16 %v6730
    %v7383 = vunpack.c.h.b16 %v6730
    %v7384 = vunpack.c.l.b16 %v6731
    %v7385 = vunpack.c.h.b16 %v6731
    %v7386 = vunpack.c.l.b16 %v6732
    %v7387 = vunpack.c.h.b16 %v6732
    %v7388 = vunpack.c.l.b16 %v6733
    %v7389 = vunpack.c.h.b16 %v6733
    %v7390 = vunpack.c.l.b16 %v6734
    %v7391 = vunpack.c.h.b16 %v6734
    %v7392 = vunpack.c.l.b16 %v6735
    %v7393 = vunpack.c.h.b16 %v6735
    %v7394 = vunpack.c.l.b16 %v6736
    %v7395 = vunpack.c.h.b16 %v6736
    %v7396 = vunpack.c.l.b16 %v6737
    %v7397 = vunpack.c.h.b16 %v6737
    %v7398 = vunpack.c.l.b16 %v6738
    %v7399 = vunpack.c.h.b16 %v6738
    %v7400 = vunpack.c.l.b16 %v6739
    %v7401 = vunpack.c.h.b16 %v6739
    %v7402 = vunpack.c.l.b16 %v6740
    %v7403 = vunpack.c.h.b16 %v6740
    %v7404 = vunpack.c.l.b16 %v6741
    %v7405 = vunpack.c.h.b16 %v6741
    %v7406 = vunpack.c.l.b16 %v6742
    %v7407 = vunpack.c.h.b16 %v6742
    %v7408 = vunpack.c.l.b16 %v6743
    %v7409 = vunpack.c.h.b16 %v6743
    %v7410 = vunpack.c.l.b16 %v6744
    %v7411 = vunpack.c.h.b16 %v6744
    %v7412 = vunpack.c.l.b16 %v6745
    %v7413 = vunpack.c.h.b16 %v6745
    %v7414 = vunpack.c.l.b16 %v6746
    %v7415 = vunpack.c.h.b16 %v6746
    %v7416 = vunpack.c.l.b16 %v6747
    %v7417 = vunpack.c.h.b16 %v6747
    %v7418 = vunpack.c.l.b16 %v6748
    %v7419 = vunpack.c.h.b16 %v6748
    %v7420 = vunpack.c.l.b16 %v6749
    %v7421 = vunpack.c.h.b16 %v6749
    %v7422 = vunpack.c.l.b16 %v6750
    %v7423 = vunpack.c.h.b16 %v6750
    %v7424 = vunpack.c.l.b16 %v6751
    %v7425 = vunpack.c.h.b16 %v6751
    %v7426 = vunpack.c.l.b16 %v6752
    %v7427 = vunpack.c.h.b16 %v6752
    %v7428 = vunpack.c.l.b16 %v6753
    %v7429 = vunpack.c.h.b16 %v6753
    %v7430 = vunpack.c.l.b16 %v6754
    %v7431 = vunpack.c.h.b16 %v6754
    %v7432 = vunpack.c.l.b16 %v6755
    %v7433 = vunpack.c.h.b16 %v6755
    %v7434 = vunpack.c.l.b16 %v6756
    %v7435 = vunpack.c.h.b16 %v6756
    %v7436 = vunpack.c.l.b16 %v6757
    %v7437 = vunpack.c.h.b16 %v6757
    %v7438 = vunpack.c.l.b16 %v6758
    %v7439 = vunpack.c.h.b16 %v6758
    %v7440 = vunpack.c.l.b16 %v6759
    %v7441 = vunpack.c.h.b16 %v6759
    %v7442 = vunpack.c.l.b16 %v6760
    %v7443 = vunpack.c.h.b16 %v6760
    %v7444 = vunpack.c.l.b16 %v6761
    %v7445 = vunpack.c.h.b16 %v6761
    %v7446 = vunpack.c.l.b16 %v6762
    %v7447 = vunpack.c.h.b16 %v6762
    %v7448 = vunpack.c.l.b16 %v6763
    %v7449 = vunpack.c.h.b16 %v6763
    %v7450 = vunpack.c.l.b16 %v6764
    %v7451 = vunpack.c.h.b16 %v6764
    %v7452 = vunpack.c.l.b16 %v6765
    %v7453 = vunpack.c.h.b16 %v6765
    %v7454 = vunpack.c.l.b16 %v6766
    %v7455 = vunpack.c.h.b16 %v6766
    %v7456 = vunpack.c.l.b16 %v6767
    %v7457 = vunpack.c.h.b16 %v6767
    %v7458 = vunpack.c.l.b16 %v6768
    %v7459 = vunpack.c.h.b16 %v6768
    %v7460 = vunpack.c.l.b16 %v6769
    %v7461 = vunpack.c.h.b16 %v6769
    %v7462 = vunpack.c.l.b16 %v6770
    %v7463 = vunpack.c.h.b16 %v6770
    %v7464 = vunpack.c.l.b16 %v6771
    %v7465 = vunpack.c.h.b16 %v6771
    %v7466 = vunpack.c.l.b16 %v6772
    %v7467 = vunpack.c.h.b16 %v6772
    %v7468 = vunpack.c.l.b16 %v6773
    %v7469 = vunpack.c.h.b16 %v6773
    %v7470 = vunpack.c.l.b16 %v6774
    %v7471 = vunpack.c.h.b16 %v6774
    %v7472 = vunpack.c.l.b16 %v6775
    %v7473 = vunpack.c.h.b16 %v6775
    %v7474 = vunpack.c.l.b16 %v6776
    %v7475 = vunpack.c.h.b16 %v6776
    %v7476 = vunpack.c.l.b16 %v6777
    %v7477 = vunpack.c.h.b16 %v6777
    %v7478 = vunpack.c.l.b16 %v6778
    %v7479 = vunpack.c.h.b16 %v6778
    %v7480 = vunpack.c.l.b16 %v6779
    %v7481 = vunpack.c.h.b16 %v6779
    %v7482 = vunpack.c.l.b16 %v6780
    %v7483 = vunpack.c.h.b16 %v6780
    %v7484 = vunpack.c.l.b16 %v6781
    %v7485 = vunpack.c.h.b16 %v6781
    %v7486 = vunpack.c.l.b16 %v6782
    %v7487 = vunpack.c.h.b16 %v6782
    %v7488 = vunpack.c.l.b16 %v6783
    %v7489 = vunpack.c.h.b16 %v6783
    %v7490 = vunpack.c.l.b16 %v6784
    %v7491 = vunpack.c.h.b16 %v6784
    %v7492 = vunpack.c.l.b16 %v6785
    %v7493 = vunpack.c.h.b16 %v6785
    %v7494 = vunpack.c.l.b16 %v6786
    %v7495 = vunpack.c.h.b16 %v6786
    %v7496 = vunpack.c.l.b16 %v6787
    %v7497 = vunpack.c.h.b16 %v6787
    %v7498 = vunpack.c.l.b16 %v6788
    %v7499 = vunpack.c.h.b16 %v6788
    %v7500 = vunpack.c.l.b16 %v6789
    %v7501 = vunpack.c.h.b16 %v6789
    %v7502 = vunpack.c.l.b16 %v6790
    %v7503 = vunpack.c.h.b16 %v6790
    %v7504 = vunpack.c.l.b16 %v6791
    %v7505 = vunpack.c.h.b16 %v6791
    %v7506 = vunpack.c.l.b16 %v6792
    %v7507 = vunpack.c.h.b16 %v6792
    %v7508 = vunpack.c.l.b16 %v6793
    %v7509 = vunpack.c.h.b16 %v6793
    %v7510 = vunpack.c.l.b16 %v6794
    %v7511 = vunpack.c.h.b16 %v6794
    %v7512 = vunpack.c.l.b16 %v6795
    %v7513 = vunpack.c.h.b16 %v6795
    %v7514 = vunpack.c.l.b16 %v6796
    %v7515 = vunpack.c.h.b16 %v6796
    %v7516 = vunpack.c.l.b16 %v6797
    %v7517 = vunpack.c.h.b16 %v6797
    %v7518 = vunpack.c.l.b16 %v6798
    %v7519 = vunpack.c.h.b16 %v6798
    %v7520 = vunpack.c.l.b16 %v6799
    %v7521 = vunpack.c.h.b16 %v6799
    %v7522 = vunpack.c.l.b16 %v6800
    %v7523 = vunpack.c.h.b16 %v6800
    %v7524 = vunpack.c.l.b16 %v6801
    %v7525 = vunpack.c.h.b16 %v6801
    %v7526 = vunpack.c.l.b16 %v6802
    %v7527 = vunpack.c.h.b16 %v6802
    %v7528 = vunpack.c.l.b16 %v6803
    %v7529 = vunpack.c.h.b16 %v6803
    %v7530 = vunpack.c.l.b16 %v6804
    %v7531 = vunpack.c.h.b16 %v6804
    %v7532 = vunpack.c.l.b16 %v6805
    %v7533 = vunpack.c.h.b16 %v6805
    %v7534 = vunpack.c.l.b16 %v6806
    %v7535 = vunpack.c.h.b16 %v6806
    %v7536 = vunpack.c.l.b16 %v6807
    %v7537 = vunpack.c.h.b16 %v6807
    %v7538 = vunpack.c.l.b16 %v6808
    %v7539 = vunpack.c.h.b16 %v6808
    %v7540 = vunpack.c.l.b16 %v6809
    %v7541 = vunpack.c.h.b16 %v6809
    %v7542 = vunpack.c.l.b16 %v6810
    %v7543 = vunpack.c.h.b16 %v6810
    %v7544 = vunpack.c.l.b16 %v6811
    %v7545 = vunpack.c.h.b16 %v6811
    %v7546 = vunpack.c.l.b16 %v6812
    %v7547 = vunpack.c.h.b16 %v6812
    %v7548 = vunpack.c.l.b16 %v6813
    %v7549 = vunpack.c.h.b16 %v6813
    %v7550 = vunpack.c.l.b16 %v6814
    %v7551 = vunpack.c.h.b16 %v6814
    %v7552 = vunpack.c.l.b16 %v6815
    %v7553 = vunpack.c.h.b16 %v6815
    %v7554 = vunpack.c.l.b16 %v6816
    %v7555 = vunpack.c.h.b16 %v6816
    %v7556 = vunpack.c.l.b16 %v6817
    %v7557 = vunpack.c.h.b16 %v6817
    %v7558 = vunpack.c.l.b16 %v6818
    %v7559 = vunpack.c.h.b16 %v6818
    %v7560 = vunpack.c.l.b16 %v6819
    %v7561 = vunpack.c.h.b16 %v6819
    %v7562 = vunpack.c.l.b16 %v6820
    %v7563 = vunpack.c.h.b16 %v6820
    %v7564 = vunpack.c.l.b16 %v6821
    %v7565 = vunpack.c.h.b16 %v6821
    %v7566 = vunpack.c.l.b16 %v6822
    %v7567 = vunpack.c.h.b16 %v6822
    %v7568 = vunpack.c.l.b16 %v6823
    %v7569 = vunpack.c.h.b16 %v6823
    %v7570 = vunpack.c.l.b16 %v6824
    %v7571 = vunpack.c.h.b16 %v6824
    %v7572 = vunpack.c.l.b16 %v6825
    %v7573 = vunpack.c.h.b16 %v6825
    %v7574 = vunpack.c.l.b16 %v6826
    %v7575 = vunpack.c.h.b16 %v6826
    %v7576 = vunpack.c.l.b16 %v6827
    %v7577 = vunpack.c.h.b16 %v6827
    %v7578 = vunpack.c.l.b16 %v6828
    %v7579 = vunpack.c.h.b16 %v6828
    %v7580 = vunpack.c.l.b16 %v6829
    %v7581 = vunpack.c.h.b16 %v6829
    %v7582 = vunpack.c.l.b16 %v6830
    %v7583 = vunpack.c.h.b16 %v6830
    %v7584 = vunpack.c.l.b16 %v6831
    %v7585 = vunpack.c.h.b16 %v6831
    %v7586 = vunpack.c.l.b16 %v6832
    %v7587 = vunpack.c.h.b16 %v6832
    %v7588 = vunpack.c.l.b16 %v6833
    %v7589 = vunpack.c.h.b16 %v6833
    %v7590 = vunpack.c.l.b16 %v6834
    %v7591 = vunpack.c.h.b16 %v6834
    %v7592 = vunpack.c.l.b16 %v6835
    %v7593 = vunpack.c.h.b16 %v6835
    %v7594 = vunpack.c.l.b16 %v6836
    %v7595 = vunpack.c.h.b16 %v6836
    %v7596 = vunpack.c.l.b16 %v6837
    %v7597 = vunpack.c.h.b16 %v6837
    %v7598 = vunpack.c.l.b16 %v6838
    %v7599 = vunpack.c.h.b16 %v6838
    %v7600 = vunpack.c.l.b16 %v6839
    %v7601 = vunpack.c.h.b16 %v6839
    %v7602 = vunpack.c.l.b16 %v6840
    %v7603 = vunpack.c.h.b16 %v6840
    %v7604 = vunpack.c.l.b16 %v6841
    %v7605 = vunpack.c.h.b16 %v6841
    %v7606 = vunpack.c.l.b16 %v6842
    %v7607 = vunpack.c.h.b16 %v6842
    %v7608 = vunpack.c.l.b16 %v6843
    %v7609 = vunpack.c.h.b16 %v6843
    %v7610 = vunpack.c.l.b16 %v6844
    %v7611 = vunpack.c.h.b16 %v6844
    %v7612 = vunpack.c.l.b16 %v6845
    %v7613 = vunpack.c.h.b16 %v6845
    %v7614 = vunpack.c.l.b16 %v6846
    %v7615 = vunpack.c.h.b16 %v6846
    %v7616 = vunpack.c.l.b16 %v6847
    %v7617 = vunpack.c.h.b16 %v6847
    %v7618 = vunpack.c.l.b16 %v6848
    %v7619 = vunpack.c.h.b16 %v6848
    %v7620 = vunpack.c.l.b16 %v6849
    %v7621 = vunpack.c.h.b16 %v6849
    %v7622 = vunpack.c.l.b16 %v6850
    %v7623 = vunpack.c.h.b16 %v6850
    %v7624 = vunpack.c.l.b16 %v6851
    %v7625 = vunpack.c.h.b16 %v6851
    %v7626 = vunpack.c.l.b16 %v6852
    %v7627 = vunpack.c.h.b16 %v6852
    %v7628 = vunpack.c.l.b16 %v6853
    %v7629 = vunpack.c.h.b16 %v6853
    %v7630 = vunpack.c.l.b16 %v6854
    %v7631 = vunpack.c.h.b16 %v6854
    %v7632 = vunpack.c.l.b16 %v6855
    %v7633 = vunpack.c.h.b16 %v6855
    %v7634 = vunpack.c.l.b16 %v6856
    %v7635 = vunpack.c.h.b16 %v6856
    %v7636 = vunpack.c.l.b16 %v6857
    %v7637 = vunpack.c.h.b16 %v6857
    %v7638 = vunpack.c.l.b16 %v6858
    %v7639 = vunpack.c.h.b16 %v6858
    %v7640 = vunpack.c.l.b16 %v6859
    %v7641 = vunpack.c.h.b16 %v6859
    %v7642 = vunpack.c.l.b16 %v6860
    %v7643 = vunpack.c.h.b16 %v6860
    %v7644 = vunpack.c.l.b16 %v6861
    %v7645 = vunpack.c.h.b16 %v6861
    %v7646 = vunpack.c.l.b16 %v6862
    %v7647 = vunpack.c.h.b16 %v6862
    %v7648 = vunpack.c.l.b16 %v6863
    %v7649 = vunpack.c.h.b16 %v6863
    %v7650 = vunpack.c.l.b16 %v6864
    %v7651 = vunpack.c.h.b16 %v6864
    %v7652 = vunpack.c.l.b16 %v6865
    %v7653 = vunpack.c.h.b16 %v6865
    %v7654 = vunpack.c.l.b16 %v6866
    %v7655 = vunpack.c.h.b16 %v6866
    %v7656 = vunpack.c.l.b16 %v6867
    %v7657 = vunpack.c.h.b16 %v6867
    %v7658 = vunpack.c.l.b16 %v6868
    %v7659 = vunpack.c.h.b16 %v6868
    %v7660 = vunpack.c.l.b16 %v6869
    %v7661 = vunpack.c.h.b16 %v6869
    %v7662 = vunpack.c.l.b16 %v6870
    %v7663 = vunpack.c.h.b16 %v6870
    %v7664 = vunpack.c.l.b16 %v6871
    %v7665 = vunpack.c.h.b16 %v6871
    %v7666 = vunpack.c.l.b16 %v6872
    %v7667 = vunpack.c.h.b16 %v6872
    %v7668 = vunpack.c.l.b16 %v6873
    %v7669 = vunpack.c.h.b16 %v6873
    %v7670 = vunpack.c.l.b16 %v6874
    %v7671 = vunpack.c.h.b16 %v6874
    %v7672 = vunpack.c.l.b16 %v6875
    %v7673 = vunpack.c.h.b16 %v6875
    %v7674 = vunpack.c.l.b16 %v6876
    %v7675 = vunpack.c.h.b16 %v6876
    %v7676 = vunpack.c.l.b16 %v6877
    %v7677 = vunpack.c.h.b16 %v6877
    %v7678 = vunpack.c.l.b16 %v6878
    %v7679 = vunpack.c.h.b16 %v6878
    %v7680 = vunpack.c.l.b16 %v6879
    %v7681 = vunpack.c.h.b16 %v6879
    %v7682 = vunpack.c.l.b16 %v6880
    %v7683 = vunpack.c.h.b16 %v6880
    %v7684 = vunpack.c.l.b16 %v6881
    %v7685 = vunpack.c.h.b16 %v6881
    %v7686 = vunpack.c.l.b16 %v6882
    %v7687 = vunpack.c.h.b16 %v6882
    %v7688 = vunpack.c.l.b16 %v6883
    %v7689 = vunpack.c.h.b16 %v6883
    %v7690 = vunpack.c.l.b16 %v6884
    %v7691 = vunpack.c.h.b16 %v6884
    %v7692 = vunpack.c.l.b16 %v6885
    %v7693 = vunpack.c.h.b16 %v6885
    %v7694 = vunpack.c.l.b16 %v6886
    %v7695 = vunpack.c.h.b16 %v6886
    %v7696 = vunpack.c.l.b16 %v6887
    %v7697 = vunpack.c.h.b16 %v6887
    %v7698 = vpack.c.b16 %v7194, %v7186
    %v7699 = vpack.c.b16 %v7195, %v7187
    %v7700 = vpack.c.b16 %v7196, %v7188
    %v7701 = vpack.c.b16 %v7197, %v7189
    %v7702 = vpack.c.b16 %v7198, %v7190
    %v7703 = vpack.c.b16 %v7199, %v7191
    %v7704 = vpack.c.b16 %v7200, %v7192
    %v7705 = vpack.c.b16 %v7201, %v7193
    %v7706 = vpack.c.b16 %v7210, %v7202
    %v7707 = vpack.c.b16 %v7211, %v7203
    %v7708 = vpack.c.b16 %v7212, %v7204
    %v7709 = vpack.c.b16 %v7213, %v7205
    %v7710 = vpack.c.b16 %v7214, %v7206
    %v7711 = vpack.c.b16 %v7215, %v7207
    %v7712 = vpack.c.b16 %v7216, %v7208
    %v7713 = vpack.c.b16 %v7217, %v7209
    %v7714 = vpack.c.b16 %v7226, %v7218
    %v7715 = vpack.c.b16 %v7227, %v7219
    %v7716 = vpack.c.b16 %v7228, %v7220
    %v7717 = vpack.c.b16 %v7229, %v7221
    %v7718 = vpack.c.b16 %v7230, %v7222
    %v7719 = vpack.c.b16 %v7231, %v7223
    %v7720 = vpack.c.b16 %v7232, %v7224
    %v7721 = vpack.c.b16 %v7233, %v7225
    %v7722 = vpack.c.b16 %v7242, %v7234
    %v7723 = vpack.c.b16 %v7243, %v7235
    %v7724 = vpack.c.b16 %v7244, %v7236
    %v7725 = vpack.c.b16 %v7245, %v7237
    %v7726 = vpack.c.b16 %v7246, %v7238
    %v7727 = vpack.c.b16 %v7247, %v7239
    %v7728 = vpack.c.b16 %v7248, %v7240
    %v7729 = vpack.c.b16 %v7249, %v7241
    %v7730 = vpack.c.b16 %v7258, %v7250
    %v7731 = vpack.c.b16 %v7259, %v7251
    %v7732 = vpack.c.b16 %v7260, %v7252
    %v7733 = vpack.c.b16 %v7261, %v7253
    %v7734 = vpack.c.b16 %v7262, %v7254
    %v7735 = vpack.c.b16 %v7263, %v7255
    %v7736 = vpack.c.b16 %v7264, %v7256
    %v7737 = vpack.c.b16 %v7265, %v7257
    %v7738 = vpack.c.b16 %v7274, %v7266
    %v7739 = vpack.c.b16 %v7275, %v7267
    %v7740 = vpack.c.b16 %v7276, %v7268
    %v7741 = vpack.c.b16 %v7277, %v7269
    %v7742 = vpack.c.b16 %v7278, %v7270
    %v7743 = vpack.c.b16 %v7279, %v7271
    %v7744 = vpack.c.b16 %v7280, %v7272
    %v7745 = vpack.c.b16 %v7281, %v7273
    %v7746 = vpack.c.b16 %v7290, %v7282
    %v7747 = vpack.c.b16 %v7291, %v7283
    %v7748 = vpack.c.b16 %v7292, %v7284
    %v7749 = vpack.c.b16 %v7293, %v7285
    %v7750 = vpack.c.b16 %v7294, %v7286
    %v7751 = vpack.c.b16 %v7295, %v7287
    %v7752 = vpack.c.b16 %v7296, %v7288
    %v7753 = vpack.c.b16 %v7297, %v7289
    %v7754 = vpack.c.b16 %v7306, %v7298
    %v7755 = vpack.c.b16 %v7307, %v7299
    %v7756 = vpack.c.b16 %v7308, %v7300
    %v7757 = vpack.c.b16 %v7309, %v7301
    %v7758 = vpack.c.b16 %v7310, %v7302
    %v7759 = vpack.c.b16 %v7311, %v7303
    %v7760 = vpack.c.b16 %v7312, %v7304
    %v7761 = vpack.c.b16 %v7313, %v7305
    %v7762 = vpack.c.b16 %v7322, %v7314
    %v7763 = vpack.c.b16 %v7323, %v7315
    %v7764 = vpack.c.b16 %v7324, %v7316
    %v7765 = vpack.c.b16 %v7325, %v7317
    %v7766 = vpack.c.b16 %v7326, %v7318
    %v7767 = vpack.c.b16 %v7327, %v7319
    %v7768 = vpack.c.b16 %v7328, %v7320
    %v7769 = vpack.c.b16 %v7329, %v7321
    %v7770 = vpack.c.b16 %v7338, %v7330
    %v7771 = vpack.c.b16 %v7339, %v7331
    %v7772 = vpack.c.b16 %v7340, %v7332
    %v7773 = vpack.c.b16 %v7341, %v7333
    %v7774 = vpack.c.b16 %v7342, %v7334
    %v7775 = vpack.c.b16 %v7343, %v7335
    %v7776 = vpack.c.b16 %v7344, %v7336
    %v7777 = vpack.c.b16 %v7345, %v7337
    %v7778 = vpack.c.b16 %v7354, %v7346
    %v7779 = vpack.c.b16 %v7355, %v7347
    %v7780 = vpack.c.b16 %v7356, %v7348
    %v7781 = vpack.c.b16 %v7357, %v7349
    %v7782 = vpack.c.b16 %v7358, %v7350
    %v7783 = vpack.c.b16 %v7359, %v7351
    %v7784 = vpack.c.b16 %v7360, %v7352
    %v7785 = vpack.c.b16 %v7361, %v7353
    %v7786 = vpack.c.b16 %v7370, %v7362
    %v7787 = vpack.c.b16 %v7371, %v7363
    %v7788 = vpack.c.b16 %v7372, %v7364
    %v7789 = vpack.c.b16 %v7373, %v7365
    %v7790 = vpack.c.b16 %v7374, %v7366
    %v7791 = vpack.c.b16 %v7375, %v7367
    %v7792 = vpack.c.b16 %v7376, %v7368
    %v7793 = vpack.c.b16 %v7377, %v7369
    %v7794 = vpack.c.b16 %v7386, %v7378
    %v7795 = vpack.c.b16 %v7387, %v7379
    %v7796 = vpack.c.b16 %v7388, %v7380
    %v7797 = vpack.c.b16 %v7389, %v7381
    %v7798 = vpack.c.b16 %v7390, %v7382
    %v7799 = vpack.c.b16 %v7391, %v7383
    %v7800 = vpack.c.b16 %v7392, %v7384
    %v7801 = vpack.c.b16 %v7393, %v7385
    %v7802 = vpack.c.b16 %v7402, %v7394
    %v7803 = vpack.c.b16 %v7403, %v7395
    %v7804 = vpack.c.b16 %v7404, %v7396
    %v7805 = vpack.c.b16 %v7405, %v7397
    %v7806 = vpack.c.b16 %v7406, %v7398
    %v7807 = vpack.c.b16 %v7407, %v7399
    %v7808 = vpack.c.b16 %v7408, %v7400
    %v7809 = vpack.c.b16 %v7409, %v7401
    %v7810 = vpack.c.b16 %v7418, %v7410
    %v7811 = vpack.c.b16 %v7419, %v7411
    %v7812 = vpack.c.b16 %v7420, %v7412
    %v7813 = vpack.c.b16 %v7421, %v7413
    %v7814 = vpack.c.b16 %v7422, %v7414
    %v7815 = vpack.c.b16 %v7423, %v7415
    %v7816 = vpack.c.b16 %v7424, %v7416
    %v7817 = vpack.c.b16 %v7425, %v7417
    %v7818 = vpack.c.b16 %v7434, %v7426
    %v7819 = vpack.c.b16 %v7435, %v7427
    %v7820 = vpack.c.b16 %v7436, %v7428
    %v7821 = vpack.c.b16 %v7437, %v7429
    %v7822 = vpack.c.b16 %v7438, %v7430
    %v7823 = vpack.c.b16 %v7439, %v7431
    %v7824 = vpack.c.b16 %v7440, %v7432
    %v7825 = vpack.c.b16 %v7441, %v7433
    %v7826 = vpack.c.b16 %v7450, %v7442
    %v7827 = vpack.c.b16 %v7451, %v7443
    %v7828 = vpack.c.b16 %v7452, %v7444
    %v7829 = vpack.c.b16 %v7453, %v7445
    %v7830 = vpack.c.b16 %v7454, %v7446
    %v7831 = vpack.c.b16 %v7455, %v7447
    %v7832 = vpack.c.b16 %v7456, %v7448
    %v7833 = vpack.c.b16 %v7457, %v7449
    %v7834 = vpack.c.b16 %v7466, %v7458
    %v7835 = vpack.c.b16 %v7467, %v7459
    %v7836 = vpack.c.b16 %v7468, %v7460
    %v7837 = vpack.c.b16 %v7469, %v7461
    %v7838 = vpack.c.b16 %v7470, %v7462
    %v7839 = vpack.c.b16 %v7471, %v7463
    %v7840 = vpack.c.b16 %v7472, %v7464
    %v7841 = vpack.c.b16 %v7473, %v7465
    %v7842 = vpack.c.b16 %v7482, %v7474
    %v7843 = vpack.c.b16 %v7483, %v7475
    %v7844 = vpack.c.b16 %v7484, %v7476
    %v7845 = vpack.c.b16 %v7485, %v7477
    %v7846 = vpack.c.b16 %v7486, %v7478
    %v7847 = vpack.c.b16 %v7487, %v7479
    %v7848 = vpack.c.b16 %v7488, %v7480
    %v7849 = vpack.c.b16 %v7489, %v7481
    %v7850 = vpack.c.b16 %v7498, %v7490
    %v7851 = vpack.c.b16 %v7499, %v7491
    %v7852 = vpack.c.b16 %v7500, %v7492
    %v7853 = vpack.c.b16 %v7501, %v7493
    %v7854 = vpack.c.b16 %v7502, %v7494
    %v7855 = vpack.c.b16 %v7503, %v7495
    %v7856 = vpack.c.b16 %v7504, %v7496
    %v7857 = vpack.c.b16 %v7505, %v7497
    %v7858 = vpack.c.b16 %v7514, %v7506
    %v7859 = vpack.c.b16 %v7515, %v7507
    %v7860 = vpack.c.b16 %v7516, %v7508
    %v7861 = vpack.c.b16 %v7517, %v7509
    %v7862 = vpack.c.b16 %v7518, %v7510
    %v7863 = vpack.c.b16 %v7519, %v7511
    %v7864 = vpack.c.b16 %v7520, %v7512
    %v7865 = vpack.c.b16 %v7521, %v7513
    %v7866 = vpack.c.b16 %v7530, %v7522
    %v7867 = vpack.c.b16 %v7531, %v7523
    %v7868 = vpack.c.b16 %v7532, %v7524
    %v7869 = vpack.c.b16 %v7533, %v7525
    %v7870 = vpack.c.b16 %v7534, %v7526
    %v7871 = vpack.c.b16 %v7535, %v7527
    %v7872 = vpack.c.b16 %v7536, %v7528
    %v7873 = vpack.c.b16 %v7537, %v7529
    %v7874 = vpack.c.b16 %v7546, %v7538
    %v7875 = vpack.c.b16 %v7547, %v7539
    %v7876 = vpack.c.b16 %v7548, %v7540
    %v7877 = vpack.c.b16 %v7549, %v7541
    %v7878 = vpack.c.b16 %v7550, %v7542
    %v7879 = vpack.c.b16 %v7551, %v7543
    %v7880 = vpack.c.b16 %v7552, %v7544
    %v7881 = vpack.c.b16 %v7553, %v7545
    %v7882 = vpack.c.b16 %v7562, %v7554
    %v7883 = vpack.c.b16 %v7563, %v7555
    %v7884 = vpack.c.b16 %v7564, %v7556
    %v7885 = vpack.c.b16 %v7565, %v7557
    %v7886 = vpack.c.b16 %v7566, %v7558
    %v7887 = vpack.c.b16 %v7567, %v7559
    %v7888 = vpack.c.b16 %v7568, %v7560
    %v7889 = vpack.c.b16 %v7569, %v7561
    %v7890 = vpack.c.b16 %v7578, %v7570
    %v7891 = vpack.c.b16 %v7579, %v7571
    %v7892 = vpack.c.b16 %v7580, %v7572
    %v7893 = vpack.c.b16 %v7581, %v7573
    %v7894 = vpack.c.b16 %v7582, %v7574
    %v7895 = vpack.c.b16 %v7583, %v7575
    %v7896 = vpack.c.b16 %v7584, %v7576
    %v7897 = vpack.c.b16 %v7585, %v7577
    %v7898 = vpack.c.b16 %v7594, %v7586
    %v7899 = vpack.c.b16 %v7595, %v7587
    %v7900 = vpack.c.b16 %v7596, %v7588
    %v7901 = vpack.c.b16 %v7597, %v7589
    %v7902 = vpack.c.b16 %v7598, %v7590
    %v7903 = vpack.c.b16 %v7599, %v7591
    %v7904 = vpack.c.b16 %v7600, %v7592
    %v7905 = vpack.c.b16 %v7601, %v7593
    %v7906 = vpack.c.b16 %v7610, %v7602
    %v7907 = vpack.c.b16 %v7611, %v7603
    %v7908 = vpack.c.b16 %v7612, %v7604
    %v7909 = vpack.c.b16 %v7613, %v7605
    %v7910 = vpack.c.b16 %v7614, %v7606
    %v7911 = vpack.c.b16 %v7615, %v7607
    %v7912 = vpack.c.b16 %v7616, %v7608
    %v7913 = vpack.c.b16 %v7617, %v7609
    %v7914 = vpack.c.b16 %v7626, %v7618
    %v7915 = vpack.c.b16 %v7627, %v7619
    %v7916 = vpack.c.b16 %v7628, %v7620
    %v7917 = vpack.c.b16 %v7629, %v7621
    %v7918 = vpack.c.b16 %v7630, %v7622
    %v7919 = vpack.c.b16 %v7631, %v7623
    %v7920 = vpack.c.b16 %v7632, %v7624
    %v7921 = vpack.c.b16 %v7633, %v7625
    %v7922 = vpack.c.b16 %v7642, %v7634
    %v7923 = vpack.c.b16 %v7643, %v7635
    %v7924 = vpack.c.b16 %v7644, %v7636
    %v7925 = vpack.c.b16 %v7645, %v7637
    %v7926 = vpack.c.b16 %v7646, %v7638
    %v7927 = vpack.c.b16 %v7647, %v7639
    %v7928 = vpack.c.b16 %v7648, %v7640
    %v7929 = vpack.c.b16 %v7649, %v7641
    %v7930 = vpack.c.b16 %v7658, %v7650
    %v7931 = vpack.c.b16 %v7659, %v7651
    %v7932 = vpack.c.b16 %v7660, %v7652
    %v7933 = vpack.c.b16 %v7661, %v7653
    %v7934 = vpack.c.b16 %v7662, %v7654
    %v7935 = vpack.c.b16 %v7663, %v7655
    %v7936 = vpack.c.b16 %v7664, %v7656
    %v7937 = vpack.c.b16 %v7665, %v7657
    %v7938 = vpack.c.b16 %v7674, %v7666
    %v7939 = vpack.c.b16 %v7675, %v7667
    %v7940 = vpack.c.b16 %v7676, %v7668
    %v7941 = vpack.c.b16 %v7677, %v7669
    %v7942 = vpack.c.b16 %v7678, %v7670
    %v7943 = vpack.c.b16 %v7679, %v7671
    %v7944 = vpack.c.b16 %v7680, %v7672
    %v7945 = vpack.c.b16 %v7681, %v7673
    %v7946 = vpack.c.b16 %v7690, %v7682
    %v7947 = vpack.c.b16 %v7691, %v7683
    %v7948 = vpack.c.b16 %v7692, %v7684
    %v7949 = vpack.c.b16 %v7693, %v7685
    %v7950 = vpack.c.b16 %v7694, %v7686
    %v7951 = vpack.c.b16 %v7695, %v7687
    %v7952 = vpack.c.b16 %v7696, %v7688
    %v7953 = vpack.c.b16 %v7697, %v7689
    %8210 = vmatprep.subr.bf16.mxu0 %v7755
    %8211 = vmatpush1.bf16.msra.mxu0 %v7754
    %8212 = vmatprep.subr.bf16.mxu0 %v7747
    %8213 = vmatpush1.bf16.msra.mxu0 %v7746
    %8214 = vmatprep.subr.bf16.mxu0 %v7739
    %8215 = vmatpush1.bf16.msra.mxu0 %v7738
    %8216 = vmatprep.subr.bf16.mxu0 %v7731
    %8217 = vmatpush1.bf16.msra.mxu0 %v7730
    %8218 = vmatprep.subr.bf16.mxu0 %v7723
    %8219 = vmatpush1.bf16.msra.mxu0 %v7722
    %8220 = vmatprep.subr.bf16.mxu0 %v7715
    %8221 = vmatpush1.bf16.msra.mxu0 %v7714
    %8222 = vmatprep.subr.bf16.mxu0 %v7707
    %8223 = vmatpush1.bf16.msra.mxu0 %v7706
    %8224 = vmatprep.subr.bf16.mxu0 %v7699
    %8225 = vmatpush1.bf16.msra.mxu0 %v7698
    %8226 = vmatprep.subr.bf16.mxu0 %v7819
    %8227 = vmatpush2.bf16.msra.mxu0 %v7818
    %8228 = vmatprep.subr.bf16.mxu0 %v7811
    %8229 = vmatpush2.bf16.msra.mxu0 %v7810
    %8230 = vmatprep.subr.bf16.mxu0 %v7803
    %8231 = vmatpush2.bf16.msra.mxu0 %v7802
    %8232 = vmatprep.subr.bf16.mxu0 %v7795
    %8233 = vmatpush2.bf16.msra.mxu0 %v7794
    %8234 = vmatprep.subr.bf16.mxu0 %v7787
    %8235 = vmatpush2.bf16.msra.mxu0 %v7786
    %8236 = vmatprep.subr.bf16.mxu0 %v7779
    %8237 = vmatpush2.bf16.msra.mxu0 %v7778
    %8238 = vmatprep.subr.bf16.mxu0 %v7771
    %8239 = vmatpush2.bf16.msra.mxu0 %v7770
    %8240 = vmatprep.subr.bf16.mxu0 %v7763
    %8241 = vmatpush2.bf16.msra.mxu0 %v7762
    %8242 = vmatprep.mubr.bf16.mxu0 %v6629
    %8243 = vmatmul.mubr.bf16.gmra.mxu0 %v6628
    %v8244 = vpop.f32.mrf.mxu0
    %v8245 = vadd.f32 %v6893, %v8244
    %v8246 = vpop.f32.mrf.mxu0
    %v8247 = vadd.f32 %v6897, %v8246
    %v8248 = vpop.f32.mrf.mxu0
    %v8249 = vadd.f32 %v6893, %v8248
    %v8250 = vpop.f32.mrf.mxu0
    %v8251 = vadd.f32 %v6897, %v8250
    %8252 = vdwg.mxu0
    %8253 = vmatprep.subr.bf16.mxu0 %v7883
    %8254 = vmatpush1.bf16.msra.mxu0 %v7882
    %8255 = vmatprep.subr.bf16.mxu0 %v7875
    %8256 = vmatpush1.bf16.msra.mxu0 %v7874
    %8257 = vmatprep.subr.bf16.mxu0 %v7867
    %8258 = vmatpush1.bf16.msra.mxu0 %v7866
    %8259 = vmatprep.subr.bf16.mxu0 %v7859
    %8260 = vmatpush1.bf16.msra.mxu0 %v7858
    %8261 = vmatprep.subr.bf16.mxu0 %v7851
    %8262 = vmatpush1.bf16.msra.mxu0 %v7850
    %8263 = vmatprep.subr.bf16.mxu0 %v7843
    %8264 = vmatpush1.bf16.msra.mxu0 %v7842
    %8265 = vmatprep.subr.bf16.mxu0 %v7835
    %8266 = vmatpush1.bf16.msra.mxu0 %v7834
    %8267 = vmatprep.subr.bf16.mxu0 %v7827
    %8268 = vmatpush1.bf16.msra.mxu0 %v7826
    %8269 = vmatprep.subr.bf16.mxu0 %v7947
    %8270 = vmatpush2.bf16.msra.mxu0 %v7946
    %8271 = vmatprep.subr.bf16.mxu0 %v7939
    %8272 = vmatpush2.bf16.msra.mxu0 %v7938
    %8273 = vmatprep.subr.bf16.mxu0 %v7931
    %8274 = vmatpush2.bf16.msra.mxu0 %v7930
    %8275 = vmatprep.subr.bf16.mxu0 %v7923
    %8276 = vmatpush2.bf16.msra.mxu0 %v7922
    %8277 = vmatprep.subr.bf16.mxu0 %v7915
    %8278 = vmatpush2.bf16.msra.mxu0 %v7914
    %8279 = vmatprep.subr.bf16.mxu0 %v7907
    %8280 = vmatpush2.bf16.msra.mxu0 %v7906
    %8281 = vmatprep.subr.bf16.mxu0 %v7899
    %8282 = vmatpush2.bf16.msra.mxu0 %v7898
    %8283 = vmatprep.subr.bf16.mxu0 %v7891
    %8284 = vmatpush2.bf16.msra.mxu0 %v7890
    %8285 = vmatprep.mubr.bf16.mxu0 %v6631
    %8286 = vmatmul.mubr.bf16.gmra.mxu0 %v6630
    %v8287 = vpop.f32.mrf.mxu0
    %v8288 = vadd.f32 %v8245, %v8287
    %v8289 = vpop.f32.mrf.mxu0
    %v8290 = vadd.f32 %v8247, %v8289
    %v8291 = vpop.f32.mrf.mxu0
    %v8292 = vadd.f32 %v8249, %v8291
    %v8293 = vpop.f32.mrf.mxu0
    %v8294 = vadd.f32 %v8251, %v8293
    %8295 = vdwg.mxu0
    %8296 = vmatprep.subr.bf16.mxu0 %v7757
    %8297 = vmatpush1.bf16.msra.mxu0 %v7756
    %8298 = vmatprep.subr.bf16.mxu0 %v7749
    %8299 = vmatpush1.bf16.msra.mxu0 %v7748
    %8300 = vmatprep.subr.bf16.mxu0 %v7741
    %8301 = vmatpush1.bf16.msra.mxu0 %v7740
    %8302 = vmatprep.subr.bf16.mxu0 %v7733
    %8303 = vmatpush1.bf16.msra.mxu0 %v7732
    %8304 = vmatprep.subr.bf16.mxu0 %v7725
    %8305 = vmatpush1.bf16.msra.mxu0 %v7724
    %8306 = vmatprep.subr.bf16.mxu0 %v7717
    %8307 = vmatpush1.bf16.msra.mxu0 %v7716
    %8308 = vmatprep.subr.bf16.mxu0 %v7709
    %8309 = vmatpush1.bf16.msra.mxu0 %v7708
    %8310 = vmatprep.subr.bf16.mxu0 %v7701
    %8311 = vmatpush1.bf16.msra.mxu0 %v7700
    %8312 = vmatprep.subr.bf16.mxu0 %v7821
    %8313 = vmatpush2.bf16.msra.mxu0 %v7820
    %8314 = vmatprep.subr.bf16.mxu0 %v7813
    %8315 = vmatpush2.bf16.msra.mxu0 %v7812
    %8316 = vmatprep.subr.bf16.mxu0 %v7805
    %8317 = vmatpush2.bf16.msra.mxu0 %v7804
    %8318 = vmatprep.subr.bf16.mxu0 %v7797
    %8319 = vmatpush2.bf16.msra.mxu0 %v7796
    %8320 = vmatprep.subr.bf16.mxu0 %v7789
    %8321 = vmatpush2.bf16.msra.mxu0 %v7788
    %8322 = vmatprep.subr.bf16.mxu0 %v7781
    %8323 = vmatpush2.bf16.msra.mxu0 %v7780
    %8324 = vmatprep.subr.bf16.mxu0 %v7773
    %8325 = vmatpush2.bf16.msra.mxu0 %v7772
    %8326 = vmatprep.subr.bf16.mxu0 %v7765
    %8327 = vmatpush2.bf16.msra.mxu0 %v7764
    %8328 = vmatprep.mubr.bf16.mxu0 %v6629
    %8329 = vmatmul.mubr.bf16.gmra.mxu0 %v6628
    %v8330 = vpop.f32.mrf.mxu0
    %v8331 = vadd.f32 %v6901, %v8330
    %v8332 = vpop.f32.mrf.mxu0
    %v8333 = vadd.f32 %v6905, %v8332
    %v8334 = vpop.f32.mrf.mxu0
    %v8335 = vadd.f32 %v6901, %v8334
    %v8336 = vpop.f32.mrf.mxu0
    %v8337 = vadd.f32 %v6905, %v8336
    %8338 = vdwg.mxu0
    %8339 = vmatprep.subr.bf16.mxu0 %v7885
    %8340 = vmatpush1.bf16.msra.mxu0 %v7884
    %8341 = vmatprep.subr.bf16.mxu0 %v7877
    %8342 = vmatpush1.bf16.msra.mxu0 %v7876
    %8343 = vmatprep.subr.bf16.mxu0 %v7869
    %8344 = vmatpush1.bf16.msra.mxu0 %v7868
    %8345 = vmatprep.subr.bf16.mxu0 %v7861
    %8346 = vmatpush1.bf16.msra.mxu0 %v7860
    %8347 = vmatprep.subr.bf16.mxu0 %v7853
    %8348 = vmatpush1.bf16.msra.mxu0 %v7852
    %8349 = vmatprep.subr.bf16.mxu0 %v7845
    %8350 = vmatpush1.bf16.msra.mxu0 %v7844
    %8351 = vmatprep.subr.bf16.mxu0 %v7837
    %8352 = vmatpush1.bf16.msra.mxu0 %v7836
    %8353 = vmatprep.subr.bf16.mxu0 %v7829
    %8354 = vmatpush1.bf16.msra.mxu0 %v7828
    %8355 = vmatprep.subr.bf16.mxu0 %v7949
    %8356 = vmatpush2.bf16.msra.mxu0 %v7948
    %8357 = vmatprep.subr.bf16.mxu0 %v7941
    %8358 = vmatpush2.bf16.msra.mxu0 %v7940
    %8359 = vmatprep.subr.bf16.mxu0 %v7933
    %8360 = vmatpush2.bf16.msra.mxu0 %v7932
    %8361 = vmatprep.subr.bf16.mxu0 %v7925
    %8362 = vmatpush2.bf16.msra.mxu0 %v7924
    %8363 = vmatprep.subr.bf16.mxu0 %v7917
    %8364 = vmatpush2.bf16.msra.mxu0 %v7916
    %8365 = vmatprep.subr.bf16.mxu0 %v7909
    %8366 = vmatpush2.bf16.msra.mxu0 %v7908
    %8367 = vmatprep.subr.bf16.mxu0 %v7901
    %8368 = vmatpush2.bf16.msra.mxu0 %v7900
    %8369 = vmatprep.subr.bf16.mxu0 %v7893
    %8370 = vmatpush2.bf16.msra.mxu0 %v7892
    %8371 = vmatprep.mubr.bf16.mxu0 %v6631
    %8372 = vmatmul.mubr.bf16.gmra.mxu0 %v6630
    %v8373 = vpop.f32.mrf.mxu0
    %v8374 = vadd.f32 %v8331, %v8373
    %v8375 = vpop.f32.mrf.mxu0
    %v8376 = vadd.f32 %v8333, %v8375
    %v8377 = vpop.f32.mrf.mxu0
    %v8378 = vadd.f32 %v8335, %v8377
    %v8379 = vpop.f32.mrf.mxu0
    %v8380 = vadd.f32 %v8337, %v8379
    %8381 = vdwg.mxu0
    %8382 = vmatprep.subr.bf16.mxu0 %v7759
    %8383 = vmatpush1.bf16.msra.mxu0 %v7758
    %8384 = vmatprep.subr.bf16.mxu0 %v7751
    %8385 = vmatpush1.bf16.msra.mxu0 %v7750
    %8386 = vmatprep.subr.bf16.mxu0 %v7743
    %8387 = vmatpush1.bf16.msra.mxu0 %v7742
    %8388 = vmatprep.subr.bf16.mxu0 %v7735
    %8389 = vmatpush1.bf16.msra.mxu0 %v7734
    %8390 = vmatprep.subr.bf16.mxu0 %v7727
    %8391 = vmatpush1.bf16.msra.mxu0 %v7726
    %8392 = vmatprep.subr.bf16.mxu0 %v7719
    %8393 = vmatpush1.bf16.msra.mxu0 %v7718
    %8394 = vmatprep.subr.bf16.mxu0 %v7711
    %8395 = vmatpush1.bf16.msra.mxu0 %v7710
    %8396 = vmatprep.subr.bf16.mxu0 %v7703
    %8397 = vmatpush1.bf16.msra.mxu0 %v7702
    %8398 = vmatprep.subr.bf16.mxu0 %v7823
    %8399 = vmatpush2.bf16.msra.mxu0 %v7822
    %8400 = vmatprep.subr.bf16.mxu0 %v7815
    %8401 = vmatpush2.bf16.msra.mxu0 %v7814
    %8402 = vmatprep.subr.bf16.mxu0 %v7807
    %8403 = vmatpush2.bf16.msra.mxu0 %v7806
    %8404 = vmatprep.subr.bf16.mxu0 %v7799
    %8405 = vmatpush2.bf16.msra.mxu0 %v7798
    %8406 = vmatprep.subr.bf16.mxu0 %v7791
    %8407 = vmatpush2.bf16.msra.mxu0 %v7790
    %8408 = vmatprep.subr.bf16.mxu0 %v7783
    %8409 = vmatpush2.bf16.msra.mxu0 %v7782
    %8410 = vmatprep.subr.bf16.mxu0 %v7775
    %8411 = vmatpush2.bf16.msra.mxu0 %v7774
    %8412 = vmatprep.subr.bf16.mxu0 %v7767
    %8413 = vmatpush2.bf16.msra.mxu0 %v7766
    %8414 = vmatprep.mubr.bf16.mxu0 %v6629
    %8415 = vmatmul.mubr.bf16.gmra.mxu0 %v6628
    %v8416 = vpop.f32.mrf.mxu0
    %v8417 = vadd.f32 %v6909, %v8416
    %v8418 = vpop.f32.mrf.mxu0
    %v8419 = vadd.f32 %v6913, %v8418
    %v8420 = vpop.f32.mrf.mxu0
    %v8421 = vadd.f32 %v6909, %v8420
    %v8422 = vpop.f32.mrf.mxu0
    %v8423 = vadd.f32 %v6913, %v8422
    %8424 = vdwg.mxu0
    %8425 = vmatprep.subr.bf16.mxu0 %v7887
    %8426 = vmatpush1.bf16.msra.mxu0 %v7886
    %8427 = vmatprep.subr.bf16.mxu0 %v7879
    %8428 = vmatpush1.bf16.msra.mxu0 %v7878
    %8429 = vmatprep.subr.bf16.mxu0 %v7871
    %8430 = vmatpush1.bf16.msra.mxu0 %v7870
    %8431 = vmatprep.subr.bf16.mxu0 %v7863
    %8432 = vmatpush1.bf16.msra.mxu0 %v7862
    %8433 = vmatprep.subr.bf16.mxu0 %v7855
    %8434 = vmatpush1.bf16.msra.mxu0 %v7854
    %8435 = vmatprep.subr.bf16.mxu0 %v7847
    %8436 = vmatpush1.bf16.msra.mxu0 %v7846
    %8437 = vmatprep.subr.bf16.mxu0 %v7839
    %8438 = vmatpush1.bf16.msra.mxu0 %v7838
    %8439 = vmatprep.subr.bf16.mxu0 %v7831
    %8440 = vmatpush1.bf16.msra.mxu0 %v7830
    %8441 = vmatprep.subr.bf16.mxu0 %v7951
    %8442 = vmatpush2.bf16.msra.mxu0 %v7950
    %8443 = vmatprep.subr.bf16.mxu0 %v7943
    %8444 = vmatpush2.bf16.msra.mxu0 %v7942
    %8445 = vmatprep.subr.bf16.mxu0 %v7935
    %8446 = vmatpush2.bf16.msra.mxu0 %v7934
    %8447 = vmatprep.subr.bf16.mxu0 %v7927
    %8448 = vmatpush2.bf16.msra.mxu0 %v7926
    %8449 = vmatprep.subr.bf16.mxu0 %v7919
    %8450 = vmatpush2.bf16.msra.mxu0 %v7918
    %8451 = vmatprep.subr.bf16.mxu0 %v7911
    %8452 = vmatpush2.bf16.msra.mxu0 %v7910
    %8453 = vmatprep.subr.bf16.mxu0 %v7903
    %8454 = vmatpush2.bf16.msra.mxu0 %v7902
    %8455 = vmatprep.subr.bf16.mxu0 %v7895
    %8456 = vmatpush2.bf16.msra.mxu0 %v7894
    %8457 = vmatprep.mubr.bf16.mxu0 %v6631
    %8458 = vmatmul.mubr.bf16.gmra.mxu0 %v6630
    %v8459 = vpop.f32.mrf.mxu0
    %v8460 = vadd.f32 %v8417, %v8459
    %v8461 = vpop.f32.mrf.mxu0
    %v8462 = vadd.f32 %v8419, %v8461
    %v8463 = vpop.f32.mrf.mxu0
    %v8464 = vadd.f32 %v8421, %v8463
    %v8465 = vpop.f32.mrf.mxu0
    %v8466 = vadd.f32 %v8423, %v8465
    %8467 = vdwg.mxu0
    %8468 = vmatprep.subr.bf16.mxu0 %v7761
    %8469 = vmatpush1.bf16.msra.mxu0 %v7760
    %8470 = vmatprep.subr.bf16.mxu0 %v7753
    %8471 = vmatpush1.bf16.msra.mxu0 %v7752
    %8472 = vmatprep.subr.bf16.mxu0 %v7745
    %8473 = vmatpush1.bf16.msra.mxu0 %v7744
    %8474 = vmatprep.subr.bf16.mxu0 %v7737
    %8475 = vmatpush1.bf16.msra.mxu0 %v7736
    %8476 = vmatprep.subr.bf16.mxu0 %v7729
    %8477 = vmatpush1.bf16.msra.mxu0 %v7728
    %8478 = vmatprep.subr.bf16.mxu0 %v7721
    %8479 = vmatpush1.bf16.msra.mxu0 %v7720
    %8480 = vmatprep.subr.bf16.mxu0 %v7713
    %8481 = vmatpush1.bf16.msra.mxu0 %v7712
    %8482 = vmatprep.subr.bf16.mxu0 %v7705
    %8483 = vmatpush1.bf16.msra.mxu0 %v7704
    %8484 = vmatprep.subr.bf16.mxu0 %v7825
    %8485 = vmatpush2.bf16.msra.mxu0 %v7824
    %8486 = vmatprep.subr.bf16.mxu0 %v7817
    %8487 = vmatpush2.bf16.msra.mxu0 %v7816
    %8488 = vmatprep.subr.bf16.mxu0 %v7809
    %8489 = vmatpush2.bf16.msra.mxu0 %v7808
    %8490 = vmatprep.subr.bf16.mxu0 %v7801
    %8491 = vmatpush2.bf16.msra.mxu0 %v7800
    %8492 = vmatprep.subr.bf16.mxu0 %v7793
    %8493 = vmatpush2.bf16.msra.mxu0 %v7792
    %8494 = vmatprep.subr.bf16.mxu0 %v7785
    %8495 = vmatpush2.bf16.msra.mxu0 %v7784
    %8496 = vmatprep.subr.bf16.mxu0 %v7777
    %8497 = vmatpush2.bf16.msra.mxu0 %v7776
    %8498 = vmatprep.subr.bf16.mxu0 %v7769
    %8499 = vmatpush2.bf16.msra.mxu0 %v7768
    %8500 = vmatprep.mubr.bf16.mxu0 %v6629
    %8501 = vmatmul.mubr.bf16.gmra.mxu0 %v6628
    %v8502 = vpop.f32.mrf.mxu0
    %v8503 = vadd.f32 %v6917, %v8502
    %v8504 = vpop.f32.mrf.mxu0
    %v8505 = vadd.f32 %v6921, %v8504
    %v8506 = vpop.f32.mrf.mxu0
    %v8507 = vadd.f32 %v6917, %v8506
    %v8508 = vpop.f32.mrf.mxu0
    %v8509 = vadd.f32 %v6921, %v8508
    %8510 = vdwg.mxu0
    %8511 = vmatprep.subr.bf16.mxu0 %v7889
    %8512 = vmatpush1.bf16.msra.mxu0 %v7888
    %8513 = vmatprep.subr.bf16.mxu0 %v7881
    %8514 = vmatpush1.bf16.msra.mxu0 %v7880
    %8515 = vmatprep.subr.bf16.mxu0 %v7873
    %8516 = vmatpush1.bf16.msra.mxu0 %v7872
    %8517 = vmatprep.subr.bf16.mxu0 %v7865
    %8518 = vmatpush1.bf16.msra.mxu0 %v7864
    %8519 = vmatprep.subr.bf16.mxu0 %v7857
    %8520 = vmatpush1.bf16.msra.mxu0 %v7856
    %8521 = vmatprep.subr.bf16.mxu0 %v7849
    %8522 = vmatpush1.bf16.msra.mxu0 %v7848
    %8523 = vmatprep.subr.bf16.mxu0 %v7841
    %8524 = vmatpush1.bf16.msra.mxu0 %v7840
    %8525 = vmatprep.subr.bf16.mxu0 %v7833
    %8526 = vmatpush1.bf16.msra.mxu0 %v7832
    %8527 = vmatprep.subr.bf16.mxu0 %v7953
    %8528 = vmatpush2.bf16.msra.mxu0 %v7952
    %8529 = vmatprep.subr.bf16.mxu0 %v7945
    %8530 = vmatpush2.bf16.msra.mxu0 %v7944
    %8531 = vmatprep.subr.bf16.mxu0 %v7937
    %8532 = vmatpush2.bf16.msra.mxu0 %v7936
    %8533 = vmatprep.subr.bf16.mxu0 %v7929
    %8534 = vmatpush2.bf16.msra.mxu0 %v7928
    %8535 = vmatprep.subr.bf16.mxu0 %v7921
    %8536 = vmatpush2.bf16.msra.mxu0 %v7920
    %8537 = vmatprep.subr.bf16.mxu0 %v7913
    %8538 = vmatpush2.bf16.msra.mxu0 %v7912
    %8539 = vmatprep.subr.bf16.mxu0 %v7905
    %8540 = vmatpush2.bf16.msra.mxu0 %v7904
    %8541 = vmatprep.subr.bf16.mxu0 %v7897
    %8542 = vmatpush2.bf16.msra.mxu0 %v7896
    %8543 = vmatprep.mubr.bf16.mxu0 %v6631
    %8544 = vmatmul.mubr.bf16.gmra.mxu0 %v6630
    %v8545 = vpop.f32.mrf.mxu0
    %v8546 = vadd.f32 %v8503, %v8545
    %v8547 = vpop.f32.mrf.mxu0
    %v8548 = vadd.f32 %v8505, %v8547
    %v8549 = vpop.f32.mrf.mxu0
    %v8550 = vadd.f32 %v8507, %v8549
    %v8551 = vpop.f32.mrf.mxu0
    %v8552 = vadd.f32 %v8509, %v8551
    %8553 = vdwg.mxu0
    %v8554 = vmax.f32 %v8288, 0.0
    %v8555 = vmax.f32 %v8290, 0.0
    %v8556 = vmax.f32 %v8374, 0.0
    %v8557 = vmax.f32 %v8376, 0.0
    %v8558 = vmax.f32 %v8460, 0.0
    %v8559 = vmax.f32 %v8462, 0.0
    %v8560 = vmax.f32 %v8546, 0.0
    %v8561 = vmax.f32 %v8548, 0.0
    %v8562 = vmax.f32 %v8292, 0.0
    %v8563 = vmax.f32 %v8294, 0.0
    %v8564 = vmax.f32 %v8378, 0.0
    %v8565 = vmax.f32 %v8380, 0.0
    %v8566 = vmax.f32 %v8464, 0.0
    %v8567 = vmax.f32 %v8466, 0.0
    %v8568 = vmax.f32 %v8550, 0.0
    %v8569 = vmax.f32 %v8552, 0.0
    %v8570 = vpack.c.bf16 %v8562, %v8554
    %v8571 = vpack.c.bf16 %v8563, %v8555
    %v8572 = vpack.c.bf16 %v8564, %v8556
    %v8573 = vpack.c.bf16 %v8565, %v8557
    %v8574 = vpack.c.bf16 %v8566, %v8558
    %v8575 = vpack.c.bf16 %v8567, %v8559
    %v8576 = vpack.c.bf16 %v8568, %v8560
    %v8577 = vpack.c.bf16 %v8569, %v8561
    %v8578 = vld [vmem:[#allocation24] sm:$0xff]
    %v8579 = vld [vmem:[#allocation24 + $0x8] sm:$0xff]
    %v8580 = vld [vmem:[#allocation24 + $0x10] sm:$0xff]
    %v8581 = vld [vmem:[#allocation24 + $0x18] sm:$0xf]
    %v8582 = vld [vmem:[#allocation24 + $0x1c] sm:$0xff]
    %v8583 = vld [vmem:[#allocation24 + $0x24] sm:$0xff]
    %v8584 = vld [vmem:[#allocation24 + $0x2c] sm:$0xff]
    %v8585 = vld [vmem:[#allocation24 + $0x34] sm:$0xf]
    %v8586 = vld [vmem:[#allocation24 + $0x38] sm:$0xff]
    %v8587 = vld [vmem:[#allocation24 + $0x40] sm:$0xff]
    %v8588 = vld [vmem:[#allocation24 + $0x48] sm:$0xff]
    %v8589 = vld [vmem:[#allocation24 + $0x50] sm:$0xf]
    %v8590 = vld [vmem:[#allocation24 + $0x54] sm:$0xff]
    %v8591 = vld [vmem:[#allocation24 + $0x5c] sm:$0xff]
    %v8592 = vld [vmem:[#allocation24 + $0x64] sm:$0xff]
    %v8593 = vld [vmem:[#allocation24 + $0x6c] sm:$0xf]
    %v8594 = vld [vmem:[#allocation24 + $0x70] sm:$0xff]
    %v8595 = vld [vmem:[#allocation24 + $0x78] sm:$0xff]
    %v8596 = vld [vmem:[#allocation24 + $0x80] sm:$0xff]
    %v8597 = vld [vmem:[#allocation24 + $0x88] sm:$0xf]
    %v8598 = vld [vmem:[#allocation24 + $0x8c] sm:$0xff]
    %v8599 = vld [vmem:[#allocation24 + $0x94] sm:$0xff]
    %v8600 = vld [vmem:[#allocation24 + $0x9c] sm:$0xff]
    %v8601 = vld [vmem:[#allocation24 + $0xa4] sm:$0xf]
    %v8602 = vld [vmem:[#allocation24 + $0xa8] sm:$0xff]
    %v8603 = vld [vmem:[#allocation24 + $0xb0] sm:$0xff]
    %v8604 = vld [vmem:[#allocation24 + $0xb8] sm:$0xff]
    %v8605 = vld [vmem:[#allocation24 + $0xc0] sm:$0xf]
    %v8606 = vld [vmem:[#allocation24 + $0xc4] sm:$0xff]
    %v8607 = vld [vmem:[#allocation24 + $0xcc] sm:$0xff]
    %v8608 = vld [vmem:[#allocation24 + $0xd4] sm:$0xff]
    %v8609 = vld [vmem:[#allocation24 + $0xdc] sm:$0xf]
    %v8610 = vld [vmem:[#allocation24 + $0xe0] sm:$0xff]
    %v8611 = vld [vmem:[#allocation24 + $0xe8] sm:$0xff]
    %v8612 = vld [vmem:[#allocation24 + $0xf0] sm:$0xff]
    %v8613 = vld [vmem:[#allocation24 + $0xf8] sm:$0xf]
    %v8614 = vld [vmem:[#allocation24 + $0xfc] sm:$0xff]
    %v8615 = vld [vmem:[#allocation24 + $0x104] sm:$0xff]
    %v8616 = vld [vmem:[#allocation24 + $0x10c] sm:$0xff]
    %v8617 = vld [vmem:[#allocation24 + $0x114] sm:$0xf]
    %v8618 = vld [vmem:[#allocation24 + $0x118] sm:$0xff]
    %v8619 = vld [vmem:[#allocation24 + $0x120] sm:$0xff]
    %v8620 = vld [vmem:[#allocation24 + $0x128] sm:$0xff]
    %v8621 = vld [vmem:[#allocation24 + $0x130] sm:$0xf]
    %v8622 = vld [vmem:[#allocation24 + $0x134] sm:$0xff]
    %v8623 = vld [vmem:[#allocation24 + $0x13c] sm:$0xff]
    %v8624 = vld [vmem:[#allocation24 + $0x144] sm:$0xff]
    %v8625 = vld [vmem:[#allocation24 + $0x14c] sm:$0xf]
    %v8626 = vld [vmem:[#allocation24 + $0x150] sm:$0xff]
    %v8627 = vld [vmem:[#allocation24 + $0x158] sm:$0xff]
    %v8628 = vld [vmem:[#allocation24 + $0x160] sm:$0xff]
    %v8629 = vld [vmem:[#allocation24 + $0x168] sm:$0xf]
    %v8630 = vld [vmem:[#allocation24 + $0x16c] sm:$0xff]
    %v8631 = vld [vmem:[#allocation24 + $0x174] sm:$0xff]
    %v8632 = vld [vmem:[#allocation24 + $0x17c] sm:$0xff]
    %v8633 = vld [vmem:[#allocation24 + $0x184] sm:$0xf]
    %v8634 = vld [vmem:[#allocation24 + $0x188] sm:$0xff]
    %v8635 = vld [vmem:[#allocation24 + $0x190] sm:$0xff]
    %v8636 = vld [vmem:[#allocation24 + $0x198] sm:$0xff]
    %v8637 = vld [vmem:[#allocation24 + $0x1a0] sm:$0xf]
    %v8638 = vld [vmem:[#allocation24 + $0x1a4] sm:$0xff]
    %v8639 = vld [vmem:[#allocation24 + $0x1ac] sm:$0xff]
    %v8640 = vld [vmem:[#allocation24 + $0x1b4] sm:$0xff]
    %v8641 = vld [vmem:[#allocation24 + $0x1bc] sm:$0xf]
    %v8642 = vld [vmem:[#allocation24 + $0x1c0] sm:$0xff]
    %v8643 = vld [vmem:[#allocation24 + $0x1c8] sm:$0xff]
    %v8644 = vld [vmem:[#allocation24 + $0x1d0] sm:$0xff]
    %v8645 = vld [vmem:[#allocation24 + $0x1d8] sm:$0xf]
    %v8646 = vld [vmem:[#allocation24 + $0x1dc] sm:$0xff]
    %v8647 = vld [vmem:[#allocation24 + $0x1e4] sm:$0xff]
    %v8648 = vld [vmem:[#allocation24 + $0x1ec] sm:$0xff]
    %v8649 = vld [vmem:[#allocation24 + $0x1f4] sm:$0xf]
    %v8650 = vld [vmem:[#allocation24 + $0x1f8] sm:$0xff]
    %v8651 = vld [vmem:[#allocation24 + $0x200] sm:$0xff]
    %v8652 = vld [vmem:[#allocation24 + $0x208] sm:$0xff]
    %v8653 = vld [vmem:[#allocation24 + $0x210] sm:$0xf]
    %v8654 = vld [vmem:[#allocation24 + $0x214] sm:$0xff]
    %v8655 = vld [vmem:[#allocation24 + $0x21c] sm:$0xff]
    %v8656 = vld [vmem:[#allocation24 + $0x224] sm:$0xff]
    %v8657 = vld [vmem:[#allocation24 + $0x22c] sm:$0xf]
    %v8658 = vld [vmem:[#allocation24 + $0x230] sm:$0xff]
    %v8659 = vld [vmem:[#allocation24 + $0x238] sm:$0xff]
    %v8660 = vld [vmem:[#allocation24 + $0x240] sm:$0xff]
    %v8661 = vld [vmem:[#allocation24 + $0x248] sm:$0xf]
    %v8662 = vld [vmem:[#allocation24 + $0x24c] sm:$0xff]
    %v8663 = vld [vmem:[#allocation24 + $0x254] sm:$0xff]
    %v8664 = vld [vmem:[#allocation24 + $0x25c] sm:$0xff]
    %v8665 = vld [vmem:[#allocation24 + $0x264] sm:$0xf]
    %v8666 = vld [vmem:[#allocation24 + $0x268] sm:$0xff]
    %v8667 = vld [vmem:[#allocation24 + $0x270] sm:$0xff]
    %v8668 = vld [vmem:[#allocation24 + $0x278] sm:$0xff]
    %v8669 = vld [vmem:[#allocation24 + $0x280] sm:$0xf]
    %v8670 = vld [vmem:[#allocation24 + $0x284] sm:$0xff]
    %v8671 = vld [vmem:[#allocation24 + $0x28c] sm:$0xff]
    %v8672 = vld [vmem:[#allocation24 + $0x294] sm:$0xff]
    %v8673 = vld [vmem:[#allocation24 + $0x29c] sm:$0xf]
    %v8674 = vld [vmem:[#allocation24 + $0x2a0] sm:$0xff]
    %v8675 = vld [vmem:[#allocation24 + $0x2a8] sm:$0xff]
    %v8676 = vld [vmem:[#allocation24 + $0x2b0] sm:$0xff]
    %v8677 = vld [vmem:[#allocation24 + $0x2b8] sm:$0xf]
    %v8678 = vld [vmem:[#allocation24 + $0x2bc] sm:$0xff]
    %v8679 = vld [vmem:[#allocation24 + $0x2c4] sm:$0xff]
    %v8680 = vld [vmem:[#allocation24 + $0x2cc] sm:$0xff]
    %v8681 = vld [vmem:[#allocation24 + $0x2d4] sm:$0xf]
    %v8682 = vld [vmem:[#allocation24 + $0x2d8] sm:$0xff]
    %v8683 = vld [vmem:[#allocation24 + $0x2e0] sm:$0xff]
    %v8684 = vld [vmem:[#allocation24 + $0x2e8] sm:$0xff]
    %v8685 = vld [vmem:[#allocation24 + $0x2f0] sm:$0xf]
    %v8686 = vld [vmem:[#allocation24 + $0x2f4] sm:$0xff]
    %v8687 = vld [vmem:[#allocation24 + $0x2fc] sm:$0xff]
    %v8688 = vld [vmem:[#allocation24 + $0x304] sm:$0xff]
    %v8689 = vld [vmem:[#allocation24 + $0x30c] sm:$0xf]
    %v8690 = vld [vmem:[#allocation24 + $0x310] sm:$0xff]
    %v8691 = vld [vmem:[#allocation24 + $0x318] sm:$0xff]
    %v8692 = vld [vmem:[#allocation24 + $0x320] sm:$0xff]
    %v8693 = vld [vmem:[#allocation24 + $0x328] sm:$0xf]
    %v8694 = vld [vmem:[#allocation24 + $0x32c] sm:$0xff]
    %v8695 = vld [vmem:[#allocation24 + $0x334] sm:$0xff]
    %v8696 = vld [vmem:[#allocation24 + $0x33c] sm:$0xff]
    %v8697 = vld [vmem:[#allocation24 + $0x344] sm:$0xf]
    %v8698 = vld [vmem:[#allocation24 + $0x348] sm:$0xff]
    %v8699 = vld [vmem:[#allocation24 + $0x350] sm:$0xff]
    %v8700 = vld [vmem:[#allocation24 + $0x358] sm:$0xff]
    %v8701 = vld [vmem:[#allocation24 + $0x360] sm:$0xf]
    %v8702 = vld [vmem:[#allocation24 + $0x364] sm:$0xff]
    %v8703 = vld [vmem:[#allocation24 + $0x36c] sm:$0xff]
    %v8704 = vld [vmem:[#allocation24 + $0x374] sm:$0xff]
    %v8705 = vld [vmem:[#allocation24 + $0x37c] sm:$0xf]
    %v8706 = vld [vmem:[#allocation24 + $0x380] sm:$0xff]
    %v8707 = vld [vmem:[#allocation24 + $0x388] sm:$0xff]
    %v8708 = vld [vmem:[#allocation24 + $0x390] sm:$0xff]
    %v8709 = vld [vmem:[#allocation24 + $0x398] sm:$0xf]
    %v8710 = vld [vmem:[#allocation24 + $0x39c] sm:$0xff]
    %v8711 = vld [vmem:[#allocation24 + $0x3a4] sm:$0xff]
    %v8712 = vld [vmem:[#allocation24 + $0x3ac] sm:$0xff]
    %v8713 = vld [vmem:[#allocation24 + $0x3b4] sm:$0xf]
    %v8714 = vld [vmem:[#allocation24 + $0x3b8] sm:$0xff]
    %v8715 = vld [vmem:[#allocation24 + $0x3c0] sm:$0xff]
    %v8716 = vld [vmem:[#allocation24 + $0x3c8] sm:$0xff]
    %v8717 = vld [vmem:[#allocation24 + $0x3d0] sm:$0xf]
    %v8718 = vld [vmem:[#allocation24 + $0x3d4] sm:$0xff]
    %v8719 = vld [vmem:[#allocation24 + $0x3dc] sm:$0xff]
    %v8720 = vld [vmem:[#allocation24 + $0x3e4] sm:$0xff]
    %v8721 = vld [vmem:[#allocation24 + $0x3ec] sm:$0xf]
    %v8722 = vld [vmem:[#allocation24 + $0x3f0] sm:$0xff]
    %v8723 = vld [vmem:[#allocation24 + $0x3f8] sm:$0xff]
    %v8724 = vld [vmem:[#allocation24 + $0x400] sm:$0xff]
    %v8725 = vld [vmem:[#allocation24 + $0x408] sm:$0xf]
    %v8726 = vld [vmem:[#allocation24 + $0x40c] sm:$0xff]
    %v8727 = vld [vmem:[#allocation24 + $0x414] sm:$0xff]
    %v8728 = vld [vmem:[#allocation24 + $0x41c] sm:$0xff]
    %v8729 = vld [vmem:[#allocation24 + $0x424] sm:$0xf]
    %v8730 = vld [vmem:[#allocation24 + $0x428] sm:$0xff]
    %v8731 = vld [vmem:[#allocation24 + $0x430] sm:$0xff]
    %v8732 = vld [vmem:[#allocation24 + $0x438] sm:$0xff]
    %v8733 = vld [vmem:[#allocation24 + $0x440] sm:$0xf]
    %v8734 = vld [vmem:[#allocation24 + $0x444] sm:$0xff]
    %v8735 = vld [vmem:[#allocation24 + $0x44c] sm:$0xff]
    %v8736 = vld [vmem:[#allocation24 + $0x454] sm:$0xff]
    %v8737 = vld [vmem:[#allocation24 + $0x45c] sm:$0xf]
    %v8738 = vld [vmem:[#allocation24 + $0x460] sm:$0xff]
    %v8739 = vld [vmem:[#allocation24 + $0x468] sm:$0xff]
    %v8740 = vld [vmem:[#allocation24 + $0x470] sm:$0xff]
    %v8741 = vld [vmem:[#allocation24 + $0x478] sm:$0xf]
    %v8742 = vld [vmem:[#allocation24 + $0x47c] sm:$0xff]
    %v8743 = vld [vmem:[#allocation24 + $0x484] sm:$0xff]
    %v8744 = vld [vmem:[#allocation24 + $0x48c] sm:$0xff]
    %v8745 = vld [vmem:[#allocation24 + $0x494] sm:$0xf]
    %v8746 = vld [vmem:[#allocation24 + $0x498] sm:$0xff]
    %v8747 = vld [vmem:[#allocation24 + $0x4a0] sm:$0xff]
    %v8748 = vld [vmem:[#allocation24 + $0x4a8] sm:$0xff]
    %v8749 = vld [vmem:[#allocation24 + $0x4b0] sm:$0xf]
    %v8750 = vld [vmem:[#allocation24 + $0x4b4] sm:$0xff]
    %v8751 = vld [vmem:[#allocation24 + $0x4bc] sm:$0xff]
    %v8752 = vld [vmem:[#allocation24 + $0x4c4] sm:$0xff]
    %v8753 = vld [vmem:[#allocation24 + $0x4cc] sm:$0xf]
    %v8754 = vld [vmem:[#allocation24 + $0x4d0] sm:$0xff]
    %v8755 = vld [vmem:[#allocation24 + $0x4d8] sm:$0xff]
    %v8756 = vld [vmem:[#allocation24 + $0x4e0] sm:$0xff]
    %v8757 = vld [vmem:[#allocation24 + $0x4e8] sm:$0xf]
    %v8758 = vld [vmem:[#allocation24 + $0x4ec] sm:$0xff]
    %v8759 = vld [vmem:[#allocation24 + $0x4f4] sm:$0xff]
    %v8760 = vld [vmem:[#allocation24 + $0x4fc] sm:$0xff]
    %v8761 = vld [vmem:[#allocation24 + $0x504] sm:$0xf]
    %v8762 = vld [vmem:[#allocation24 + $0x508] sm:$0xff]
    %v8763 = vld [vmem:[#allocation24 + $0x510] sm:$0xff]
    %v8764 = vld [vmem:[#allocation24 + $0x518] sm:$0xff]
    %v8765 = vld [vmem:[#allocation24 + $0x520] sm:$0xf]
    %v8766 = vld [vmem:[#allocation24 + $0x524] sm:$0xff]
    %v8767 = vld [vmem:[#allocation24 + $0x52c] sm:$0xff]
    %v8768 = vld [vmem:[#allocation24 + $0x534] sm:$0xff]
    %v8769 = vld [vmem:[#allocation24 + $0x53c] sm:$0xf]
    %v8770 = vld [vmem:[#allocation24 + $0x540] sm:$0xff]
    %v8771 = vld [vmem:[#allocation24 + $0x548] sm:$0xff]
    %v8772 = vld [vmem:[#allocation24 + $0x550] sm:$0xff]
    %v8773 = vld [vmem:[#allocation24 + $0x558] sm:$0xf]
    %v8774 = vld [vmem:[#allocation24 + $0x55c] sm:$0xff]
    %v8775 = vld [vmem:[#allocation24 + $0x564] sm:$0xff]
    %v8776 = vld [vmem:[#allocation24 + $0x56c] sm:$0xff]
    %v8777 = vld [vmem:[#allocation24 + $0x574] sm:$0xf]
    %v8778 = vld [vmem:[#allocation24 + $0x578] sm:$0xff]
    %v8779 = vld [vmem:[#allocation24 + $0x580] sm:$0xff]
    %v8780 = vld [vmem:[#allocation24 + $0x588] sm:$0xff]
    %v8781 = vld [vmem:[#allocation24 + $0x590] sm:$0xf]
    %v8782 = vld [vmem:[#allocation24 + $0x594] sm:$0xff]
    %v8783 = vld [vmem:[#allocation24 + $0x59c] sm:$0xff]
    %v8784 = vld [vmem:[#allocation24 + $0x5a4] sm:$0xff]
    %v8785 = vld [vmem:[#allocation24 + $0x5ac] sm:$0xf]
    %v8786 = vld [vmem:[#allocation24 + $0x5b0] sm:$0xff]
    %v8787 = vld [vmem:[#allocation24 + $0x5b8] sm:$0xff]
    %v8788 = vld [vmem:[#allocation24 + $0x5c0] sm:$0xff]
    %v8789 = vld [vmem:[#allocation24 + $0x5c8] sm:$0xf]
    %v8790 = vld [vmem:[#allocation24 + $0x5cc] sm:$0xff]
    %v8791 = vld [vmem:[#allocation24 + $0x5d4] sm:$0xff]
    %v8792 = vld [vmem:[#allocation24 + $0x5dc] sm:$0xff]
    %v8793 = vld [vmem:[#allocation24 + $0x5e4] sm:$0xf]
    %v8794 = vld [vmem:[#allocation24 + $0x5e8] sm:$0xff]
    %v8795 = vld [vmem:[#allocation24 + $0x5f0] sm:$0xff]
    %v8796 = vld [vmem:[#allocation24 + $0x5f8] sm:$0xff]
    %v8797 = vld [vmem:[#allocation24 + $0x600] sm:$0xf]
    %v8798 = vld [vmem:[#allocation24 + $0x604] sm:$0xff]
    %v8799 = vld [vmem:[#allocation24 + $0x60c] sm:$0xff]
    %v8800 = vld [vmem:[#allocation24 + $0x614] sm:$0xff]
    %v8801 = vld [vmem:[#allocation24 + $0x61c] sm:$0xf]
    %v8802 = vld [vmem:[#allocation24 + $0x620] sm:$0xff]
    %v8803 = vld [vmem:[#allocation24 + $0x628] sm:$0xff]
    %v8804 = vld [vmem:[#allocation24 + $0x630] sm:$0xff]
    %v8805 = vld [vmem:[#allocation24 + $0x638] sm:$0xf]
    %v8806 = vld [vmem:[#allocation24 + $0x63c] sm:$0xff]
    %v8807 = vld [vmem:[#allocation24 + $0x644] sm:$0xff]
    %v8808 = vld [vmem:[#allocation24 + $0x64c] sm:$0xff]
    %v8809 = vld [vmem:[#allocation24 + $0x654] sm:$0xf]
    %v8810 = vld [vmem:[#allocation24 + $0x658] sm:$0xff]
    %v8811 = vld [vmem:[#allocation24 + $0x660] sm:$0xff]
    %v8812 = vld [vmem:[#allocation24 + $0x668] sm:$0xff]
    %v8813 = vld [vmem:[#allocation24 + $0x670] sm:$0xf]
    %v8814 = vld [vmem:[#allocation24 + $0x674] sm:$0xff]
    %v8815 = vld [vmem:[#allocation24 + $0x67c] sm:$0xff]
    %v8816 = vld [vmem:[#allocation24 + $0x684] sm:$0xff]
    %v8817 = vld [vmem:[#allocation24 + $0x68c] sm:$0xf]
    %v8818 = vld [vmem:[#allocation24 + $0x690] sm:$0xff]
    %v8819 = vld [vmem:[#allocation24 + $0x698] sm:$0xff]
    %v8820 = vld [vmem:[#allocation24 + $0x6a0] sm:$0xff]
    %v8821 = vld [vmem:[#allocation24 + $0x6a8] sm:$0xf]
    %v8822 = vld [vmem:[#allocation24 + $0x6ac] sm:$0xff]
    %v8823 = vld [vmem:[#allocation24 + $0x6b4] sm:$0xff]
    %v8824 = vld [vmem:[#allocation24 + $0x6bc] sm:$0xff]
    %v8825 = vld [vmem:[#allocation24 + $0x6c4] sm:$0xf]
    %v8826 = vld [vmem:[#allocation24 + $0x6c8] sm:$0xff]
    %v8827 = vld [vmem:[#allocation24 + $0x6d0] sm:$0xff]
    %v8828 = vld [vmem:[#allocation24 + $0x6d8] sm:$0xff]
    %v8829 = vld [vmem:[#allocation24 + $0x6e0] sm:$0xf]
    %v8830 = vld [vmem:[#allocation24 + $0x6e4] sm:$0xff]
    %v8831 = vld [vmem:[#allocation24 + $0x6ec] sm:$0xff]
    %v8832 = vld [vmem:[#allocation24 + $0x6f4] sm:$0xff]
    %v8833 = vld [vmem:[#allocation24 + $0x6fc] sm:$0xf]
    %v8834 = vld [vmem:[#allocation24 + $0x700] sm:$0xff]
    %v8835 = vld [vmem:[#allocation24 + $0x708] sm:$0xff]
    %v8836 = vld [vmem:[#allocation24 + $0x710] sm:$0xff]
    %v8837 = vld [vmem:[#allocation24 + $0x718] sm:$0xf]
    %v8838 = vld [vmem:[#allocation24 + $0x71c] sm:$0xff]
    %v8839 = vld [vmem:[#allocation24 + $0x724] sm:$0xff]
    %v8840 = vld [vmem:[#allocation24 + $0x72c] sm:$0xff]
    %v8841 = vld [vmem:[#allocation24 + $0x734] sm:$0xf]
    %v8842 = vld [vmem:[#allocation24 + $0x738] sm:$0xff]
    %v8843 = vld [vmem:[#allocation24 + $0x740] sm:$0xff]
    %v8844 = vld [vmem:[#allocation24 + $0x748] sm:$0xff]
    %v8845 = vld [vmem:[#allocation24 + $0x750] sm:$0xf]
    %v8846 = vld [vmem:[#allocation24 + $0x754] sm:$0xff]
    %v8847 = vld [vmem:[#allocation24 + $0x75c] sm:$0xff]
    %v8848 = vld [vmem:[#allocation24 + $0x764] sm:$0xff]
    %v8849 = vld [vmem:[#allocation24 + $0x76c] sm:$0xf]
    %v8850 = vld [vmem:[#allocation24 + $0x770] sm:$0xff]
    %v8851 = vld [vmem:[#allocation24 + $0x778] sm:$0xff]
    %v8852 = vld [vmem:[#allocation24 + $0x780] sm:$0xff]
    %v8853 = vld [vmem:[#allocation24 + $0x788] sm:$0xf]
    %v8854 = vld [vmem:[#allocation24 + $0x78c] sm:$0xff]
    %v8855 = vld [vmem:[#allocation24 + $0x794] sm:$0xff]
    %v8856 = vld [vmem:[#allocation24 + $0x79c] sm:$0xff]
    %v8857 = vld [vmem:[#allocation24 + $0x7a4] sm:$0xf]
    %v8858 = vld [vmem:[#allocation24 + $0x7a8] sm:$0xff]
    %v8859 = vld [vmem:[#allocation24 + $0x7b0] sm:$0xff]
    %v8860 = vld [vmem:[#allocation24 + $0x7b8] sm:$0xff]
    %v8861 = vld [vmem:[#allocation24 + $0x7c0] sm:$0xf]
    %v8862 = vld [vmem:[#allocation24 + $0x7c4] sm:$0xff]
    %v8863 = vld [vmem:[#allocation24 + $0x7cc] sm:$0xff]
    %v8864 = vld [vmem:[#allocation24 + $0x7d4] sm:$0xff]
    %v8865 = vld [vmem:[#allocation24 + $0x7dc] sm:$0xf]
    %v8866 = vld [vmem:[#allocation24 + $0x7e0] sm:$0xff]
    %v8867 = vld [vmem:[#allocation24 + $0x7e8] sm:$0xff]
    %v8868 = vld [vmem:[#allocation24 + $0x7f0] sm:$0xff]
    %v8869 = vld [vmem:[#allocation24 + $0x7f8] sm:$0xf]
    %v8870 = vld [vmem:[#allocation24 + $0x7fc] sm:$0xff]
    %v8871 = vld [vmem:[#allocation24 + $0x804] sm:$0xff]
    %v8872 = vld [vmem:[#allocation24 + $0x80c] sm:$0xff]
    %v8873 = vld [vmem:[#allocation24 + $0x814] sm:$0xf]
    %v8874 = vld [vmem:[#allocation24 + $0x818] sm:$0xff]
    %v8875 = vld [vmem:[#allocation24 + $0x820] sm:$0xff]
    %v8876 = vld [vmem:[#allocation24 + $0x828] sm:$0xff]
    %v8877 = vld [vmem:[#allocation24 + $0x830] sm:$0xf]
    %v8878 = vld [vmem:[#allocation24 + $0x834] sm:$0xff]
    %v8879 = vld [vmem:[#allocation24 + $0x83c] sm:$0xff]
    %v8880 = vld [vmem:[#allocation24 + $0x844] sm:$0xff]
    %v8881 = vld [vmem:[#allocation24 + $0x84c] sm:$0xf]
    %v8882 = vld [vmem:[#allocation24 + $0x850] sm:$0xff]
    %v8883 = vld [vmem:[#allocation24 + $0x858] sm:$0xff]
    %v8884 = vld [vmem:[#allocation24 + $0x860] sm:$0xff]
    %v8885 = vld [vmem:[#allocation24 + $0x868] sm:$0xf]
    %v8886 = vld [vmem:[#allocation24 + $0x86c] sm:$0xff]
    %v8887 = vld [vmem:[#allocation24 + $0x874] sm:$0xff]
    %v8888 = vld [vmem:[#allocation24 + $0x87c] sm:$0xff]
    %v8889 = vld [vmem:[#allocation24 + $0x884] sm:$0xf]
    %v8890 = vld [vmem:[#allocation24 + $0x888] sm:$0xff]
    %v8891 = vld [vmem:[#allocation24 + $0x890] sm:$0xff]
    %v8892 = vld [vmem:[#allocation24 + $0x898] sm:$0xff]
    %v8893 = vld [vmem:[#allocation24 + $0x8a0] sm:$0xf]
    %v8894 = vld [vmem:[#allocation24 + $0x8a4] sm:$0xff]
    %v8895 = vld [vmem:[#allocation24 + $0x8ac] sm:$0xff]
    %v8896 = vld [vmem:[#allocation24 + $0x8b4] sm:$0xff]
    %v8897 = vld [vmem:[#allocation24 + $0x8bc] sm:$0xf]
    %v8898 = vld [vmem:[#allocation24 + $0x8c0] sm:$0xff]
    %v8899 = vld [vmem:[#allocation24 + $0x8c8] sm:$0xff]
    %v8900 = vld [vmem:[#allocation24 + $0x8d0] sm:$0xff]
    %v8901 = vld [vmem:[#allocation24 + $0x8d8] sm:$0xf]
    %v8902 = vld [vmem:[#allocation24 + $0x8dc] sm:$0xff]
    %v8903 = vld [vmem:[#allocation24 + $0x8e4] sm:$0xff]
    %v8904 = vld [vmem:[#allocation24 + $0x8ec] sm:$0xff]
    %v8905 = vld [vmem:[#allocation24 + $0x8f4] sm:$0xf]
    %v8906 = vld [vmem:[#allocation24 + $0x8f8] sm:$0xff]
    %v8907 = vld [vmem:[#allocation24 + $0x900] sm:$0xff]
    %v8908 = vld [vmem:[#allocation24 + $0x908] sm:$0xff]
    %v8909 = vld [vmem:[#allocation24 + $0x910] sm:$0xf]
    %v8910 = vld [vmem:[#allocation24 + $0x914] sm:$0xff]
    %v8911 = vld [vmem:[#allocation24 + $0x91c] sm:$0xff]
    %v8912 = vld [vmem:[#allocation24 + $0x924] sm:$0xff]
    %v8913 = vld [vmem:[#allocation24 + $0x92c] sm:$0xf]
    %v8914 = vld [vmem:[#allocation24 + $0x930] sm:$0xff]
    %v8915 = vld [vmem:[#allocation24 + $0x938] sm:$0xff]
    %v8916 = vld [vmem:[#allocation24 + $0x940] sm:$0xff]
    %v8917 = vld [vmem:[#allocation24 + $0x948] sm:$0xf]
    %v8918 = vld [vmem:[#allocation24 + $0x94c] sm:$0xff]
    %v8919 = vld [vmem:[#allocation24 + $0x954] sm:$0xff]
    %v8920 = vld [vmem:[#allocation24 + $0x95c] sm:$0xff]
    %v8921 = vld [vmem:[#allocation24 + $0x964] sm:$0xf]
    %v8922 = vld [vmem:[#allocation24 + $0x968] sm:$0xff]
    %v8923 = vld [vmem:[#allocation24 + $0x970] sm:$0xff]
    %v8924 = vld [vmem:[#allocation24 + $0x978] sm:$0xff]
    %v8925 = vld [vmem:[#allocation24 + $0x980] sm:$0xf]
    %v8926 = vld [vmem:[#allocation24 + $0x984] sm:$0xff]
    %v8927 = vld [vmem:[#allocation24 + $0x98c] sm:$0xff]
    %v8928 = vld [vmem:[#allocation24 + $0x994] sm:$0xff]
    %v8929 = vld [vmem:[#allocation24 + $0x99c] sm:$0xf]
    %v8930 = vld [vmem:[#allocation24 + $0x9a0] sm:$0xff]
    %v8931 = vld [vmem:[#allocation24 + $0x9a8] sm:$0xff]
    %v8932 = vld [vmem:[#allocation24 + $0x9b0] sm:$0xff]
    %v8933 = vld [vmem:[#allocation24 + $0x9b8] sm:$0xf]
    %v8934 = vld [vmem:[#allocation24 + $0x9bc] sm:$0xff]
    %v8935 = vld [vmem:[#allocation24 + $0x9c4] sm:$0xff]
    %v8936 = vld [vmem:[#allocation24 + $0x9cc] sm:$0xff]
    %v8937 = vld [vmem:[#allocation24 + $0x9d4] sm:$0xf]
    %v8938 = vld [vmem:[#allocation24 + $0x9d8] sm:$0xff]
    %v8939 = vld [vmem:[#allocation24 + $0x9e0] sm:$0xff]
    %v8940 = vld [vmem:[#allocation24 + $0x9e8] sm:$0xff]
    %v8941 = vld [vmem:[#allocation24 + $0x9f0] sm:$0xf]
    %v8942 = vld [vmem:[#allocation24 + $0x9f4] sm:$0xff]
    %v8943 = vld [vmem:[#allocation24 + $0x9fc] sm:$0xff]
    %v8944 = vld [vmem:[#allocation24 + $0xa04] sm:$0xff]
    %v8945 = vld [vmem:[#allocation24 + $0xa0c] sm:$0xf]
    %v8946 = vld [vmem:[#allocation24 + $0xa10] sm:$0xff]
    %v8947 = vld [vmem:[#allocation24 + $0xa18] sm:$0xff]
    %v8948 = vld [vmem:[#allocation24 + $0xa20] sm:$0xff]
    %v8949 = vld [vmem:[#allocation24 + $0xa28] sm:$0xf]
    %v8950 = vld [vmem:[#allocation24 + $0xa2c] sm:$0xff]
    %v8951 = vld [vmem:[#allocation24 + $0xa34] sm:$0xff]
    %v8952 = vld [vmem:[#allocation24 + $0xa3c] sm:$0xff]
    %v8953 = vld [vmem:[#allocation24 + $0xa44] sm:$0xf]
    %v8954 = vld [vmem:[#allocation24 + $0xa48] sm:$0xff]
    %v8955 = vld [vmem:[#allocation24 + $0xa50] sm:$0xff]
    %v8956 = vld [vmem:[#allocation24 + $0xa58] sm:$0xff]
    %v8957 = vld [vmem:[#allocation24 + $0xa60] sm:$0xf]
    %v8958 = vld [vmem:[#allocation24 + $0xa64] sm:$0xff]
    %v8959 = vld [vmem:[#allocation24 + $0xa6c] sm:$0xff]
    %v8960 = vld [vmem:[#allocation24 + $0xa74] sm:$0xff]
    %v8961 = vld [vmem:[#allocation24 + $0xa7c] sm:$0xf]
    %v8962 = vld [vmem:[#allocation24 + $0xa80] sm:$0xff]
    %v8963 = vld [vmem:[#allocation24 + $0xa88] sm:$0xff]
    %v8964 = vld [vmem:[#allocation24 + $0xa90] sm:$0xff]
    %v8965 = vld [vmem:[#allocation24 + $0xa98] sm:$0xf]
    %v8966 = vld [vmem:[#allocation24 + $0xa9c] sm:$0xff]
    %v8967 = vld [vmem:[#allocation24 + $0xaa4] sm:$0xff]
    %v8968 = vld [vmem:[#allocation24 + $0xaac] sm:$0xff]
    %v8969 = vld [vmem:[#allocation24 + $0xab4] sm:$0xf]
    %v8970 = vld [vmem:[#allocation24 + $0xab8] sm:$0xff]
    %v8971 = vld [vmem:[#allocation24 + $0xac0] sm:$0xff]
    %v8972 = vld [vmem:[#allocation24 + $0xac8] sm:$0xff]
    %v8973 = vld [vmem:[#allocation24 + $0xad0] sm:$0xf]
    %v8974 = vld [vmem:[#allocation24 + $0xad4] sm:$0xff]
    %v8975 = vld [vmem:[#allocation24 + $0xadc] sm:$0xff]
    %v8976 = vld [vmem:[#allocation24 + $0xae4] sm:$0xff]
    %v8977 = vld [vmem:[#allocation24 + $0xaec] sm:$0xf]
    %v8978 = vld [vmem:[#allocation24 + $0xaf0] sm:$0xff]
    %v8979 = vld [vmem:[#allocation24 + $0xaf8] sm:$0xff]
    %v8980 = vld [vmem:[#allocation24 + $0xb00] sm:$0xff]
    %v8981 = vld [vmem:[#allocation24 + $0xb08] sm:$0xf]
    %v8982 = vld [vmem:[#allocation24 + $0xb0c] sm:$0xff]
    %v8983 = vld [vmem:[#allocation24 + $0xb14] sm:$0xff]
    %v8984 = vld [vmem:[#allocation24 + $0xb1c] sm:$0xff]
    %v8985 = vld [vmem:[#allocation24 + $0xb24] sm:$0xf]
    %v8986 = vld [vmem:[#allocation24 + $0xb28] sm:$0xff]
    %v8987 = vld [vmem:[#allocation24 + $0xb30] sm:$0xff]
    %v8988 = vld [vmem:[#allocation24 + $0xb38] sm:$0xff]
    %v8989 = vld [vmem:[#allocation24 + $0xb40] sm:$0xf]
    %v8990 = vld [vmem:[#allocation24 + $0xb44] sm:$0xff]
    %v8991 = vld [vmem:[#allocation24 + $0xb4c] sm:$0xff]
    %v8992 = vld [vmem:[#allocation24 + $0xb54] sm:$0xff]
    %v8993 = vld [vmem:[#allocation24 + $0xb5c] sm:$0xf]
    %v8994 = vld [vmem:[#allocation24 + $0xb60] sm:$0xff]
    %v8995 = vld [vmem:[#allocation24 + $0xb68] sm:$0xff]
    %v8996 = vld [vmem:[#allocation24 + $0xb70] sm:$0xff]
    %v8997 = vld [vmem:[#allocation24 + $0xb78] sm:$0xf]
    %v8998 = vld [vmem:[#allocation24 + $0xb7c] sm:$0xff]
    %v8999 = vld [vmem:[#allocation24 + $0xb84] sm:$0xff]
    %v9000 = vld [vmem:[#allocation24 + $0xb8c] sm:$0xff]
    %v9001 = vld [vmem:[#allocation24 + $0xb94] sm:$0xf]
    %v9002 = vld [vmem:[#allocation24 + $0xb98] sm:$0xff]
    %v9003 = vld [vmem:[#allocation24 + $0xba0] sm:$0xff]
    %v9004 = vld [vmem:[#allocation24 + $0xba8] sm:$0xff]
    %v9005 = vld [vmem:[#allocation24 + $0xbb0] sm:$0xf]
    %v9006 = vld [vmem:[#allocation24 + $0xbb4] sm:$0xff]
    %v9007 = vld [vmem:[#allocation24 + $0xbbc] sm:$0xff]
    %v9008 = vld [vmem:[#allocation24 + $0xbc4] sm:$0xff]
    %v9009 = vld [vmem:[#allocation24 + $0xbcc] sm:$0xf]
    %v9010 = vld [vmem:[#allocation24 + $0xbd0] sm:$0xff]
    %v9011 = vld [vmem:[#allocation24 + $0xbd8] sm:$0xff]
    %v9012 = vld [vmem:[#allocation24 + $0xbe0] sm:$0xff]
    %v9013 = vld [vmem:[#allocation24 + $0xbe8] sm:$0xf]
    %v9014 = vld [vmem:[#allocation24 + $0xbec] sm:$0xff]
    %v9015 = vld [vmem:[#allocation24 + $0xbf4] sm:$0xff]
    %v9016 = vld [vmem:[#allocation24 + $0xbfc] sm:$0xff]
    %v9017 = vld [vmem:[#allocation24 + $0xc04] sm:$0xf]
    %v9018 = vld [vmem:[#allocation24 + $0xc08] sm:$0xff]
    %v9019 = vld [vmem:[#allocation24 + $0xc10] sm:$0xff]
    %v9020 = vld [vmem:[#allocation24 + $0xc18] sm:$0xff]
    %v9021 = vld [vmem:[#allocation24 + $0xc20] sm:$0xf]
    %v9022 = vld [vmem:[#allocation24 + $0xc24] sm:$0xff]
    %v9023 = vld [vmem:[#allocation24 + $0xc2c] sm:$0xff]
    %v9024 = vld [vmem:[#allocation24 + $0xc34] sm:$0xff]
    %v9025 = vld [vmem:[#allocation24 + $0xc3c] sm:$0xf]
    %v9026 = vld [vmem:[#allocation24 + $0xc40] sm:$0xff]
    %v9027 = vld [vmem:[#allocation24 + $0xc48] sm:$0xff]
    %v9028 = vld [vmem:[#allocation24 + $0xc50] sm:$0xff]
    %v9029 = vld [vmem:[#allocation24 + $0xc58] sm:$0xf]
    %v9030 = vld [vmem:[#allocation24 + $0xc5c] sm:$0xff]
    %v9031 = vld [vmem:[#allocation24 + $0xc64] sm:$0xff]
    %v9032 = vld [vmem:[#allocation24 + $0xc6c] sm:$0xff]
    %v9033 = vld [vmem:[#allocation24 + $0xc74] sm:$0xf]
    %v9034 = vld [vmem:[#allocation24 + $0xc78] sm:$0xff]
    %v9035 = vld [vmem:[#allocation24 + $0xc80] sm:$0xff]
    %v9036 = vld [vmem:[#allocation24 + $0xc88] sm:$0xff]
    %v9037 = vld [vmem:[#allocation24 + $0xc90] sm:$0xf]
    %v9038 = vld [vmem:[#allocation24 + $0xc94] sm:$0xff]
    %v9039 = vld [vmem:[#allocation24 + $0xc9c] sm:$0xff]
    %v9040 = vld [vmem:[#allocation24 + $0xca4] sm:$0xff]
    %v9041 = vld [vmem:[#allocation24 + $0xcac] sm:$0xf]
    %v9042 = vld [vmem:[#allocation24 + $0xcb0] sm:$0xff]
    %v9043 = vld [vmem:[#allocation24 + $0xcb8] sm:$0xff]
    %v9044 = vld [vmem:[#allocation24 + $0xcc0] sm:$0xff]
    %v9045 = vld [vmem:[#allocation24 + $0xcc8] sm:$0xf]
    %v9046 = vld [vmem:[#allocation24 + $0xccc] sm:$0xff]
    %v9047 = vld [vmem:[#allocation24 + $0xcd4] sm:$0xff]
    %v9048 = vld [vmem:[#allocation24 + $0xcdc] sm:$0xff]
    %v9049 = vld [vmem:[#allocation24 + $0xce4] sm:$0xf]
    %v9050 = vld [vmem:[#allocation24 + $0xce8] sm:$0xff]
    %v9051 = vld [vmem:[#allocation24 + $0xcf0] sm:$0xff]
    %v9052 = vld [vmem:[#allocation24 + $0xcf8] sm:$0xff]
    %v9053 = vld [vmem:[#allocation24 + $0xd00] sm:$0xf]
    %v9054 = vld [vmem:[#allocation24 + $0xd04] sm:$0xff]
    %v9055 = vld [vmem:[#allocation24 + $0xd0c] sm:$0xff]
    %v9056 = vld [vmem:[#allocation24 + $0xd14] sm:$0xff]
    %v9057 = vld [vmem:[#allocation24 + $0xd1c] sm:$0xf]
    %v9058 = vld [vmem:[#allocation24 + $0xd20] sm:$0xff]
    %v9059 = vld [vmem:[#allocation24 + $0xd28] sm:$0xff]
    %v9060 = vld [vmem:[#allocation24 + $0xd30] sm:$0xff]
    %v9061 = vld [vmem:[#allocation24 + $0xd38] sm:$0xf]
    %v9062 = vld [vmem:[#allocation24 + $0xd3c] sm:$0xff]
    %v9063 = vld [vmem:[#allocation24 + $0xd44] sm:$0xff]
    %v9064 = vld [vmem:[#allocation24 + $0xd4c] sm:$0xff]
    %v9065 = vld [vmem:[#allocation24 + $0xd54] sm:$0xf]
    %v9066 = vld [vmem:[#allocation24 + $0xd58] sm:$0xff]
    %v9067 = vld [vmem:[#allocation24 + $0xd60] sm:$0xff]
    %v9068 = vld [vmem:[#allocation24 + $0xd68] sm:$0xff]
    %v9069 = vld [vmem:[#allocation24 + $0xd70] sm:$0xf]
    %v9070 = vld [vmem:[#allocation24 + $0xd74] sm:$0xff]
    %v9071 = vld [vmem:[#allocation24 + $0xd7c] sm:$0xff]
    %v9072 = vld [vmem:[#allocation24 + $0xd84] sm:$0xff]
    %v9073 = vld [vmem:[#allocation24 + $0xd8c] sm:$0xf]
    %v9074 = vld [vmem:[#allocation24 + $0xd90] sm:$0xff]
    %v9075 = vld [vmem:[#allocation24 + $0xd98] sm:$0xff]
    %v9076 = vld [vmem:[#allocation24 + $0xda0] sm:$0xff]
    %v9077 = vld [vmem:[#allocation24 + $0xda8] sm:$0xf]
    %v9078 = vld [vmem:[#allocation24 + $0xdac] sm:$0xff]
    %v9079 = vld [vmem:[#allocation24 + $0xdb4] sm:$0xff]
    %v9080 = vld [vmem:[#allocation24 + $0xdbc] sm:$0xff]
    %v9081 = vld [vmem:[#allocation24 + $0xdc4] sm:$0xf]
    %v9082 = vld [vmem:[#allocation24 + $0xdc8] sm:$0xff]
    %v9083 = vld [vmem:[#allocation24 + $0xdd0] sm:$0xff]
    %v9084 = vld [vmem:[#allocation24 + $0xdd8] sm:$0xff]
    %v9085 = vld [vmem:[#allocation24 + $0xde0] sm:$0xf]
    %v9086 = vld [vmem:[#allocation24 + $0xde4] sm:$0xff]
    %v9087 = vld [vmem:[#allocation24 + $0xdec] sm:$0xff]
    %v9088 = vld [vmem:[#allocation24 + $0xdf4] sm:$0xff]
    %v9089 = vld [vmem:[#allocation24 + $0xdfc] sm:$0xf]
    %v9090 = vld [vmem:[#allocation25] sm:$0xff]
    %v9092 = vlaneseq
    %v9093 = vshrl.u32 %v9092, 7
    %v9094 = vsub.s32 0, %v9093
    %v9095 = vrot.slane %v9090, %v9094
    %v9096 = vlaneseq
    %v9097 = vshrl.u32 %v9096, 7
    %v9098 = vsub.s32 1, %v9097
    %v9099 = vrot.slane %v9090, %v9098
    %v9100 = vlaneseq
    %v9101 = vshrl.u32 %v9100, 7
    %v9102 = vsub.s32 2, %v9101
    %v9103 = vrot.slane %v9090, %v9102
    %v9104 = vlaneseq
    %v9105 = vshrl.u32 %v9104, 7
    %v9106 = vsub.s32 3, %v9105
    %v9107 = vrot.slane %v9090, %v9106
    %v9108 = vlaneseq
    %v9109 = vshrl.u32 %v9108, 7
    %v9110 = vsub.s32 4, %v9109
    %v9111 = vrot.slane %v9090, %v9110
    %v9112 = vlaneseq
    %v9113 = vshrl.u32 %v9112, 7
    %v9114 = vsub.s32 5, %v9113
    %v9115 = vrot.slane %v9090, %v9114
    %v9116 = vlaneseq
    %v9117 = vshrl.u32 %v9116, 7
    %v9118 = vsub.s32 6, %v9117
    %v9119 = vrot.slane %v9090, %v9118
    %v9639 = vunpack.c.l.b16 %v8578
    %v9640 = vunpack.c.h.b16 %v8578
    %v9641 = vunpack.c.l.b16 %v8579
    %v9642 = vunpack.c.h.b16 %v8579
    %v9643 = vunpack.c.l.b16 %v8580
    %v9644 = vunpack.c.h.b16 %v8580
    %v9645 = vunpack.c.l.b16 %v8581
    %v9646 = vunpack.c.l.b16 %v8582
    %v9647 = vunpack.c.h.b16 %v8582
    %v9648 = vunpack.c.l.b16 %v8583
    %v9649 = vunpack.c.h.b16 %v8583
    %v9650 = vunpack.c.l.b16 %v8584
    %v9651 = vunpack.c.h.b16 %v8584
    %v9652 = vunpack.c.l.b16 %v8585
    %v9653 = vunpack.c.l.b16 %v8586
    %v9654 = vunpack.c.h.b16 %v8586
    %v9655 = vunpack.c.l.b16 %v8587
    %v9656 = vunpack.c.h.b16 %v8587
    %v9657 = vunpack.c.l.b16 %v8588
    %v9658 = vunpack.c.h.b16 %v8588
    %v9659 = vunpack.c.l.b16 %v8589
    %v9660 = vunpack.c.l.b16 %v8590
    %v9661 = vunpack.c.h.b16 %v8590
    %v9662 = vunpack.c.l.b16 %v8591
    %v9663 = vunpack.c.h.b16 %v8591
    %v9664 = vunpack.c.l.b16 %v8592
    %v9665 = vunpack.c.h.b16 %v8592
    %v9666 = vunpack.c.l.b16 %v8593
    %v9667 = vunpack.c.l.b16 %v8594
    %v9668 = vunpack.c.h.b16 %v8594
    %v9669 = vunpack.c.l.b16 %v8595
    %v9670 = vunpack.c.h.b16 %v8595
    %v9671 = vunpack.c.l.b16 %v8596
    %v9672 = vunpack.c.h.b16 %v8596
    %v9673 = vunpack.c.l.b16 %v8597
    %v9674 = vunpack.c.l.b16 %v8598
    %v9675 = vunpack.c.h.b16 %v8598
    %v9676 = vunpack.c.l.b16 %v8599
    %v9677 = vunpack.c.h.b16 %v8599
    %v9678 = vunpack.c.l.b16 %v8600
    %v9679 = vunpack.c.h.b16 %v8600
    %v9680 = vunpack.c.l.b16 %v8601
    %v9681 = vunpack.c.l.b16 %v8602
    %v9682 = vunpack.c.h.b16 %v8602
    %v9683 = vunpack.c.l.b16 %v8603
    %v9684 = vunpack.c.h.b16 %v8603
    %v9685 = vunpack.c.l.b16 %v8604
    %v9686 = vunpack.c.h.b16 %v8604
    %v9687 = vunpack.c.l.b16 %v8605
    %v9688 = vunpack.c.l.b16 %v8606
    %v9689 = vunpack.c.h.b16 %v8606
    %v9690 = vunpack.c.l.b16 %v8607
    %v9691 = vunpack.c.h.b16 %v8607
    %v9692 = vunpack.c.l.b16 %v8608
    %v9693 = vunpack.c.h.b16 %v8608
    %v9694 = vunpack.c.l.b16 %v8609
    %v9695 = vunpack.c.l.b16 %v8610
    %v9696 = vunpack.c.h.b16 %v8610
    %v9697 = vunpack.c.l.b16 %v8611
    %v9698 = vunpack.c.h.b16 %v8611
    %v9699 = vunpack.c.l.b16 %v8612
    %v9700 = vunpack.c.h.b16 %v8612
    %v9701 = vunpack.c.l.b16 %v8613
    %v9702 = vunpack.c.l.b16 %v8614
    %v9703 = vunpack.c.h.b16 %v8614
    %v9704 = vunpack.c.l.b16 %v8615
    %v9705 = vunpack.c.h.b16 %v8615
    %v9706 = vunpack.c.l.b16 %v8616
    %v9707 = vunpack.c.h.b16 %v8616
    %v9708 = vunpack.c.l.b16 %v8617
    %v9709 = vunpack.c.l.b16 %v8618
    %v9710 = vunpack.c.h.b16 %v8618
    %v9711 = vunpack.c.l.b16 %v8619
    %v9712 = vunpack.c.h.b16 %v8619
    %v9713 = vunpack.c.l.b16 %v8620
    %v9714 = vunpack.c.h.b16 %v8620
    %v9715 = vunpack.c.l.b16 %v8621
    %v9716 = vunpack.c.l.b16 %v8622
    %v9717 = vunpack.c.h.b16 %v8622
    %v9718 = vunpack.c.l.b16 %v8623
    %v9719 = vunpack.c.h.b16 %v8623
    %v9720 = vunpack.c.l.b16 %v8624
    %v9721 = vunpack.c.h.b16 %v8624
    %v9722 = vunpack.c.l.b16 %v8625
    %v9723 = vunpack.c.l.b16 %v8626
    %v9724 = vunpack.c.h.b16 %v8626
    %v9725 = vunpack.c.l.b16 %v8627
    %v9726 = vunpack.c.h.b16 %v8627
    %v9727 = vunpack.c.l.b16 %v8628
    %v9728 = vunpack.c.h.b16 %v8628
    %v9729 = vunpack.c.l.b16 %v8629
    %v9730 = vunpack.c.l.b16 %v8630
    %v9731 = vunpack.c.h.b16 %v8630
    %v9732 = vunpack.c.l.b16 %v8631
    %v9733 = vunpack.c.h.b16 %v8631
    %v9734 = vunpack.c.l.b16 %v8632
    %v9735 = vunpack.c.h.b16 %v8632
    %v9736 = vunpack.c.l.b16 %v8633
    %v9737 = vunpack.c.l.b16 %v8634
    %v9738 = vunpack.c.h.b16 %v8634
    %v9739 = vunpack.c.l.b16 %v8635
    %v9740 = vunpack.c.h.b16 %v8635
    %v9741 = vunpack.c.l.b16 %v8636
    %v9742 = vunpack.c.h.b16 %v8636
    %v9743 = vunpack.c.l.b16 %v8637
    %v9744 = vunpack.c.l.b16 %v8638
    %v9745 = vunpack.c.h.b16 %v8638
    %v9746 = vunpack.c.l.b16 %v8639
    %v9747 = vunpack.c.h.b16 %v8639
    %v9748 = vunpack.c.l.b16 %v8640
    %v9749 = vunpack.c.h.b16 %v8640
    %v9750 = vunpack.c.l.b16 %v8641
    %v9751 = vunpack.c.l.b16 %v8642
    %v9752 = vunpack.c.h.b16 %v8642
    %v9753 = vunpack.c.l.b16 %v8643
    %v9754 = vunpack.c.h.b16 %v8643
    %v9755 = vunpack.c.l.b16 %v8644
    %v9756 = vunpack.c.h.b16 %v8644
    %v9757 = vunpack.c.l.b16 %v8645
    %v9758 = vunpack.c.l.b16 %v8646
    %v9759 = vunpack.c.h.b16 %v8646
    %v9760 = vunpack.c.l.b16 %v8647
    %v9761 = vunpack.c.h.b16 %v8647
    %v9762 = vunpack.c.l.b16 %v8648
    %v9763 = vunpack.c.h.b16 %v8648
    %v9764 = vunpack.c.l.b16 %v8649
    %v9765 = vunpack.c.l.b16 %v8650
    %v9766 = vunpack.c.h.b16 %v8650
    %v9767 = vunpack.c.l.b16 %v8651
    %v9768 = vunpack.c.h.b16 %v8651
    %v9769 = vunpack.c.l.b16 %v8652
    %v9770 = vunpack.c.h.b16 %v8652
    %v9771 = vunpack.c.l.b16 %v8653
    %v9772 = vunpack.c.l.b16 %v8654
    %v9773 = vunpack.c.h.b16 %v8654
    %v9774 = vunpack.c.l.b16 %v8655
    %v9775 = vunpack.c.h.b16 %v8655
    %v9776 = vunpack.c.l.b16 %v8656
    %v9777 = vunpack.c.h.b16 %v8656
    %v9778 = vunpack.c.l.b16 %v8657
    %v9779 = vunpack.c.l.b16 %v8658
    %v9780 = vunpack.c.h.b16 %v8658
    %v9781 = vunpack.c.l.b16 %v8659
    %v9782 = vunpack.c.h.b16 %v8659
    %v9783 = vunpack.c.l.b16 %v8660
    %v9784 = vunpack.c.h.b16 %v8660
    %v9785 = vunpack.c.l.b16 %v8661
    %v9786 = vunpack.c.l.b16 %v8662
    %v9787 = vunpack.c.h.b16 %v8662
    %v9788 = vunpack.c.l.b16 %v8663
    %v9789 = vunpack.c.h.b16 %v8663
    %v9790 = vunpack.c.l.b16 %v8664
    %v9791 = vunpack.c.h.b16 %v8664
    %v9792 = vunpack.c.l.b16 %v8665
    %v9793 = vunpack.c.l.b16 %v8666
    %v9794 = vunpack.c.h.b16 %v8666
    %v9795 = vunpack.c.l.b16 %v8667
    %v9796 = vunpack.c.h.b16 %v8667
    %v9797 = vunpack.c.l.b16 %v8668
    %v9798 = vunpack.c.h.b16 %v8668
    %v9799 = vunpack.c.l.b16 %v8669
    %v9800 = vunpack.c.l.b16 %v8670
    %v9801 = vunpack.c.h.b16 %v8670
    %v9802 = vunpack.c.l.b16 %v8671
    %v9803 = vunpack.c.h.b16 %v8671
    %v9804 = vunpack.c.l.b16 %v8672
    %v9805 = vunpack.c.h.b16 %v8672
    %v9806 = vunpack.c.l.b16 %v8673
    %v9807 = vunpack.c.l.b16 %v8674
    %v9808 = vunpack.c.h.b16 %v8674
    %v9809 = vunpack.c.l.b16 %v8675
    %v9810 = vunpack.c.h.b16 %v8675
    %v9811 = vunpack.c.l.b16 %v8676
    %v9812 = vunpack.c.h.b16 %v8676
    %v9813 = vunpack.c.l.b16 %v8677
    %v9814 = vunpack.c.l.b16 %v8678
    %v9815 = vunpack.c.h.b16 %v8678
    %v9816 = vunpack.c.l.b16 %v8679
    %v9817 = vunpack.c.h.b16 %v8679
    %v9818 = vunpack.c.l.b16 %v8680
    %v9819 = vunpack.c.h.b16 %v8680
    %v9820 = vunpack.c.l.b16 %v8681
    %v9821 = vunpack.c.l.b16 %v8682
    %v9822 = vunpack.c.h.b16 %v8682
    %v9823 = vunpack.c.l.b16 %v8683
    %v9824 = vunpack.c.h.b16 %v8683
    %v9825 = vunpack.c.l.b16 %v8684
    %v9826 = vunpack.c.h.b16 %v8684
    %v9827 = vunpack.c.l.b16 %v8685
    %v9828 = vunpack.c.l.b16 %v8686
    %v9829 = vunpack.c.h.b16 %v8686
    %v9830 = vunpack.c.l.b16 %v8687
    %v9831 = vunpack.c.h.b16 %v8687
    %v9832 = vunpack.c.l.b16 %v8688
    %v9833 = vunpack.c.h.b16 %v8688
    %v9834 = vunpack.c.l.b16 %v8689
    %v9835 = vunpack.c.l.b16 %v8690
    %v9836 = vunpack.c.h.b16 %v8690
    %v9837 = vunpack.c.l.b16 %v8691
    %v9838 = vunpack.c.h.b16 %v8691
    %v9839 = vunpack.c.l.b16 %v8692
    %v9840 = vunpack.c.h.b16 %v8692
    %v9841 = vunpack.c.l.b16 %v8693
    %v9842 = vunpack.c.l.b16 %v8694
    %v9843 = vunpack.c.h.b16 %v8694
    %v9844 = vunpack.c.l.b16 %v8695
    %v9845 = vunpack.c.h.b16 %v8695
    %v9846 = vunpack.c.l.b16 %v8696
    %v9847 = vunpack.c.h.b16 %v8696
    %v9848 = vunpack.c.l.b16 %v8697
    %v9849 = vunpack.c.l.b16 %v8698
    %v9850 = vunpack.c.h.b16 %v8698
    %v9851 = vunpack.c.l.b16 %v8699
    %v9852 = vunpack.c.h.b16 %v8699
    %v9853 = vunpack.c.l.b16 %v8700
    %v9854 = vunpack.c.h.b16 %v8700
    %v9855 = vunpack.c.l.b16 %v8701
    %v9856 = vunpack.c.l.b16 %v8702
    %v9857 = vunpack.c.h.b16 %v8702
    %v9858 = vunpack.c.l.b16 %v8703
    %v9859 = vunpack.c.h.b16 %v8703
    %v9860 = vunpack.c.l.b16 %v8704
    %v9861 = vunpack.c.h.b16 %v8704
    %v9862 = vunpack.c.l.b16 %v8705
    %v9863 = vunpack.c.l.b16 %v8706
    %v9864 = vunpack.c.h.b16 %v8706
    %v9865 = vunpack.c.l.b16 %v8707
    %v9866 = vunpack.c.h.b16 %v8707
    %v9867 = vunpack.c.l.b16 %v8708
    %v9868 = vunpack.c.h.b16 %v8708
    %v9869 = vunpack.c.l.b16 %v8709
    %v9870 = vunpack.c.l.b16 %v8710
    %v9871 = vunpack.c.h.b16 %v8710
    %v9872 = vunpack.c.l.b16 %v8711
    %v9873 = vunpack.c.h.b16 %v8711
    %v9874 = vunpack.c.l.b16 %v8712
    %v9875 = vunpack.c.h.b16 %v8712
    %v9876 = vunpack.c.l.b16 %v8713
    %v9877 = vunpack.c.l.b16 %v8714
    %v9878 = vunpack.c.h.b16 %v8714
    %v9879 = vunpack.c.l.b16 %v8715
    %v9880 = vunpack.c.h.b16 %v8715
    %v9881 = vunpack.c.l.b16 %v8716
    %v9882 = vunpack.c.h.b16 %v8716
    %v9883 = vunpack.c.l.b16 %v8717
    %v9884 = vunpack.c.l.b16 %v8718
    %v9885 = vunpack.c.h.b16 %v8718
    %v9886 = vunpack.c.l.b16 %v8719
    %v9887 = vunpack.c.h.b16 %v8719
    %v9888 = vunpack.c.l.b16 %v8720
    %v9889 = vunpack.c.h.b16 %v8720
    %v9890 = vunpack.c.l.b16 %v8721
    %v9891 = vunpack.c.l.b16 %v8722
    %v9892 = vunpack.c.h.b16 %v8722
    %v9893 = vunpack.c.l.b16 %v8723
    %v9894 = vunpack.c.h.b16 %v8723
    %v9895 = vunpack.c.l.b16 %v8724
    %v9896 = vunpack.c.h.b16 %v8724
    %v9897 = vunpack.c.l.b16 %v8725
    %v9898 = vunpack.c.l.b16 %v8726
    %v9899 = vunpack.c.h.b16 %v8726
    %v9900 = vunpack.c.l.b16 %v8727
    %v9901 = vunpack.c.h.b16 %v8727
    %v9902 = vunpack.c.l.b16 %v8728
    %v9903 = vunpack.c.h.b16 %v8728
    %v9904 = vunpack.c.l.b16 %v8729
    %v9905 = vunpack.c.l.b16 %v8730
    %v9906 = vunpack.c.h.b16 %v8730
    %v9907 = vunpack.c.l.b16 %v8731
    %v9908 = vunpack.c.h.b16 %v8731
    %v9909 = vunpack.c.l.b16 %v8732
    %v9910 = vunpack.c.h.b16 %v8732
    %v9911 = vunpack.c.l.b16 %v8733
    %v9912 = vunpack.c.l.b16 %v8734
    %v9913 = vunpack.c.h.b16 %v8734
    %v9914 = vunpack.c.l.b16 %v8735
    %v9915 = vunpack.c.h.b16 %v8735
    %v9916 = vunpack.c.l.b16 %v8736
    %v9917 = vunpack.c.h.b16 %v8736
    %v9918 = vunpack.c.l.b16 %v8737
    %v9919 = vunpack.c.l.b16 %v8738
    %v9920 = vunpack.c.h.b16 %v8738
    %v9921 = vunpack.c.l.b16 %v8739
    %v9922 = vunpack.c.h.b16 %v8739
    %v9923 = vunpack.c.l.b16 %v8740
    %v9924 = vunpack.c.h.b16 %v8740
    %v9925 = vunpack.c.l.b16 %v8741
    %v9926 = vunpack.c.l.b16 %v8742
    %v9927 = vunpack.c.h.b16 %v8742
    %v9928 = vunpack.c.l.b16 %v8743
    %v9929 = vunpack.c.h.b16 %v8743
    %v9930 = vunpack.c.l.b16 %v8744
    %v9931 = vunpack.c.h.b16 %v8744
    %v9932 = vunpack.c.l.b16 %v8745
    %v9933 = vunpack.c.l.b16 %v8746
    %v9934 = vunpack.c.h.b16 %v8746
    %v9935 = vunpack.c.l.b16 %v8747
    %v9936 = vunpack.c.h.b16 %v8747
    %v9937 = vunpack.c.l.b16 %v8748
    %v9938 = vunpack.c.h.b16 %v8748
    %v9939 = vunpack.c.l.b16 %v8749
    %v9940 = vunpack.c.l.b16 %v8750
    %v9941 = vunpack.c.h.b16 %v8750
    %v9942 = vunpack.c.l.b16 %v8751
    %v9943 = vunpack.c.h.b16 %v8751
    %v9944 = vunpack.c.l.b16 %v8752
    %v9945 = vunpack.c.h.b16 %v8752
    %v9946 = vunpack.c.l.b16 %v8753
    %v9947 = vunpack.c.l.b16 %v8754
    %v9948 = vunpack.c.h.b16 %v8754
    %v9949 = vunpack.c.l.b16 %v8755
    %v9950 = vunpack.c.h.b16 %v8755
    %v9951 = vunpack.c.l.b16 %v8756
    %v9952 = vunpack.c.h.b16 %v8756
    %v9953 = vunpack.c.l.b16 %v8757
    %v9954 = vunpack.c.l.b16 %v8758
    %v9955 = vunpack.c.h.b16 %v8758
    %v9956 = vunpack.c.l.b16 %v8759
    %v9957 = vunpack.c.h.b16 %v8759
    %v9958 = vunpack.c.l.b16 %v8760
    %v9959 = vunpack.c.h.b16 %v8760
    %v9960 = vunpack.c.l.b16 %v8761
    %v9961 = vunpack.c.l.b16 %v8762
    %v9962 = vunpack.c.h.b16 %v8762
    %v9963 = vunpack.c.l.b16 %v8763
    %v9964 = vunpack.c.h.b16 %v8763
    %v9965 = vunpack.c.l.b16 %v8764
    %v9966 = vunpack.c.h.b16 %v8764
    %v9967 = vunpack.c.l.b16 %v8765
    %v9968 = vunpack.c.l.b16 %v8766
    %v9969 = vunpack.c.h.b16 %v8766
    %v9970 = vunpack.c.l.b16 %v8767
    %v9971 = vunpack.c.h.b16 %v8767
    %v9972 = vunpack.c.l.b16 %v8768
    %v9973 = vunpack.c.h.b16 %v8768
    %v9974 = vunpack.c.l.b16 %v8769
    %v9975 = vunpack.c.l.b16 %v8770
    %v9976 = vunpack.c.h.b16 %v8770
    %v9977 = vunpack.c.l.b16 %v8771
    %v9978 = vunpack.c.h.b16 %v8771
    %v9979 = vunpack.c.l.b16 %v8772
    %v9980 = vunpack.c.h.b16 %v8772
    %v9981 = vunpack.c.l.b16 %v8773
    %v9982 = vunpack.c.l.b16 %v8774
    %v9983 = vunpack.c.h.b16 %v8774
    %v9984 = vunpack.c.l.b16 %v8775
    %v9985 = vunpack.c.h.b16 %v8775
    %v9986 = vunpack.c.l.b16 %v8776
    %v9987 = vunpack.c.h.b16 %v8776
    %v9988 = vunpack.c.l.b16 %v8777
    %v9989 = vunpack.c.l.b16 %v8778
    %v9990 = vunpack.c.h.b16 %v8778
    %v9991 = vunpack.c.l.b16 %v8779
    %v9992 = vunpack.c.h.b16 %v8779
    %v9993 = vunpack.c.l.b16 %v8780
    %v9994 = vunpack.c.h.b16 %v8780
    %v9995 = vunpack.c.l.b16 %v8781
    %v9996 = vunpack.c.l.b16 %v8782
    %v9997 = vunpack.c.h.b16 %v8782
    %v9998 = vunpack.c.l.b16 %v8783
    %v9999 = vunpack.c.h.b16 %v8783
    %v10000 = vunpack.c.l.b16 %v8784
    %v10001 = vunpack.c.h.b16 %v8784
    %v10002 = vunpack.c.l.b16 %v8785
    %v10003 = vunpack.c.l.b16 %v8786
    %v10004 = vunpack.c.h.b16 %v8786
    %v10005 = vunpack.c.l.b16 %v8787
    %v10006 = vunpack.c.h.b16 %v8787
    %v10007 = vunpack.c.l.b16 %v8788
    %v10008 = vunpack.c.h.b16 %v8788
    %v10009 = vunpack.c.l.b16 %v8789
    %v10010 = vunpack.c.l.b16 %v8790
    %v10011 = vunpack.c.h.b16 %v8790
    %v10012 = vunpack.c.l.b16 %v8791
    %v10013 = vunpack.c.h.b16 %v8791
    %v10014 = vunpack.c.l.b16 %v8792
    %v10015 = vunpack.c.h.b16 %v8792
    %v10016 = vunpack.c.l.b16 %v8793
    %v10017 = vunpack.c.l.b16 %v8794
    %v10018 = vunpack.c.h.b16 %v8794
    %v10019 = vunpack.c.l.b16 %v8795
    %v10020 = vunpack.c.h.b16 %v8795
    %v10021 = vunpack.c.l.b16 %v8796
    %v10022 = vunpack.c.h.b16 %v8796
    %v10023 = vunpack.c.l.b16 %v8797
    %v10024 = vunpack.c.l.b16 %v8798
    %v10025 = vunpack.c.h.b16 %v8798
    %v10026 = vunpack.c.l.b16 %v8799
    %v10027 = vunpack.c.h.b16 %v8799
    %v10028 = vunpack.c.l.b16 %v8800
    %v10029 = vunpack.c.h.b16 %v8800
    %v10030 = vunpack.c.l.b16 %v8801
    %v10031 = vunpack.c.l.b16 %v8802
    %v10032 = vunpack.c.h.b16 %v8802
    %v10033 = vunpack.c.l.b16 %v8803
    %v10034 = vunpack.c.h.b16 %v8803
    %v10035 = vunpack.c.l.b16 %v8804
    %v10036 = vunpack.c.h.b16 %v8804
    %v10037 = vunpack.c.l.b16 %v8805
    %v10038 = vunpack.c.l.b16 %v8806
    %v10039 = vunpack.c.h.b16 %v8806
    %v10040 = vunpack.c.l.b16 %v8807
    %v10041 = vunpack.c.h.b16 %v8807
    %v10042 = vunpack.c.l.b16 %v8808
    %v10043 = vunpack.c.h.b16 %v8808
    %v10044 = vunpack.c.l.b16 %v8809
    %v10045 = vunpack.c.l.b16 %v8810
    %v10046 = vunpack.c.h.b16 %v8810
    %v10047 = vunpack.c.l.b16 %v8811
    %v10048 = vunpack.c.h.b16 %v8811
    %v10049 = vunpack.c.l.b16 %v8812
    %v10050 = vunpack.c.h.b16 %v8812
    %v10051 = vunpack.c.l.b16 %v8813
    %v10052 = vunpack.c.l.b16 %v8814
    %v10053 = vunpack.c.h.b16 %v8814
    %v10054 = vunpack.c.l.b16 %v8815
    %v10055 = vunpack.c.h.b16 %v8815
    %v10056 = vunpack.c.l.b16 %v8816
    %v10057 = vunpack.c.h.b16 %v8816
    %v10058 = vunpack.c.l.b16 %v8817
    %v10059 = vunpack.c.l.b16 %v8818
    %v10060 = vunpack.c.h.b16 %v8818
    %v10061 = vunpack.c.l.b16 %v8819
    %v10062 = vunpack.c.h.b16 %v8819
    %v10063 = vunpack.c.l.b16 %v8820
    %v10064 = vunpack.c.h.b16 %v8820
    %v10065 = vunpack.c.l.b16 %v8821
    %v10066 = vunpack.c.l.b16 %v8822
    %v10067 = vunpack.c.h.b16 %v8822
    %v10068 = vunpack.c.l.b16 %v8823
    %v10069 = vunpack.c.h.b16 %v8823
    %v10070 = vunpack.c.l.b16 %v8824
    %v10071 = vunpack.c.h.b16 %v8824
    %v10072 = vunpack.c.l.b16 %v8825
    %v10073 = vunpack.c.l.b16 %v8826
    %v10074 = vunpack.c.h.b16 %v8826
    %v10075 = vunpack.c.l.b16 %v8827
    %v10076 = vunpack.c.h.b16 %v8827
    %v10077 = vunpack.c.l.b16 %v8828
    %v10078 = vunpack.c.h.b16 %v8828
    %v10079 = vunpack.c.l.b16 %v8829
    %v10080 = vunpack.c.l.b16 %v8830
    %v10081 = vunpack.c.h.b16 %v8830
    %v10082 = vunpack.c.l.b16 %v8831
    %v10083 = vunpack.c.h.b16 %v8831
    %v10084 = vunpack.c.l.b16 %v8832
    %v10085 = vunpack.c.h.b16 %v8832
    %v10086 = vunpack.c.l.b16 %v8833
    %v10087 = vunpack.c.l.b16 %v8834
    %v10088 = vunpack.c.h.b16 %v8834
    %v10089 = vunpack.c.l.b16 %v8835
    %v10090 = vunpack.c.h.b16 %v8835
    %v10091 = vunpack.c.l.b16 %v8836
    %v10092 = vunpack.c.h.b16 %v8836
    %v10093 = vunpack.c.l.b16 %v8837
    %v10094 = vunpack.c.l.b16 %v8838
    %v10095 = vunpack.c.h.b16 %v8838
    %v10096 = vunpack.c.l.b16 %v8839
    %v10097 = vunpack.c.h.b16 %v8839
    %v10098 = vunpack.c.l.b16 %v8840
    %v10099 = vunpack.c.h.b16 %v8840
    %v10100 = vunpack.c.l.b16 %v8841
    %v10101 = vunpack.c.l.b16 %v8842
    %v10102 = vunpack.c.h.b16 %v8842
    %v10103 = vunpack.c.l.b16 %v8843
    %v10104 = vunpack.c.h.b16 %v8843
    %v10105 = vunpack.c.l.b16 %v8844
    %v10106 = vunpack.c.h.b16 %v8844
    %v10107 = vunpack.c.l.b16 %v8845
    %v10108 = vunpack.c.l.b16 %v8846
    %v10109 = vunpack.c.h.b16 %v8846
    %v10110 = vunpack.c.l.b16 %v8847
    %v10111 = vunpack.c.h.b16 %v8847
    %v10112 = vunpack.c.l.b16 %v8848
    %v10113 = vunpack.c.h.b16 %v8848
    %v10114 = vunpack.c.l.b16 %v8849
    %v10115 = vunpack.c.l.b16 %v8850
    %v10116 = vunpack.c.h.b16 %v8850
    %v10117 = vunpack.c.l.b16 %v8851
    %v10118 = vunpack.c.h.b16 %v8851
    %v10119 = vunpack.c.l.b16 %v8852
    %v10120 = vunpack.c.h.b16 %v8852
    %v10121 = vunpack.c.l.b16 %v8853
    %v10122 = vunpack.c.l.b16 %v8854
    %v10123 = vunpack.c.h.b16 %v8854
    %v10124 = vunpack.c.l.b16 %v8855
    %v10125 = vunpack.c.h.b16 %v8855
    %v10126 = vunpack.c.l.b16 %v8856
    %v10127 = vunpack.c.h.b16 %v8856
    %v10128 = vunpack.c.l.b16 %v8857
    %v10129 = vunpack.c.l.b16 %v8858
    %v10130 = vunpack.c.h.b16 %v8858
    %v10131 = vunpack.c.l.b16 %v8859
    %v10132 = vunpack.c.h.b16 %v8859
    %v10133 = vunpack.c.l.b16 %v8860
    %v10134 = vunpack.c.h.b16 %v8860
    %v10135 = vunpack.c.l.b16 %v8861
    %v10136 = vunpack.c.l.b16 %v8862
    %v10137 = vunpack.c.h.b16 %v8862
    %v10138 = vunpack.c.l.b16 %v8863
    %v10139 = vunpack.c.h.b16 %v8863
    %v10140 = vunpack.c.l.b16 %v8864
    %v10141 = vunpack.c.h.b16 %v8864
    %v10142 = vunpack.c.l.b16 %v8865
    %v10143 = vunpack.c.l.b16 %v8866
    %v10144 = vunpack.c.h.b16 %v8866
    %v10145 = vunpack.c.l.b16 %v8867
    %v10146 = vunpack.c.h.b16 %v8867
    %v10147 = vunpack.c.l.b16 %v8868
    %v10148 = vunpack.c.h.b16 %v8868
    %v10149 = vunpack.c.l.b16 %v8869
    %v10150 = vunpack.c.l.b16 %v8870
    %v10151 = vunpack.c.h.b16 %v8870
    %v10152 = vunpack.c.l.b16 %v8871
    %v10153 = vunpack.c.h.b16 %v8871
    %v10154 = vunpack.c.l.b16 %v8872
    %v10155 = vunpack.c.h.b16 %v8872
    %v10156 = vunpack.c.l.b16 %v8873
    %v10157 = vunpack.c.l.b16 %v8874
    %v10158 = vunpack.c.h.b16 %v8874
    %v10159 = vunpack.c.l.b16 %v8875
    %v10160 = vunpack.c.h.b16 %v8875
    %v10161 = vunpack.c.l.b16 %v8876
    %v10162 = vunpack.c.h.b16 %v8876
    %v10163 = vunpack.c.l.b16 %v8877
    %v10164 = vunpack.c.l.b16 %v8878
    %v10165 = vunpack.c.h.b16 %v8878
    %v10166 = vunpack.c.l.b16 %v8879
    %v10167 = vunpack.c.h.b16 %v8879
    %v10168 = vunpack.c.l.b16 %v8880
    %v10169 = vunpack.c.h.b16 %v8880
    %v10170 = vunpack.c.l.b16 %v8881
    %v10171 = vunpack.c.l.b16 %v8882
    %v10172 = vunpack.c.h.b16 %v8882
    %v10173 = vunpack.c.l.b16 %v8883
    %v10174 = vunpack.c.h.b16 %v8883
    %v10175 = vunpack.c.l.b16 %v8884
    %v10176 = vunpack.c.h.b16 %v8884
    %v10177 = vunpack.c.l.b16 %v8885
    %v10178 = vunpack.c.l.b16 %v8886
    %v10179 = vunpack.c.h.b16 %v8886
    %v10180 = vunpack.c.l.b16 %v8887
    %v10181 = vunpack.c.h.b16 %v8887
    %v10182 = vunpack.c.l.b16 %v8888
    %v10183 = vunpack.c.h.b16 %v8888
    %v10184 = vunpack.c.l.b16 %v8889
    %v10185 = vunpack.c.l.b16 %v8890
    %v10186 = vunpack.c.h.b16 %v8890
    %v10187 = vunpack.c.l.b16 %v8891
    %v10188 = vunpack.c.h.b16 %v8891
    %v10189 = vunpack.c.l.b16 %v8892
    %v10190 = vunpack.c.h.b16 %v8892
    %v10191 = vunpack.c.l.b16 %v8893
    %v10192 = vunpack.c.l.b16 %v8894
    %v10193 = vunpack.c.h.b16 %v8894
    %v10194 = vunpack.c.l.b16 %v8895
    %v10195 = vunpack.c.h.b16 %v8895
    %v10196 = vunpack.c.l.b16 %v8896
    %v10197 = vunpack.c.h.b16 %v8896
    %v10198 = vunpack.c.l.b16 %v8897
    %v10199 = vunpack.c.l.b16 %v8898
    %v10200 = vunpack.c.h.b16 %v8898
    %v10201 = vunpack.c.l.b16 %v8899
    %v10202 = vunpack.c.h.b16 %v8899
    %v10203 = vunpack.c.l.b16 %v8900
    %v10204 = vunpack.c.h.b16 %v8900
    %v10205 = vunpack.c.l.b16 %v8901
    %v10206 = vunpack.c.l.b16 %v8902
    %v10207 = vunpack.c.h.b16 %v8902
    %v10208 = vunpack.c.l.b16 %v8903
    %v10209 = vunpack.c.h.b16 %v8903
    %v10210 = vunpack.c.l.b16 %v8904
    %v10211 = vunpack.c.h.b16 %v8904
    %v10212 = vunpack.c.l.b16 %v8905
    %v10213 = vunpack.c.l.b16 %v8906
    %v10214 = vunpack.c.h.b16 %v8906
    %v10215 = vunpack.c.l.b16 %v8907
    %v10216 = vunpack.c.h.b16 %v8907
    %v10217 = vunpack.c.l.b16 %v8908
    %v10218 = vunpack.c.h.b16 %v8908
    %v10219 = vunpack.c.l.b16 %v8909
    %v10220 = vunpack.c.l.b16 %v8910
    %v10221 = vunpack.c.h.b16 %v8910
    %v10222 = vunpack.c.l.b16 %v8911
    %v10223 = vunpack.c.h.b16 %v8911
    %v10224 = vunpack.c.l.b16 %v8912
    %v10225 = vunpack.c.h.b16 %v8912
    %v10226 = vunpack.c.l.b16 %v8913
    %v10227 = vunpack.c.l.b16 %v8914
    %v10228 = vunpack.c.h.b16 %v8914
    %v10229 = vunpack.c.l.b16 %v8915
    %v10230 = vunpack.c.h.b16 %v8915
    %v10231 = vunpack.c.l.b16 %v8916
    %v10232 = vunpack.c.h.b16 %v8916
    %v10233 = vunpack.c.l.b16 %v8917
    %v10234 = vunpack.c.l.b16 %v8918
    %v10235 = vunpack.c.h.b16 %v8918
    %v10236 = vunpack.c.l.b16 %v8919
    %v10237 = vunpack.c.h.b16 %v8919
    %v10238 = vunpack.c.l.b16 %v8920
    %v10239 = vunpack.c.h.b16 %v8920
    %v10240 = vunpack.c.l.b16 %v8921
    %v10241 = vunpack.c.l.b16 %v8922
    %v10242 = vunpack.c.h.b16 %v8922
    %v10243 = vunpack.c.l.b16 %v8923
    %v10244 = vunpack.c.h.b16 %v8923
    %v10245 = vunpack.c.l.b16 %v8924
    %v10246 = vunpack.c.h.b16 %v8924
    %v10247 = vunpack.c.l.b16 %v8925
    %v10248 = vunpack.c.l.b16 %v8926
    %v10249 = vunpack.c.h.b16 %v8926
    %v10250 = vunpack.c.l.b16 %v8927
    %v10251 = vunpack.c.h.b16 %v8927
    %v10252 = vunpack.c.l.b16 %v8928
    %v10253 = vunpack.c.h.b16 %v8928
    %v10254 = vunpack.c.l.b16 %v8929
    %v10255 = vunpack.c.l.b16 %v8930
    %v10256 = vunpack.c.h.b16 %v8930
    %v10257 = vunpack.c.l.b16 %v8931
    %v10258 = vunpack.c.h.b16 %v8931
    %v10259 = vunpack.c.l.b16 %v8932
    %v10260 = vunpack.c.h.b16 %v8932
    %v10261 = vunpack.c.l.b16 %v8933
    %v10262 = vunpack.c.l.b16 %v8934
    %v10263 = vunpack.c.h.b16 %v8934
    %v10264 = vunpack.c.l.b16 %v8935
    %v10265 = vunpack.c.h.b16 %v8935
    %v10266 = vunpack.c.l.b16 %v8936
    %v10267 = vunpack.c.h.b16 %v8936
    %v10268 = vunpack.c.l.b16 %v8937
    %v10269 = vunpack.c.l.b16 %v8938
    %v10270 = vunpack.c.h.b16 %v8938
    %v10271 = vunpack.c.l.b16 %v8939
    %v10272 = vunpack.c.h.b16 %v8939
    %v10273 = vunpack.c.l.b16 %v8940
    %v10274 = vunpack.c.h.b16 %v8940
    %v10275 = vunpack.c.l.b16 %v8941
    %v10276 = vunpack.c.l.b16 %v8942
    %v10277 = vunpack.c.h.b16 %v8942
    %v10278 = vunpack.c.l.b16 %v8943
    %v10279 = vunpack.c.h.b16 %v8943
    %v10280 = vunpack.c.l.b16 %v8944
    %v10281 = vunpack.c.h.b16 %v8944
    %v10282 = vunpack.c.l.b16 %v8945
    %v10283 = vunpack.c.l.b16 %v8946
    %v10284 = vunpack.c.h.b16 %v8946
    %v10285 = vunpack.c.l.b16 %v8947
    %v10286 = vunpack.c.h.b16 %v8947
    %v10287 = vunpack.c.l.b16 %v8948
    %v10288 = vunpack.c.h.b16 %v8948
    %v10289 = vunpack.c.l.b16 %v8949
    %v10290 = vunpack.c.l.b16 %v8950
    %v10291 = vunpack.c.h.b16 %v8950
    %v10292 = vunpack.c.l.b16 %v8951
    %v10293 = vunpack.c.h.b16 %v8951
    %v10294 = vunpack.c.l.b16 %v8952
    %v10295 = vunpack.c.h.b16 %v8952
    %v10296 = vunpack.c.l.b16 %v8953
    %v10297 = vunpack.c.l.b16 %v8954
    %v10298 = vunpack.c.h.b16 %v8954
    %v10299 = vunpack.c.l.b16 %v8955
    %v10300 = vunpack.c.h.b16 %v8955
    %v10301 = vunpack.c.l.b16 %v8956
    %v10302 = vunpack.c.h.b16 %v8956
    %v10303 = vunpack.c.l.b16 %v8957
    %v10304 = vunpack.c.l.b16 %v8958
    %v10305 = vunpack.c.h.b16 %v8958
    %v10306 = vunpack.c.l.b16 %v8959
    %v10307 = vunpack.c.h.b16 %v8959
    %v10308 = vunpack.c.l.b16 %v8960
    %v10309 = vunpack.c.h.b16 %v8960
    %v10310 = vunpack.c.l.b16 %v8961
    %v10311 = vunpack.c.l.b16 %v8962
    %v10312 = vunpack.c.h.b16 %v8962
    %v10313 = vunpack.c.l.b16 %v8963
    %v10314 = vunpack.c.h.b16 %v8963
    %v10315 = vunpack.c.l.b16 %v8964
    %v10316 = vunpack.c.h.b16 %v8964
    %v10317 = vunpack.c.l.b16 %v8965
    %v10318 = vunpack.c.l.b16 %v8966
    %v10319 = vunpack.c.h.b16 %v8966
    %v10320 = vunpack.c.l.b16 %v8967
    %v10321 = vunpack.c.h.b16 %v8967
    %v10322 = vunpack.c.l.b16 %v8968
    %v10323 = vunpack.c.h.b16 %v8968
    %v10324 = vunpack.c.l.b16 %v8969
    %v10325 = vunpack.c.l.b16 %v8970
    %v10326 = vunpack.c.h.b16 %v8970
    %v10327 = vunpack.c.l.b16 %v8971
    %v10328 = vunpack.c.h.b16 %v8971
    %v10329 = vunpack.c.l.b16 %v8972
    %v10330 = vunpack.c.h.b16 %v8972
    %v10331 = vunpack.c.l.b16 %v8973
    %v10332 = vunpack.c.l.b16 %v8974
    %v10333 = vunpack.c.h.b16 %v8974
    %v10334 = vunpack.c.l.b16 %v8975
    %v10335 = vunpack.c.h.b16 %v8975
    %v10336 = vunpack.c.l.b16 %v8976
    %v10337 = vunpack.c.h.b16 %v8976
    %v10338 = vunpack.c.l.b16 %v8977
    %v10339 = vunpack.c.l.b16 %v8978
    %v10340 = vunpack.c.h.b16 %v8978
    %v10341 = vunpack.c.l.b16 %v8979
    %v10342 = vunpack.c.h.b16 %v8979
    %v10343 = vunpack.c.l.b16 %v8980
    %v10344 = vunpack.c.h.b16 %v8980
    %v10345 = vunpack.c.l.b16 %v8981
    %v10346 = vunpack.c.l.b16 %v8982
    %v10347 = vunpack.c.h.b16 %v8982
    %v10348 = vunpack.c.l.b16 %v8983
    %v10349 = vunpack.c.h.b16 %v8983
    %v10350 = vunpack.c.l.b16 %v8984
    %v10351 = vunpack.c.h.b16 %v8984
    %v10352 = vunpack.c.l.b16 %v8985
    %v10353 = vunpack.c.l.b16 %v8986
    %v10354 = vunpack.c.h.b16 %v8986
    %v10355 = vunpack.c.l.b16 %v8987
    %v10356 = vunpack.c.h.b16 %v8987
    %v10357 = vunpack.c.l.b16 %v8988
    %v10358 = vunpack.c.h.b16 %v8988
    %v10359 = vunpack.c.l.b16 %v8989
    %v10360 = vunpack.c.l.b16 %v8990
    %v10361 = vunpack.c.h.b16 %v8990
    %v10362 = vunpack.c.l.b16 %v8991
    %v10363 = vunpack.c.h.b16 %v8991
    %v10364 = vunpack.c.l.b16 %v8992
    %v10365 = vunpack.c.h.b16 %v8992
    %v10366 = vunpack.c.l.b16 %v8993
    %v10367 = vunpack.c.l.b16 %v8994
    %v10368 = vunpack.c.h.b16 %v8994
    %v10369 = vunpack.c.l.b16 %v8995
    %v10370 = vunpack.c.h.b16 %v8995
    %v10371 = vunpack.c.l.b16 %v8996
    %v10372 = vunpack.c.h.b16 %v8996
    %v10373 = vunpack.c.l.b16 %v8997
    %v10374 = vunpack.c.l.b16 %v8998
    %v10375 = vunpack.c.h.b16 %v8998
    %v10376 = vunpack.c.l.b16 %v8999
    %v10377 = vunpack.c.h.b16 %v8999
    %v10378 = vunpack.c.l.b16 %v9000
    %v10379 = vunpack.c.h.b16 %v9000
    %v10380 = vunpack.c.l.b16 %v9001
    %v10381 = vunpack.c.l.b16 %v9002
    %v10382 = vunpack.c.h.b16 %v9002
    %v10383 = vunpack.c.l.b16 %v9003
    %v10384 = vunpack.c.h.b16 %v9003
    %v10385 = vunpack.c.l.b16 %v9004
    %v10386 = vunpack.c.h.b16 %v9004
    %v10387 = vunpack.c.l.b16 %v9005
    %v10388 = vunpack.c.l.b16 %v9006
    %v10389 = vunpack.c.h.b16 %v9006
    %v10390 = vunpack.c.l.b16 %v9007
    %v10391 = vunpack.c.h.b16 %v9007
    %v10392 = vunpack.c.l.b16 %v9008
    %v10393 = vunpack.c.h.b16 %v9008
    %v10394 = vunpack.c.l.b16 %v9009
    %v10395 = vunpack.c.l.b16 %v9010
    %v10396 = vunpack.c.h.b16 %v9010
    %v10397 = vunpack.c.l.b16 %v9011
    %v10398 = vunpack.c.h.b16 %v9011
    %v10399 = vunpack.c.l.b16 %v9012
    %v10400 = vunpack.c.h.b16 %v9012
    %v10401 = vunpack.c.l.b16 %v9013
    %v10402 = vunpack.c.l.b16 %v9014
    %v10403 = vunpack.c.h.b16 %v9014
    %v10404 = vunpack.c.l.b16 %v9015
    %v10405 = vunpack.c.h.b16 %v9015
    %v10406 = vunpack.c.l.b16 %v9016
    %v10407 = vunpack.c.h.b16 %v9016
    %v10408 = vunpack.c.l.b16 %v9017
    %v10409 = vunpack.c.l.b16 %v9018
    %v10410 = vunpack.c.h.b16 %v9018
    %v10411 = vunpack.c.l.b16 %v9019
    %v10412 = vunpack.c.h.b16 %v9019
    %v10413 = vunpack.c.l.b16 %v9020
    %v10414 = vunpack.c.h.b16 %v9020
    %v10415 = vunpack.c.l.b16 %v9021
    %v10416 = vunpack.c.l.b16 %v9022
    %v10417 = vunpack.c.h.b16 %v9022
    %v10418 = vunpack.c.l.b16 %v9023
    %v10419 = vunpack.c.h.b16 %v9023
    %v10420 = vunpack.c.l.b16 %v9024
    %v10421 = vunpack.c.h.b16 %v9024
    %v10422 = vunpack.c.l.b16 %v9025
    %v10423 = vunpack.c.l.b16 %v9026
    %v10424 = vunpack.c.h.b16 %v9026
    %v10425 = vunpack.c.l.b16 %v9027
    %v10426 = vunpack.c.h.b16 %v9027
    %v10427 = vunpack.c.l.b16 %v9028
    %v10428 = vunpack.c.h.b16 %v9028
    %v10429 = vunpack.c.l.b16 %v9029
    %v10430 = vunpack.c.l.b16 %v9030
    %v10431 = vunpack.c.h.b16 %v9030
    %v10432 = vunpack.c.l.b16 %v9031
    %v10433 = vunpack.c.h.b16 %v9031
    %v10434 = vunpack.c.l.b16 %v9032
    %v10435 = vunpack.c.h.b16 %v9032
    %v10436 = vunpack.c.l.b16 %v9033
    %v10437 = vunpack.c.l.b16 %v9034
    %v10438 = vunpack.c.h.b16 %v9034
    %v10439 = vunpack.c.l.b16 %v9035
    %v10440 = vunpack.c.h.b16 %v9035
    %v10441 = vunpack.c.l.b16 %v9036
    %v10442 = vunpack.c.h.b16 %v9036
    %v10443 = vunpack.c.l.b16 %v9037
    %v10444 = vunpack.c.l.b16 %v9038
    %v10445 = vunpack.c.h.b16 %v9038
    %v10446 = vunpack.c.l.b16 %v9039
    %v10447 = vunpack.c.h.b16 %v9039
    %v10448 = vunpack.c.l.b16 %v9040
    %v10449 = vunpack.c.h.b16 %v9040
    %v10450 = vunpack.c.l.b16 %v9041
    %v10451 = vunpack.c.l.b16 %v9042
    %v10452 = vunpack.c.h.b16 %v9042
    %v10453 = vunpack.c.l.b16 %v9043
    %v10454 = vunpack.c.h.b16 %v9043
    %v10455 = vunpack.c.l.b16 %v9044
    %v10456 = vunpack.c.h.b16 %v9044
    %v10457 = vunpack.c.l.b16 %v9045
    %v10458 = vunpack.c.l.b16 %v9046
    %v10459 = vunpack.c.h.b16 %v9046
    %v10460 = vunpack.c.l.b16 %v9047
    %v10461 = vunpack.c.h.b16 %v9047
    %v10462 = vunpack.c.l.b16 %v9048
    %v10463 = vunpack.c.h.b16 %v9048
    %v10464 = vunpack.c.l.b16 %v9049
    %v10465 = vunpack.c.l.b16 %v9050
    %v10466 = vunpack.c.h.b16 %v9050
    %v10467 = vunpack.c.l.b16 %v9051
    %v10468 = vunpack.c.h.b16 %v9051
    %v10469 = vunpack.c.l.b16 %v9052
    %v10470 = vunpack.c.h.b16 %v9052
    %v10471 = vunpack.c.l.b16 %v9053
    %v10472 = vunpack.c.l.b16 %v9054
    %v10473 = vunpack.c.h.b16 %v9054
    %v10474 = vunpack.c.l.b16 %v9055
    %v10475 = vunpack.c.h.b16 %v9055
    %v10476 = vunpack.c.l.b16 %v9056
    %v10477 = vunpack.c.h.b16 %v9056
    %v10478 = vunpack.c.l.b16 %v9057
    %v10479 = vunpack.c.l.b16 %v9058
    %v10480 = vunpack.c.h.b16 %v9058
    %v10481 = vunpack.c.l.b16 %v9059
    %v10482 = vunpack.c.h.b16 %v9059
    %v10483 = vunpack.c.l.b16 %v9060
    %v10484 = vunpack.c.h.b16 %v9060
    %v10485 = vunpack.c.l.b16 %v9061
    %v10486 = vunpack.c.l.b16 %v9062
    %v10487 = vunpack.c.h.b16 %v9062
    %v10488 = vunpack.c.l.b16 %v9063
    %v10489 = vunpack.c.h.b16 %v9063
    %v10490 = vunpack.c.l.b16 %v9064
    %v10491 = vunpack.c.h.b16 %v9064
    %v10492 = vunpack.c.l.b16 %v9065
    %v10493 = vunpack.c.l.b16 %v9066
    %v10494 = vunpack.c.h.b16 %v9066
    %v10495 = vunpack.c.l.b16 %v9067
    %v10496 = vunpack.c.h.b16 %v9067
    %v10497 = vunpack.c.l.b16 %v9068
    %v10498 = vunpack.c.h.b16 %v9068
    %v10499 = vunpack.c.l.b16 %v9069
    %v10500 = vunpack.c.l.b16 %v9070
    %v10501 = vunpack.c.h.b16 %v9070
    %v10502 = vunpack.c.l.b16 %v9071
    %v10503 = vunpack.c.h.b16 %v9071
    %v10504 = vunpack.c.l.b16 %v9072
    %v10505 = vunpack.c.h.b16 %v9072
    %v10506 = vunpack.c.l.b16 %v9073
    %v10507 = vunpack.c.l.b16 %v9074
    %v10508 = vunpack.c.h.b16 %v9074
    %v10509 = vunpack.c.l.b16 %v9075
    %v10510 = vunpack.c.h.b16 %v9075
    %v10511 = vunpack.c.l.b16 %v9076
    %v10512 = vunpack.c.h.b16 %v9076
    %v10513 = vunpack.c.l.b16 %v9077
    %v10514 = vunpack.c.l.b16 %v9078
    %v10515 = vunpack.c.h.b16 %v9078
    %v10516 = vunpack.c.l.b16 %v9079
    %v10517 = vunpack.c.h.b16 %v9079
    %v10518 = vunpack.c.l.b16 %v9080
    %v10519 = vunpack.c.h.b16 %v9080
    %v10520 = vunpack.c.l.b16 %v9081
    %v10521 = vunpack.c.l.b16 %v9082
    %v10522 = vunpack.c.h.b16 %v9082
    %v10523 = vunpack.c.l.b16 %v9083
    %v10524 = vunpack.c.h.b16 %v9083
    %v10525 = vunpack.c.l.b16 %v9084
    %v10526 = vunpack.c.h.b16 %v9084
    %v10527 = vunpack.c.l.b16 %v9085
    %v10528 = vunpack.c.l.b16 %v9086
    %v10529 = vunpack.c.h.b16 %v9086
    %v10530 = vunpack.c.l.b16 %v9087
    %v10531 = vunpack.c.h.b16 %v9087
    %v10532 = vunpack.c.l.b16 %v9088
    %v10533 = vunpack.c.h.b16 %v9088
    %v10534 = vunpack.c.l.b16 %v9089
    %v10535 = vpack.c.b16 %v9646, %v9639
    %v10536 = vpack.c.b16 %v9647, %v9640
    %v10537 = vpack.c.b16 %v9648, %v9641
    %v10538 = vpack.c.b16 %v9649, %v9642
    %v10539 = vpack.c.b16 %v9650, %v9643
    %v10540 = vpack.c.b16 %v9651, %v9644
    %v10541 = vpack.c.b16 %v9652, %v9645
    %v10542 = vpack.c.b16 %v9660, %v9653
    %v10543 = vpack.c.b16 %v9661, %v9654
    %v10544 = vpack.c.b16 %v9662, %v9655
    %v10545 = vpack.c.b16 %v9663, %v9656
    %v10546 = vpack.c.b16 %v9664, %v9657
    %v10547 = vpack.c.b16 %v9665, %v9658
    %v10548 = vpack.c.b16 %v9666, %v9659
    %v10549 = vpack.c.b16 %v9674, %v9667
    %v10550 = vpack.c.b16 %v9675, %v9668
    %v10551 = vpack.c.b16 %v9676, %v9669
    %v10552 = vpack.c.b16 %v9677, %v9670
    %v10553 = vpack.c.b16 %v9678, %v9671
    %v10554 = vpack.c.b16 %v9679, %v9672
    %v10555 = vpack.c.b16 %v9680, %v9673
    %v10556 = vpack.c.b16 %v9688, %v9681
    %v10557 = vpack.c.b16 %v9689, %v9682
    %v10558 = vpack.c.b16 %v9690, %v9683
    %v10559 = vpack.c.b16 %v9691, %v9684
    %v10560 = vpack.c.b16 %v9692, %v9685
    %v10561 = vpack.c.b16 %v9693, %v9686
    %v10562 = vpack.c.b16 %v9694, %v9687
    %v10563 = vpack.c.b16 %v9702, %v9695
    %v10564 = vpack.c.b16 %v9703, %v9696
    %v10565 = vpack.c.b16 %v9704, %v9697
    %v10566 = vpack.c.b16 %v9705, %v9698
    %v10567 = vpack.c.b16 %v9706, %v9699
    %v10568 = vpack.c.b16 %v9707, %v9700
    %v10569 = vpack.c.b16 %v9708, %v9701
    %v10570 = vpack.c.b16 %v9716, %v9709
    %v10571 = vpack.c.b16 %v9717, %v9710
    %v10572 = vpack.c.b16 %v9718, %v9711
    %v10573 = vpack.c.b16 %v9719, %v9712
    %v10574 = vpack.c.b16 %v9720, %v9713
    %v10575 = vpack.c.b16 %v9721, %v9714
    %v10576 = vpack.c.b16 %v9722, %v9715
    %v10577 = vpack.c.b16 %v9730, %v9723
    %v10578 = vpack.c.b16 %v9731, %v9724
    %v10579 = vpack.c.b16 %v9732, %v9725
    %v10580 = vpack.c.b16 %v9733, %v9726
    %v10581 = vpack.c.b16 %v9734, %v9727
    %v10582 = vpack.c.b16 %v9735, %v9728
    %v10583 = vpack.c.b16 %v9736, %v9729
    %v10584 = vpack.c.b16 %v9744, %v9737
    %v10585 = vpack.c.b16 %v9745, %v9738
    %v10586 = vpack.c.b16 %v9746, %v9739
    %v10587 = vpack.c.b16 %v9747, %v9740
    %v10588 = vpack.c.b16 %v9748, %v9741
    %v10589 = vpack.c.b16 %v9749, %v9742
    %v10590 = vpack.c.b16 %v9750, %v9743
    %v10591 = vpack.c.b16 %v9758, %v9751
    %v10592 = vpack.c.b16 %v9759, %v9752
    %v10593 = vpack.c.b16 %v9760, %v9753
    %v10594 = vpack.c.b16 %v9761, %v9754
    %v10595 = vpack.c.b16 %v9762, %v9755
    %v10596 = vpack.c.b16 %v9763, %v9756
    %v10597 = vpack.c.b16 %v9764, %v9757
    %v10598 = vpack.c.b16 %v9772, %v9765
    %v10599 = vpack.c.b16 %v9773, %v9766
    %v10600 = vpack.c.b16 %v9774, %v9767
    %v10601 = vpack.c.b16 %v9775, %v9768
    %v10602 = vpack.c.b16 %v9776, %v9769
    %v10603 = vpack.c.b16 %v9777, %v9770
    %v10604 = vpack.c.b16 %v9778, %v9771
    %v10605 = vpack.c.b16 %v9786, %v9779
    %v10606 = vpack.c.b16 %v9787, %v9780
    %v10607 = vpack.c.b16 %v9788, %v9781
    %v10608 = vpack.c.b16 %v9789, %v9782
    %v10609 = vpack.c.b16 %v9790, %v9783
    %v10610 = vpack.c.b16 %v9791, %v9784
    %v10611 = vpack.c.b16 %v9792, %v9785
    %v10612 = vpack.c.b16 %v9800, %v9793
    %v10613 = vpack.c.b16 %v9801, %v9794
    %v10614 = vpack.c.b16 %v9802, %v9795
    %v10615 = vpack.c.b16 %v9803, %v9796
    %v10616 = vpack.c.b16 %v9804, %v9797
    %v10617 = vpack.c.b16 %v9805, %v9798
    %v10618 = vpack.c.b16 %v9806, %v9799
    %v10619 = vpack.c.b16 %v9814, %v9807
    %v10620 = vpack.c.b16 %v9815, %v9808
    %v10621 = vpack.c.b16 %v9816, %v9809
    %v10622 = vpack.c.b16 %v9817, %v9810
    %v10623 = vpack.c.b16 %v9818, %v9811
    %v10624 = vpack.c.b16 %v9819, %v9812
    %v10625 = vpack.c.b16 %v9820, %v9813
    %v10626 = vpack.c.b16 %v9828, %v9821
    %v10627 = vpack.c.b16 %v9829, %v9822
    %v10628 = vpack.c.b16 %v9830, %v9823
    %v10629 = vpack.c.b16 %v9831, %v9824
    %v10630 = vpack.c.b16 %v9832, %v9825
    %v10631 = vpack.c.b16 %v9833, %v9826
    %v10632 = vpack.c.b16 %v9834, %v9827
    %v10633 = vpack.c.b16 %v9842, %v9835
    %v10634 = vpack.c.b16 %v9843, %v9836
    %v10635 = vpack.c.b16 %v9844, %v9837
    %v10636 = vpack.c.b16 %v9845, %v9838
    %v10637 = vpack.c.b16 %v9846, %v9839
    %v10638 = vpack.c.b16 %v9847, %v9840
    %v10639 = vpack.c.b16 %v9848, %v9841
    %v10640 = vpack.c.b16 %v9856, %v9849
    %v10641 = vpack.c.b16 %v9857, %v9850
    %v10642 = vpack.c.b16 %v9858, %v9851
    %v10643 = vpack.c.b16 %v9859, %v9852
    %v10644 = vpack.c.b16 %v9860, %v9853
    %v10645 = vpack.c.b16 %v9861, %v9854
    %v10646 = vpack.c.b16 %v9862, %v9855
    %v10647 = vpack.c.b16 %v9870, %v9863
    %v10648 = vpack.c.b16 %v9871, %v9864
    %v10649 = vpack.c.b16 %v9872, %v9865
    %v10650 = vpack.c.b16 %v9873, %v9866
    %v10651 = vpack.c.b16 %v9874, %v9867
    %v10652 = vpack.c.b16 %v9875, %v9868
    %v10653 = vpack.c.b16 %v9876, %v9869
    %v10654 = vpack.c.b16 %v9884, %v9877
    %v10655 = vpack.c.b16 %v9885, %v9878
    %v10656 = vpack.c.b16 %v9886, %v9879
    %v10657 = vpack.c.b16 %v9887, %v9880
    %v10658 = vpack.c.b16 %v9888, %v9881
    %v10659 = vpack.c.b16 %v9889, %v9882
    %v10660 = vpack.c.b16 %v9890, %v9883
    %v10661 = vpack.c.b16 %v9898, %v9891
    %v10662 = vpack.c.b16 %v9899, %v9892
    %v10663 = vpack.c.b16 %v9900, %v9893
    %v10664 = vpack.c.b16 %v9901, %v9894
    %v10665 = vpack.c.b16 %v9902, %v9895
    %v10666 = vpack.c.b16 %v9903, %v9896
    %v10667 = vpack.c.b16 %v9904, %v9897
    %v10668 = vpack.c.b16 %v9912, %v9905
    %v10669 = vpack.c.b16 %v9913, %v9906
    %v10670 = vpack.c.b16 %v9914, %v9907
    %v10671 = vpack.c.b16 %v9915, %v9908
    %v10672 = vpack.c.b16 %v9916, %v9909
    %v10673 = vpack.c.b16 %v9917, %v9910
    %v10674 = vpack.c.b16 %v9918, %v9911
    %v10675 = vpack.c.b16 %v9926, %v9919
    %v10676 = vpack.c.b16 %v9927, %v9920
    %v10677 = vpack.c.b16 %v9928, %v9921
    %v10678 = vpack.c.b16 %v9929, %v9922
    %v10679 = vpack.c.b16 %v9930, %v9923
    %v10680 = vpack.c.b16 %v9931, %v9924
    %v10681 = vpack.c.b16 %v9932, %v9925
    %v10682 = vpack.c.b16 %v9940, %v9933
    %v10683 = vpack.c.b16 %v9941, %v9934
    %v10684 = vpack.c.b16 %v9942, %v9935
    %v10685 = vpack.c.b16 %v9943, %v9936
    %v10686 = vpack.c.b16 %v9944, %v9937
    %v10687 = vpack.c.b16 %v9945, %v9938
    %v10688 = vpack.c.b16 %v9946, %v9939
    %v10689 = vpack.c.b16 %v9954, %v9947
    %v10690 = vpack.c.b16 %v9955, %v9948
    %v10691 = vpack.c.b16 %v9956, %v9949
    %v10692 = vpack.c.b16 %v9957, %v9950
    %v10693 = vpack.c.b16 %v9958, %v9951
    %v10694 = vpack.c.b16 %v9959, %v9952
    %v10695 = vpack.c.b16 %v9960, %v9953
    %v10696 = vpack.c.b16 %v9968, %v9961
    %v10697 = vpack.c.b16 %v9969, %v9962
    %v10698 = vpack.c.b16 %v9970, %v9963
    %v10699 = vpack.c.b16 %v9971, %v9964
    %v10700 = vpack.c.b16 %v9972, %v9965
    %v10701 = vpack.c.b16 %v9973, %v9966
    %v10702 = vpack.c.b16 %v9974, %v9967
    %v10703 = vpack.c.b16 %v9982, %v9975
    %v10704 = vpack.c.b16 %v9983, %v9976
    %v10705 = vpack.c.b16 %v9984, %v9977
    %v10706 = vpack.c.b16 %v9985, %v9978
    %v10707 = vpack.c.b16 %v9986, %v9979
    %v10708 = vpack.c.b16 %v9987, %v9980
    %v10709 = vpack.c.b16 %v9988, %v9981
    %v10710 = vpack.c.b16 %v9996, %v9989
    %v10711 = vpack.c.b16 %v9997, %v9990
    %v10712 = vpack.c.b16 %v9998, %v9991
    %v10713 = vpack.c.b16 %v9999, %v9992
    %v10714 = vpack.c.b16 %v10000, %v9993
    %v10715 = vpack.c.b16 %v10001, %v9994
    %v10716 = vpack.c.b16 %v10002, %v9995
    %v10717 = vpack.c.b16 %v10010, %v10003
    %v10718 = vpack.c.b16 %v10011, %v10004
    %v10719 = vpack.c.b16 %v10012, %v10005
    %v10720 = vpack.c.b16 %v10013, %v10006
    %v10721 = vpack.c.b16 %v10014, %v10007
    %v10722 = vpack.c.b16 %v10015, %v10008
    %v10723 = vpack.c.b16 %v10016, %v10009
    %v10724 = vpack.c.b16 %v10024, %v10017
    %v10725 = vpack.c.b16 %v10025, %v10018
    %v10726 = vpack.c.b16 %v10026, %v10019
    %v10727 = vpack.c.b16 %v10027, %v10020
    %v10728 = vpack.c.b16 %v10028, %v10021
    %v10729 = vpack.c.b16 %v10029, %v10022
    %v10730 = vpack.c.b16 %v10030, %v10023
    %v10731 = vpack.c.b16 %v10038, %v10031
    %v10732 = vpack.c.b16 %v10039, %v10032
    %v10733 = vpack.c.b16 %v10040, %v10033
    %v10734 = vpack.c.b16 %v10041, %v10034
    %v10735 = vpack.c.b16 %v10042, %v10035
    %v10736 = vpack.c.b16 %v10043, %v10036
    %v10737 = vpack.c.b16 %v10044, %v10037
    %v10738 = vpack.c.b16 %v10052, %v10045
    %v10739 = vpack.c.b16 %v10053, %v10046
    %v10740 = vpack.c.b16 %v10054, %v10047
    %v10741 = vpack.c.b16 %v10055, %v10048
    %v10742 = vpack.c.b16 %v10056, %v10049
    %v10743 = vpack.c.b16 %v10057, %v10050
    %v10744 = vpack.c.b16 %v10058, %v10051
    %v10745 = vpack.c.b16 %v10066, %v10059
    %v10746 = vpack.c.b16 %v10067, %v10060
    %v10747 = vpack.c.b16 %v10068, %v10061
    %v10748 = vpack.c.b16 %v10069, %v10062
    %v10749 = vpack.c.b16 %v10070, %v10063
    %v10750 = vpack.c.b16 %v10071, %v10064
    %v10751 = vpack.c.b16 %v10072, %v10065
    %v10752 = vpack.c.b16 %v10080, %v10073
    %v10753 = vpack.c.b16 %v10081, %v10074
    %v10754 = vpack.c.b16 %v10082, %v10075
    %v10755 = vpack.c.b16 %v10083, %v10076
    %v10756 = vpack.c.b16 %v10084, %v10077
    %v10757 = vpack.c.b16 %v10085, %v10078
    %v10758 = vpack.c.b16 %v10086, %v10079
    %v10759 = vpack.c.b16 %v10094, %v10087
    %v10760 = vpack.c.b16 %v10095, %v10088
    %v10761 = vpack.c.b16 %v10096, %v10089
    %v10762 = vpack.c.b16 %v10097, %v10090
    %v10763 = vpack.c.b16 %v10098, %v10091
    %v10764 = vpack.c.b16 %v10099, %v10092
    %v10765 = vpack.c.b16 %v10100, %v10093
    %v10766 = vpack.c.b16 %v10108, %v10101
    %v10767 = vpack.c.b16 %v10109, %v10102
    %v10768 = vpack.c.b16 %v10110, %v10103
    %v10769 = vpack.c.b16 %v10111, %v10104
    %v10770 = vpack.c.b16 %v10112, %v10105
    %v10771 = vpack.c.b16 %v10113, %v10106
    %v10772 = vpack.c.b16 %v10114, %v10107
    %v10773 = vpack.c.b16 %v10122, %v10115
    %v10774 = vpack.c.b16 %v10123, %v10116
    %v10775 = vpack.c.b16 %v10124, %v10117
    %v10776 = vpack.c.b16 %v10125, %v10118
    %v10777 = vpack.c.b16 %v10126, %v10119
    %v10778 = vpack.c.b16 %v10127, %v10120
    %v10779 = vpack.c.b16 %v10128, %v10121
    %v10780 = vpack.c.b16 %v10136, %v10129
    %v10781 = vpack.c.b16 %v10137, %v10130
    %v10782 = vpack.c.b16 %v10138, %v10131
    %v10783 = vpack.c.b16 %v10139, %v10132
    %v10784 = vpack.c.b16 %v10140, %v10133
    %v10785 = vpack.c.b16 %v10141, %v10134
    %v10786 = vpack.c.b16 %v10142, %v10135
    %v10787 = vpack.c.b16 %v10150, %v10143
    %v10788 = vpack.c.b16 %v10151, %v10144
    %v10789 = vpack.c.b16 %v10152, %v10145
    %v10790 = vpack.c.b16 %v10153, %v10146
    %v10791 = vpack.c.b16 %v10154, %v10147
    %v10792 = vpack.c.b16 %v10155, %v10148
    %v10793 = vpack.c.b16 %v10156, %v10149
    %v10794 = vpack.c.b16 %v10164, %v10157
    %v10795 = vpack.c.b16 %v10165, %v10158
    %v10796 = vpack.c.b16 %v10166, %v10159
    %v10797 = vpack.c.b16 %v10167, %v10160
    %v10798 = vpack.c.b16 %v10168, %v10161
    %v10799 = vpack.c.b16 %v10169, %v10162
    %v10800 = vpack.c.b16 %v10170, %v10163
    %v10801 = vpack.c.b16 %v10178, %v10171
    %v10802 = vpack.c.b16 %v10179, %v10172
    %v10803 = vpack.c.b16 %v10180, %v10173
    %v10804 = vpack.c.b16 %v10181, %v10174
    %v10805 = vpack.c.b16 %v10182, %v10175
    %v10806 = vpack.c.b16 %v10183, %v10176
    %v10807 = vpack.c.b16 %v10184, %v10177
    %v10808 = vpack.c.b16 %v10192, %v10185
    %v10809 = vpack.c.b16 %v10193, %v10186
    %v10810 = vpack.c.b16 %v10194, %v10187
    %v10811 = vpack.c.b16 %v10195, %v10188
    %v10812 = vpack.c.b16 %v10196, %v10189
    %v10813 = vpack.c.b16 %v10197, %v10190
    %v10814 = vpack.c.b16 %v10198, %v10191
    %v10815 = vpack.c.b16 %v10206, %v10199
    %v10816 = vpack.c.b16 %v10207, %v10200
    %v10817 = vpack.c.b16 %v10208, %v10201
    %v10818 = vpack.c.b16 %v10209, %v10202
    %v10819 = vpack.c.b16 %v10210, %v10203
    %v10820 = vpack.c.b16 %v10211, %v10204
    %v10821 = vpack.c.b16 %v10212, %v10205
    %v10822 = vpack.c.b16 %v10220, %v10213
    %v10823 = vpack.c.b16 %v10221, %v10214
    %v10824 = vpack.c.b16 %v10222, %v10215
    %v10825 = vpack.c.b16 %v10223, %v10216
    %v10826 = vpack.c.b16 %v10224, %v10217
    %v10827 = vpack.c.b16 %v10225, %v10218
    %v10828 = vpack.c.b16 %v10226, %v10219
    %v10829 = vpack.c.b16 %v10234, %v10227
    %v10830 = vpack.c.b16 %v10235, %v10228
    %v10831 = vpack.c.b16 %v10236, %v10229
    %v10832 = vpack.c.b16 %v10237, %v10230
    %v10833 = vpack.c.b16 %v10238, %v10231
    %v10834 = vpack.c.b16 %v10239, %v10232
    %v10835 = vpack.c.b16 %v10240, %v10233
    %v10836 = vpack.c.b16 %v10248, %v10241
    %v10837 = vpack.c.b16 %v10249, %v10242
    %v10838 = vpack.c.b16 %v10250, %v10243
    %v10839 = vpack.c.b16 %v10251, %v10244
    %v10840 = vpack.c.b16 %v10252, %v10245
    %v10841 = vpack.c.b16 %v10253, %v10246
    %v10842 = vpack.c.b16 %v10254, %v10247
    %v10843 = vpack.c.b16 %v10262, %v10255
    %v10844 = vpack.c.b16 %v10263, %v10256
    %v10845 = vpack.c.b16 %v10264, %v10257
    %v10846 = vpack.c.b16 %v10265, %v10258
    %v10847 = vpack.c.b16 %v10266, %v10259
    %v10848 = vpack.c.b16 %v10267, %v10260
    %v10849 = vpack.c.b16 %v10268, %v10261
    %v10850 = vpack.c.b16 %v10276, %v10269
    %v10851 = vpack.c.b16 %v10277, %v10270
    %v10852 = vpack.c.b16 %v10278, %v10271
    %v10853 = vpack.c.b16 %v10279, %v10272
    %v10854 = vpack.c.b16 %v10280, %v10273
    %v10855 = vpack.c.b16 %v10281, %v10274
    %v10856 = vpack.c.b16 %v10282, %v10275
    %v10857 = vpack.c.b16 %v10290, %v10283
    %v10858 = vpack.c.b16 %v10291, %v10284
    %v10859 = vpack.c.b16 %v10292, %v10285
    %v10860 = vpack.c.b16 %v10293, %v10286
    %v10861 = vpack.c.b16 %v10294, %v10287
    %v10862 = vpack.c.b16 %v10295, %v10288
    %v10863 = vpack.c.b16 %v10296, %v10289
    %v10864 = vpack.c.b16 %v10304, %v10297
    %v10865 = vpack.c.b16 %v10305, %v10298
    %v10866 = vpack.c.b16 %v10306, %v10299
    %v10867 = vpack.c.b16 %v10307, %v10300
    %v10868 = vpack.c.b16 %v10308, %v10301
    %v10869 = vpack.c.b16 %v10309, %v10302
    %v10870 = vpack.c.b16 %v10310, %v10303
    %v10871 = vpack.c.b16 %v10318, %v10311
    %v10872 = vpack.c.b16 %v10319, %v10312
    %v10873 = vpack.c.b16 %v10320, %v10313
    %v10874 = vpack.c.b16 %v10321, %v10314
    %v10875 = vpack.c.b16 %v10322, %v10315
    %v10876 = vpack.c.b16 %v10323, %v10316
    %v10877 = vpack.c.b16 %v10324, %v10317
    %v10878 = vpack.c.b16 %v10332, %v10325
    %v10879 = vpack.c.b16 %v10333, %v10326
    %v10880 = vpack.c.b16 %v10334, %v10327
    %v10881 = vpack.c.b16 %v10335, %v10328
    %v10882 = vpack.c.b16 %v10336, %v10329
    %v10883 = vpack.c.b16 %v10337, %v10330
    %v10884 = vpack.c.b16 %v10338, %v10331
    %v10885 = vpack.c.b16 %v10346, %v10339
    %v10886 = vpack.c.b16 %v10347, %v10340
    %v10887 = vpack.c.b16 %v10348, %v10341
    %v10888 = vpack.c.b16 %v10349, %v10342
    %v10889 = vpack.c.b16 %v10350, %v10343
    %v10890 = vpack.c.b16 %v10351, %v10344
    %v10891 = vpack.c.b16 %v10352, %v10345
    %v10892 = vpack.c.b16 %v10360, %v10353
    %v10893 = vpack.c.b16 %v10361, %v10354
    %v10894 = vpack.c.b16 %v10362, %v10355
    %v10895 = vpack.c.b16 %v10363, %v10356
    %v10896 = vpack.c.b16 %v10364, %v10357
    %v10897 = vpack.c.b16 %v10365, %v10358
    %v10898 = vpack.c.b16 %v10366, %v10359
    %v10899 = vpack.c.b16 %v10374, %v10367
    %v10900 = vpack.c.b16 %v10375, %v10368
    %v10901 = vpack.c.b16 %v10376, %v10369
    %v10902 = vpack.c.b16 %v10377, %v10370
    %v10903 = vpack.c.b16 %v10378, %v10371
    %v10904 = vpack.c.b16 %v10379, %v10372
    %v10905 = vpack.c.b16 %v10380, %v10373
    %v10906 = vpack.c.b16 %v10388, %v10381
    %v10907 = vpack.c.b16 %v10389, %v10382
    %v10908 = vpack.c.b16 %v10390, %v10383
    %v10909 = vpack.c.b16 %v10391, %v10384
    %v10910 = vpack.c.b16 %v10392, %v10385
    %v10911 = vpack.c.b16 %v10393, %v10386
    %v10912 = vpack.c.b16 %v10394, %v10387
    %v10913 = vpack.c.b16 %v10402, %v10395
    %v10914 = vpack.c.b16 %v10403, %v10396
    %v10915 = vpack.c.b16 %v10404, %v10397
    %v10916 = vpack.c.b16 %v10405, %v10398
    %v10917 = vpack.c.b16 %v10406, %v10399
    %v10918 = vpack.c.b16 %v10407, %v10400
    %v10919 = vpack.c.b16 %v10408, %v10401
    %v10920 = vpack.c.b16 %v10416, %v10409
    %v10921 = vpack.c.b16 %v10417, %v10410
    %v10922 = vpack.c.b16 %v10418, %v10411
    %v10923 = vpack.c.b16 %v10419, %v10412
    %v10924 = vpack.c.b16 %v10420, %v10413
    %v10925 = vpack.c.b16 %v10421, %v10414
    %v10926 = vpack.c.b16 %v10422, %v10415
    %v10927 = vpack.c.b16 %v10430, %v10423
    %v10928 = vpack.c.b16 %v10431, %v10424
    %v10929 = vpack.c.b16 %v10432, %v10425
    %v10930 = vpack.c.b16 %v10433, %v10426
    %v10931 = vpack.c.b16 %v10434, %v10427
    %v10932 = vpack.c.b16 %v10435, %v10428
    %v10933 = vpack.c.b16 %v10436, %v10429
    %v10934 = vpack.c.b16 %v10444, %v10437
    %v10935 = vpack.c.b16 %v10445, %v10438
    %v10936 = vpack.c.b16 %v10446, %v10439
    %v10937 = vpack.c.b16 %v10447, %v10440
    %v10938 = vpack.c.b16 %v10448, %v10441
    %v10939 = vpack.c.b16 %v10449, %v10442
    %v10940 = vpack.c.b16 %v10450, %v10443
    %v10941 = vpack.c.b16 %v10458, %v10451
    %v10942 = vpack.c.b16 %v10459, %v10452
    %v10943 = vpack.c.b16 %v10460, %v10453
    %v10944 = vpack.c.b16 %v10461, %v10454
    %v10945 = vpack.c.b16 %v10462, %v10455
    %v10946 = vpack.c.b16 %v10463, %v10456
    %v10947 = vpack.c.b16 %v10464, %v10457
    %v10948 = vpack.c.b16 %v10472, %v10465
    %v10949 = vpack.c.b16 %v10473, %v10466
    %v10950 = vpack.c.b16 %v10474, %v10467
    %v10951 = vpack.c.b16 %v10475, %v10468
    %v10952 = vpack.c.b16 %v10476, %v10469
    %v10953 = vpack.c.b16 %v10477, %v10470
    %v10954 = vpack.c.b16 %v10478, %v10471
    %v10955 = vpack.c.b16 %v10486, %v10479
    %v10956 = vpack.c.b16 %v10487, %v10480
    %v10957 = vpack.c.b16 %v10488, %v10481
    %v10958 = vpack.c.b16 %v10489, %v10482
    %v10959 = vpack.c.b16 %v10490, %v10483
    %v10960 = vpack.c.b16 %v10491, %v10484
    %v10961 = vpack.c.b16 %v10492, %v10485
    %v10962 = vpack.c.b16 %v10500, %v10493
    %v10963 = vpack.c.b16 %v10501, %v10494
    %v10964 = vpack.c.b16 %v10502, %v10495
    %v10965 = vpack.c.b16 %v10503, %v10496
    %v10966 = vpack.c.b16 %v10504, %v10497
    %v10967 = vpack.c.b16 %v10505, %v10498
    %v10968 = vpack.c.b16 %v10506, %v10499
    %v10969 = vpack.c.b16 %v10514, %v10507
    %v10970 = vpack.c.b16 %v10515, %v10508
    %v10971 = vpack.c.b16 %v10516, %v10509
    %v10972 = vpack.c.b16 %v10517, %v10510
    %v10973 = vpack.c.b16 %v10518, %v10511
    %v10974 = vpack.c.b16 %v10519, %v10512
    %v10975 = vpack.c.b16 %v10520, %v10513
    %v10976 = vpack.c.b16 %v10528, %v10521
    %v10977 = vpack.c.b16 %v10529, %v10522
    %v10978 = vpack.c.b16 %v10530, %v10523
    %v10979 = vpack.c.b16 %v10531, %v10524
    %v10980 = vpack.c.b16 %v10532, %v10525
    %v10981 = vpack.c.b16 %v10533, %v10526
    %v10982 = vpack.c.b16 %v10534, %v10527
    %11431 = vmatprep.subr.bf16.mxu0 %v10585
    %11432 = vmatpush1.bf16.msra.mxu0 %v10584
    %11433 = vmatprep.subr.bf16.mxu0 %v10578
    %11434 = vmatpush1.bf16.msra.mxu0 %v10577
    %11435 = vmatprep.subr.bf16.mxu0 %v10571
    %11436 = vmatpush1.bf16.msra.mxu0 %v10570
    %11437 = vmatprep.subr.bf16.mxu0 %v10564
    %11438 = vmatpush1.bf16.msra.mxu0 %v10563
    %11439 = vmatprep.subr.bf16.mxu0 %v10557
    %11440 = vmatpush1.bf16.msra.mxu0 %v10556
    %11441 = vmatprep.subr.bf16.mxu0 %v10550
    %11442 = vmatpush1.bf16.msra.mxu0 %v10549
    %11443 = vmatprep.subr.bf16.mxu0 %v10543
    %11444 = vmatpush1.bf16.msra.mxu0 %v10542
    %11445 = vmatprep.subr.bf16.mxu0 %v10536
    %11446 = vmatpush1.bf16.msra.mxu0 %v10535
    %11447 = vmatprep.subr.bf16.mxu0 %v10641
    %11448 = vmatpush2.bf16.msra.mxu0 %v10640
    %11449 = vmatprep.subr.bf16.mxu0 %v10634
    %11450 = vmatpush2.bf16.msra.mxu0 %v10633
    %11451 = vmatprep.subr.bf16.mxu0 %v10627
    %11452 = vmatpush2.bf16.msra.mxu0 %v10626
    %11453 = vmatprep.subr.bf16.mxu0 %v10620
    %11454 = vmatpush2.bf16.msra.mxu0 %v10619
    %11455 = vmatprep.subr.bf16.mxu0 %v10613
    %11456 = vmatpush2.bf16.msra.mxu0 %v10612
    %11457 = vmatprep.subr.bf16.mxu0 %v10606
    %11458 = vmatpush2.bf16.msra.mxu0 %v10605
    %11459 = vmatprep.subr.bf16.mxu0 %v10599
    %11460 = vmatpush2.bf16.msra.mxu0 %v10598
    %11461 = vmatprep.subr.bf16.mxu0 %v10592
    %11462 = vmatpush2.bf16.msra.mxu0 %v10591
    %11463 = vmatprep.mubr.bf16.mxu0 %v8571
    %11464 = vmatmul.mubr.bf16.gmra.mxu0 %v8570
    %v11465 = vpop.f32.mrf.mxu0
    %v11466 = vadd.f32 %v9095, %v11465
    %v11467 = vpop.f32.mrf.mxu0
    %v11468 = vadd.f32 %v9099, %v11467
    %v11469 = vpop.f32.mrf.mxu0
    %v11470 = vadd.f32 %v9095, %v11469
    %v11471 = vpop.f32.mrf.mxu0
    %v11472 = vadd.f32 %v9099, %v11471
    %11473 = vdwg.mxu0
    %11474 = vmatprep.subr.bf16.mxu0 %v10697
    %11475 = vmatpush1.bf16.msra.mxu0 %v10696
    %11476 = vmatprep.subr.bf16.mxu0 %v10690
    %11477 = vmatpush1.bf16.msra.mxu0 %v10689
    %11478 = vmatprep.subr.bf16.mxu0 %v10683
    %11479 = vmatpush1.bf16.msra.mxu0 %v10682
    %11480 = vmatprep.subr.bf16.mxu0 %v10676
    %11481 = vmatpush1.bf16.msra.mxu0 %v10675
    %11482 = vmatprep.subr.bf16.mxu0 %v10669
    %11483 = vmatpush1.bf16.msra.mxu0 %v10668
    %11484 = vmatprep.subr.bf16.mxu0 %v10662
    %11485 = vmatpush1.bf16.msra.mxu0 %v10661
    %11486 = vmatprep.subr.bf16.mxu0 %v10655
    %11487 = vmatpush1.bf16.msra.mxu0 %v10654
    %11488 = vmatprep.subr.bf16.mxu0 %v10648
    %11489 = vmatpush1.bf16.msra.mxu0 %v10647
    %11490 = vmatprep.subr.bf16.mxu0 %v10753
    %11491 = vmatpush2.bf16.msra.mxu0 %v10752
    %11492 = vmatprep.subr.bf16.mxu0 %v10746
    %11493 = vmatpush2.bf16.msra.mxu0 %v10745
    %11494 = vmatprep.subr.bf16.mxu0 %v10739
    %11495 = vmatpush2.bf16.msra.mxu0 %v10738
    %11496 = vmatprep.subr.bf16.mxu0 %v10732
    %11497 = vmatpush2.bf16.msra.mxu0 %v10731
    %11498 = vmatprep.subr.bf16.mxu0 %v10725
    %11499 = vmatpush2.bf16.msra.mxu0 %v10724
    %11500 = vmatprep.subr.bf16.mxu0 %v10718
    %11501 = vmatpush2.bf16.msra.mxu0 %v10717
    %11502 = vmatprep.subr.bf16.mxu0 %v10711
    %11503 = vmatpush2.bf16.msra.mxu0 %v10710
    %11504 = vmatprep.subr.bf16.mxu0 %v10704
    %11505 = vmatpush2.bf16.msra.mxu0 %v10703
    %11506 = vmatprep.mubr.bf16.mxu0 %v8573
    %11507 = vmatmul.mubr.bf16.gmra.mxu0 %v8572
    %v11508 = vpop.f32.mrf.mxu0
    %v11509 = vadd.f32 %v11466, %v11508
    %v11510 = vpop.f32.mrf.mxu0
    %v11511 = vadd.f32 %v11468, %v11510
    %v11512 = vpop.f32.mrf.mxu0
    %v11513 = vadd.f32 %v11470, %v11512
    %v11514 = vpop.f32.mrf.mxu0
    %v11515 = vadd.f32 %v11472, %v11514
    %11516 = vdwg.mxu0
    %11517 = vmatprep.subr.bf16.mxu0 %v10809
    %11518 = vmatpush1.bf16.msra.mxu0 %v10808
    %11519 = vmatprep.subr.bf16.mxu0 %v10802
    %11520 = vmatpush1.bf16.msra.mxu0 %v10801
    %11521 = vmatprep.subr.bf16.mxu0 %v10795
    %11522 = vmatpush1.bf16.msra.mxu0 %v10794
    %11523 = vmatprep.subr.bf16.mxu0 %v10788
    %11524 = vmatpush1.bf16.msra.mxu0 %v10787
    %11525 = vmatprep.subr.bf16.mxu0 %v10781
    %11526 = vmatpush1.bf16.msra.mxu0 %v10780
    %11527 = vmatprep.subr.bf16.mxu0 %v10774
    %11528 = vmatpush1.bf16.msra.mxu0 %v10773
    %11529 = vmatprep.subr.bf16.mxu0 %v10767
    %11530 = vmatpush1.bf16.msra.mxu0 %v10766
    %11531 = vmatprep.subr.bf16.mxu0 %v10760
    %11532 = vmatpush1.bf16.msra.mxu0 %v10759
    %11533 = vmatprep.subr.bf16.mxu0 %v10865
    %11534 = vmatpush2.bf16.msra.mxu0 %v10864
    %11535 = vmatprep.subr.bf16.mxu0 %v10858
    %11536 = vmatpush2.bf16.msra.mxu0 %v10857
    %11537 = vmatprep.subr.bf16.mxu0 %v10851
    %11538 = vmatpush2.bf16.msra.mxu0 %v10850
    %11539 = vmatprep.subr.bf16.mxu0 %v10844
    %11540 = vmatpush2.bf16.msra.mxu0 %v10843
    %11541 = vmatprep.subr.bf16.mxu0 %v10837
    %11542 = vmatpush2.bf16.msra.mxu0 %v10836
    %11543 = vmatprep.subr.bf16.mxu0 %v10830
    %11544 = vmatpush2.bf16.msra.mxu0 %v10829
    %11545 = vmatprep.subr.bf16.mxu0 %v10823
    %11546 = vmatpush2.bf16.msra.mxu0 %v10822
    %11547 = vmatprep.subr.bf16.mxu0 %v10816
    %11548 = vmatpush2.bf16.msra.mxu0 %v10815
    %11549 = vmatprep.mubr.bf16.mxu0 %v8575
    %11550 = vmatmul.mubr.bf16.gmra.mxu0 %v8574
    %v11551 = vpop.f32.mrf.mxu0
    %v11552 = vadd.f32 %v11509, %v11551
    %v11553 = vpop.f32.mrf.mxu0
    %v11554 = vadd.f32 %v11511, %v11553
    %v11555 = vpop.f32.mrf.mxu0
    %v11556 = vadd.f32 %v11513, %v11555
    %v11557 = vpop.f32.mrf.mxu0
    %v11558 = vadd.f32 %v11515, %v11557
    %11559 = vdwg.mxu0
    %11560 = vmatprep.subr.bf16.mxu0 %v10921
    %11561 = vmatpush1.bf16.msra.mxu0 %v10920
    %11562 = vmatprep.subr.bf16.mxu0 %v10914
    %11563 = vmatpush1.bf16.msra.mxu0 %v10913
    %11564 = vmatprep.subr.bf16.mxu0 %v10907
    %11565 = vmatpush1.bf16.msra.mxu0 %v10906
    %11566 = vmatprep.subr.bf16.mxu0 %v10900
    %11567 = vmatpush1.bf16.msra.mxu0 %v10899
    %11568 = vmatprep.subr.bf16.mxu0 %v10893
    %11569 = vmatpush1.bf16.msra.mxu0 %v10892
    %11570 = vmatprep.subr.bf16.mxu0 %v10886
    %11571 = vmatpush1.bf16.msra.mxu0 %v10885
    %11572 = vmatprep.subr.bf16.mxu0 %v10879
    %11573 = vmatpush1.bf16.msra.mxu0 %v10878
    %11574 = vmatprep.subr.bf16.mxu0 %v10872
    %11575 = vmatpush1.bf16.msra.mxu0 %v10871
    %11576 = vmatprep.subr.bf16.mxu0 %v10977
    %11577 = vmatpush2.bf16.msra.mxu0 %v10976
    %11578 = vmatprep.subr.bf16.mxu0 %v10970
    %11579 = vmatpush2.bf16.msra.mxu0 %v10969
    %11580 = vmatprep.subr.bf16.mxu0 %v10963
    %11581 = vmatpush2.bf16.msra.mxu0 %v10962
    %11582 = vmatprep.subr.bf16.mxu0 %v10956
    %11583 = vmatpush2.bf16.msra.mxu0 %v10955
    %11584 = vmatprep.subr.bf16.mxu0 %v10949
    %11585 = vmatpush2.bf16.msra.mxu0 %v10948
    %11586 = vmatprep.subr.bf16.mxu0 %v10942
    %11587 = vmatpush2.bf16.msra.mxu0 %v10941
    %11588 = vmatprep.subr.bf16.mxu0 %v10935
    %11589 = vmatpush2.bf16.msra.mxu0 %v10934
    %11590 = vmatprep.subr.bf16.mxu0 %v10928
    %11591 = vmatpush2.bf16.msra.mxu0 %v10927
    %11592 = vmatprep.mubr.bf16.mxu0 %v8577
    %11593 = vmatmul.mubr.bf16.gmra.mxu0 %v8576
    %v11594 = vpop.f32.mrf.mxu0
    %v11595 = vadd.f32 %v11552, %v11594
    %v11596 = vpop.f32.mrf.mxu0
    %v11597 = vadd.f32 %v11554, %v11596
    %v11598 = vpop.f32.mrf.mxu0
    %v11599 = vadd.f32 %v11556, %v11598
    %v11600 = vpop.f32.mrf.mxu0
    %v11601 = vadd.f32 %v11558, %v11600
    %11602 = vdwg.mxu0
    %11603 = vmatprep.subr.bf16.mxu0 %v10587
    %11604 = vmatpush1.bf16.msra.mxu0 %v10586
    %11605 = vmatprep.subr.bf16.mxu0 %v10580
    %11606 = vmatpush1.bf16.msra.mxu0 %v10579
    %11607 = vmatprep.subr.bf16.mxu0 %v10573
    %11608 = vmatpush1.bf16.msra.mxu0 %v10572
    %11609 = vmatprep.subr.bf16.mxu0 %v10566
    %11610 = vmatpush1.bf16.msra.mxu0 %v10565
    %11611 = vmatprep.subr.bf16.mxu0 %v10559
    %11612 = vmatpush1.bf16.msra.mxu0 %v10558
    %11613 = vmatprep.subr.bf16.mxu0 %v10552
    %11614 = vmatpush1.bf16.msra.mxu0 %v10551
    %11615 = vmatprep.subr.bf16.mxu0 %v10545
    %11616 = vmatpush1.bf16.msra.mxu0 %v10544
    %11617 = vmatprep.subr.bf16.mxu0 %v10538
    %11618 = vmatpush1.bf16.msra.mxu0 %v10537
    %11619 = vmatprep.subr.bf16.mxu0 %v10643
    %11620 = vmatpush2.bf16.msra.mxu0 %v10642
    %11621 = vmatprep.subr.bf16.mxu0 %v10636
    %11622 = vmatpush2.bf16.msra.mxu0 %v10635
    %11623 = vmatprep.subr.bf16.mxu0 %v10629
    %11624 = vmatpush2.bf16.msra.mxu0 %v10628
    %11625 = vmatprep.subr.bf16.mxu0 %v10622
    %11626 = vmatpush2.bf16.msra.mxu0 %v10621
    %11627 = vmatprep.subr.bf16.mxu0 %v10615
    %11628 = vmatpush2.bf16.msra.mxu0 %v10614
    %11629 = vmatprep.subr.bf16.mxu0 %v10608
    %11630 = vmatpush2.bf16.msra.mxu0 %v10607
    %11631 = vmatprep.subr.bf16.mxu0 %v10601
    %11632 = vmatpush2.bf16.msra.mxu0 %v10600
    %11633 = vmatprep.subr.bf16.mxu0 %v10594
    %11634 = vmatpush2.bf16.msra.mxu0 %v10593
    %11635 = vmatprep.mubr.bf16.mxu0 %v8571
    %11636 = vmatmul.mubr.bf16.gmra.mxu0 %v8570
    %v11637 = vpop.f32.mrf.mxu0
    %v11638 = vadd.f32 %v9103, %v11637
    %v11639 = vpop.f32.mrf.mxu0
    %v11640 = vadd.f32 %v9107, %v11639
    %v11641 = vpop.f32.mrf.mxu0
    %v11642 = vadd.f32 %v9103, %v11641
    %v11643 = vpop.f32.mrf.mxu0
    %v11644 = vadd.f32 %v9107, %v11643
    %11645 = vdwg.mxu0
    %11646 = vmatprep.subr.bf16.mxu0 %v10699
    %11647 = vmatpush1.bf16.msra.mxu0 %v10698
    %11648 = vmatprep.subr.bf16.mxu0 %v10692
    %11649 = vmatpush1.bf16.msra.mxu0 %v10691
    %11650 = vmatprep.subr.bf16.mxu0 %v10685
    %11651 = vmatpush1.bf16.msra.mxu0 %v10684
    %11652 = vmatprep.subr.bf16.mxu0 %v10678
    %11653 = vmatpush1.bf16.msra.mxu0 %v10677
    %11654 = vmatprep.subr.bf16.mxu0 %v10671
    %11655 = vmatpush1.bf16.msra.mxu0 %v10670
    %11656 = vmatprep.subr.bf16.mxu0 %v10664
    %11657 = vmatpush1.bf16.msra.mxu0 %v10663
    %11658 = vmatprep.subr.bf16.mxu0 %v10657
    %11659 = vmatpush1.bf16.msra.mxu0 %v10656
    %11660 = vmatprep.subr.bf16.mxu0 %v10650
    %11661 = vmatpush1.bf16.msra.mxu0 %v10649
    %11662 = vmatprep.subr.bf16.mxu0 %v10755
    %11663 = vmatpush2.bf16.msra.mxu0 %v10754
    %11664 = vmatprep.subr.bf16.mxu0 %v10748
    %11665 = vmatpush2.bf16.msra.mxu0 %v10747
    %11666 = vmatprep.subr.bf16.mxu0 %v10741
    %11667 = vmatpush2.bf16.msra.mxu0 %v10740
    %11668 = vmatprep.subr.bf16.mxu0 %v10734
    %11669 = vmatpush2.bf16.msra.mxu0 %v10733
    %11670 = vmatprep.subr.bf16.mxu0 %v10727
    %11671 = vmatpush2.bf16.msra.mxu0 %v10726
    %11672 = vmatprep.subr.bf16.mxu0 %v10720
    %11673 = vmatpush2.bf16.msra.mxu0 %v10719
    %11674 = vmatprep.subr.bf16.mxu0 %v10713
    %11675 = vmatpush2.bf16.msra.mxu0 %v10712
    %11676 = vmatprep.subr.bf16.mxu0 %v10706
    %11677 = vmatpush2.bf16.msra.mxu0 %v10705
    %11678 = vmatprep.mubr.bf16.mxu0 %v8573
    %11679 = vmatmul.mubr.bf16.gmra.mxu0 %v8572
    %v11680 = vpop.f32.mrf.mxu0
    %v11681 = vadd.f32 %v11638, %v11680
    %v11682 = vpop.f32.mrf.mxu0
    %v11683 = vadd.f32 %v11640, %v11682
    %v11684 = vpop.f32.mrf.mxu0
    %v11685 = vadd.f32 %v11642, %v11684
    %v11686 = vpop.f32.mrf.mxu0
    %v11687 = vadd.f32 %v11644, %v11686
    %11688 = vdwg.mxu0
    %11689 = vmatprep.subr.bf16.mxu0 %v10811
    %11690 = vmatpush1.bf16.msra.mxu0 %v10810
    %11691 = vmatprep.subr.bf16.mxu0 %v10804
    %11692 = vmatpush1.bf16.msra.mxu0 %v10803
    %11693 = vmatprep.subr.bf16.mxu0 %v10797
    %11694 = vmatpush1.bf16.msra.mxu0 %v10796
    %11695 = vmatprep.subr.bf16.mxu0 %v10790
    %11696 = vmatpush1.bf16.msra.mxu0 %v10789
    %11697 = vmatprep.subr.bf16.mxu0 %v10783
    %11698 = vmatpush1.bf16.msra.mxu0 %v10782
    %11699 = vmatprep.subr.bf16.mxu0 %v10776
    %11700 = vmatpush1.bf16.msra.mxu0 %v10775
    %11701 = vmatprep.subr.bf16.mxu0 %v10769
    %11702 = vmatpush1.bf16.msra.mxu0 %v10768
    %11703 = vmatprep.subr.bf16.mxu0 %v10762
    %11704 = vmatpush1.bf16.msra.mxu0 %v10761
    %11705 = vmatprep.subr.bf16.mxu0 %v10867
    %11706 = vmatpush2.bf16.msra.mxu0 %v10866
    %11707 = vmatprep.subr.bf16.mxu0 %v10860
    %11708 = vmatpush2.bf16.msra.mxu0 %v10859
    %11709 = vmatprep.subr.bf16.mxu0 %v10853
    %11710 = vmatpush2.bf16.msra.mxu0 %v10852
    %11711 = vmatprep.subr.bf16.mxu0 %v10846
    %11712 = vmatpush2.bf16.msra.mxu0 %v10845
    %11713 = vmatprep.subr.bf16.mxu0 %v10839
    %11714 = vmatpush2.bf16.msra.mxu0 %v10838
    %11715 = vmatprep.subr.bf16.mxu0 %v10832
    %11716 = vmatpush2.bf16.msra.mxu0 %v10831
    %11717 = vmatprep.subr.bf16.mxu0 %v10825
    %11718 = vmatpush2.bf16.msra.mxu0 %v10824
    %11719 = vmatprep.subr.bf16.mxu0 %v10818
    %11720 = vmatpush2.bf16.msra.mxu0 %v10817
    %11721 = vmatprep.mubr.bf16.mxu0 %v8575
    %11722 = vmatmul.mubr.bf16.gmra.mxu0 %v8574
    %v11723 = vpop.f32.mrf.mxu0
    %v11724 = vadd.f32 %v11681, %v11723
    %v11725 = vpop.f32.mrf.mxu0
    %v11726 = vadd.f32 %v11683, %v11725
    %v11727 = vpop.f32.mrf.mxu0
    %v11728 = vadd.f32 %v11685, %v11727
    %v11729 = vpop.f32.mrf.mxu0
    %v11730 = vadd.f32 %v11687, %v11729
    %11731 = vdwg.mxu0
    %11732 = vmatprep.subr.bf16.mxu0 %v10923
    %11733 = vmatpush1.bf16.msra.mxu0 %v10922
    %11734 = vmatprep.subr.bf16.mxu0 %v10916
    %11735 = vmatpush1.bf16.msra.mxu0 %v10915
    %11736 = vmatprep.subr.bf16.mxu0 %v10909
    %11737 = vmatpush1.bf16.msra.mxu0 %v10908
    %11738 = vmatprep.subr.bf16.mxu0 %v10902
    %11739 = vmatpush1.bf16.msra.mxu0 %v10901
    %11740 = vmatprep.subr.bf16.mxu0 %v10895
    %11741 = vmatpush1.bf16.msra.mxu0 %v10894
    %11742 = vmatprep.subr.bf16.mxu0 %v10888
    %11743 = vmatpush1.bf16.msra.mxu0 %v10887
    %11744 = vmatprep.subr.bf16.mxu0 %v10881
    %11745 = vmatpush1.bf16.msra.mxu0 %v10880
    %11746 = vmatprep.subr.bf16.mxu0 %v10874
    %11747 = vmatpush1.bf16.msra.mxu0 %v10873
    %11748 = vmatprep.subr.bf16.mxu0 %v10979
    %11749 = vmatpush2.bf16.msra.mxu0 %v10978
    %11750 = vmatprep.subr.bf16.mxu0 %v10972
    %11751 = vmatpush2.bf16.msra.mxu0 %v10971
    %11752 = vmatprep.subr.bf16.mxu0 %v10965
    %11753 = vmatpush2.bf16.msra.mxu0 %v10964
    %11754 = vmatprep.subr.bf16.mxu0 %v10958
    %11755 = vmatpush2.bf16.msra.mxu0 %v10957
    %11756 = vmatprep.subr.bf16.mxu0 %v10951
    %11757 = vmatpush2.bf16.msra.mxu0 %v10950
    %11758 = vmatprep.subr.bf16.mxu0 %v10944
    %11759 = vmatpush2.bf16.msra.mxu0 %v10943
    %11760 = vmatprep.subr.bf16.mxu0 %v10937
    %11761 = vmatpush2.bf16.msra.mxu0 %v10936
    %11762 = vmatprep.subr.bf16.mxu0 %v10930
    %11763 = vmatpush2.bf16.msra.mxu0 %v10929
    %11764 = vmatprep.mubr.bf16.mxu0 %v8577
    %11765 = vmatmul.mubr.bf16.gmra.mxu0 %v8576
    %v11766 = vpop.f32.mrf.mxu0
    %v11767 = vadd.f32 %v11724, %v11766
    %v11768 = vpop.f32.mrf.mxu0
    %v11769 = vadd.f32 %v11726, %v11768
    %v11770 = vpop.f32.mrf.mxu0
    %v11771 = vadd.f32 %v11728, %v11770
    %v11772 = vpop.f32.mrf.mxu0
    %v11773 = vadd.f32 %v11730, %v11772
    %11774 = vdwg.mxu0
    %11775 = vmatprep.subr.bf16.mxu0 %v10589
    %11776 = vmatpush1.bf16.msra.mxu0 %v10588
    %11777 = vmatprep.subr.bf16.mxu0 %v10582
    %11778 = vmatpush1.bf16.msra.mxu0 %v10581
    %11779 = vmatprep.subr.bf16.mxu0 %v10575
    %11780 = vmatpush1.bf16.msra.mxu0 %v10574
    %11781 = vmatprep.subr.bf16.mxu0 %v10568
    %11782 = vmatpush1.bf16.msra.mxu0 %v10567
    %11783 = vmatprep.subr.bf16.mxu0 %v10561
    %11784 = vmatpush1.bf16.msra.mxu0 %v10560
    %11785 = vmatprep.subr.bf16.mxu0 %v10554
    %11786 = vmatpush1.bf16.msra.mxu0 %v10553
    %11787 = vmatprep.subr.bf16.mxu0 %v10547
    %11788 = vmatpush1.bf16.msra.mxu0 %v10546
    %11789 = vmatprep.subr.bf16.mxu0 %v10540
    %11790 = vmatpush1.bf16.msra.mxu0 %v10539
    %11791 = vmatprep.subr.bf16.mxu0 %v10645
    %11792 = vmatpush2.bf16.msra.mxu0 %v10644
    %11793 = vmatprep.subr.bf16.mxu0 %v10638
    %11794 = vmatpush2.bf16.msra.mxu0 %v10637
    %11795 = vmatprep.subr.bf16.mxu0 %v10631
    %11796 = vmatpush2.bf16.msra.mxu0 %v10630
    %11797 = vmatprep.subr.bf16.mxu0 %v10624
    %11798 = vmatpush2.bf16.msra.mxu0 %v10623
    %11799 = vmatprep.subr.bf16.mxu0 %v10617
    %11800 = vmatpush2.bf16.msra.mxu0 %v10616
    %11801 = vmatprep.subr.bf16.mxu0 %v10610
    %11802 = vmatpush2.bf16.msra.mxu0 %v10609
    %11803 = vmatprep.subr.bf16.mxu0 %v10603
    %11804 = vmatpush2.bf16.msra.mxu0 %v10602
    %11805 = vmatprep.subr.bf16.mxu0 %v10596
    %11806 = vmatpush2.bf16.msra.mxu0 %v10595
    %11807 = vmatprep.mubr.bf16.mxu0 %v8571
    %11808 = vmatmul.mubr.bf16.gmra.mxu0 %v8570
    %v11809 = vpop.f32.mrf.mxu0
    %v11810 = vadd.f32 %v9111, %v11809
    %v11811 = vpop.f32.mrf.mxu0
    %v11812 = vadd.f32 %v9115, %v11811
    %v11813 = vpop.f32.mrf.mxu0
    %v11814 = vadd.f32 %v9111, %v11813
    %v11815 = vpop.f32.mrf.mxu0
    %v11816 = vadd.f32 %v9115, %v11815
    %11817 = vdwg.mxu0
    %11818 = vmatprep.subr.bf16.mxu0 %v10701
    %11819 = vmatpush1.bf16.msra.mxu0 %v10700
    %11820 = vmatprep.subr.bf16.mxu0 %v10694
    %11821 = vmatpush1.bf16.msra.mxu0 %v10693
    %11822 = vmatprep.subr.bf16.mxu0 %v10687
    %11823 = vmatpush1.bf16.msra.mxu0 %v10686
    %11824 = vmatprep.subr.bf16.mxu0 %v10680
    %11825 = vmatpush1.bf16.msra.mxu0 %v10679
    %11826 = vmatprep.subr.bf16.mxu0 %v10673
    %11827 = vmatpush1.bf16.msra.mxu0 %v10672
    %11828 = vmatprep.subr.bf16.mxu0 %v10666
    %11829 = vmatpush1.bf16.msra.mxu0 %v10665
    %11830 = vmatprep.subr.bf16.mxu0 %v10659
    %11831 = vmatpush1.bf16.msra.mxu0 %v10658
    %11832 = vmatprep.subr.bf16.mxu0 %v10652
    %11833 = vmatpush1.bf16.msra.mxu0 %v10651
    %11834 = vmatprep.subr.bf16.mxu0 %v10757
    %11835 = vmatpush2.bf16.msra.mxu0 %v10756
    %11836 = vmatprep.subr.bf16.mxu0 %v10750
    %11837 = vmatpush2.bf16.msra.mxu0 %v10749
    %11838 = vmatprep.subr.bf16.mxu0 %v10743
    %11839 = vmatpush2.bf16.msra.mxu0 %v10742
    %11840 = vmatprep.subr.bf16.mxu0 %v10736
    %11841 = vmatpush2.bf16.msra.mxu0 %v10735
    %11842 = vmatprep.subr.bf16.mxu0 %v10729
    %11843 = vmatpush2.bf16.msra.mxu0 %v10728
    %11844 = vmatprep.subr.bf16.mxu0 %v10722
    %11845 = vmatpush2.bf16.msra.mxu0 %v10721
    %11846 = vmatprep.subr.bf16.mxu0 %v10715
    %11847 = vmatpush2.bf16.msra.mxu0 %v10714
    %11848 = vmatprep.subr.bf16.mxu0 %v10708
    %11849 = vmatpush2.bf16.msra.mxu0 %v10707
    %11850 = vmatprep.mubr.bf16.mxu0 %v8573
    %11851 = vmatmul.mubr.bf16.gmra.mxu0 %v8572
    %v11852 = vpop.f32.mrf.mxu0
    %v11853 = vadd.f32 %v11810, %v11852
    %v11854 = vpop.f32.mrf.mxu0
    %v11855 = vadd.f32 %v11812, %v11854
    %v11856 = vpop.f32.mrf.mxu0
    %v11857 = vadd.f32 %v11814, %v11856
    %v11858 = vpop.f32.mrf.mxu0
    %v11859 = vadd.f32 %v11816, %v11858
    %11860 = vdwg.mxu0
    %11861 = vmatprep.subr.bf16.mxu0 %v10813
    %11862 = vmatpush1.bf16.msra.mxu0 %v10812
    %11863 = vmatprep.subr.bf16.mxu0 %v10806
    %11864 = vmatpush1.bf16.msra.mxu0 %v10805
    %11865 = vmatprep.subr.bf16.mxu0 %v10799
    %11866 = vmatpush1.bf16.msra.mxu0 %v10798
    %11867 = vmatprep.subr.bf16.mxu0 %v10792
    %11868 = vmatpush1.bf16.msra.mxu0 %v10791
    %11869 = vmatprep.subr.bf16.mxu0 %v10785
    %11870 = vmatpush1.bf16.msra.mxu0 %v10784
    %11871 = vmatprep.subr.bf16.mxu0 %v10778
    %11872 = vmatpush1.bf16.msra.mxu0 %v10777
    %11873 = vmatprep.subr.bf16.mxu0 %v10771
    %11874 = vmatpush1.bf16.msra.mxu0 %v10770
    %11875 = vmatprep.subr.bf16.mxu0 %v10764
    %11876 = vmatpush1.bf16.msra.mxu0 %v10763
    %11877 = vmatprep.subr.bf16.mxu0 %v10869
    %11878 = vmatpush2.bf16.msra.mxu0 %v10868
    %11879 = vmatprep.subr.bf16.mxu0 %v10862
    %11880 = vmatpush2.bf16.msra.mxu0 %v10861
    %11881 = vmatprep.subr.bf16.mxu0 %v10855
    %11882 = vmatpush2.bf16.msra.mxu0 %v10854
    %11883 = vmatprep.subr.bf16.mxu0 %v10848
    %11884 = vmatpush2.bf16.msra.mxu0 %v10847
    %11885 = vmatprep.subr.bf16.mxu0 %v10841
    %11886 = vmatpush2.bf16.msra.mxu0 %v10840
    %11887 = vmatprep.subr.bf16.mxu0 %v10834
    %11888 = vmatpush2.bf16.msra.mxu0 %v10833
    %11889 = vmatprep.subr.bf16.mxu0 %v10827
    %11890 = vmatpush2.bf16.msra.mxu0 %v10826
    %11891 = vmatprep.subr.bf16.mxu0 %v10820
    %11892 = vmatpush2.bf16.msra.mxu0 %v10819
    %11893 = vmatprep.mubr.bf16.mxu0 %v8575
    %11894 = vmatmul.mubr.bf16.gmra.mxu0 %v8574
    %v11895 = vpop.f32.mrf.mxu0
    %v11896 = vadd.f32 %v11853, %v11895
    %v11897 = vpop.f32.mrf.mxu0
    %v11898 = vadd.f32 %v11855, %v11897
    %v11899 = vpop.f32.mrf.mxu0
    %v11900 = vadd.f32 %v11857, %v11899
    %v11901 = vpop.f32.mrf.mxu0
    %v11902 = vadd.f32 %v11859, %v11901
    %11903 = vdwg.mxu0
    %11904 = vmatprep.subr.bf16.mxu0 %v10925
    %11905 = vmatpush1.bf16.msra.mxu0 %v10924
    %11906 = vmatprep.subr.bf16.mxu0 %v10918
    %11907 = vmatpush1.bf16.msra.mxu0 %v10917
    %11908 = vmatprep.subr.bf16.mxu0 %v10911
    %11909 = vmatpush1.bf16.msra.mxu0 %v10910
    %11910 = vmatprep.subr.bf16.mxu0 %v10904
    %11911 = vmatpush1.bf16.msra.mxu0 %v10903
    %11912 = vmatprep.subr.bf16.mxu0 %v10897
    %11913 = vmatpush1.bf16.msra.mxu0 %v10896
    %11914 = vmatprep.subr.bf16.mxu0 %v10890
    %11915 = vmatpush1.bf16.msra.mxu0 %v10889
    %11916 = vmatprep.subr.bf16.mxu0 %v10883
    %11917 = vmatpush1.bf16.msra.mxu0 %v10882
    %11918 = vmatprep.subr.bf16.mxu0 %v10876
    %11919 = vmatpush1.bf16.msra.mxu0 %v10875
    %11920 = vmatprep.subr.bf16.mxu0 %v10981
    %11921 = vmatpush2.bf16.msra.mxu0 %v10980
    %11922 = vmatprep.subr.bf16.mxu0 %v10974
    %11923 = vmatpush2.bf16.msra.mxu0 %v10973
    %11924 = vmatprep.subr.bf16.mxu0 %v10967
    %11925 = vmatpush2.bf16.msra.mxu0 %v10966
    %11926 = vmatprep.subr.bf16.mxu0 %v10960
    %11927 = vmatpush2.bf16.msra.mxu0 %v10959
    %11928 = vmatprep.subr.bf16.mxu0 %v10953
    %11929 = vmatpush2.bf16.msra.mxu0 %v10952
    %11930 = vmatprep.subr.bf16.mxu0 %v10946
    %11931 = vmatpush2.bf16.msra.mxu0 %v10945
    %11932 = vmatprep.subr.bf16.mxu0 %v10939
    %11933 = vmatpush2.bf16.msra.mxu0 %v10938
    %11934 = vmatprep.subr.bf16.mxu0 %v10932
    %11935 = vmatpush2.bf16.msra.mxu0 %v10931
    %11936 = vmatprep.mubr.bf16.mxu0 %v8577
    %11937 = vmatmul.mubr.bf16.gmra.mxu0 %v8576
    %v11938 = vpop.f32.mrf.mxu0
    %v11939 = vadd.f32 %v11896, %v11938
    %v11940 = vpop.f32.mrf.mxu0
    %v11941 = vadd.f32 %v11898, %v11940
    %v11942 = vpop.f32.mrf.mxu0
    %v11943 = vadd.f32 %v11900, %v11942
    %v11944 = vpop.f32.mrf.mxu0
    %v11945 = vadd.f32 %v11902, %v11944
    %11946 = vdwg.mxu0
    %11947 = vmatprep.subr.bf16.mxu0 0
    %11948 = vmatpush1.bf16.msra.mxu0 %v10590
    %11949 = vmatprep.subr.bf16.mxu0 0
    %11950 = vmatpush1.bf16.msra.mxu0 %v10583
    %11951 = vmatprep.subr.bf16.mxu0 0
    %11952 = vmatpush1.bf16.msra.mxu0 %v10576
    %11953 = vmatprep.subr.bf16.mxu0 0
    %11954 = vmatpush1.bf16.msra.mxu0 %v10569
    %11955 = vmatprep.subr.bf16.mxu0 0
    %11956 = vmatpush1.bf16.msra.mxu0 %v10562
    %11957 = vmatprep.subr.bf16.mxu0 0
    %11958 = vmatpush1.bf16.msra.mxu0 %v10555
    %11959 = vmatprep.subr.bf16.mxu0 0
    %11960 = vmatpush1.bf16.msra.mxu0 %v10548
    %11961 = vmatprep.subr.bf16.mxu0 0
    %11962 = vmatpush1.bf16.msra.mxu0 %v10541
    %11963 = vmatprep.subr.bf16.mxu0 0
    %11964 = vmatpush2.bf16.msra.mxu0 %v10646
    %11965 = vmatprep.subr.bf16.mxu0 0
    %11966 = vmatpush2.bf16.msra.mxu0 %v10639
    %11967 = vmatprep.subr.bf16.mxu0 0
    %11968 = vmatpush2.bf16.msra.mxu0 %v10632
    %11969 = vmatprep.subr.bf16.mxu0 0
    %11970 = vmatpush2.bf16.msra.mxu0 %v10625
    %11971 = vmatprep.subr.bf16.mxu0 0
    %11972 = vmatpush2.bf16.msra.mxu0 %v10618
    %11973 = vmatprep.subr.bf16.mxu0 0
    %11974 = vmatpush2.bf16.msra.mxu0 %v10611
    %11975 = vmatprep.subr.bf16.mxu0 0
    %11976 = vmatpush2.bf16.msra.mxu0 %v10604
    %11977 = vmatprep.subr.bf16.mxu0 0
    %11978 = vmatpush2.bf16.msra.mxu0 %v10597
    %11979 = vmatprep.mubr.bf16.mxu0 %v8571
    %11980 = vmatmul.mubr.bf16.gmra.mxu0 %v8570
    %v11981 = vpop.f32.mrf.mxu0
    %v11982 = vadd.f32 %v9119, %v11981
    %v11983 = vpop.f32.mrf.mxu0
    %v11984 = vpop.f32.mrf.mxu0
    %v11985 = vadd.f32 %v9119, %v11984
    %v11986 = vpop.f32.mrf.mxu0
    %11987 = vdwg.mxu0
    %11988 = vmatprep.subr.bf16.mxu0 0
    %11989 = vmatpush1.bf16.msra.mxu0 %v10702
    %11990 = vmatprep.subr.bf16.mxu0 0
    %11991 = vmatpush1.bf16.msra.mxu0 %v10695
    %11992 = vmatprep.subr.bf16.mxu0 0
    %11993 = vmatpush1.bf16.msra.mxu0 %v10688
    %11994 = vmatprep.subr.bf16.mxu0 0
    %11995 = vmatpush1.bf16.msra.mxu0 %v10681
    %11996 = vmatprep.subr.bf16.mxu0 0
    %11997 = vmatpush1.bf16.msra.mxu0 %v10674
    %11998 = vmatprep.subr.bf16.mxu0 0
    %11999 = vmatpush1.bf16.msra.mxu0 %v10667
    %12000 = vmatprep.subr.bf16.mxu0 0
    %12001 = vmatpush1.bf16.msra.mxu0 %v10660
    %12002 = vmatprep.subr.bf16.mxu0 0
    %12003 = vmatpush1.bf16.msra.mxu0 %v10653
    %12004 = vmatprep.subr.bf16.mxu0 0
    %12005 = vmatpush2.bf16.msra.mxu0 %v10758
    %12006 = vmatprep.subr.bf16.mxu0 0
    %12007 = vmatpush2.bf16.msra.mxu0 %v10751
    %12008 = vmatprep.subr.bf16.mxu0 0
    %12009 = vmatpush2.bf16.msra.mxu0 %v10744
    %12010 = vmatprep.subr.bf16.mxu0 0
    %12011 = vmatpush2.bf16.msra.mxu0 %v10737
    %12012 = vmatprep.subr.bf16.mxu0 0
    %12013 = vmatpush2.bf16.msra.mxu0 %v10730
    %12014 = vmatprep.subr.bf16.mxu0 0
    %12015 = vmatpush2.bf16.msra.mxu0 %v10723
    %12016 = vmatprep.subr.bf16.mxu0 0
    %12017 = vmatpush2.bf16.msra.mxu0 %v10716
    %12018 = vmatprep.subr.bf16.mxu0 0
    %12019 = vmatpush2.bf16.msra.mxu0 %v10709
    %12020 = vmatprep.mubr.bf16.mxu0 %v8573
    %12021 = vmatmul.mubr.bf16.gmra.mxu0 %v8572
    %v12022 = vpop.f32.mrf.mxu0
    %v12023 = vadd.f32 %v11982, %v12022
    %v12024 = vpop.f32.mrf.mxu0
    %v12025 = vpop.f32.mrf.mxu0
    %v12026 = vadd.f32 %v11985, %v12025
    %v12027 = vpop.f32.mrf.mxu0
    %12028 = vdwg.mxu0
    %12029 = vmatprep.subr.bf16.mxu0 0
    %12030 = vmatpush1.bf16.msra.mxu0 %v10814
    %12031 = vmatprep.subr.bf16.mxu0 0
    %12032 = vmatpush1.bf16.msra.mxu0 %v10807
    %12033 = vmatprep.subr.bf16.mxu0 0
    %12034 = vmatpush1.bf16.msra.mxu0 %v10800
    %12035 = vmatprep.subr.bf16.mxu0 0
    %12036 = vmatpush1.bf16.msra.mxu0 %v10793
    %12037 = vmatprep.subr.bf16.mxu0 0
    %12038 = vmatpush1.bf16.msra.mxu0 %v10786
    %12039 = vmatprep.subr.bf16.mxu0 0
    %12040 = vmatpush1.bf16.msra.mxu0 %v10779
    %12041 = vmatprep.subr.bf16.mxu0 0
    %12042 = vmatpush1.bf16.msra.mxu0 %v10772
    %12043 = vmatprep.subr.bf16.mxu0 0
    %12044 = vmatpush1.bf16.msra.mxu0 %v10765
    %12045 = vmatprep.subr.bf16.mxu0 0
    %12046 = vmatpush2.bf16.msra.mxu0 %v10870
    %12047 = vmatprep.subr.bf16.mxu0 0
    %12048 = vmatpush2.bf16.msra.mxu0 %v10863
    %12049 = vmatprep.subr.bf16.mxu0 0
    %12050 = vmatpush2.bf16.msra.mxu0 %v10856
    %12051 = vmatprep.subr.bf16.mxu0 0
    %12052 = vmatpush2.bf16.msra.mxu0 %v10849
    %12053 = vmatprep.subr.bf16.mxu0 0
    %12054 = vmatpush2.bf16.msra.mxu0 %v10842
    %12055 = vmatprep.subr.bf16.mxu0 0
    %12056 = vmatpush2.bf16.msra.mxu0 %v10835
    %12057 = vmatprep.subr.bf16.mxu0 0
    %12058 = vmatpush2.bf16.msra.mxu0 %v10828
    %12059 = vmatprep.subr.bf16.mxu0 0
    %12060 = vmatpush2.bf16.msra.mxu0 %v10821
    %12061 = vmatprep.mubr.bf16.mxu0 %v8575
    %12062 = vmatmul.mubr.bf16.gmra.mxu0 %v8574
    %v12063 = vpop.f32.mrf.mxu0
    %v12064 = vadd.f32 %v12023, %v12063
    %v12065 = vpop.f32.mrf.mxu0
    %v12066 = vpop.f32.mrf.mxu0
    %v12067 = vadd.f32 %v12026, %v12066
    %v12068 = vpop.f32.mrf.mxu0
    %12069 = vdwg.mxu0
    %12070 = vmatprep.subr.bf16.mxu0 0
    %12071 = vmatpush1.bf16.msra.mxu0 %v10926
    %12072 = vmatprep.subr.bf16.mxu0 0
    %12073 = vmatpush1.bf16.msra.mxu0 %v10919
    %12074 = vmatprep.subr.bf16.mxu0 0
    %12075 = vmatpush1.bf16.msra.mxu0 %v10912
    %12076 = vmatprep.subr.bf16.mxu0 0
    %12077 = vmatpush1.bf16.msra.mxu0 %v10905
    %12078 = vmatprep.subr.bf16.mxu0 0
    %12079 = vmatpush1.bf16.msra.mxu0 %v10898
    %12080 = vmatprep.subr.bf16.mxu0 0
    %12081 = vmatpush1.bf16.msra.mxu0 %v10891
    %12082 = vmatprep.subr.bf16.mxu0 0
    %12083 = vmatpush1.bf16.msra.mxu0 %v10884
    %12084 = vmatprep.subr.bf16.mxu0 0
    %12085 = vmatpush1.bf16.msra.mxu0 %v10877
    %12086 = vmatprep.subr.bf16.mxu0 0
    %12087 = vmatpush2.bf16.msra.mxu0 %v10982
    %12088 = vmatprep.subr.bf16.mxu0 0
    %12089 = vmatpush2.bf16.msra.mxu0 %v10975
    %12090 = vmatprep.subr.bf16.mxu0 0
    %12091 = vmatpush2.bf16.msra.mxu0 %v10968
    %12092 = vmatprep.subr.bf16.mxu0 0
    %12093 = vmatpush2.bf16.msra.mxu0 %v10961
    %12094 = vmatprep.subr.bf16.mxu0 0
    %12095 = vmatpush2.bf16.msra.mxu0 %v10954
    %12096 = vmatprep.subr.bf16.mxu0 0
    %12097 = vmatpush2.bf16.msra.mxu0 %v10947
    %12098 = vmatprep.subr.bf16.mxu0 0
    %12099 = vmatpush2.bf16.msra.mxu0 %v10940
    %12100 = vmatprep.subr.bf16.mxu0 0
    %12101 = vmatpush2.bf16.msra.mxu0 %v10933
    %12102 = vmatprep.mubr.bf16.mxu0 %v8577
    %12103 = vmatmul.mubr.bf16.gmra.mxu0 %v8576
    %v12104 = vpop.f32.mrf.mxu0
    %v12105 = vadd.f32 %v12064, %v12104
    %v12106 = vpop.f32.mrf.mxu0
    %v12107 = vpop.f32.mrf.mxu0
    %v12108 = vadd.f32 %v12067, %v12107
    %v12109 = vpop.f32.mrf.mxu0
    %12110 = vdwg.mxu0
    %v12111 = vxor.u32 %v11595, 2147483648
    %v12112 = vxor.u32 %v11597, 2147483648
    %v12113 = vxor.u32 %v11767, 2147483648
    %v12114 = vxor.u32 %v11769, 2147483648
    %v12115 = vxor.u32 %v11939, 2147483648
    %v12116 = vxor.u32 %v11941, 2147483648
    %v12117 = vxor.u32 %v12105, 2147483648
    %v12118 = vxor.u32 %v11599, 2147483648
    %v12119 = vxor.u32 %v11601, 2147483648
    %v12120 = vxor.u32 %v11771, 2147483648
    %v12121 = vxor.u32 %v11773, 2147483648
    %v12122 = vxor.u32 %v11943, 2147483648
    %v12123 = vxor.u32 %v11945, 2147483648
    %v12124 = vxor.u32 %v12108, 2147483648
    %v12125 = vmul.f32 %v12111, 1.442695
    %v12126 = vpow.pop %v12125
    %v12127 = vmul.f32 %v12112, 1.442695
    %v12128 = vpow.pop %v12127
    %v12129 = vmul.f32 %v12113, 1.442695
    %v12130 = vpow.pop %v12129
    %v12131 = vmul.f32 %v12114, 1.442695
    %v12132 = vpow.pop %v12131
    %v12133 = vmul.f32 %v12115, 1.442695
    %v12134 = vpow.pop %v12133
    %v12135 = vmul.f32 %v12116, 1.442695
    %v12136 = vpow.pop %v12135
    %v12137 = vmul.f32 %v12117, 1.442695
    %v12138 = vpow.pop %v12137
    %v12139 = vmul.f32 %v12118, 1.442695
    %v12140 = vpow.pop %v12139
    %v12141 = vmul.f32 %v12119, 1.442695
    %v12142 = vpow.pop %v12141
    %v12143 = vmul.f32 %v12120, 1.442695
    %v12144 = vpow.pop %v12143
    %v12145 = vmul.f32 %v12121, 1.442695
    %v12146 = vpow.pop %v12145
    %v12147 = vmul.f32 %v12122, 1.442695
    %v12148 = vpow.pop %v12147
    %v12149 = vmul.f32 %v12123, 1.442695
    %v12150 = vpow.pop %v12149
    %v12151 = vmul.f32 %v12124, 1.442695
    %v12152 = vpow.pop %v12151
    %v12153 = vadd.f32 %v12126, 1.0
    %v12154 = vadd.f32 %v12128, 1.0
    %v12155 = vadd.f32 %v12130, 1.0
    %v12156 = vadd.f32 %v12132, 1.0
    %v12157 = vadd.f32 %v12134, 1.0
    %v12158 = vadd.f32 %v12136, 1.0
    %v12159 = vadd.f32 %v12138, 1.0
    %v12160 = vadd.f32 %v12140, 1.0
    %v12161 = vadd.f32 %v12142, 1.0
    %v12162 = vadd.f32 %v12144, 1.0
    %v12163 = vadd.f32 %v12146, 1.0
    %v12164 = vadd.f32 %v12148, 1.0
    %v12165 = vadd.f32 %v12150, 1.0
    %v12166 = vadd.f32 %v12152, 1.0
    %v12167 = vrcp.pop %v12153
    %v12168 = vmul.f32 1.0, %v12167
    %v12169 = vrcp.pop %v12154
    %v12170 = vmul.f32 1.0, %v12169
    %v12171 = vrcp.pop %v12155
    %v12172 = vmul.f32 1.0, %v12171
    %v12173 = vrcp.pop %v12156
    %v12174 = vmul.f32 1.0, %v12173
    %v12175 = vrcp.pop %v12157
    %v12176 = vmul.f32 1.0, %v12175
    %v12177 = vrcp.pop %v12158
    %v12178 = vmul.f32 1.0, %v12177
    %v12179 = vrcp.pop %v12159
    %v12180 = vmul.f32 1.0, %v12179
    %v12181 = vrcp.pop %v12160
    %v12182 = vmul.f32 1.0, %v12181
    %v12183 = vrcp.pop %v12161
    %v12184 = vmul.f32 1.0, %v12183
    %v12185 = vrcp.pop %v12162
    %v12186 = vmul.f32 1.0, %v12185
    %v12187 = vrcp.pop %v12163
    %v12188 = vmul.f32 1.0, %v12187
    %v12189 = vrcp.pop %v12164
    %v12190 = vmul.f32 1.0, %v12189
    %v12191 = vrcp.pop %v12165
    %v12192 = vmul.f32 1.0, %v12191
    %v12193 = vrcp.pop %v12166
    %v12194 = vmul.f32 1.0, %v12193
    %v12195 = vpack.c.bf16 %v12182, %v12168
    %v12196 = vpack.c.bf16 %v12184, %v12170
    %v12197 = vpack.c.bf16 %v12186, %v12172
    %v12198 = vpack.c.bf16 %v12188, %v12174
    %v12199 = vpack.c.bf16 %v12190, %v12176
    %v12200 = vpack.c.bf16 %v12192, %v12178
    %v12201 = vpack.c.bf16 %v12194, %v12180
    %v12209 = vunpack.c.l.b16 %v12195
    %v12210 = vunpack.c.l.b16 %v12196
    %v12211 = vunpack.c.l.b16 %v12197
    %v12212 = vunpack.c.l.b16 %v12198
    %v12213 = vunpack.c.l.b16 %v12199
    %v12214 = vunpack.c.l.b16 %v12200
    %v12215 = vunpack.c.l.b16 %v12201
    %v12216 = vunpack.c.h.b16 %v12195
    %v12217 = vunpack.c.h.b16 %v12196
    %v12218 = vunpack.c.h.b16 %v12197
    %v12219 = vunpack.c.h.b16 %v12198
    %v12220 = vunpack.c.h.b16 %v12199
    %v12221 = vunpack.c.h.b16 %v12200
    %v12222 = vunpack.c.h.b16 %v12201
    %v12223 = vpack.c.b16 %v12210, %v12209
    %v12224 = vpack.c.b16 %v12212, %v12211
    %v12225 = vpack.c.b16 %v12214, %v12213
    %v12226 = vpack.c.b16 %v12215, %v12215
    %v12227 = vpack.c.b16 %v12217, %v12216
    %v12228 = vpack.c.b16 %v12219, %v12218
    %v12229 = vpack.c.b16 %v12221, %v12220
    %v12230 = vpack.c.b16 %v12222, %v12222
    %12239 = vst [vmem:[%s18] sm:$0xff] %v12223
    %12240 = vst [vmem:[%s18 + $0x8] sm:$0xff] %v12224
    %12241 = vst [vmem:[%s18 + $0x10] sm:$0xff] %v12225
    %12242 = vst [vmem:[%s18 + $0x18] sm:$0xf] %v12226
    %12243 = vst [vmem:[%s18 + $0x1c] sm:$0xff] %v12227
    %12244 = vst [vmem:[%s18 + $0x24] sm:$0xff] %v12228
    %12245 = vst [vmem:[%s18 + $0x2c] sm:$0xff] %v12229
    %12246 = vst [vmem:[%s18 + $0x34] sm:$0xf] %v12230
    %12247 = vst [vmem:[%s19] sm:$0xff] %v5988
    %12248 = vst [vmem:[%s19 + $0x8] sm:$0xff] %v5991
    // Predicated region
    $region138: #{deep_vae_forward.1} parent=1 // pred_check
      _
    $region139: #{deep_vae_forward.1} parent=1 // pred_check_branch
      %12250 = sbr.rel (0) target = $region141
    $region140: #{deep_vae_forward.1} parent=1 // pred_region
      _
    $region141: #{deep_vae_forward.1} parent=1 // pred_fallthru
      _
    // Predicated region
    $region142: #{deep_vae_forward.1} parent=1 // pred_check
      _
    $region143: #{deep_vae_forward.1} parent=1 // pred_check_branch
      %12252 = sbr.rel (0) target = $region145
    $region144: #{deep_vae_forward.1} parent=1 // pred_region
      _
    $region145: #{deep_vae_forward.1} parent=1 // pred_fallthru
      _
    // Predicated region
    $region146: #{deep_vae_forward.1} parent=1 // pred_check
      _
    $region147: #{deep_vae_forward.1} parent=1 // pred_check_branch
      %12254 = sbr.rel (0) target = $region149
    $region148: #{deep_vae_forward.1} parent=1 // pred_region
      _
    $region149: #{deep_vae_forward.1} parent=1 // pred_fallthru
      _
    // Predicated region
    $region150: #{deep_vae_forward.1} parent=1 // pred_check
      _
    $region151: #{deep_vae_forward.1} parent=1 // pred_check_branch
      %12256 = sbr.rel (0) target = $region153
    $region152: #{deep_vae_forward.1} parent=1 // pred_region
      _
    $region153: #{deep_vae_forward.1} parent=1 // pred_fallthru
      _
    %12257 = vsyncpa [#allocation3], 1
    %12258 = vsyncpa [#allocation5], 1
    %12259 = vsyncpa [#allocation8], 1
    %12260 = vsyncpa [#allocation11], 1
    %12261 = vsyncpa [#allocation14], 1
    %12262 = vsyncpa [#allocation17], 1
    %12263 = vsyncpa [#allocation20], 1
    %12264 = vsyncpa [#allocation23], 1
    %12265 = vsyncpa [#allocation26], 1

</llo_original>
